<compile_context>
chip_gen: v7x
topology: tpu7x:2x2x1
jax: 0.10.0
libtpu: 0.0.40
codegen_flags: <defaults>
</compile_context>

<pallas_src>
import functools

import jax
import jax.numpy as jnp
import numpy as np
from jax import lax
from jax.experimental import pallas as pl
from jax.experimental.pallas import tpu as pltpu


def _round_up(x, m):
    return (x + m - 1) // m * m


def _pick_vmem_limit_bytes():
    """Generation-aware scoped-VMEM budget with headroom."""
    cap = None
    try:
        info = pltpu.get_tpu_info()
        cap = getattr(info, "vmem_capacity_bytes", None)
    except Exception:
        cap = None
    if not cap:
        cap = 64 * 1024 * 1024          # conservative fallback (v7x per-TC)
    # Leave ~8 MiB headroom for compiler-internal scratch; never exceed ~112 MiB.
    return int(max(32 * 1024 * 1024,
                   min(cap - 8 * 1024 * 1024, 112 * 1024 * 1024)))


def _lstm_stack_kernel(x_ref,
                       wih0_ref, whh0_ref, b0_ref,
                       wih1_ref, whh1_ref, b1_ref,
                       wih2_ref, whh2_ref, b2_ref,
                       wout_ref, bout_ref,
                       out_ref,
                       gx_buf, buf0, buf1, h_state, c_state,
                       *, hidden, unroll):
    """One grid step = one (batch-shard, time-chunk) through all 3 LSTM layers
    + output projection.

    x_ref   : (Tc, Bc, I)        current time chunk (time-major), matmul dtype
    wihK    : (F_in, 4H)         input->gates weights, gate order (i,f,o,g)
    whhK    : (H, 4H)            hidden->gates weights, gate order (i,f,o,g)
    bK      : (1, 4H)            folded f32 bias (b_ih + b_hh), reordered/padded
    wout    : (H, O_pad), bout : (1, O_pad)
    out_ref : (Tc, Bc, O_pad)    f32
    gx_buf  : (Tc, Bc, 4H) f32   precomputed input-side gates for the chunk
    buf0/1  : (Tc, Bc, H)        per-layer hidden sequences (matmul dtype)
    h_state/c_state : (3, Bc, H) f32 carried LSTM state (persists across chunks)
    """
    Tc, Bc, _ = x_ref.shape
    H = hidden
    Op = out_ref.shape[-1]

    # Reset carried (h, c) at the first time chunk of every batch shard.
    @pl.when(pl.program_id(1) == 0)
    def _init():
        h_state[...] = jnp.zeros_like(h_state)
        c_state[...] = jnp.zeros_like(c_state)

    def run_layer(layer_idx, read_input, wih, whh, b, out_buf):
        # (1) Hoisted input->gates matmul for the whole chunk (one MXU op,
        #     bf16 operands, f32 accumulation), bias folded in here — off the
        #     serial critical path.
        x2d = read_input().reshape(Tc * Bc, -1)
        gx = jnp.dot(x2d.astype(wih.dtype), wih,
                     preferred_element_type=jnp.float32) + b
        gx_buf[...] = gx.reshape(Tc, Bc, 4 * H)

        # (2) Serial recurrence: only h @ Whh + f32 elementwise gate math.
        def step(t, carry):
            h, c = carry
            gates = gx_buf[t] + jnp.dot(h.astype(whh.dtype), whh,
                                        preferred_element_type=jnp.float32)
            # Gate order (after wrapper reorder): i, f, o, g — H is a multiple
            # of 128, so every slice below is a clean lane-aligned view.
            sg = jax.nn.sigmoid(gates[:, :3 * H])     # one EUP slab
            g = jnp.tanh(gates[:, 3 * H:])            # one EUP slab
            i = sg[:, 0 * H:1 * H]
            f = sg[:, 1 * H:2 * H]
            o = sg[:, 2 * H:3 * H]
            c_new = f * c + i * g
            h_new = o * jnp.tanh(c_new)
            out_buf[t] = h_new.astype(out_buf.dtype)
            return (h_new, c_new)

        h0 = h_state[layer_idx]
        c0 = c_state[layer_idx]
        h_fin, c_fin = lax.fori_loop(0, Tc, step, (h0, c0), unroll=unroll)
        h_state[layer_idx] = h_fin
        c_state[layer_idx] = c_fin

    run_layer(0, lambda: x_ref[...], wih0_ref[...], whh0_ref[...], b0_ref[...], buf0)
    run_layer(1, lambda: buf0[...], wih1_ref[...], whh1_ref[...], b1_ref[...], buf1)
    run_layer(2, lambda: buf1[...], wih2_ref[...], whh2_ref[...], b2_ref[...], buf0)

    # (3) One dense output projection + sigmoid for the whole chunk
    #     (lane-dense O_pad store; wrapper slices back to O).
    wout = wout_ref[...]
    h2d = buf0[...].reshape(Tc * Bc, H)
    y = jnp.dot(h2d.astype(wout.dtype), wout,
                preferred_element_type=jnp.float32) + bout_ref[...]
    out_ref[...] = jax.nn.sigmoid(y).reshape(Tc, Bc, Op)


def prepare_params(params, *, h_pad, o_pad, matmul_dtype):
    """Reorder gate columns (i,f,g,o)->(i,f,o,g), zero-pad each gate block to
    h_pad, zero-pad hidden rows to h_pad, cast matmul weights, pad output."""
    H = params["whh0_t"].shape[0]

    def pad_last(b):
        pad = [(0, 0)] * (b.ndim - 1) + [(0, h_pad - H)]
        return jnp.pad(b, pad)

    def reorder_pad_cols(w):
        i = w[..., 0 * H:1 * H]
        f = w[..., 1 * H:2 * H]
        g = w[..., 2 * H:3 * H]
        o = w[..., 3 * H:4 * H]
        return jnp.concatenate(
            [pad_last(i), pad_last(f), pad_last(o), pad_last(g)], axis=-1)

    def pad_rows(w):
        return jnp.pad(w, ((0, h_pad - H), (0, 0)))

    prepped = {}
    for l in range(3):
        wih = reorder_pad_cols(params[f"wih{l}_t"])
        if l > 0:
            wih = pad_rows(wih)                      # previous layer is h_pad wide
        whh = pad_rows(reorder_pad_cols(params[f"whh{l}_t"]))
        prepped[f"wih{l}"] = wih.astype(matmul_dtype)
        prepped[f"whh{l}"] = whh.astype(matmul_dtype)
        # Padded bias entries are 0 -> padded i/f/o = 0.5, g = 0, so padded
        # c and h provably stay 0 (padding is inert).
        prepped[f"b{l}"] = reorder_pad_cols(params[f"b{l}"]).astype(jnp.float32)

    wout = params["wout_t"]
    O = wout.shape[1]
    prepped["wout"] = jnp.pad(wout, ((0, h_pad - H), (0, o_pad - O))).astype(matmul_dtype)
    prepped["bout"] = jnp.pad(params["bout"], ((0, 0), (0, o_pad - O))).astype(jnp.float32)
    return prepped


def rnn_forward(x, params, *, time_chunk=32, matmul_dtype=jnp.bfloat16):
    """x: (B, T, input_size) batch_first, like the PyTorch module. Returns f32."""
    B, T, I = x.shape
    H = params["whh0_t"].shape[0]
    O = params["wout_t"].shape[1]

    B_pad = _round_up(max(B, 1), 8)          # sublane-pad batch
    H_pad = _round_up(max(H, 1), 128)        # lane-align every gate slice
    O_pad = _round_up(max(O, 1), 128)        # lane-dense output stores
    Tc = max(1, min(time_chunk, T))
    T_pad = _round_up(T, Tc)
    n_chunks = T_pad // Tc

    # v7x megacore: shard padded batch across two TensorCores when big enough.
    if B_pad >= 16 and B_pad % 16 == 0:
        n_bshards, Bc = 2, B_pad // 2
    else:
        n_bshards, Bc = 1, B_pad

    prepped = prepare_params(params, h_pad=H_pad, o_pad=O_pad,
                             matmul_dtype=matmul_dtype)

    # time-major, cast to matmul dtype (halves streamed DMA in bf16), pad
    # batch / time with zeros (causal -> trailing time pads are inert).
    x_tm = jnp.transpose(x, (1, 0, 2)).astype(matmul_dtype)
    x_tm = jnp.pad(x_tm, ((0, T_pad - T), (0, B_pad - B), (0, 0)))

    args = [x_tm,
            prepped["wih0"], prepped["whh0"], prepped["b0"],
            prepped["wih1"], prepped["whh1"], prepped["b1"],
            prepped["wih2"], prepped["whh2"], prepped["b2"],
            prepped["wout"], prepped["bout"]]

    # Weights/biases: whole-array, single VMEM-resident copy (no per-chunk
    # double buffering, DMA'd once).
    in_specs = ([pl.BlockSpec((Tc, Bc, I), lambda b, c: (c, b, 0))]
                + [pl.BlockSpec(memory_space=pltpu.MemorySpace.VMEM)
                   for _ in args[1:]])

    # Advisory cost estimate for XLA scheduling around this long serial kernel.
    flops = 0
    in_sizes = [I, H_pad, H_pad]
    for l in range(3):
        flops += 2 * T_pad * B_pad * in_sizes[l] * 4 * H_pad   # hoisted gx matmul
        flops += 2 * T_pad * B_pad * H_pad * 4 * H_pad         # recurrence matmul
        flops += 10 * T_pad * B_pad * H_pad                    # elementwise gates
    flops += 2 * T_pad * B_pad * H_pad * O_pad
    transcendentals = 3 * T_pad * B_pad * 5 * H_pad + T_pad * B_pad * O_pad
    bytes_accessed = (x_tm.size * x_tm.dtype.itemsize
                      + T_pad * B_pad * O_pad * 4
                      + sum(int(np.prod(a.shape)) * a.dtype.itemsize
                            for a in args[1:]))

    # Cap unroll so large-H recurrences don't flip into a spill-bound regime.
    unroll = 8 if H_pad <= 256 else 2

    kernel = functools.partial(_lstm_stack_kernel, hidden=H_pad, unroll=unroll)

    out_tm = pl.pallas_call(
        kernel,
        grid=(n_bshards, n_chunks),
        out_shape=jax.ShapeDtypeStruct((T_pad, B_pad, O_pad), jnp.float32),
        in_specs=in_specs,
        out_specs=pl.BlockSpec((Tc, Bc, O_pad), lambda b, c: (c, b, 0)),
        scratch_shapes=[
            pltpu.VMEM((Tc, Bc, 4 * H_pad), jnp.float32),   # gx_buf
            pltpu.VMEM((Tc, Bc, H_pad), matmul_dtype),      # buf0
            pltpu.VMEM((Tc, Bc, H_pad), matmul_dtype),      # buf1
            pltpu.VMEM((3, Bc, H_pad), jnp.float32),        # h_state (carried)
            pltpu.VMEM((3, Bc, H_pad), jnp.float32),        # c_state (carried)
        ],
        compiler_params=pltpu.CompilerParams(
            dimension_semantics=("parallel", "arbitrary"),
            vmem_limit_bytes=_pick_vmem_limit_bytes()),
        cost_estimate=pl.CostEstimate(flops=int(flops),
                                      transcendentals=int(transcendentals),
                                      bytes_accessed=int(bytes_accessed)),
    )(*args)

    return jnp.transpose(out_tm[:T, :B, :O], (1, 0, 2))    # (B, T, O)


def init_params(key, input_size, hidden_size, output_size):
    """Deterministic init matching PyTorch shapes (stored pre-transposed,
    PyTorch gate order i,f,g,o)."""
    H = hidden_size
    bound = 1.0 / np.sqrt(H)
    keys = jax.random.split(key, 16)

    def u(k_, shape):
        return jax.random.uniform(k_, shape, jnp.float32, -bound, bound)

    params = {}
    in_sizes = [input_size, H, H]
    idx = 0
    for l in range(3):
        params[f"wih{l}_t"] = u(keys[idx], (in_sizes[l], 4 * H)); idx += 1
        params[f"whh{l}_t"] = u(keys[idx], (H, 4 * H)); idx += 1
        # PyTorch LSTM has b_ih + b_hh; fold them into a single bias.
        params[f"b{l}"] = (u(keys[idx], (1, 4 * H))
                           + u(jax.random.fold_in(keys[idx], 1), (1, 4 * H)))
        idx += 1
    params["wout_t"] = u(keys[idx], (H, output_size)); idx += 1
    params["bout"] = u(keys[idx], (1, output_size)); idx += 1
    return params


def ref_forward(x, params):
    """Pure-JAX f32 reference (PyTorch gate order i,f,g,o) for correctness."""
    B, T, _ = x.shape
    H = params["whh0_t"].shape[0]

    def layer(seq, wih_t, whh_t, b):
        def step(carry, x_t):
            h, c = carry
            gates = x_t @ wih_t + h @ whh_t + b[0]
            i, f, g, o = jnp.split(gates, 4, axis=-1)
            i = jax.nn.sigmoid(i)
            f = jax.nn.sigmoid(f)
            g = jnp.tanh(g)
            o = jax.nn.sigmoid(o)
            c = f * c + i * g
            h = o * jnp.tanh(c)
            return (h, c), h

        h0 = jnp.zeros((B, H), jnp.float32)
        c0 = jnp.zeros((B, H), jnp.float32)
        _, hs = lax.scan(step, (h0, c0), jnp.transpose(seq, (1, 0, 2)))
        return jnp.transpose(hs, (1, 0, 2))

    h = layer(x, params["wih0_t"], params["whh0_t"], params["b0"])
    h = layer(h, params["wih1_t"], params["whh1_t"], params["b1"])
    h = layer(h, params["wih2_t"], params["whh2_t"], params["b2"])
    y = h @ params["wout_t"] + params["bout"][0]
    return jax.nn.sigmoid(y)


if __name__ == "__main__":
    B, T = 2, 16
    input_size, hidden_size, output_size = 8, 32, 4

    key = jax.random.PRNGKey(0)
    kx, kp = jax.random.split(key)
    x = jax.random.normal(kx, (B, T, input_size), jnp.float32)
    params = init_params(kp, input_size, hidden_size, output_size)

    ref = jax.block_until_ready(ref_forward(x, params))

    # f32 MXU path: tight correctness check. time_chunk=8 with T=16 exercises
    # the multi-chunk grid and the carried (h, c) VMEM state.
    out_f32 = jax.block_until_ready(
        rnn_forward(x, params, time_chunk=8, matmul_dtype=jnp.float32))
    np.testing.assert_allclose(np.asarray(out_f32), np.asarray(ref),
                               rtol=2e-3, atol=2e-3)
    assert out_f32.shape == (B, T, output_size)

    # bf16 MXU path (the default / fast path on v5e/v6e/v7x): looser tolerance
    # is expected precision loss, not a kernel bug.
    out_bf16 = jax.block_until_ready(rnn_forward(x, params, time_chunk=8))
    np.testing.assert_allclose(np.asarray(out_bf16), np.asarray(ref),
                               rtol=5e-2, atol=5e-2)
    assert out_bf16.shape == (B, T, output_size)

    print("KERNEL_OK")
</pallas_src>

<mosaic_0001>
module attributes {stable_mosaic.version = 11 : i64} {
  func.func @_lstm_stack_kernel(%arg0: i32, %arg1: i32, %arg2: memref<8x8x8xf32, #tpu.memory_space<vmem>>, %arg3: memref<8x512xf32, #tpu.memory_space<vmem>>, %arg4: memref<128x512xf32, #tpu.memory_space<vmem>>, %arg5: memref<1x512xf32, #tpu.memory_space<vmem>>, %arg6: memref<128x512xf32, #tpu.memory_space<vmem>>, %arg7: memref<128x512xf32, #tpu.memory_space<vmem>>, %arg8: memref<1x512xf32, #tpu.memory_space<vmem>>, %arg9: memref<128x512xf32, #tpu.memory_space<vmem>>, %arg10: memref<128x512xf32, #tpu.memory_space<vmem>>, %arg11: memref<1x512xf32, #tpu.memory_space<vmem>>, %arg12: memref<128x128xf32, #tpu.memory_space<vmem>>, %arg13: memref<1x128xf32, #tpu.memory_space<vmem>>, %arg14: memref<8x8x128xf32, #tpu.memory_space<vmem>>, %arg15: memref<8x8x512xf32, #tpu.memory_space<vmem>>, %arg16: memref<8x8x128xf32, #tpu.memory_space<vmem>>, %arg17: memref<8x8x128xf32, #tpu.memory_space<vmem>>, %arg18: memref<3x8x128xf32, #tpu.memory_space<vmem>>, %arg19: memref<3x8x128xf32, #tpu.memory_space<vmem>>) attributes {dimension_semantics = [#tpu.dimension_semantics<parallel>, #tpu.dimension_semantics<arbitrary>], iteration_bounds = array<i64: 1, 2>, scalar_prefetch = 0 : i64, scratch_operands = 5 : i64, tpu.core_type = #tpu.core_type<tc>, window_params = [{transform_indices = @transform_0, window_bounds = array<i64: 8, 8, 8>}, {pipeline_mode = #tpu.pipeline_mode<synchronous>, transform_indices = @transform_1, window_bounds = array<i64: 8, 512>}, {pipeline_mode = #tpu.pipeline_mode<synchronous>, transform_indices = @transform_2, window_bounds = array<i64: 128, 512>}, {pipeline_mode = #tpu.pipeline_mode<synchronous>, transform_indices = @transform_3, window_bounds = array<i64: 1, 512>}, {pipeline_mode = #tpu.pipeline_mode<synchronous>, transform_indices = @transform_4, window_bounds = array<i64: 128, 512>}, {pipeline_mode = #tpu.pipeline_mode<synchronous>, transform_indices = @transform_5, window_bounds = array<i64: 128, 512>}, {pipeline_mode = #tpu.pipeline_mode<synchronous>, transform_indices = @transform_6, window_bounds = array<i64: 1, 512>}, {pipeline_mode = #tpu.pipeline_mode<synchronous>, transform_indices = @transform_7, window_bounds = array<i64: 128, 512>}, {pipeline_mode = #tpu.pipeline_mode<synchronous>, transform_indices = @transform_8, window_bounds = array<i64: 128, 512>}, {pipeline_mode = #tpu.pipeline_mode<synchronous>, transform_indices = @transform_9, window_bounds = array<i64: 1, 512>}, {pipeline_mode = #tpu.pipeline_mode<synchronous>, transform_indices = @transform_10, window_bounds = array<i64: 128, 128>}, {pipeline_mode = #tpu.pipeline_mode<synchronous>, transform_indices = @transform_11, window_bounds = array<i64: 1, 128>}, {transform_indices = @transform_12, window_bounds = array<i64: 8, 8, 128>}]} {
    %c0_i32 = arith.constant 0 : i32
    %0 = arith.cmpi eq, %arg1, %c0_i32 : i32
    %1 = arith.extui %0 : i1 to i32
    %c0_i32_0 = arith.constant 0 : i32
    %2 = arith.cmpi ne, %1, %c0_i32_0 : i32
    scf.if %2 {
      %cst_247 = arith.constant 0.000000e+00 : f32
      %677 = vector.broadcast %cst_247 : f32 to vector<3x8x128xf32>
      %c0_248 = arith.constant 0 : index
      %c0_249 = arith.constant 0 : index
      %c0_250 = arith.constant 0 : index
      %678 = vector.load %arg18[%c0_248, %c0_249, %c0_250] : memref<3x8x128xf32, #tpu.memory_space<vmem>>, vector<3x8x128xf32>
      tpu.vector_store %arg18[%c0_248, %c0_249, %c0_250], %677 {strides = array<i32>} : memref<3x8x128xf32, #tpu.memory_space<vmem>>, vector<3x8x128xf32>,
      %cst_251 = arith.constant 0.000000e+00 : f32
      %679 = vector.broadcast %cst_251 : f32 to vector<3x8x128xf32>
      %c0_252 = arith.constant 0 : index
      %c0_253 = arith.constant 0 : index
      %c0_254 = arith.constant 0 : index
      %680 = vector.load %arg19[%c0_252, %c0_253, %c0_254] : memref<3x8x128xf32, #tpu.memory_space<vmem>>, vector<3x8x128xf32>
      tpu.vector_store %arg19[%c0_252, %c0_253, %c0_254], %679 {strides = array<i32>} : memref<3x8x128xf32, #tpu.memory_space<vmem>>, vector<3x8x128xf32>,
    } else {
    }
    %c0 = arith.constant 0 : index
    %c0_1 = arith.constant 0 : index
    %3 = vector.load %arg3[%c0, %c0_1] : memref<8x512xf32, #tpu.memory_space<vmem>>, vector<8x512xf32>
    %c0_2 = arith.constant 0 : index
    %c0_3 = arith.constant 0 : index
    %4 = vector.load %arg4[%c0_2, %c0_3] : memref<128x512xf32, #tpu.memory_space<vmem>>, vector<128x512xf32>
    %c0_4 = arith.constant 0 : index
    %c0_5 = arith.constant 0 : index
    %5 = vector.load %arg5[%c0_4, %c0_5] : memref<1x512xf32, #tpu.memory_space<vmem>>, vector<1x512xf32>
    %c0_6 = arith.constant 0 : index
    %c0_7 = arith.constant 0 : index
    %c0_8 = arith.constant 0 : index
    %6 = vector.load %arg2[%c0_6, %c0_7, %c0_8] : memref<8x8x8xf32, #tpu.memory_space<vmem>>, vector<8x8x8xf32>
    %7 = vector.shape_cast %6 : vector<8x8x8xf32> to vector<64x8xf32>
    %cst = arith.constant dense<0.000000e+00> : vector<64x512xf32>
    %8 = tpu.matmul %7, %3, %cst {dimension_numbers = #tpu.dot_dimension_numbers<[1], [0], [0], [1], [0, 0, 1, 1], [], []>} : vector<64x8xf32>, vector<8x512xf32>, vector<64x512xf32> -> vector<64x512xf32>
    %9 = vector.broadcast %5 : vector<1x512xf32> to vector<64x512xf32>
    %10 = arith.addf %8, %9 : vector<64x512xf32>
    %11 = vector.shape_cast %10 : vector<64x512xf32> to vector<8x8x512xf32>
    %c0_9 = arith.constant 0 : index
    %c0_10 = arith.constant 0 : index
    %c0_11 = arith.constant 0 : index
    %12 = vector.load %arg15[%c0_9, %c0_10, %c0_11] : memref<8x8x512xf32, #tpu.memory_space<vmem>>, vector<8x8x512xf32>
    tpu.vector_store %arg15[%c0_9, %c0_10, %c0_11], %11 {strides = array<i32>} : memref<8x8x512xf32, #tpu.memory_space<vmem>>, vector<8x8x512xf32>,
    %c0_12 = arith.constant 0 : index
    %c0_13 = arith.constant 0 : index
    %c0_14 = arith.constant 0 : index
    %13 = vector.load %arg18[%c0_12, %c0_13, %c0_14] : memref<3x8x128xf32, #tpu.memory_space<vmem>>, vector<1x8x128xf32>
    %14 = vector.shape_cast %13 : vector<1x8x128xf32> to vector<8x128xf32>
    %c0_15 = arith.constant 0 : index
    %c0_16 = arith.constant 0 : index
    %c0_17 = arith.constant 0 : index
    %15 = vector.load %arg19[%c0_15, %c0_16, %c0_17] : memref<3x8x128xf32, #tpu.memory_space<vmem>>, vector<1x8x128xf32>
    %16 = vector.shape_cast %15 : vector<1x8x128xf32> to vector<8x128xf32>
    %c0_i32_18 = arith.constant 0 : i32
    %17 = arith.index_cast %c0_i32_18 : i32 to index
    %c0_19 = arith.constant 0 : index
    %c0_20 = arith.constant 0 : index
    %18 = vector.load %arg15[%17, %c0_19, %c0_20] : memref<8x8x512xf32, #tpu.memory_space<vmem>>, vector<1x8x512xf32>
    %19 = vector.shape_cast %18 : vector<1x8x512xf32> to vector<8x512xf32>
    %cst_21 = arith.constant dense<0.000000e+00> : vector<8x512xf32>
    %20 = tpu.matmul %14, %4, %cst_21 {dimension_numbers = #tpu.dot_dimension_numbers<[1], [0], [0], [1], [0, 0, 1, 1], [], []>} : vector<8x128xf32>, vector<128x512xf32>, vector<8x512xf32> -> vector<8x512xf32>
    %21 = arith.addf %19, %20 : vector<8x512xf32>
    %22 = vector.extract_strided_slice %21 {offsets = [0, 0], sizes = [8, 384], strides = [1, 1]} : vector<8x512xf32> to vector<8x384xf32>
    %23 = arith.negf %22 : vector<8x384xf32>
    %24 = math.exp %23 : vector<8x384xf32>
    %cst_22 = arith.constant 1.000000e+00 : f32
    %25 = vector.broadcast %cst_22 : f32 to vector<8x384xf32>
    %26 = arith.addf %25, %24 : vector<8x384xf32>
    %27 = arith.divf %25, %26 : vector<8x384xf32>
    %28 = vector.extract_strided_slice %21 {offsets = [0, 384], sizes = [8, 128], strides = [1, 1]} : vector<8x512xf32> to vector<8x128xf32>
    %29 = math.tanh %28 : vector<8x128xf32>
    %30 = vector.extract_strided_slice %27 {offsets = [0, 0], sizes = [8, 128], strides = [1, 1]} : vector<8x384xf32> to vector<8x128xf32>
    %31 = vector.extract_strided_slice %27 {offsets = [0, 128], sizes = [8, 128], strides = [1, 1]} : vector<8x384xf32> to vector<8x128xf32>
    %32 = vector.extract_strided_slice %27 {offsets = [0, 256], sizes = [8, 128], strides = [1, 1]} : vector<8x384xf32> to vector<8x128xf32>
    %33 = arith.mulf %31, %16 : vector<8x128xf32>
    %34 = arith.mulf %30, %29 : vector<8x128xf32>
    %35 = arith.addf %33, %34 : vector<8x128xf32>
    %36 = math.tanh %35 : vector<8x128xf32>
    %37 = arith.mulf %32, %36 : vector<8x128xf32>
    %38 = arith.index_cast %c0_i32_18 : i32 to index
    %c0_23 = arith.constant 0 : index
    %c0_24 = arith.constant 0 : index
    %39 = vector.load %arg16[%38, %c0_23, %c0_24] : memref<8x8x128xf32, #tpu.memory_space<vmem>>, vector<1x8x128xf32>
    %40 = vector.shape_cast %39 : vector<1x8x128xf32> to vector<8x128xf32>
    %41 = vector.shape_cast %37 : vector<8x128xf32> to vector<1x8x128xf32>
    tpu.vector_store %arg16[%38, %c0_23, %c0_24], %41 {strides = array<i32>} : memref<8x8x128xf32, #tpu.memory_space<vmem>>, vector<1x8x128xf32>,
    %c1_i32 = arith.constant 1 : i32
    %42 = arith.index_cast %c1_i32 : i32 to index
    %c0_25 = arith.constant 0 : index
    %c0_26 = arith.constant 0 : index
    %43 = vector.load %arg15[%42, %c0_25, %c0_26] : memref<8x8x512xf32, #tpu.memory_space<vmem>>, vector<1x8x512xf32>
    %44 = vector.shape_cast %43 : vector<1x8x512xf32> to vector<8x512xf32>
    %cst_27 = arith.constant dense<0.000000e+00> : vector<8x512xf32>
    %45 = tpu.matmul %37, %4, %cst_27 {dimension_numbers = #tpu.dot_dimension_numbers<[1], [0], [0], [1], [0, 0, 1, 1], [], []>} : vector<8x128xf32>, vector<128x512xf32>, vector<8x512xf32> -> vector<8x512xf32>
    %46 = arith.addf %44, %45 : vector<8x512xf32>
    %47 = vector.extract_strided_slice %46 {offsets = [0, 0], sizes = [8, 384], strides = [1, 1]} : vector<8x512xf32> to vector<8x384xf32>
    %48 = arith.negf %47 : vector<8x384xf32>
    %49 = math.exp %48 : vector<8x384xf32>
    %cst_28 = arith.constant 1.000000e+00 : f32
    %50 = vector.broadcast %cst_28 : f32 to vector<8x384xf32>
    %51 = arith.addf %50, %49 : vector<8x384xf32>
    %52 = arith.divf %50, %51 : vector<8x384xf32>
    %53 = vector.extract_strided_slice %46 {offsets = [0, 384], sizes = [8, 128], strides = [1, 1]} : vector<8x512xf32> to vector<8x128xf32>
    %54 = math.tanh %53 : vector<8x128xf32>
    %55 = vector.extract_strided_slice %52 {offsets = [0, 0], sizes = [8, 128], strides = [1, 1]} : vector<8x384xf32> to vector<8x128xf32>
    %56 = vector.extract_strided_slice %52 {offsets = [0, 128], sizes = [8, 128], strides = [1, 1]} : vector<8x384xf32> to vector<8x128xf32>
    %57 = vector.extract_strided_slice %52 {offsets = [0, 256], sizes = [8, 128], strides = [1, 1]} : vector<8x384xf32> to vector<8x128xf32>
    %58 = arith.mulf %56, %35 : vector<8x128xf32>
    %59 = arith.mulf %55, %54 : vector<8x128xf32>
    %60 = arith.addf %58, %59 : vector<8x128xf32>
    %61 = math.tanh %60 : vector<8x128xf32>
    %62 = arith.mulf %57, %61 : vector<8x128xf32>
    %63 = arith.index_cast %c1_i32 : i32 to index
    %c0_29 = arith.constant 0 : index
    %c0_30 = arith.constant 0 : index
    %64 = vector.load %arg16[%63, %c0_29, %c0_30] : memref<8x8x128xf32, #tpu.memory_space<vmem>>, vector<1x8x128xf32>
    %65 = vector.shape_cast %64 : vector<1x8x128xf32> to vector<8x128xf32>
    %66 = vector.shape_cast %62 : vector<8x128xf32> to vector<1x8x128xf32>
    tpu.vector_store %arg16[%63, %c0_29, %c0_30], %66 {strides = array<i32>} : memref<8x8x128xf32, #tpu.memory_space<vmem>>, vector<1x8x128xf32>,
    %c2_i32 = arith.constant 2 : i32
    %67 = arith.index_cast %c2_i32 : i32 to index
    %c0_31 = arith.constant 0 : index
    %c0_32 = arith.constant 0 : index
    %68 = vector.load %arg15[%67, %c0_31, %c0_32] : memref<8x8x512xf32, #tpu.memory_space<vmem>>, vector<1x8x512xf32>
    %69 = vector.shape_cast %68 : vector<1x8x512xf32> to vector<8x512xf32>
    %cst_33 = arith.constant dense<0.000000e+00> : vector<8x512xf32>
    %70 = tpu.matmul %62, %4, %cst_33 {dimension_numbers = #tpu.dot_dimension_numbers<[1], [0], [0], [1], [0, 0, 1, 1], [], []>} : vector<8x128xf32>, vector<128x512xf32>, vector<8x512xf32> -> vector<8x512xf32>
    %71 = arith.addf %69, %70 : vector<8x512xf32>
    %72 = vector.extract_strided_slice %71 {offsets = [0, 0], sizes = [8, 384], strides = [1, 1]} : vector<8x512xf32> to vector<8x384xf32>
    %73 = arith.negf %72 : vector<8x384xf32>
    %74 = math.exp %73 : vector<8x384xf32>
    %cst_34 = arith.constant 1.000000e+00 : f32
    %75 = vector.broadcast %cst_34 : f32 to vector<8x384xf32>
    %76 = arith.addf %75, %74 : vector<8x384xf32>
    %77 = arith.divf %75, %76 : vector<8x384xf32>
    %78 = vector.extract_strided_slice %71 {offsets = [0, 384], sizes = [8, 128], strides = [1, 1]} : vector<8x512xf32> to vector<8x128xf32>
    %79 = math.tanh %78 : vector<8x128xf32>
    %80 = vector.extract_strided_slice %77 {offsets = [0, 0], sizes = [8, 128], strides = [1, 1]} : vector<8x384xf32> to vector<8x128xf32>
    %81 = vector.extract_strided_slice %77 {offsets = [0, 128], sizes = [8, 128], strides = [1, 1]} : vector<8x384xf32> to vector<8x128xf32>
    %82 = vector.extract_strided_slice %77 {offsets = [0, 256], sizes = [8, 128], strides = [1, 1]} : vector<8x384xf32> to vector<8x128xf32>
    %83 = arith.mulf %81, %60 : vector<8x128xf32>
    %84 = arith.mulf %80, %79 : vector<8x128xf32>
    %85 = arith.addf %83, %84 : vector<8x128xf32>
    %86 = math.tanh %85 : vector<8x128xf32>
    %87 = arith.mulf %82, %86 : vector<8x128xf32>
    %88 = arith.index_cast %c2_i32 : i32 to index
    %c0_35 = arith.constant 0 : index
    %c0_36 = arith.constant 0 : index
    %89 = vector.load %arg16[%88, %c0_35, %c0_36] : memref<8x8x128xf32, #tpu.memory_space<vmem>>, vector<1x8x128xf32>
    %90 = vector.shape_cast %89 : vector<1x8x128xf32> to vector<8x128xf32>
    %91 = vector.shape_cast %87 : vector<8x128xf32> to vector<1x8x128xf32>
    tpu.vector_store %arg16[%88, %c0_35, %c0_36], %91 {strides = array<i32>} : memref<8x8x128xf32, #tpu.memory_space<vmem>>, vector<1x8x128xf32>,
    %c3_i32 = arith.constant 3 : i32
    %92 = arith.index_cast %c3_i32 : i32 to index
    %c0_37 = arith.constant 0 : index
    %c0_38 = arith.constant 0 : index
    %93 = vector.load %arg15[%92, %c0_37, %c0_38] : memref<8x8x512xf32, #tpu.memory_space<vmem>>, vector<1x8x512xf32>
    %94 = vector.shape_cast %93 : vector<1x8x512xf32> to vector<8x512xf32>
    %cst_39 = arith.constant dense<0.000000e+00> : vector<8x512xf32>
    %95 = tpu.matmul %87, %4, %cst_39 {dimension_numbers = #tpu.dot_dimension_numbers<[1], [0], [0], [1], [0, 0, 1, 1], [], []>} : vector<8x128xf32>, vector<128x512xf32>, vector<8x512xf32> -> vector<8x512xf32>
    %96 = arith.addf %94, %95 : vector<8x512xf32>
    %97 = vector.extract_strided_slice %96 {offsets = [0, 0], sizes = [8, 384], strides = [1, 1]} : vector<8x512xf32> to vector<8x384xf32>
    %98 = arith.negf %97 : vector<8x384xf32>
    %99 = math.exp %98 : vector<8x384xf32>
    %cst_40 = arith.constant 1.000000e+00 : f32
    %100 = vector.broadcast %cst_40 : f32 to vector<8x384xf32>
    %101 = arith.addf %100, %99 : vector<8x384xf32>
    %102 = arith.divf %100, %101 : vector<8x384xf32>
    %103 = vector.extract_strided_slice %96 {offsets = [0, 384], sizes = [8, 128], strides = [1, 1]} : vector<8x512xf32> to vector<8x128xf32>
    %104 = math.tanh %103 : vector<8x128xf32>
    %105 = vector.extract_strided_slice %102 {offsets = [0, 0], sizes = [8, 128], strides = [1, 1]} : vector<8x384xf32> to vector<8x128xf32>
    %106 = vector.extract_strided_slice %102 {offsets = [0, 128], sizes = [8, 128], strides = [1, 1]} : vector<8x384xf32> to vector<8x128xf32>
    %107 = vector.extract_strided_slice %102 {offsets = [0, 256], sizes = [8, 128], strides = [1, 1]} : vector<8x384xf32> to vector<8x128xf32>
    %108 = arith.mulf %106, %85 : vector<8x128xf32>
    %109 = arith.mulf %105, %104 : vector<8x128xf32>
    %110 = arith.addf %108, %109 : vector<8x128xf32>
    %111 = math.tanh %110 : vector<8x128xf32>
    %112 = arith.mulf %107, %111 : vector<8x128xf32>
    %113 = arith.index_cast %c3_i32 : i32 to index
    %c0_41 = arith.constant 0 : index
    %c0_42 = arith.constant 0 : index
    %114 = vector.load %arg16[%113, %c0_41, %c0_42] : memref<8x8x128xf32, #tpu.memory_space<vmem>>, vector<1x8x128xf32>
    %115 = vector.shape_cast %114 : vector<1x8x128xf32> to vector<8x128xf32>
    %116 = vector.shape_cast %112 : vector<8x128xf32> to vector<1x8x128xf32>
    tpu.vector_store %arg16[%113, %c0_41, %c0_42], %116 {strides = array<i32>} : memref<8x8x128xf32, #tpu.memory_space<vmem>>, vector<1x8x128xf32>,
    %c4_i32 = arith.constant 4 : i32
    %117 = arith.index_cast %c4_i32 : i32 to index
    %c0_43 = arith.constant 0 : index
    %c0_44 = arith.constant 0 : index
    %118 = vector.load %arg15[%117, %c0_43, %c0_44] : memref<8x8x512xf32, #tpu.memory_space<vmem>>, vector<1x8x512xf32>
    %119 = vector.shape_cast %118 : vector<1x8x512xf32> to vector<8x512xf32>
    %cst_45 = arith.constant dense<0.000000e+00> : vector<8x512xf32>
    %120 = tpu.matmul %112, %4, %cst_45 {dimension_numbers = #tpu.dot_dimension_numbers<[1], [0], [0], [1], [0, 0, 1, 1], [], []>} : vector<8x128xf32>, vector<128x512xf32>, vector<8x512xf32> -> vector<8x512xf32>
    %121 = arith.addf %119, %120 : vector<8x512xf32>
    %122 = vector.extract_strided_slice %121 {offsets = [0, 0], sizes = [8, 384], strides = [1, 1]} : vector<8x512xf32> to vector<8x384xf32>
    %123 = arith.negf %122 : vector<8x384xf32>
    %124 = math.exp %123 : vector<8x384xf32>
    %cst_46 = arith.constant 1.000000e+00 : f32
    %125 = vector.broadcast %cst_46 : f32 to vector<8x384xf32>
    %126 = arith.addf %125, %124 : vector<8x384xf32>
    %127 = arith.divf %125, %126 : vector<8x384xf32>
    %128 = vector.extract_strided_slice %121 {offsets = [0, 384], sizes = [8, 128], strides = [1, 1]} : vector<8x512xf32> to vector<8x128xf32>
    %129 = math.tanh %128 : vector<8x128xf32>
    %130 = vector.extract_strided_slice %127 {offsets = [0, 0], sizes = [8, 128], strides = [1, 1]} : vector<8x384xf32> to vector<8x128xf32>
    %131 = vector.extract_strided_slice %127 {offsets = [0, 128], sizes = [8, 128], strides = [1, 1]} : vector<8x384xf32> to vector<8x128xf32>
    %132 = vector.extract_strided_slice %127 {offsets = [0, 256], sizes = [8, 128], strides = [1, 1]} : vector<8x384xf32> to vector<8x128xf32>
    %133 = arith.mulf %131, %110 : vector<8x128xf32>
    %134 = arith.mulf %130, %129 : vector<8x128xf32>
    %135 = arith.addf %133, %134 : vector<8x128xf32>
    %136 = math.tanh %135 : vector<8x128xf32>
    %137 = arith.mulf %132, %136 : vector<8x128xf32>
    %138 = arith.index_cast %c4_i32 : i32 to index
    %c0_47 = arith.constant 0 : index
    %c0_48 = arith.constant 0 : index
    %139 = vector.load %arg16[%138, %c0_47, %c0_48] : memref<8x8x128xf32, #tpu.memory_space<vmem>>, vector<1x8x128xf32>
    %140 = vector.shape_cast %139 : vector<1x8x128xf32> to vector<8x128xf32>
    %141 = vector.shape_cast %137 : vector<8x128xf32> to vector<1x8x128xf32>
    tpu.vector_store %arg16[%138, %c0_47, %c0_48], %141 {strides = array<i32>} : memref<8x8x128xf32, #tpu.memory_space<vmem>>, vector<1x8x128xf32>,
    %c5_i32 = arith.constant 5 : i32
    %142 = arith.index_cast %c5_i32 : i32 to index
    %c0_49 = arith.constant 0 : index
    %c0_50 = arith.constant 0 : index
    %143 = vector.load %arg15[%142, %c0_49, %c0_50] : memref<8x8x512xf32, #tpu.memory_space<vmem>>, vector<1x8x512xf32>
    %144 = vector.shape_cast %143 : vector<1x8x512xf32> to vector<8x512xf32>
    %cst_51 = arith.constant dense<0.000000e+00> : vector<8x512xf32>
    %145 = tpu.matmul %137, %4, %cst_51 {dimension_numbers = #tpu.dot_dimension_numbers<[1], [0], [0], [1], [0, 0, 1, 1], [], []>} : vector<8x128xf32>, vector<128x512xf32>, vector<8x512xf32> -> vector<8x512xf32>
    %146 = arith.addf %144, %145 : vector<8x512xf32>
    %147 = vector.extract_strided_slice %146 {offsets = [0, 0], sizes = [8, 384], strides = [1, 1]} : vector<8x512xf32> to vector<8x384xf32>
    %148 = arith.negf %147 : vector<8x384xf32>
    %149 = math.exp %148 : vector<8x384xf32>
    %cst_52 = arith.constant 1.000000e+00 : f32
    %150 = vector.broadcast %cst_52 : f32 to vector<8x384xf32>
    %151 = arith.addf %150, %149 : vector<8x384xf32>
    %152 = arith.divf %150, %151 : vector<8x384xf32>
    %153 = vector.extract_strided_slice %146 {offsets = [0, 384], sizes = [8, 128], strides = [1, 1]} : vector<8x512xf32> to vector<8x128xf32>
    %154 = math.tanh %153 : vector<8x128xf32>
    %155 = vector.extract_strided_slice %152 {offsets = [0, 0], sizes = [8, 128], strides = [1, 1]} : vector<8x384xf32> to vector<8x128xf32>
    %156 = vector.extract_strided_slice %152 {offsets = [0, 128], sizes = [8, 128], strides = [1, 1]} : vector<8x384xf32> to vector<8x128xf32>
    %157 = vector.extract_strided_slice %152 {offsets = [0, 256], sizes = [8, 128], strides = [1, 1]} : vector<8x384xf32> to vector<8x128xf32>
    %158 = arith.mulf %156, %135 : vector<8x128xf32>
    %159 = arith.mulf %155, %154 : vector<8x128xf32>
    %160 = arith.addf %158, %159 : vector<8x128xf32>
    %161 = math.tanh %160 : vector<8x128xf32>
    %162 = arith.mulf %157, %161 : vector<8x128xf32>
    %163 = arith.index_cast %c5_i32 : i32 to index
    %c0_53 = arith.constant 0 : index
    %c0_54 = arith.constant 0 : index
    %164 = vector.load %arg16[%163, %c0_53, %c0_54] : memref<8x8x128xf32, #tpu.memory_space<vmem>>, vector<1x8x128xf32>
    %165 = vector.shape_cast %164 : vector<1x8x128xf32> to vector<8x128xf32>
    %166 = vector.shape_cast %162 : vector<8x128xf32> to vector<1x8x128xf32>
    tpu.vector_store %arg16[%163, %c0_53, %c0_54], %166 {strides = array<i32>} : memref<8x8x128xf32, #tpu.memory_space<vmem>>, vector<1x8x128xf32>,
    %c6_i32 = arith.constant 6 : i32
    %167 = arith.index_cast %c6_i32 : i32 to index
    %c0_55 = arith.constant 0 : index
    %c0_56 = arith.constant 0 : index
    %168 = vector.load %arg15[%167, %c0_55, %c0_56] : memref<8x8x512xf32, #tpu.memory_space<vmem>>, vector<1x8x512xf32>
    %169 = vector.shape_cast %168 : vector<1x8x512xf32> to vector<8x512xf32>
    %cst_57 = arith.constant dense<0.000000e+00> : vector<8x512xf32>
    %170 = tpu.matmul %162, %4, %cst_57 {dimension_numbers = #tpu.dot_dimension_numbers<[1], [0], [0], [1], [0, 0, 1, 1], [], []>} : vector<8x128xf32>, vector<128x512xf32>, vector<8x512xf32> -> vector<8x512xf32>
    %171 = arith.addf %169, %170 : vector<8x512xf32>
    %172 = vector.extract_strided_slice %171 {offsets = [0, 0], sizes = [8, 384], strides = [1, 1]} : vector<8x512xf32> to vector<8x384xf32>
    %173 = arith.negf %172 : vector<8x384xf32>
    %174 = math.exp %173 : vector<8x384xf32>
    %cst_58 = arith.constant 1.000000e+00 : f32
    %175 = vector.broadcast %cst_58 : f32 to vector<8x384xf32>
    %176 = arith.addf %175, %174 : vector<8x384xf32>
    %177 = arith.divf %175, %176 : vector<8x384xf32>
    %178 = vector.extract_strided_slice %171 {offsets = [0, 384], sizes = [8, 128], strides = [1, 1]} : vector<8x512xf32> to vector<8x128xf32>
    %179 = math.tanh %178 : vector<8x128xf32>
    %180 = vector.extract_strided_slice %177 {offsets = [0, 0], sizes = [8, 128], strides = [1, 1]} : vector<8x384xf32> to vector<8x128xf32>
    %181 = vector.extract_strided_slice %177 {offsets = [0, 128], sizes = [8, 128], strides = [1, 1]} : vector<8x384xf32> to vector<8x128xf32>
    %182 = vector.extract_strided_slice %177 {offsets = [0, 256], sizes = [8, 128], strides = [1, 1]} : vector<8x384xf32> to vector<8x128xf32>
    %183 = arith.mulf %181, %160 : vector<8x128xf32>
    %184 = arith.mulf %180, %179 : vector<8x128xf32>
    %185 = arith.addf %183, %184 : vector<8x128xf32>
    %186 = math.tanh %185 : vector<8x128xf32>
    %187 = arith.mulf %182, %186 : vector<8x128xf32>
    %188 = arith.index_cast %c6_i32 : i32 to index
    %c0_59 = arith.constant 0 : index
    %c0_60 = arith.constant 0 : index
    %189 = vector.load %arg16[%188, %c0_59, %c0_60] : memref<8x8x128xf32, #tpu.memory_space<vmem>>, vector<1x8x128xf32>
    %190 = vector.shape_cast %189 : vector<1x8x128xf32> to vector<8x128xf32>
    %191 = vector.shape_cast %187 : vector<8x128xf32> to vector<1x8x128xf32>
    tpu.vector_store %arg16[%188, %c0_59, %c0_60], %191 {strides = array<i32>} : memref<8x8x128xf32, #tpu.memory_space<vmem>>, vector<1x8x128xf32>,
    %c7_i32 = arith.constant 7 : i32
    %192 = arith.index_cast %c7_i32 : i32 to index
    %c0_61 = arith.constant 0 : index
    %c0_62 = arith.constant 0 : index
    %193 = vector.load %arg15[%192, %c0_61, %c0_62] : memref<8x8x512xf32, #tpu.memory_space<vmem>>, vector<1x8x512xf32>
    %194 = vector.shape_cast %193 : vector<1x8x512xf32> to vector<8x512xf32>
    %cst_63 = arith.constant dense<0.000000e+00> : vector<8x512xf32>
    %195 = tpu.matmul %187, %4, %cst_63 {dimension_numbers = #tpu.dot_dimension_numbers<[1], [0], [0], [1], [0, 0, 1, 1], [], []>} : vector<8x128xf32>, vector<128x512xf32>, vector<8x512xf32> -> vector<8x512xf32>
    %196 = arith.addf %194, %195 : vector<8x512xf32>
    %197 = vector.extract_strided_slice %196 {offsets = [0, 0], sizes = [8, 384], strides = [1, 1]} : vector<8x512xf32> to vector<8x384xf32>
    %198 = arith.negf %197 : vector<8x384xf32>
    %199 = math.exp %198 : vector<8x384xf32>
    %cst_64 = arith.constant 1.000000e+00 : f32
    %200 = vector.broadcast %cst_64 : f32 to vector<8x384xf32>
    %201 = arith.addf %200, %199 : vector<8x384xf32>
    %202 = arith.divf %200, %201 : vector<8x384xf32>
    %203 = vector.extract_strided_slice %196 {offsets = [0, 384], sizes = [8, 128], strides = [1, 1]} : vector<8x512xf32> to vector<8x128xf32>
    %204 = math.tanh %203 : vector<8x128xf32>
    %205 = vector.extract_strided_slice %202 {offsets = [0, 0], sizes = [8, 128], strides = [1, 1]} : vector<8x384xf32> to vector<8x128xf32>
    %206 = vector.extract_strided_slice %202 {offsets = [0, 128], sizes = [8, 128], strides = [1, 1]} : vector<8x384xf32> to vector<8x128xf32>
    %207 = vector.extract_strided_slice %202 {offsets = [0, 256], sizes = [8, 128], strides = [1, 1]} : vector<8x384xf32> to vector<8x128xf32>
    %208 = arith.mulf %206, %185 : vector<8x128xf32>
    %209 = arith.mulf %205, %204 : vector<8x128xf32>
    %210 = arith.addf %208, %209 : vector<8x128xf32>
    %211 = math.tanh %210 : vector<8x128xf32>
    %212 = arith.mulf %207, %211 : vector<8x128xf32>
    %213 = arith.index_cast %c7_i32 : i32 to index
    %c0_65 = arith.constant 0 : index
    %c0_66 = arith.constant 0 : index
    %214 = vector.load %arg16[%213, %c0_65, %c0_66] : memref<8x8x128xf32, #tpu.memory_space<vmem>>, vector<1x8x128xf32>
    %215 = vector.shape_cast %214 : vector<1x8x128xf32> to vector<8x128xf32>
    %216 = vector.shape_cast %212 : vector<8x128xf32> to vector<1x8x128xf32>
    tpu.vector_store %arg16[%213, %c0_65, %c0_66], %216 {strides = array<i32>} : memref<8x8x128xf32, #tpu.memory_space<vmem>>, vector<1x8x128xf32>,
    %c8_i32 = arith.constant 8 : i32
    %c0_67 = arith.constant 0 : index
    %c0_68 = arith.constant 0 : index
    %c0_69 = arith.constant 0 : index
    %217 = vector.load %arg18[%c0_67, %c0_68, %c0_69] : memref<3x8x128xf32, #tpu.memory_space<vmem>>, vector<1x8x128xf32>
    %218 = vector.shape_cast %217 : vector<1x8x128xf32> to vector<8x128xf32>
    %219 = vector.shape_cast %212 : vector<8x128xf32> to vector<1x8x128xf32>
    tpu.vector_store %arg18[%c0_67, %c0_68, %c0_69], %219 {strides = array<i32>} : memref<3x8x128xf32, #tpu.memory_space<vmem>>, vector<1x8x128xf32>,
    %c0_70 = arith.constant 0 : index
    %c0_71 = arith.constant 0 : index
    %c0_72 = arith.constant 0 : index
    %220 = vector.load %arg19[%c0_70, %c0_71, %c0_72] : memref<3x8x128xf32, #tpu.memory_space<vmem>>, vector<1x8x128xf32>
    %221 = vector.shape_cast %220 : vector<1x8x128xf32> to vector<8x128xf32>
    %222 = vector.shape_cast %210 : vector<8x128xf32> to vector<1x8x128xf32>
    tpu.vector_store %arg19[%c0_70, %c0_71, %c0_72], %222 {strides = array<i32>} : memref<3x8x128xf32, #tpu.memory_space<vmem>>, vector<1x8x128xf32>,
    %c0_73 = arith.constant 0 : index
    %c0_74 = arith.constant 0 : index
    %223 = vector.load %arg6[%c0_73, %c0_74] : memref<128x512xf32, #tpu.memory_space<vmem>>, vector<128x512xf32>
    %c0_75 = arith.constant 0 : index
    %c0_76 = arith.constant 0 : index
    %224 = vector.load %arg7[%c0_75, %c0_76] : memref<128x512xf32, #tpu.memory_space<vmem>>, vector<128x512xf32>
    %c0_77 = arith.constant 0 : index
    %c0_78 = arith.constant 0 : index
    %225 = vector.load %arg8[%c0_77, %c0_78] : memref<1x512xf32, #tpu.memory_space<vmem>>, vector<1x512xf32>
    %c0_79 = arith.constant 0 : index
    %c0_80 = arith.constant 0 : index
    %c0_81 = arith.constant 0 : index
    %226 = vector.load %arg16[%c0_79, %c0_80, %c0_81] : memref<8x8x128xf32, #tpu.memory_space<vmem>>, vector<8x8x128xf32>
    %227 = vector.shape_cast %226 : vector<8x8x128xf32> to vector<64x128xf32>
    %cst_82 = arith.constant dense<0.000000e+00> : vector<64x512xf32>
    %228 = tpu.matmul %227, %223, %cst_82 {dimension_numbers = #tpu.dot_dimension_numbers<[1], [0], [0], [1], [0, 0, 1, 1], [], []>} : vector<64x128xf32>, vector<128x512xf32>, vector<64x512xf32> -> vector<64x512xf32>
    %229 = vector.broadcast %225 : vector<1x512xf32> to vector<64x512xf32>
    %230 = arith.addf %228, %229 : vector<64x512xf32>
    %231 = vector.shape_cast %230 : vector<64x512xf32> to vector<8x8x512xf32>
    %c0_83 = arith.constant 0 : index
    %c0_84 = arith.constant 0 : index
    %c0_85 = arith.constant 0 : index
    %232 = vector.load %arg15[%c0_83, %c0_84, %c0_85] : memref<8x8x512xf32, #tpu.memory_space<vmem>>, vector<8x8x512xf32>
    tpu.vector_store %arg15[%c0_83, %c0_84, %c0_85], %231 {strides = array<i32>} : memref<8x8x512xf32, #tpu.memory_space<vmem>>, vector<8x8x512xf32>,
    %c1 = arith.constant 1 : index
    %c0_86 = arith.constant 0 : index
    %c0_87 = arith.constant 0 : index
    %233 = vector.load %arg18[%c1, %c0_86, %c0_87] : memref<3x8x128xf32, #tpu.memory_space<vmem>>, vector<1x8x128xf32>
    %234 = vector.shape_cast %233 : vector<1x8x128xf32> to vector<8x128xf32>
    %c1_88 = arith.constant 1 : index
    %c0_89 = arith.constant 0 : index
    %c0_90 = arith.constant 0 : index
    %235 = vector.load %arg19[%c1_88, %c0_89, %c0_90] : memref<3x8x128xf32, #tpu.memory_space<vmem>>, vector<1x8x128xf32>
    %236 = vector.shape_cast %235 : vector<1x8x128xf32> to vector<8x128xf32>
    %c0_i32_91 = arith.constant 0 : i32
    %237 = arith.index_cast %c0_i32_91 : i32 to index
    %c0_92 = arith.constant 0 : index
    %c0_93 = arith.constant 0 : index
    %238 = vector.load %arg15[%237, %c0_92, %c0_93] : memref<8x8x512xf32, #tpu.memory_space<vmem>>, vector<1x8x512xf32>
    %239 = vector.shape_cast %238 : vector<1x8x512xf32> to vector<8x512xf32>
    %cst_94 = arith.constant dense<0.000000e+00> : vector<8x512xf32>
    %240 = tpu.matmul %234, %224, %cst_94 {dimension_numbers = #tpu.dot_dimension_numbers<[1], [0], [0], [1], [0, 0, 1, 1], [], []>} : vector<8x128xf32>, vector<128x512xf32>, vector<8x512xf32> -> vector<8x512xf32>
    %241 = arith.addf %239, %240 : vector<8x512xf32>
    %242 = vector.extract_strided_slice %241 {offsets = [0, 0], sizes = [8, 384], strides = [1, 1]} : vector<8x512xf32> to vector<8x384xf32>
    %243 = arith.negf %242 : vector<8x384xf32>
    %244 = math.exp %243 : vector<8x384xf32>
    %cst_95 = arith.constant 1.000000e+00 : f32
    %245 = vector.broadcast %cst_95 : f32 to vector<8x384xf32>
    %246 = arith.addf %245, %244 : vector<8x384xf32>
    %247 = arith.divf %245, %246 : vector<8x384xf32>
    %248 = vector.extract_strided_slice %241 {offsets = [0, 384], sizes = [8, 128], strides = [1, 1]} : vector<8x512xf32> to vector<8x128xf32>
    %249 = math.tanh %248 : vector<8x128xf32>
    %250 = vector.extract_strided_slice %247 {offsets = [0, 0], sizes = [8, 128], strides = [1, 1]} : vector<8x384xf32> to vector<8x128xf32>
    %251 = vector.extract_strided_slice %247 {offsets = [0, 128], sizes = [8, 128], strides = [1, 1]} : vector<8x384xf32> to vector<8x128xf32>
    %252 = vector.extract_strided_slice %247 {offsets = [0, 256], sizes = [8, 128], strides = [1, 1]} : vector<8x384xf32> to vector<8x128xf32>
    %253 = arith.mulf %251, %236 : vector<8x128xf32>
    %254 = arith.mulf %250, %249 : vector<8x128xf32>
    %255 = arith.addf %253, %254 : vector<8x128xf32>
    %256 = math.tanh %255 : vector<8x128xf32>
    %257 = arith.mulf %252, %256 : vector<8x128xf32>
    %258 = arith.index_cast %c0_i32_91 : i32 to index
    %c0_96 = arith.constant 0 : index
    %c0_97 = arith.constant 0 : index
    %259 = vector.load %arg17[%258, %c0_96, %c0_97] : memref<8x8x128xf32, #tpu.memory_space<vmem>>, vector<1x8x128xf32>
    %260 = vector.shape_cast %259 : vector<1x8x128xf32> to vector<8x128xf32>
    %261 = vector.shape_cast %257 : vector<8x128xf32> to vector<1x8x128xf32>
    tpu.vector_store %arg17[%258, %c0_96, %c0_97], %261 {strides = array<i32>} : memref<8x8x128xf32, #tpu.memory_space<vmem>>, vector<1x8x128xf32>,
    %c1_i32_98 = arith.constant 1 : i32
    %262 = arith.index_cast %c1_i32_98 : i32 to index
    %c0_99 = arith.constant 0 : index
    %c0_100 = arith.constant 0 : index
    %263 = vector.load %arg15[%262, %c0_99, %c0_100] : memref<8x8x512xf32, #tpu.memory_space<vmem>>, vector<1x8x512xf32>
    %264 = vector.shape_cast %263 : vector<1x8x512xf32> to vector<8x512xf32>
    %cst_101 = arith.constant dense<0.000000e+00> : vector<8x512xf32>
    %265 = tpu.matmul %257, %224, %cst_101 {dimension_numbers = #tpu.dot_dimension_numbers<[1], [0], [0], [1], [0, 0, 1, 1], [], []>} : vector<8x128xf32>, vector<128x512xf32>, vector<8x512xf32> -> vector<8x512xf32>
    %266 = arith.addf %264, %265 : vector<8x512xf32>
    %267 = vector.extract_strided_slice %266 {offsets = [0, 0], sizes = [8, 384], strides = [1, 1]} : vector<8x512xf32> to vector<8x384xf32>
    %268 = arith.negf %267 : vector<8x384xf32>
    %269 = math.exp %268 : vector<8x384xf32>
    %cst_102 = arith.constant 1.000000e+00 : f32
    %270 = vector.broadcast %cst_102 : f32 to vector<8x384xf32>
    %271 = arith.addf %270, %269 : vector<8x384xf32>
    %272 = arith.divf %270, %271 : vector<8x384xf32>
    %273 = vector.extract_strided_slice %266 {offsets = [0, 384], sizes = [8, 128], strides = [1, 1]} : vector<8x512xf32> to vector<8x128xf32>
    %274 = math.tanh %273 : vector<8x128xf32>
    %275 = vector.extract_strided_slice %272 {offsets = [0, 0], sizes = [8, 128], strides = [1, 1]} : vector<8x384xf32> to vector<8x128xf32>
    %276 = vector.extract_strided_slice %272 {offsets = [0, 128], sizes = [8, 128], strides = [1, 1]} : vector<8x384xf32> to vector<8x128xf32>
    %277 = vector.extract_strided_slice %272 {offsets = [0, 256], sizes = [8, 128], strides = [1, 1]} : vector<8x384xf32> to vector<8x128xf32>
    %278 = arith.mulf %276, %255 : vector<8x128xf32>
    %279 = arith.mulf %275, %274 : vector<8x128xf32>
    %280 = arith.addf %278, %279 : vector<8x128xf32>
    %281 = math.tanh %280 : vector<8x128xf32>
    %282 = arith.mulf %277, %281 : vector<8x128xf32>
    %283 = arith.index_cast %c1_i32_98 : i32 to index
    %c0_103 = arith.constant 0 : index
    %c0_104 = arith.constant 0 : index
    %284 = vector.load %arg17[%283, %c0_103, %c0_104] : memref<8x8x128xf32, #tpu.memory_space<vmem>>, vector<1x8x128xf32>
    %285 = vector.shape_cast %284 : vector<1x8x128xf32> to vector<8x128xf32>
    %286 = vector.shape_cast %282 : vector<8x128xf32> to vector<1x8x128xf32>
    tpu.vector_store %arg17[%283, %c0_103, %c0_104], %286 {strides = array<i32>} : memref<8x8x128xf32, #tpu.memory_space<vmem>>, vector<1x8x128xf32>,
    %c2_i32_105 = arith.constant 2 : i32
    %287 = arith.index_cast %c2_i32_105 : i32 to index
    %c0_106 = arith.constant 0 : index
    %c0_107 = arith.constant 0 : index
    %288 = vector.load %arg15[%287, %c0_106, %c0_107] : memref<8x8x512xf32, #tpu.memory_space<vmem>>, vector<1x8x512xf32>
    %289 = vector.shape_cast %288 : vector<1x8x512xf32> to vector<8x512xf32>
    %cst_108 = arith.constant dense<0.000000e+00> : vector<8x512xf32>
    %290 = tpu.matmul %282, %224, %cst_108 {dimension_numbers = #tpu.dot_dimension_numbers<[1], [0], [0], [1], [0, 0, 1, 1], [], []>} : vector<8x128xf32>, vector<128x512xf32>, vector<8x512xf32> -> vector<8x512xf32>
    %291 = arith.addf %289, %290 : vector<8x512xf32>
    %292 = vector.extract_strided_slice %291 {offsets = [0, 0], sizes = [8, 384], strides = [1, 1]} : vector<8x512xf32> to vector<8x384xf32>
    %293 = arith.negf %292 : vector<8x384xf32>
    %294 = math.exp %293 : vector<8x384xf32>
    %cst_109 = arith.constant 1.000000e+00 : f32
    %295 = vector.broadcast %cst_109 : f32 to vector<8x384xf32>
    %296 = arith.addf %295, %294 : vector<8x384xf32>
    %297 = arith.divf %295, %296 : vector<8x384xf32>
    %298 = vector.extract_strided_slice %291 {offsets = [0, 384], sizes = [8, 128], strides = [1, 1]} : vector<8x512xf32> to vector<8x128xf32>
    %299 = math.tanh %298 : vector<8x128xf32>
    %300 = vector.extract_strided_slice %297 {offsets = [0, 0], sizes = [8, 128], strides = [1, 1]} : vector<8x384xf32> to vector<8x128xf32>
    %301 = vector.extract_strided_slice %297 {offsets = [0, 128], sizes = [8, 128], strides = [1, 1]} : vector<8x384xf32> to vector<8x128xf32>
    %302 = vector.extract_strided_slice %297 {offsets = [0, 256], sizes = [8, 128], strides = [1, 1]} : vector<8x384xf32> to vector<8x128xf32>
    %303 = arith.mulf %301, %280 : vector<8x128xf32>
    %304 = arith.mulf %300, %299 : vector<8x128xf32>
    %305 = arith.addf %303, %304 : vector<8x128xf32>
    %306 = math.tanh %305 : vector<8x128xf32>
    %307 = arith.mulf %302, %306 : vector<8x128xf32>
    %308 = arith.index_cast %c2_i32_105 : i32 to index
    %c0_110 = arith.constant 0 : index
    %c0_111 = arith.constant 0 : index
    %309 = vector.load %arg17[%308, %c0_110, %c0_111] : memref<8x8x128xf32, #tpu.memory_space<vmem>>, vector<1x8x128xf32>
    %310 = vector.shape_cast %309 : vector<1x8x128xf32> to vector<8x128xf32>
    %311 = vector.shape_cast %307 : vector<8x128xf32> to vector<1x8x128xf32>
    tpu.vector_store %arg17[%308, %c0_110, %c0_111], %311 {strides = array<i32>} : memref<8x8x128xf32, #tpu.memory_space<vmem>>, vector<1x8x128xf32>,
    %c3_i32_112 = arith.constant 3 : i32
    %312 = arith.index_cast %c3_i32_112 : i32 to index
    %c0_113 = arith.constant 0 : index
    %c0_114 = arith.constant 0 : index
    %313 = vector.load %arg15[%312, %c0_113, %c0_114] : memref<8x8x512xf32, #tpu.memory_space<vmem>>, vector<1x8x512xf32>
    %314 = vector.shape_cast %313 : vector<1x8x512xf32> to vector<8x512xf32>
    %cst_115 = arith.constant dense<0.000000e+00> : vector<8x512xf32>
    %315 = tpu.matmul %307, %224, %cst_115 {dimension_numbers = #tpu.dot_dimension_numbers<[1], [0], [0], [1], [0, 0, 1, 1], [], []>} : vector<8x128xf32>, vector<128x512xf32>, vector<8x512xf32> -> vector<8x512xf32>
    %316 = arith.addf %314, %315 : vector<8x512xf32>
    %317 = vector.extract_strided_slice %316 {offsets = [0, 0], sizes = [8, 384], strides = [1, 1]} : vector<8x512xf32> to vector<8x384xf32>
    %318 = arith.negf %317 : vector<8x384xf32>
    %319 = math.exp %318 : vector<8x384xf32>
    %cst_116 = arith.constant 1.000000e+00 : f32
    %320 = vector.broadcast %cst_116 : f32 to vector<8x384xf32>
    %321 = arith.addf %320, %319 : vector<8x384xf32>
    %322 = arith.divf %320, %321 : vector<8x384xf32>
    %323 = vector.extract_strided_slice %316 {offsets = [0, 384], sizes = [8, 128], strides = [1, 1]} : vector<8x512xf32> to vector<8x128xf32>
    %324 = math.tanh %323 : vector<8x128xf32>
    %325 = vector.extract_strided_slice %322 {offsets = [0, 0], sizes = [8, 128], strides = [1, 1]} : vector<8x384xf32> to vector<8x128xf32>
    %326 = vector.extract_strided_slice %322 {offsets = [0, 128], sizes = [8, 128], strides = [1, 1]} : vector<8x384xf32> to vector<8x128xf32>
    %327 = vector.extract_strided_slice %322 {offsets = [0, 256], sizes = [8, 128], strides = [1, 1]} : vector<8x384xf32> to vector<8x128xf32>
    %328 = arith.mulf %326, %305 : vector<8x128xf32>
    %329 = arith.mulf %325, %324 : vector<8x128xf32>
    %330 = arith.addf %328, %329 : vector<8x128xf32>
    %331 = math.tanh %330 : vector<8x128xf32>
    %332 = arith.mulf %327, %331 : vector<8x128xf32>
    %333 = arith.index_cast %c3_i32_112 : i32 to index
    %c0_117 = arith.constant 0 : index
    %c0_118 = arith.constant 0 : index
    %334 = vector.load %arg17[%333, %c0_117, %c0_118] : memref<8x8x128xf32, #tpu.memory_space<vmem>>, vector<1x8x128xf32>
    %335 = vector.shape_cast %334 : vector<1x8x128xf32> to vector<8x128xf32>
    %336 = vector.shape_cast %332 : vector<8x128xf32> to vector<1x8x128xf32>
    tpu.vector_store %arg17[%333, %c0_117, %c0_118], %336 {strides = array<i32>} : memref<8x8x128xf32, #tpu.memory_space<vmem>>, vector<1x8x128xf32>,
    %c4_i32_119 = arith.constant 4 : i32
    %337 = arith.index_cast %c4_i32_119 : i32 to index
    %c0_120 = arith.constant 0 : index
    %c0_121 = arith.constant 0 : index
    %338 = vector.load %arg15[%337, %c0_120, %c0_121] : memref<8x8x512xf32, #tpu.memory_space<vmem>>, vector<1x8x512xf32>
    %339 = vector.shape_cast %338 : vector<1x8x512xf32> to vector<8x512xf32>
    %cst_122 = arith.constant dense<0.000000e+00> : vector<8x512xf32>
    %340 = tpu.matmul %332, %224, %cst_122 {dimension_numbers = #tpu.dot_dimension_numbers<[1], [0], [0], [1], [0, 0, 1, 1], [], []>} : vector<8x128xf32>, vector<128x512xf32>, vector<8x512xf32> -> vector<8x512xf32>
    %341 = arith.addf %339, %340 : vector<8x512xf32>
    %342 = vector.extract_strided_slice %341 {offsets = [0, 0], sizes = [8, 384], strides = [1, 1]} : vector<8x512xf32> to vector<8x384xf32>
    %343 = arith.negf %342 : vector<8x384xf32>
    %344 = math.exp %343 : vector<8x384xf32>
    %cst_123 = arith.constant 1.000000e+00 : f32
    %345 = vector.broadcast %cst_123 : f32 to vector<8x384xf32>
    %346 = arith.addf %345, %344 : vector<8x384xf32>
    %347 = arith.divf %345, %346 : vector<8x384xf32>
    %348 = vector.extract_strided_slice %341 {offsets = [0, 384], sizes = [8, 128], strides = [1, 1]} : vector<8x512xf32> to vector<8x128xf32>
    %349 = math.tanh %348 : vector<8x128xf32>
    %350 = vector.extract_strided_slice %347 {offsets = [0, 0], sizes = [8, 128], strides = [1, 1]} : vector<8x384xf32> to vector<8x128xf32>
    %351 = vector.extract_strided_slice %347 {offsets = [0, 128], sizes = [8, 128], strides = [1, 1]} : vector<8x384xf32> to vector<8x128xf32>
    %352 = vector.extract_strided_slice %347 {offsets = [0, 256], sizes = [8, 128], strides = [1, 1]} : vector<8x384xf32> to vector<8x128xf32>
    %353 = arith.mulf %351, %330 : vector<8x128xf32>
    %354 = arith.mulf %350, %349 : vector<8x128xf32>
    %355 = arith.addf %353, %354 : vector<8x128xf32>
    %356 = math.tanh %355 : vector<8x128xf32>
    %357 = arith.mulf %352, %356 : vector<8x128xf32>
    %358 = arith.index_cast %c4_i32_119 : i32 to index
    %c0_124 = arith.constant 0 : index
    %c0_125 = arith.constant 0 : index
    %359 = vector.load %arg17[%358, %c0_124, %c0_125] : memref<8x8x128xf32, #tpu.memory_space<vmem>>, vector<1x8x128xf32>
    %360 = vector.shape_cast %359 : vector<1x8x128xf32> to vector<8x128xf32>
    %361 = vector.shape_cast %357 : vector<8x128xf32> to vector<1x8x128xf32>
    tpu.vector_store %arg17[%358, %c0_124, %c0_125], %361 {strides = array<i32>} : memref<8x8x128xf32, #tpu.memory_space<vmem>>, vector<1x8x128xf32>,
    %c5_i32_126 = arith.constant 5 : i32
    %362 = arith.index_cast %c5_i32_126 : i32 to index
    %c0_127 = arith.constant 0 : index
    %c0_128 = arith.constant 0 : index
    %363 = vector.load %arg15[%362, %c0_127, %c0_128] : memref<8x8x512xf32, #tpu.memory_space<vmem>>, vector<1x8x512xf32>
    %364 = vector.shape_cast %363 : vector<1x8x512xf32> to vector<8x512xf32>
    %cst_129 = arith.constant dense<0.000000e+00> : vector<8x512xf32>
    %365 = tpu.matmul %357, %224, %cst_129 {dimension_numbers = #tpu.dot_dimension_numbers<[1], [0], [0], [1], [0, 0, 1, 1], [], []>} : vector<8x128xf32>, vector<128x512xf32>, vector<8x512xf32> -> vector<8x512xf32>
    %366 = arith.addf %364, %365 : vector<8x512xf32>
    %367 = vector.extract_strided_slice %366 {offsets = [0, 0], sizes = [8, 384], strides = [1, 1]} : vector<8x512xf32> to vector<8x384xf32>
    %368 = arith.negf %367 : vector<8x384xf32>
    %369 = math.exp %368 : vector<8x384xf32>
    %cst_130 = arith.constant 1.000000e+00 : f32
    %370 = vector.broadcast %cst_130 : f32 to vector<8x384xf32>
    %371 = arith.addf %370, %369 : vector<8x384xf32>
    %372 = arith.divf %370, %371 : vector<8x384xf32>
    %373 = vector.extract_strided_slice %366 {offsets = [0, 384], sizes = [8, 128], strides = [1, 1]} : vector<8x512xf32> to vector<8x128xf32>
    %374 = math.tanh %373 : vector<8x128xf32>
    %375 = vector.extract_strided_slice %372 {offsets = [0, 0], sizes = [8, 128], strides = [1, 1]} : vector<8x384xf32> to vector<8x128xf32>
    %376 = vector.extract_strided_slice %372 {offsets = [0, 128], sizes = [8, 128], strides = [1, 1]} : vector<8x384xf32> to vector<8x128xf32>
    %377 = vector.extract_strided_slice %372 {offsets = [0, 256], sizes = [8, 128], strides = [1, 1]} : vector<8x384xf32> to vector<8x128xf32>
    %378 = arith.mulf %376, %355 : vector<8x128xf32>
    %379 = arith.mulf %375, %374 : vector<8x128xf32>
    %380 = arith.addf %378, %379 : vector<8x128xf32>
    %381 = math.tanh %380 : vector<8x128xf32>
    %382 = arith.mulf %377, %381 : vector<8x128xf32>
    %383 = arith.index_cast %c5_i32_126 : i32 to index
    %c0_131 = arith.constant 0 : index
    %c0_132 = arith.constant 0 : index
    %384 = vector.load %arg17[%383, %c0_131, %c0_132] : memref<8x8x128xf32, #tpu.memory_space<vmem>>, vector<1x8x128xf32>
    %385 = vector.shape_cast %384 : vector<1x8x128xf32> to vector<8x128xf32>
    %386 = vector.shape_cast %382 : vector<8x128xf32> to vector<1x8x128xf32>
    tpu.vector_store %arg17[%383, %c0_131, %c0_132], %386 {strides = array<i32>} : memref<8x8x128xf32, #tpu.memory_space<vmem>>, vector<1x8x128xf32>,
    %c6_i32_133 = arith.constant 6 : i32
    %387 = arith.index_cast %c6_i32_133 : i32 to index
    %c0_134 = arith.constant 0 : index
    %c0_135 = arith.constant 0 : index
    %388 = vector.load %arg15[%387, %c0_134, %c0_135] : memref<8x8x512xf32, #tpu.memory_space<vmem>>, vector<1x8x512xf32>
    %389 = vector.shape_cast %388 : vector<1x8x512xf32> to vector<8x512xf32>
    %cst_136 = arith.constant dense<0.000000e+00> : vector<8x512xf32>
    %390 = tpu.matmul %382, %224, %cst_136 {dimension_numbers = #tpu.dot_dimension_numbers<[1], [0], [0], [1], [0, 0, 1, 1], [], []>} : vector<8x128xf32>, vector<128x512xf32>, vector<8x512xf32> -> vector<8x512xf32>
    %391 = arith.addf %389, %390 : vector<8x512xf32>
    %392 = vector.extract_strided_slice %391 {offsets = [0, 0], sizes = [8, 384], strides = [1, 1]} : vector<8x512xf32> to vector<8x384xf32>
    %393 = arith.negf %392 : vector<8x384xf32>
    %394 = math.exp %393 : vector<8x384xf32>
    %cst_137 = arith.constant 1.000000e+00 : f32
    %395 = vector.broadcast %cst_137 : f32 to vector<8x384xf32>
    %396 = arith.addf %395, %394 : vector<8x384xf32>
    %397 = arith.divf %395, %396 : vector<8x384xf32>
    %398 = vector.extract_strided_slice %391 {offsets = [0, 384], sizes = [8, 128], strides = [1, 1]} : vector<8x512xf32> to vector<8x128xf32>
    %399 = math.tanh %398 : vector<8x128xf32>
    %400 = vector.extract_strided_slice %397 {offsets = [0, 0], sizes = [8, 128], strides = [1, 1]} : vector<8x384xf32> to vector<8x128xf32>
    %401 = vector.extract_strided_slice %397 {offsets = [0, 128], sizes = [8, 128], strides = [1, 1]} : vector<8x384xf32> to vector<8x128xf32>
    %402 = vector.extract_strided_slice %397 {offsets = [0, 256], sizes = [8, 128], strides = [1, 1]} : vector<8x384xf32> to vector<8x128xf32>
    %403 = arith.mulf %401, %380 : vector<8x128xf32>
    %404 = arith.mulf %400, %399 : vector<8x128xf32>
    %405 = arith.addf %403, %404 : vector<8x128xf32>
    %406 = math.tanh %405 : vector<8x128xf32>
    %407 = arith.mulf %402, %406 : vector<8x128xf32>
    %408 = arith.index_cast %c6_i32_133 : i32 to index
    %c0_138 = arith.constant 0 : index
    %c0_139 = arith.constant 0 : index
    %409 = vector.load %arg17[%408, %c0_138, %c0_139] : memref<8x8x128xf32, #tpu.memory_space<vmem>>, vector<1x8x128xf32>
    %410 = vector.shape_cast %409 : vector<1x8x128xf32> to vector<8x128xf32>
    %411 = vector.shape_cast %407 : vector<8x128xf32> to vector<1x8x128xf32>
    tpu.vector_store %arg17[%408, %c0_138, %c0_139], %411 {strides = array<i32>} : memref<8x8x128xf32, #tpu.memory_space<vmem>>, vector<1x8x128xf32>,
    %c7_i32_140 = arith.constant 7 : i32
    %412 = arith.index_cast %c7_i32_140 : i32 to index
    %c0_141 = arith.constant 0 : index
    %c0_142 = arith.constant 0 : index
    %413 = vector.load %arg15[%412, %c0_141, %c0_142] : memref<8x8x512xf32, #tpu.memory_space<vmem>>, vector<1x8x512xf32>
    %414 = vector.shape_cast %413 : vector<1x8x512xf32> to vector<8x512xf32>
    %cst_143 = arith.constant dense<0.000000e+00> : vector<8x512xf32>
    %415 = tpu.matmul %407, %224, %cst_143 {dimension_numbers = #tpu.dot_dimension_numbers<[1], [0], [0], [1], [0, 0, 1, 1], [], []>} : vector<8x128xf32>, vector<128x512xf32>, vector<8x512xf32> -> vector<8x512xf32>
    %416 = arith.addf %414, %415 : vector<8x512xf32>
    %417 = vector.extract_strided_slice %416 {offsets = [0, 0], sizes = [8, 384], strides = [1, 1]} : vector<8x512xf32> to vector<8x384xf32>
    %418 = arith.negf %417 : vector<8x384xf32>
    %419 = math.exp %418 : vector<8x384xf32>
    %cst_144 = arith.constant 1.000000e+00 : f32
    %420 = vector.broadcast %cst_144 : f32 to vector<8x384xf32>
    %421 = arith.addf %420, %419 : vector<8x384xf32>
    %422 = arith.divf %420, %421 : vector<8x384xf32>
    %423 = vector.extract_strided_slice %416 {offsets = [0, 384], sizes = [8, 128], strides = [1, 1]} : vector<8x512xf32> to vector<8x128xf32>
    %424 = math.tanh %423 : vector<8x128xf32>
    %425 = vector.extract_strided_slice %422 {offsets = [0, 0], sizes = [8, 128], strides = [1, 1]} : vector<8x384xf32> to vector<8x128xf32>
    %426 = vector.extract_strided_slice %422 {offsets = [0, 128], sizes = [8, 128], strides = [1, 1]} : vector<8x384xf32> to vector<8x128xf32>
    %427 = vector.extract_strided_slice %422 {offsets = [0, 256], sizes = [8, 128], strides = [1, 1]} : vector<8x384xf32> to vector<8x128xf32>
    %428 = arith.mulf %426, %405 : vector<8x128xf32>
    %429 = arith.mulf %425, %424 : vector<8x128xf32>
    %430 = arith.addf %428, %429 : vector<8x128xf32>
    %431 = math.tanh %430 : vector<8x128xf32>
    %432 = arith.mulf %427, %431 : vector<8x128xf32>
    %433 = arith.index_cast %c7_i32_140 : i32 to index
    %c0_145 = arith.constant 0 : index
    %c0_146 = arith.constant 0 : index
    %434 = vector.load %arg17[%433, %c0_145, %c0_146] : memref<8x8x128xf32, #tpu.memory_space<vmem>>, vector<1x8x128xf32>
    %435 = vector.shape_cast %434 : vector<1x8x128xf32> to vector<8x128xf32>
    %436 = vector.shape_cast %432 : vector<8x128xf32> to vector<1x8x128xf32>
    tpu.vector_store %arg17[%433, %c0_145, %c0_146], %436 {strides = array<i32>} : memref<8x8x128xf32, #tpu.memory_space<vmem>>, vector<1x8x128xf32>,
    %c8_i32_147 = arith.constant 8 : i32
    %c1_148 = arith.constant 1 : index
    %c0_149 = arith.constant 0 : index
    %c0_150 = arith.constant 0 : index
    %437 = vector.load %arg18[%c1_148, %c0_149, %c0_150] : memref<3x8x128xf32, #tpu.memory_space<vmem>>, vector<1x8x128xf32>
    %438 = vector.shape_cast %437 : vector<1x8x128xf32> to vector<8x128xf32>
    %439 = vector.shape_cast %432 : vector<8x128xf32> to vector<1x8x128xf32>
    tpu.vector_store %arg18[%c1_148, %c0_149, %c0_150], %439 {strides = array<i32>} : memref<3x8x128xf32, #tpu.memory_space<vmem>>, vector<1x8x128xf32>,
    %c1_151 = arith.constant 1 : index
    %c0_152 = arith.constant 0 : index
    %c0_153 = arith.constant 0 : index
    %440 = vector.load %arg19[%c1_151, %c0_152, %c0_153] : memref<3x8x128xf32, #tpu.memory_space<vmem>>, vector<1x8x128xf32>
    %441 = vector.shape_cast %440 : vector<1x8x128xf32> to vector<8x128xf32>
    %442 = vector.shape_cast %430 : vector<8x128xf32> to vector<1x8x128xf32>
    tpu.vector_store %arg19[%c1_151, %c0_152, %c0_153], %442 {strides = array<i32>} : memref<3x8x128xf32, #tpu.memory_space<vmem>>, vector<1x8x128xf32>,
    %c0_154 = arith.constant 0 : index
    %c0_155 = arith.constant 0 : index
    %443 = vector.load %arg9[%c0_154, %c0_155] : memref<128x512xf32, #tpu.memory_space<vmem>>, vector<128x512xf32>
    %c0_156 = arith.constant 0 : index
    %c0_157 = arith.constant 0 : index
    %444 = vector.load %arg10[%c0_156, %c0_157] : memref<128x512xf32, #tpu.memory_space<vmem>>, vector<128x512xf32>
    %c0_158 = arith.constant 0 : index
    %c0_159 = arith.constant 0 : index
    %445 = vector.load %arg11[%c0_158, %c0_159] : memref<1x512xf32, #tpu.memory_space<vmem>>, vector<1x512xf32>
    %c0_160 = arith.constant 0 : index
    %c0_161 = arith.constant 0 : index
    %c0_162 = arith.constant 0 : index
    %446 = vector.load %arg17[%c0_160, %c0_161, %c0_162] : memref<8x8x128xf32, #tpu.memory_space<vmem>>, vector<8x8x128xf32>
    %447 = vector.shape_cast %446 : vector<8x8x128xf32> to vector<64x128xf32>
    %cst_163 = arith.constant dense<0.000000e+00> : vector<64x512xf32>
    %448 = tpu.matmul %447, %443, %cst_163 {dimension_numbers = #tpu.dot_dimension_numbers<[1], [0], [0], [1], [0, 0, 1, 1], [], []>} : vector<64x128xf32>, vector<128x512xf32>, vector<64x512xf32> -> vector<64x512xf32>
    %449 = vector.broadcast %445 : vector<1x512xf32> to vector<64x512xf32>
    %450 = arith.addf %448, %449 : vector<64x512xf32>
    %451 = vector.shape_cast %450 : vector<64x512xf32> to vector<8x8x512xf32>
    %c0_164 = arith.constant 0 : index
    %c0_165 = arith.constant 0 : index
    %c0_166 = arith.constant 0 : index
    %452 = vector.load %arg15[%c0_164, %c0_165, %c0_166] : memref<8x8x512xf32, #tpu.memory_space<vmem>>, vector<8x8x512xf32>
    tpu.vector_store %arg15[%c0_164, %c0_165, %c0_166], %451 {strides = array<i32>} : memref<8x8x512xf32, #tpu.memory_space<vmem>>, vector<8x8x512xf32>,
    %c2 = arith.constant 2 : index
    %c0_167 = arith.constant 0 : index
    %c0_168 = arith.constant 0 : index
    %453 = vector.load %arg18[%c2, %c0_167, %c0_168] : memref<3x8x128xf32, #tpu.memory_space<vmem>>, vector<1x8x128xf32>
    %454 = vector.shape_cast %453 : vector<1x8x128xf32> to vector<8x128xf32>
    %c2_169 = arith.constant 2 : index
    %c0_170 = arith.constant 0 : index
    %c0_171 = arith.constant 0 : index
    %455 = vector.load %arg19[%c2_169, %c0_170, %c0_171] : memref<3x8x128xf32, #tpu.memory_space<vmem>>, vector<1x8x128xf32>
    %456 = vector.shape_cast %455 : vector<1x8x128xf32> to vector<8x128xf32>
    %c0_i32_172 = arith.constant 0 : i32
    %457 = arith.index_cast %c0_i32_172 : i32 to index
    %c0_173 = arith.constant 0 : index
    %c0_174 = arith.constant 0 : index
    %458 = vector.load %arg15[%457, %c0_173, %c0_174] : memref<8x8x512xf32, #tpu.memory_space<vmem>>, vector<1x8x512xf32>
    %459 = vector.shape_cast %458 : vector<1x8x512xf32> to vector<8x512xf32>
    %cst_175 = arith.constant dense<0.000000e+00> : vector<8x512xf32>
    %460 = tpu.matmul %454, %444, %cst_175 {dimension_numbers = #tpu.dot_dimension_numbers<[1], [0], [0], [1], [0, 0, 1, 1], [], []>} : vector<8x128xf32>, vector<128x512xf32>, vector<8x512xf32> -> vector<8x512xf32>
    %461 = arith.addf %459, %460 : vector<8x512xf32>
    %462 = vector.extract_strided_slice %461 {offsets = [0, 0], sizes = [8, 384], strides = [1, 1]} : vector<8x512xf32> to vector<8x384xf32>
    %463 = arith.negf %462 : vector<8x384xf32>
    %464 = math.exp %463 : vector<8x384xf32>
    %cst_176 = arith.constant 1.000000e+00 : f32
    %465 = vector.broadcast %cst_176 : f32 to vector<8x384xf32>
    %466 = arith.addf %465, %464 : vector<8x384xf32>
    %467 = arith.divf %465, %466 : vector<8x384xf32>
    %468 = vector.extract_strided_slice %461 {offsets = [0, 384], sizes = [8, 128], strides = [1, 1]} : vector<8x512xf32> to vector<8x128xf32>
    %469 = math.tanh %468 : vector<8x128xf32>
    %470 = vector.extract_strided_slice %467 {offsets = [0, 0], sizes = [8, 128], strides = [1, 1]} : vector<8x384xf32> to vector<8x128xf32>
    %471 = vector.extract_strided_slice %467 {offsets = [0, 128], sizes = [8, 128], strides = [1, 1]} : vector<8x384xf32> to vector<8x128xf32>
    %472 = vector.extract_strided_slice %467 {offsets = [0, 256], sizes = [8, 128], strides = [1, 1]} : vector<8x384xf32> to vector<8x128xf32>
    %473 = arith.mulf %471, %456 : vector<8x128xf32>
    %474 = arith.mulf %470, %469 : vector<8x128xf32>
    %475 = arith.addf %473, %474 : vector<8x128xf32>
    %476 = math.tanh %475 : vector<8x128xf32>
    %477 = arith.mulf %472, %476 : vector<8x128xf32>
    %478 = arith.index_cast %c0_i32_172 : i32 to index
    %c0_177 = arith.constant 0 : index
    %c0_178 = arith.constant 0 : index
    %479 = vector.load %arg16[%478, %c0_177, %c0_178] : memref<8x8x128xf32, #tpu.memory_space<vmem>>, vector<1x8x128xf32>
    %480 = vector.shape_cast %479 : vector<1x8x128xf32> to vector<8x128xf32>
    %481 = vector.shape_cast %477 : vector<8x128xf32> to vector<1x8x128xf32>
    tpu.vector_store %arg16[%478, %c0_177, %c0_178], %481 {strides = array<i32>} : memref<8x8x128xf32, #tpu.memory_space<vmem>>, vector<1x8x128xf32>,
    %c1_i32_179 = arith.constant 1 : i32
    %482 = arith.index_cast %c1_i32_179 : i32 to index
    %c0_180 = arith.constant 0 : index
    %c0_181 = arith.constant 0 : index
    %483 = vector.load %arg15[%482, %c0_180, %c0_181] : memref<8x8x512xf32, #tpu.memory_space<vmem>>, vector<1x8x512xf32>
    %484 = vector.shape_cast %483 : vector<1x8x512xf32> to vector<8x512xf32>
    %cst_182 = arith.constant dense<0.000000e+00> : vector<8x512xf32>
    %485 = tpu.matmul %477, %444, %cst_182 {dimension_numbers = #tpu.dot_dimension_numbers<[1], [0], [0], [1], [0, 0, 1, 1], [], []>} : vector<8x128xf32>, vector<128x512xf32>, vector<8x512xf32> -> vector<8x512xf32>
    %486 = arith.addf %484, %485 : vector<8x512xf32>
    %487 = vector.extract_strided_slice %486 {offsets = [0, 0], sizes = [8, 384], strides = [1, 1]} : vector<8x512xf32> to vector<8x384xf32>
    %488 = arith.negf %487 : vector<8x384xf32>
    %489 = math.exp %488 : vector<8x384xf32>
    %cst_183 = arith.constant 1.000000e+00 : f32
    %490 = vector.broadcast %cst_183 : f32 to vector<8x384xf32>
    %491 = arith.addf %490, %489 : vector<8x384xf32>
    %492 = arith.divf %490, %491 : vector<8x384xf32>
    %493 = vector.extract_strided_slice %486 {offsets = [0, 384], sizes = [8, 128], strides = [1, 1]} : vector<8x512xf32> to vector<8x128xf32>
    %494 = math.tanh %493 : vector<8x128xf32>
    %495 = vector.extract_strided_slice %492 {offsets = [0, 0], sizes = [8, 128], strides = [1, 1]} : vector<8x384xf32> to vector<8x128xf32>
    %496 = vector.extract_strided_slice %492 {offsets = [0, 128], sizes = [8, 128], strides = [1, 1]} : vector<8x384xf32> to vector<8x128xf32>
    %497 = vector.extract_strided_slice %492 {offsets = [0, 256], sizes = [8, 128], strides = [1, 1]} : vector<8x384xf32> to vector<8x128xf32>
    %498 = arith.mulf %496, %475 : vector<8x128xf32>
    %499 = arith.mulf %495, %494 : vector<8x128xf32>
    %500 = arith.addf %498, %499 : vector<8x128xf32>
    %501 = math.tanh %500 : vector<8x128xf32>
    %502 = arith.mulf %497, %501 : vector<8x128xf32>
    %503 = arith.index_cast %c1_i32_179 : i32 to index
    %c0_184 = arith.constant 0 : index
    %c0_185 = arith.constant 0 : index
    %504 = vector.load %arg16[%503, %c0_184, %c0_185] : memref<8x8x128xf32, #tpu.memory_space<vmem>>, vector<1x8x128xf32>
    %505 = vector.shape_cast %504 : vector<1x8x128xf32> to vector<8x128xf32>
    %506 = vector.shape_cast %502 : vector<8x128xf32> to vector<1x8x128xf32>
    tpu.vector_store %arg16[%503, %c0_184, %c0_185], %506 {strides = array<i32>} : memref<8x8x128xf32, #tpu.memory_space<vmem>>, vector<1x8x128xf32>,
    %c2_i32_186 = arith.constant 2 : i32
    %507 = arith.index_cast %c2_i32_186 : i32 to index
    %c0_187 = arith.constant 0 : index
    %c0_188 = arith.constant 0 : index
    %508 = vector.load %arg15[%507, %c0_187, %c0_188] : memref<8x8x512xf32, #tpu.memory_space<vmem>>, vector<1x8x512xf32>
    %509 = vector.shape_cast %508 : vector<1x8x512xf32> to vector<8x512xf32>
    %cst_189 = arith.constant dense<0.000000e+00> : vector<8x512xf32>
    %510 = tpu.matmul %502, %444, %cst_189 {dimension_numbers = #tpu.dot_dimension_numbers<[1], [0], [0], [1], [0, 0, 1, 1], [], []>} : vector<8x128xf32>, vector<128x512xf32>, vector<8x512xf32> -> vector<8x512xf32>
    %511 = arith.addf %509, %510 : vector<8x512xf32>
    %512 = vector.extract_strided_slice %511 {offsets = [0, 0], sizes = [8, 384], strides = [1, 1]} : vector<8x512xf32> to vector<8x384xf32>
    %513 = arith.negf %512 : vector<8x384xf32>
    %514 = math.exp %513 : vector<8x384xf32>
    %cst_190 = arith.constant 1.000000e+00 : f32
    %515 = vector.broadcast %cst_190 : f32 to vector<8x384xf32>
    %516 = arith.addf %515, %514 : vector<8x384xf32>
    %517 = arith.divf %515, %516 : vector<8x384xf32>
    %518 = vector.extract_strided_slice %511 {offsets = [0, 384], sizes = [8, 128], strides = [1, 1]} : vector<8x512xf32> to vector<8x128xf32>
    %519 = math.tanh %518 : vector<8x128xf32>
    %520 = vector.extract_strided_slice %517 {offsets = [0, 0], sizes = [8, 128], strides = [1, 1]} : vector<8x384xf32> to vector<8x128xf32>
    %521 = vector.extract_strided_slice %517 {offsets = [0, 128], sizes = [8, 128], strides = [1, 1]} : vector<8x384xf32> to vector<8x128xf32>
    %522 = vector.extract_strided_slice %517 {offsets = [0, 256], sizes = [8, 128], strides = [1, 1]} : vector<8x384xf32> to vector<8x128xf32>
    %523 = arith.mulf %521, %500 : vector<8x128xf32>
    %524 = arith.mulf %520, %519 : vector<8x128xf32>
    %525 = arith.addf %523, %524 : vector<8x128xf32>
    %526 = math.tanh %525 : vector<8x128xf32>
    %527 = arith.mulf %522, %526 : vector<8x128xf32>
    %528 = arith.index_cast %c2_i32_186 : i32 to index
    %c0_191 = arith.constant 0 : index
    %c0_192 = arith.constant 0 : index
    %529 = vector.load %arg16[%528, %c0_191, %c0_192] : memref<8x8x128xf32, #tpu.memory_space<vmem>>, vector<1x8x128xf32>
    %530 = vector.shape_cast %529 : vector<1x8x128xf32> to vector<8x128xf32>
    %531 = vector.shape_cast %527 : vector<8x128xf32> to vector<1x8x128xf32>
    tpu.vector_store %arg16[%528, %c0_191, %c0_192], %531 {strides = array<i32>} : memref<8x8x128xf32, #tpu.memory_space<vmem>>, vector<1x8x128xf32>,
    %c3_i32_193 = arith.constant 3 : i32
    %532 = arith.index_cast %c3_i32_193 : i32 to index
    %c0_194 = arith.constant 0 : index
    %c0_195 = arith.constant 0 : index
    %533 = vector.load %arg15[%532, %c0_194, %c0_195] : memref<8x8x512xf32, #tpu.memory_space<vmem>>, vector<1x8x512xf32>
    %534 = vector.shape_cast %533 : vector<1x8x512xf32> to vector<8x512xf32>
    %cst_196 = arith.constant dense<0.000000e+00> : vector<8x512xf32>
    %535 = tpu.matmul %527, %444, %cst_196 {dimension_numbers = #tpu.dot_dimension_numbers<[1], [0], [0], [1], [0, 0, 1, 1], [], []>} : vector<8x128xf32>, vector<128x512xf32>, vector<8x512xf32> -> vector<8x512xf32>
    %536 = arith.addf %534, %535 : vector<8x512xf32>
    %537 = vector.extract_strided_slice %536 {offsets = [0, 0], sizes = [8, 384], strides = [1, 1]} : vector<8x512xf32> to vector<8x384xf32>
    %538 = arith.negf %537 : vector<8x384xf32>
    %539 = math.exp %538 : vector<8x384xf32>
    %cst_197 = arith.constant 1.000000e+00 : f32
    %540 = vector.broadcast %cst_197 : f32 to vector<8x384xf32>
    %541 = arith.addf %540, %539 : vector<8x384xf32>
    %542 = arith.divf %540, %541 : vector<8x384xf32>
    %543 = vector.extract_strided_slice %536 {offsets = [0, 384], sizes = [8, 128], strides = [1, 1]} : vector<8x512xf32> to vector<8x128xf32>
    %544 = math.tanh %543 : vector<8x128xf32>
    %545 = vector.extract_strided_slice %542 {offsets = [0, 0], sizes = [8, 128], strides = [1, 1]} : vector<8x384xf32> to vector<8x128xf32>
    %546 = vector.extract_strided_slice %542 {offsets = [0, 128], sizes = [8, 128], strides = [1, 1]} : vector<8x384xf32> to vector<8x128xf32>
    %547 = vector.extract_strided_slice %542 {offsets = [0, 256], sizes = [8, 128], strides = [1, 1]} : vector<8x384xf32> to vector<8x128xf32>
    %548 = arith.mulf %546, %525 : vector<8x128xf32>
    %549 = arith.mulf %545, %544 : vector<8x128xf32>
    %550 = arith.addf %548, %549 : vector<8x128xf32>
    %551 = math.tanh %550 : vector<8x128xf32>
    %552 = arith.mulf %547, %551 : vector<8x128xf32>
    %553 = arith.index_cast %c3_i32_193 : i32 to index
    %c0_198 = arith.constant 0 : index
    %c0_199 = arith.constant 0 : index
    %554 = vector.load %arg16[%553, %c0_198, %c0_199] : memref<8x8x128xf32, #tpu.memory_space<vmem>>, vector<1x8x128xf32>
    %555 = vector.shape_cast %554 : vector<1x8x128xf32> to vector<8x128xf32>
    %556 = vector.shape_cast %552 : vector<8x128xf32> to vector<1x8x128xf32>
    tpu.vector_store %arg16[%553, %c0_198, %c0_199], %556 {strides = array<i32>} : memref<8x8x128xf32, #tpu.memory_space<vmem>>, vector<1x8x128xf32>,
    %c4_i32_200 = arith.constant 4 : i32
    %557 = arith.index_cast %c4_i32_200 : i32 to index
    %c0_201 = arith.constant 0 : index
    %c0_202 = arith.constant 0 : index
    %558 = vector.load %arg15[%557, %c0_201, %c0_202] : memref<8x8x512xf32, #tpu.memory_space<vmem>>, vector<1x8x512xf32>
    %559 = vector.shape_cast %558 : vector<1x8x512xf32> to vector<8x512xf32>
    %cst_203 = arith.constant dense<0.000000e+00> : vector<8x512xf32>
    %560 = tpu.matmul %552, %444, %cst_203 {dimension_numbers = #tpu.dot_dimension_numbers<[1], [0], [0], [1], [0, 0, 1, 1], [], []>} : vector<8x128xf32>, vector<128x512xf32>, vector<8x512xf32> -> vector<8x512xf32>
    %561 = arith.addf %559, %560 : vector<8x512xf32>
    %562 = vector.extract_strided_slice %561 {offsets = [0, 0], sizes = [8, 384], strides = [1, 1]} : vector<8x512xf32> to vector<8x384xf32>
    %563 = arith.negf %562 : vector<8x384xf32>
    %564 = math.exp %563 : vector<8x384xf32>
    %cst_204 = arith.constant 1.000000e+00 : f32
    %565 = vector.broadcast %cst_204 : f32 to vector<8x384xf32>
    %566 = arith.addf %565, %564 : vector<8x384xf32>
    %567 = arith.divf %565, %566 : vector<8x384xf32>
    %568 = vector.extract_strided_slice %561 {offsets = [0, 384], sizes = [8, 128], strides = [1, 1]} : vector<8x512xf32> to vector<8x128xf32>
    %569 = math.tanh %568 : vector<8x128xf32>
    %570 = vector.extract_strided_slice %567 {offsets = [0, 0], sizes = [8, 128], strides = [1, 1]} : vector<8x384xf32> to vector<8x128xf32>
    %571 = vector.extract_strided_slice %567 {offsets = [0, 128], sizes = [8, 128], strides = [1, 1]} : vector<8x384xf32> to vector<8x128xf32>
    %572 = vector.extract_strided_slice %567 {offsets = [0, 256], sizes = [8, 128], strides = [1, 1]} : vector<8x384xf32> to vector<8x128xf32>
    %573 = arith.mulf %571, %550 : vector<8x128xf32>
    %574 = arith.mulf %570, %569 : vector<8x128xf32>
    %575 = arith.addf %573, %574 : vector<8x128xf32>
    %576 = math.tanh %575 : vector<8x128xf32>
    %577 = arith.mulf %572, %576 : vector<8x128xf32>
    %578 = arith.index_cast %c4_i32_200 : i32 to index
    %c0_205 = arith.constant 0 : index
    %c0_206 = arith.constant 0 : index
    %579 = vector.load %arg16[%578, %c0_205, %c0_206] : memref<8x8x128xf32, #tpu.memory_space<vmem>>, vector<1x8x128xf32>
    %580 = vector.shape_cast %579 : vector<1x8x128xf32> to vector<8x128xf32>
    %581 = vector.shape_cast %577 : vector<8x128xf32> to vector<1x8x128xf32>
    tpu.vector_store %arg16[%578, %c0_205, %c0_206], %581 {strides = array<i32>} : memref<8x8x128xf32, #tpu.memory_space<vmem>>, vector<1x8x128xf32>,
    %c5_i32_207 = arith.constant 5 : i32
    %582 = arith.index_cast %c5_i32_207 : i32 to index
    %c0_208 = arith.constant 0 : index
    %c0_209 = arith.constant 0 : index
    %583 = vector.load %arg15[%582, %c0_208, %c0_209] : memref<8x8x512xf32, #tpu.memory_space<vmem>>, vector<1x8x512xf32>
    %584 = vector.shape_cast %583 : vector<1x8x512xf32> to vector<8x512xf32>
    %cst_210 = arith.constant dense<0.000000e+00> : vector<8x512xf32>
    %585 = tpu.matmul %577, %444, %cst_210 {dimension_numbers = #tpu.dot_dimension_numbers<[1], [0], [0], [1], [0, 0, 1, 1], [], []>} : vector<8x128xf32>, vector<128x512xf32>, vector<8x512xf32> -> vector<8x512xf32>
    %586 = arith.addf %584, %585 : vector<8x512xf32>
    %587 = vector.extract_strided_slice %586 {offsets = [0, 0], sizes = [8, 384], strides = [1, 1]} : vector<8x512xf32> to vector<8x384xf32>
    %588 = arith.negf %587 : vector<8x384xf32>
    %589 = math.exp %588 : vector<8x384xf32>
    %cst_211 = arith.constant 1.000000e+00 : f32
    %590 = vector.broadcast %cst_211 : f32 to vector<8x384xf32>
    %591 = arith.addf %590, %589 : vector<8x384xf32>
    %592 = arith.divf %590, %591 : vector<8x384xf32>
    %593 = vector.extract_strided_slice %586 {offsets = [0, 384], sizes = [8, 128], strides = [1, 1]} : vector<8x512xf32> to vector<8x128xf32>
    %594 = math.tanh %593 : vector<8x128xf32>
    %595 = vector.extract_strided_slice %592 {offsets = [0, 0], sizes = [8, 128], strides = [1, 1]} : vector<8x384xf32> to vector<8x128xf32>
    %596 = vector.extract_strided_slice %592 {offsets = [0, 128], sizes = [8, 128], strides = [1, 1]} : vector<8x384xf32> to vector<8x128xf32>
    %597 = vector.extract_strided_slice %592 {offsets = [0, 256], sizes = [8, 128], strides = [1, 1]} : vector<8x384xf32> to vector<8x128xf32>
    %598 = arith.mulf %596, %575 : vector<8x128xf32>
    %599 = arith.mulf %595, %594 : vector<8x128xf32>
    %600 = arith.addf %598, %599 : vector<8x128xf32>
    %601 = math.tanh %600 : vector<8x128xf32>
    %602 = arith.mulf %597, %601 : vector<8x128xf32>
    %603 = arith.index_cast %c5_i32_207 : i32 to index
    %c0_212 = arith.constant 0 : index
    %c0_213 = arith.constant 0 : index
    %604 = vector.load %arg16[%603, %c0_212, %c0_213] : memref<8x8x128xf32, #tpu.memory_space<vmem>>, vector<1x8x128xf32>
    %605 = vector.shape_cast %604 : vector<1x8x128xf32> to vector<8x128xf32>
    %606 = vector.shape_cast %602 : vector<8x128xf32> to vector<1x8x128xf32>
    tpu.vector_store %arg16[%603, %c0_212, %c0_213], %606 {strides = array<i32>} : memref<8x8x128xf32, #tpu.memory_space<vmem>>, vector<1x8x128xf32>,
    %c6_i32_214 = arith.constant 6 : i32
    %607 = arith.index_cast %c6_i32_214 : i32 to index
    %c0_215 = arith.constant 0 : index
    %c0_216 = arith.constant 0 : index
    %608 = vector.load %arg15[%607, %c0_215, %c0_216] : memref<8x8x512xf32, #tpu.memory_space<vmem>>, vector<1x8x512xf32>
    %609 = vector.shape_cast %608 : vector<1x8x512xf32> to vector<8x512xf32>
    %cst_217 = arith.constant dense<0.000000e+00> : vector<8x512xf32>
    %610 = tpu.matmul %602, %444, %cst_217 {dimension_numbers = #tpu.dot_dimension_numbers<[1], [0], [0], [1], [0, 0, 1, 1], [], []>} : vector<8x128xf32>, vector<128x512xf32>, vector<8x512xf32> -> vector<8x512xf32>
    %611 = arith.addf %609, %610 : vector<8x512xf32>
    %612 = vector.extract_strided_slice %611 {offsets = [0, 0], sizes = [8, 384], strides = [1, 1]} : vector<8x512xf32> to vector<8x384xf32>
    %613 = arith.negf %612 : vector<8x384xf32>
    %614 = math.exp %613 : vector<8x384xf32>
    %cst_218 = arith.constant 1.000000e+00 : f32
    %615 = vector.broadcast %cst_218 : f32 to vector<8x384xf32>
    %616 = arith.addf %615, %614 : vector<8x384xf32>
    %617 = arith.divf %615, %616 : vector<8x384xf32>
    %618 = vector.extract_strided_slice %611 {offsets = [0, 384], sizes = [8, 128], strides = [1, 1]} : vector<8x512xf32> to vector<8x128xf32>
    %619 = math.tanh %618 : vector<8x128xf32>
    %620 = vector.extract_strided_slice %617 {offsets = [0, 0], sizes = [8, 128], strides = [1, 1]} : vector<8x384xf32> to vector<8x128xf32>
    %621 = vector.extract_strided_slice %617 {offsets = [0, 128], sizes = [8, 128], strides = [1, 1]} : vector<8x384xf32> to vector<8x128xf32>
    %622 = vector.extract_strided_slice %617 {offsets = [0, 256], sizes = [8, 128], strides = [1, 1]} : vector<8x384xf32> to vector<8x128xf32>
    %623 = arith.mulf %621, %600 : vector<8x128xf32>
    %624 = arith.mulf %620, %619 : vector<8x128xf32>
    %625 = arith.addf %623, %624 : vector<8x128xf32>
    %626 = math.tanh %625 : vector<8x128xf32>
    %627 = arith.mulf %622, %626 : vector<8x128xf32>
    %628 = arith.index_cast %c6_i32_214 : i32 to index
    %c0_219 = arith.constant 0 : index
    %c0_220 = arith.constant 0 : index
    %629 = vector.load %arg16[%628, %c0_219, %c0_220] : memref<8x8x128xf32, #tpu.memory_space<vmem>>, vector<1x8x128xf32>
    %630 = vector.shape_cast %629 : vector<1x8x128xf32> to vector<8x128xf32>
    %631 = vector.shape_cast %627 : vector<8x128xf32> to vector<1x8x128xf32>
    tpu.vector_store %arg16[%628, %c0_219, %c0_220], %631 {strides = array<i32>} : memref<8x8x128xf32, #tpu.memory_space<vmem>>, vector<1x8x128xf32>,
    %c7_i32_221 = arith.constant 7 : i32
    %632 = arith.index_cast %c7_i32_221 : i32 to index
    %c0_222 = arith.constant 0 : index
    %c0_223 = arith.constant 0 : index
    %633 = vector.load %arg15[%632, %c0_222, %c0_223] : memref<8x8x512xf32, #tpu.memory_space<vmem>>, vector<1x8x512xf32>
    %634 = vector.shape_cast %633 : vector<1x8x512xf32> to vector<8x512xf32>
    %cst_224 = arith.constant dense<0.000000e+00> : vector<8x512xf32>
    %635 = tpu.matmul %627, %444, %cst_224 {dimension_numbers = #tpu.dot_dimension_numbers<[1], [0], [0], [1], [0, 0, 1, 1], [], []>} : vector<8x128xf32>, vector<128x512xf32>, vector<8x512xf32> -> vector<8x512xf32>
    %636 = arith.addf %634, %635 : vector<8x512xf32>
    %637 = vector.extract_strided_slice %636 {offsets = [0, 0], sizes = [8, 384], strides = [1, 1]} : vector<8x512xf32> to vector<8x384xf32>
    %638 = arith.negf %637 : vector<8x384xf32>
    %639 = math.exp %638 : vector<8x384xf32>
    %cst_225 = arith.constant 1.000000e+00 : f32
    %640 = vector.broadcast %cst_225 : f32 to vector<8x384xf32>
    %641 = arith.addf %640, %639 : vector<8x384xf32>
    %642 = arith.divf %640, %641 : vector<8x384xf32>
    %643 = vector.extract_strided_slice %636 {offsets = [0, 384], sizes = [8, 128], strides = [1, 1]} : vector<8x512xf32> to vector<8x128xf32>
    %644 = math.tanh %643 : vector<8x128xf32>
    %645 = vector.extract_strided_slice %642 {offsets = [0, 0], sizes = [8, 128], strides = [1, 1]} : vector<8x384xf32> to vector<8x128xf32>
    %646 = vector.extract_strided_slice %642 {offsets = [0, 128], sizes = [8, 128], strides = [1, 1]} : vector<8x384xf32> to vector<8x128xf32>
    %647 = vector.extract_strided_slice %642 {offsets = [0, 256], sizes = [8, 128], strides = [1, 1]} : vector<8x384xf32> to vector<8x128xf32>
    %648 = arith.mulf %646, %625 : vector<8x128xf32>
    %649 = arith.mulf %645, %644 : vector<8x128xf32>
    %650 = arith.addf %648, %649 : vector<8x128xf32>
    %651 = math.tanh %650 : vector<8x128xf32>
    %652 = arith.mulf %647, %651 : vector<8x128xf32>
    %653 = arith.index_cast %c7_i32_221 : i32 to index
    %c0_226 = arith.constant 0 : index
    %c0_227 = arith.constant 0 : index
    %654 = vector.load %arg16[%653, %c0_226, %c0_227] : memref<8x8x128xf32, #tpu.memory_space<vmem>>, vector<1x8x128xf32>
    %655 = vector.shape_cast %654 : vector<1x8x128xf32> to vector<8x128xf32>
    %656 = vector.shape_cast %652 : vector<8x128xf32> to vector<1x8x128xf32>
    tpu.vector_store %arg16[%653, %c0_226, %c0_227], %656 {strides = array<i32>} : memref<8x8x128xf32, #tpu.memory_space<vmem>>, vector<1x8x128xf32>,
    %c8_i32_228 = arith.constant 8 : i32
    %c2_229 = arith.constant 2 : index
    %c0_230 = arith.constant 0 : index
    %c0_231 = arith.constant 0 : index
    %657 = vector.load %arg18[%c2_229, %c0_230, %c0_231] : memref<3x8x128xf32, #tpu.memory_space<vmem>>, vector<1x8x128xf32>
    %658 = vector.shape_cast %657 : vector<1x8x128xf32> to vector<8x128xf32>
    %659 = vector.shape_cast %652 : vector<8x128xf32> to vector<1x8x128xf32>
    tpu.vector_store %arg18[%c2_229, %c0_230, %c0_231], %659 {strides = array<i32>} : memref<3x8x128xf32, #tpu.memory_space<vmem>>, vector<1x8x128xf32>,
    %c2_232 = arith.constant 2 : index
    %c0_233 = arith.constant 0 : index
    %c0_234 = arith.constant 0 : index
    %660 = vector.load %arg19[%c2_232, %c0_233, %c0_234] : memref<3x8x128xf32, #tpu.memory_space<vmem>>, vector<1x8x128xf32>
    %661 = vector.shape_cast %660 : vector<1x8x128xf32> to vector<8x128xf32>
    %662 = vector.shape_cast %650 : vector<8x128xf32> to vector<1x8x128xf32>
    tpu.vector_store %arg19[%c2_232, %c0_233, %c0_234], %662 {strides = array<i32>} : memref<3x8x128xf32, #tpu.memory_space<vmem>>, vector<1x8x128xf32>,
    %c0_235 = arith.constant 0 : index
    %c0_236 = arith.constant 0 : index
    %663 = vector.load %arg12[%c0_235, %c0_236] : memref<128x128xf32, #tpu.memory_space<vmem>>, vector<128x128xf32>
    %c0_237 = arith.constant 0 : index
    %c0_238 = arith.constant 0 : index
    %c0_239 = arith.constant 0 : index
    %664 = vector.load %arg16[%c0_237, %c0_238, %c0_239] : memref<8x8x128xf32, #tpu.memory_space<vmem>>, vector<8x8x128xf32>
    %665 = vector.shape_cast %664 : vector<8x8x128xf32> to vector<64x128xf32>
    %cst_240 = arith.constant dense<0.000000e+00> : vector<64x128xf32>
    %666 = tpu.matmul %665, %663, %cst_240 {dimension_numbers = #tpu.dot_dimension_numbers<[1], [0], [0], [1], [0, 0, 1, 1], [], []>} : vector<64x128xf32>, vector<128x128xf32>, vector<64x128xf32> -> vector<64x128xf32>
    %c0_241 = arith.constant 0 : index
    %c0_242 = arith.constant 0 : index
    %667 = vector.load %arg13[%c0_241, %c0_242] : memref<1x128xf32, #tpu.memory_space<vmem>>, vector<1x128xf32>
    %668 = vector.broadcast %667 : vector<1x128xf32> to vector<64x128xf32>
    %669 = arith.addf %666, %668 : vector<64x128xf32>
    %670 = arith.negf %669 : vector<64x128xf32>
    %671 = math.exp %670 : vector<64x128xf32>
    %cst_243 = arith.constant 1.000000e+00 : f32
    %672 = vector.broadcast %cst_243 : f32 to vector<64x128xf32>
    %673 = arith.addf %672, %671 : vector<64x128xf32>
    %674 = arith.divf %672, %673 : vector<64x128xf32>
    %675 = vector.shape_cast %674 : vector<64x128xf32> to vector<8x8x128xf32>
    %c0_244 = arith.constant 0 : index
    %c0_245 = arith.constant 0 : index
    %c0_246 = arith.constant 0 : index
    %676 = vector.load %arg14[%c0_244, %c0_245, %c0_246] : memref<8x8x128xf32, #tpu.memory_space<vmem>>, vector<8x8x128xf32>
    tpu.vector_store %arg14[%c0_244, %c0_245, %c0_246], %675 {strides = array<i32>} : memref<8x8x128xf32, #tpu.memory_space<vmem>>, vector<8x8x128xf32>,
    return
  }
  func.func @transform_0(%arg0: i32, %arg1: i32) -> (i32, i32, i32) {
    %c0_i32 = arith.constant 0 : i32
    %c0_i32_0 = arith.constant 0 : i32
    return %arg1, %arg0, %c0_i32 : i32, i32, i32
  }
  func.func @transform_1(%arg0: i32, %arg1: i32) -> (i32, i32) {
    %c0_i32 = arith.constant 0 : i32
    %c0_i32_0 = arith.constant 0 : i32
    %c0_i32_1 = arith.constant 0 : i32
    return %c0_i32, %c0_i32_0 : i32, i32
  }
  func.func @transform_2(%arg0: i32, %arg1: i32) -> (i32, i32) {
    %c0_i32 = arith.constant 0 : i32
    %c0_i32_0 = arith.constant 0 : i32
    %c0_i32_1 = arith.constant 0 : i32
    return %c0_i32, %c0_i32_0 : i32, i32
  }
  func.func @transform_3(%arg0: i32, %arg1: i32) -> (i32, i32) {
    %c0_i32 = arith.constant 0 : i32
    %c0_i32_0 = arith.constant 0 : i32
    %c0_i32_1 = arith.constant 0 : i32
    return %c0_i32, %c0_i32_0 : i32, i32
  }
  func.func @transform_4(%arg0: i32, %arg1: i32) -> (i32, i32) {
    %c0_i32 = arith.constant 0 : i32
    %c0_i32_0 = arith.constant 0 : i32
    %c0_i32_1 = arith.constant 0 : i32
    return %c0_i32, %c0_i32_0 : i32, i32
  }
  func.func @transform_5(%arg0: i32, %arg1: i32) -> (i32, i32) {
    %c0_i32 = arith.constant 0 : i32
    %c0_i32_0 = arith.constant 0 : i32
    %c0_i32_1 = arith.constant 0 : i32
    return %c0_i32, %c0_i32_0 : i32, i32
  }
  func.func @transform_6(%arg0: i32, %arg1: i32) -> (i32, i32) {
    %c0_i32 = arith.constant 0 : i32
    %c0_i32_0 = arith.constant 0 : i32
    %c0_i32_1 = arith.constant 0 : i32
    return %c0_i32, %c0_i32_0 : i32, i32
  }
  func.func @transform_7(%arg0: i32, %arg1: i32) -> (i32, i32) {
    %c0_i32 = arith.constant 0 : i32
    %c0_i32_0 = arith.constant 0 : i32
    %c0_i32_1 = arith.constant 0 : i32
    return %c0_i32, %c0_i32_0 : i32, i32
  }
  func.func @transform_8(%arg0: i32, %arg1: i32) -> (i32, i32) {
    %c0_i32 = arith.constant 0 : i32
    %c0_i32_0 = arith.constant 0 : i32
    %c0_i32_1 = arith.constant 0 : i32
    return %c0_i32, %c0_i32_0 : i32, i32
  }
  func.func @transform_9(%arg0: i32, %arg1: i32) -> (i32, i32) {
    %c0_i32 = arith.constant 0 : i32
    %c0_i32_0 = arith.constant 0 : i32
    %c0_i32_1 = arith.constant 0 : i32
    return %c0_i32, %c0_i32_0 : i32, i32
  }
  func.func @transform_10(%arg0: i32, %arg1: i32) -> (i32, i32) {
    %c0_i32 = arith.constant 0 : i32
    %c0_i32_0 = arith.constant 0 : i32
    %c0_i32_1 = arith.constant 0 : i32
    return %c0_i32, %c0_i32_0 : i32, i32
  }
  func.func @transform_11(%arg0: i32, %arg1: i32) -> (i32, i32) {
    %c0_i32 = arith.constant 0 : i32
    %c0_i32_0 = arith.constant 0 : i32
    %c0_i32_1 = arith.constant 0 : i32
    return %c0_i32, %c0_i32_0 : i32, i32
  }
  func.func @transform_12(%arg0: i32, %arg1: i32) -> (i32, i32, i32) {
    %c0_i32 = arith.constant 0 : i32
    %c0_i32_0 = arith.constant 0 : i32
    return %arg1, %arg0, %c0_i32 : i32, i32, i32
  }
}

</mosaic_0001>

<llo_original>
// kernel: tpu_custom_call.1
$region0: #{tpu_custom_call.1}
  #allocation0 [shape = 'u32[]', space=smem, size = 0x4, offset = 0x4, fixed_abs, tag = 'smem constant byte address 0x4 - core index']
  #allocation1 [shape = 'u32[144,128]{1,0:T(1,128)}', space=vmem, size = 0x12000, scoped, tag = 'internal scratch']
  #allocation2 [shape = 'f32[8,8,512]{2,1,0:T(8,128)}', space=vmem, size = 0x20000, scoped, tag = 'scratch operand']
  #allocation3 [shape = 'f32[8,8,128]{2,1,0:T(8,128)}', space=vmem, size = 0x8000, scoped, tag = 'scratch operand']
  #allocation4 [shape = 'f32[8,8,128]{2,1,0:T(8,128)}', space=vmem, size = 0x8000, scoped, tag = 'scratch operand']
  #allocation5 [shape = 'f32[3,8,128]{2,1,0:T(8,128)}', space=vmem, size = 0x3000, scoped, tag = 'scratch operand']
  #allocation6 [shape = 'f32[3,8,128]{2,1,0:T(8,128)}', space=vmem, size = 0x3000, scoped, tag = 'scratch operand']
  %s0 = inlined_call_operand.vmem [shape: f32[16,8,8], index: 0, kind: input, shape index: {}]
  %s1 = inlined_call_operand.vmem [shape: f32[8,512], index: 1, kind: input, shape index: {}]
  %s2 = inlined_call_operand.hbm [shape: f32[128,512], index: 2, kind: input, shape index: {}]
  %s3 = inlined_call_operand.vmem [shape: f32[1,512], index: 3, kind: input, shape index: {}]
  %s4 = inlined_call_operand.hbm [shape: f32[128,512], index: 4, kind: input, shape index: {}]
  %s5 = inlined_call_operand.hbm [shape: f32[128,512], index: 5, kind: input, shape index: {}]
  %s6 = inlined_call_operand.vmem [shape: f32[1,512], index: 6, kind: input, shape index: {}]
  %s7 = inlined_call_operand.hbm [shape: f32[128,512], index: 7, kind: input, shape index: {}]
  %s8 = inlined_call_operand.hbm [shape: f32[128,512], index: 8, kind: input, shape index: {}]
  %s9 = inlined_call_operand.vmem [shape: f32[1,512], index: 9, kind: input, shape index: {}]
  %s10 = inlined_call_operand.vmem [shape: f32[128,128], index: 10, kind: input, shape index: {}]
  %s11 = inlined_call_operand.vmem [shape: f32[1,128], index: 11, kind: input, shape index: {}]
  %s12 = inlined_call_operand.hbm [shape: f32[16,8,128], index: 12, kind: output, shape index: {}]
  %s13 = sld [smem:[#allocation0]]
  $region105: #{tpu_custom_call.1} parent=0
    _
  %s15 = ssub.s32 1, %s13
  %s16 = scalar_select 0, %s15, %s13
  $region1: #{tpu_custom_call.1} parent=0
    #allocation7 [shape = 'u8[262144]{0}', space=vmem, size = 0x40000, scoped, tag = 'input window, operand 2, single buffered']
    #allocation8 [shape = 's32[2]{0}', space=sflag, size = 0x8, scoped, tag = 'scoped memory for tpu_custom_call.1']
    #allocation9 [shape = 's32[2]{0}', space=sflag, size = 0x8, scoped, tag = 'scoped memory for tpu_custom_call.1']
    #allocation10 [shape = 'u8[262144]{0}', space=vmem, size = 0x40000, scoped, tag = 'input window, operand 4, single buffered']
    #allocation11 [shape = 's32[1]{0}', space=sflag, size = 0x4, scoped, tag = 'scoped memory for tpu_custom_call.1']
    #allocation12 [shape = 'u8[262144]{0}', space=vmem, size = 0x40000, scoped, tag = 'input window, operand 5, single buffered']
    #allocation13 [shape = 'u8[262144]{0}', space=vmem, size = 0x40000, scoped, tag = 'input window, operand 7, single buffered']
    #allocation14 [shape = 's32[1]{0}', space=sflag, size = 0x4, scoped, tag = 'scoped memory for tpu_custom_call.1']
    #allocation15 [shape = 'u8[262144]{0}', space=vmem, size = 0x40000, scoped, tag = 'input window, operand 8, single buffered']
    #allocation16 [shape = 'u8[65536]{0}', space=vmem, size = 0x10000, scoped, tag = 'output window, operand 0']
    %17 = vsyncpa [#allocation8], 0
    %18 = vsyncpa [#allocation11], 0
    %19 = vsyncpa [#allocation14], 0
    %20 = vsyncpa [#allocation9], 0
    %s21 = scalar_lea.sflag [#allocation9], 1
    %22 = vsyncpa %s21, 0
    loop: start=0, step=1, limit=4
    $region2: #{tpu_custom_call.1} parent=1 // loop_pre_header
      _
    $region3: #{tpu_custom_call.1} parent=1 // loop_header
      %s24 = sphi 0, %s28
      %p25 = scmp.ge.s32.totalorder %s24, 4
      %s31 = sphi 0, %s43
      %s32 = sphi 0, %s39
      %s33 = sphi 0, %s31
      %s34 = sphi 0, %s32
      %s35 = sphi 0, %s33
      %s36 = sphi 0, %s34
      %s48 = sphi 0, %s50
      %s51 = sphi 0, %s48
      %s52 = sphi 0, %s51
      %s68 = sphi 0, %s52
      %s72 = sphi 0, %s72
      %s74 = sphi 0, %s72
      %s75 = sphi 0, %s74
      %s89 = sphi 0, %s75
      %s93 = sphi 0, %s93
      %s95 = sphi 0, %s93
      %s96 = sphi 0, %s95
      %s110 = sphi 0, %s96
      %s114 = sphi 0, %s114
      %s116 = sphi 0, %s114
      %s117 = sphi 0, %s116
      %s131 = sphi 0, %s117
      %s135 = sphi 0, %s135
      %s137 = sphi 0, %s135
      %s138 = sphi 0, %s137
      %s152 = sphi 0, %s138
      %s156 = sphi 0, %s156
      %s158 = sphi 0, %s156
      %s159 = sphi 0, %s158
      %s173 = sphi 0, %s159
      %s177 = sphi 0, %s177
      %s179 = sphi 0, %s177
      %s180 = sphi 0, %s179
      %s194 = sphi 0, %s180
      %s198 = sphi 0, %s198
      %s200 = sphi 0, %s198
      %s201 = sphi 0, %s200
      %s215 = sphi 0, %s201
      %s219 = sphi 0, %s219
      %s221 = sphi 0, %s219
      %s222 = sphi 0, %s221
      %s236 = sphi 0, %s222
      %s240 = sphi 0, %s240
      %s242 = sphi 0, %s240
      %s243 = sphi 0, %s242
      %s257 = sphi 0, %s243
      %s261 = sphi 0, %s261
      %s263 = sphi 0, %s261
      %s264 = sphi 0, %s263
      %s278 = sphi 0, %s264
      %s282 = sphi 0, %s282
      %s284 = sphi 0, %s282
      %s285 = sphi 0, %s284
      %s299 = sphi 0, %s285
      %s307 = sphi 0, %s309
      %s310 = sphi 0, %s307
      %s311 = sphi 0, %s310
      %s327 = sphi 0, %s311
    $region4: #{tpu_custom_call.1} parent=1 // loop_header_branch
      %27 = sbr.rel (%p25) target = $region8
    $region5: #{tpu_custom_call.1} parent=1 // loop_body
      %s29 = ssub.s32 %s24, 1
      %s30 = ssub.s32 %s24, 2
      %s37 = sadd.s32 1, %s32
      %p38 = scmp.ge.s32.totalorder %s37, 2
      %s39 = scalar_select %p38, 0, %s37
      %s40 = sadd.s32 1, %s31
      %s41 = scalar_select %p38, %s40, %s31
      %p42 = scmp.ge.s32.totalorder %s41, 1
      %s43 = scalar_select %p42, 0, %s41
      %s44 = ssub.s32 %s32, %s39
      %s45 = ssub.s32 %s31, %s43
      %s46 = sor.u32 %s44, %s45
      %p47 = scmp.eq.s32.totalorder %s46, 0
      %s49 = sadd.s32 %s48, 1
      %s50 = scalar_select %p47, %s48, %s49
      %p53 = pneg %p47
      %p54 = scmp.eq.s32.totalorder %s24, 1
      %p55 = por %p53, %p54
      %p56 = scmp.ne.s32.totalorder %s48, %s51
      %p57 = scmp.eq.s32.totalorder %s24, 0
      %p58 = por %p56, %p57
      %p59 = scmp.ne.s32.totalorder %s48, %s51
      %p60 = scmp.eq.s32.totalorder %s29, 1
      %p61 = por %p59, %p60
      %p62 = scmp.ne.s32.totalorder %s51, %s52
      %p63 = scmp.eq.s32.totalorder %s29, 0
      %p64 = por %p62, %p63
      %p65 = scmp.ne.s32.totalorder %s51, %s52
      %p66 = scmp.eq.s32.totalorder %s30, 1
      %p67 = por %p65, %p66
      %p69 = scmp.ne.s32.totalorder %s52, %s68
      %p70 = scmp.eq.s32.totalorder %s30, 0
      %p71 = por %p69, %p70
      %s73 = sadd.s32 %s72, 1
      %p76 = scmp.eq.s32.totalorder %s24, 1
      %p77 = scmp.ne.s32.totalorder %s72, %s74
      %p78 = scmp.eq.s32.totalorder %s24, 0
      %p79 = por %p77, %p78
      %p80 = scmp.ne.s32.totalorder %s72, %s74
      %p81 = scmp.eq.s32.totalorder %s29, 1
      %p82 = por %p80, %p81
      %p83 = scmp.ne.s32.totalorder %s74, %s75
      %p84 = scmp.eq.s32.totalorder %s29, 0
      %p85 = por %p83, %p84
      %p86 = scmp.ne.s32.totalorder %s74, %s75
      %p87 = scmp.eq.s32.totalorder %s30, 1
      %p88 = por %p86, %p87
      %p90 = scmp.ne.s32.totalorder %s75, %s89
      %p91 = scmp.eq.s32.totalorder %s30, 0
      %p92 = por %p90, %p91
      %s94 = sadd.s32 %s93, 1
      %p97 = scmp.eq.s32.totalorder %s24, 1
      %p98 = scmp.ne.s32.totalorder %s93, %s95
      %p99 = scmp.eq.s32.totalorder %s24, 0
      %p100 = por %p98, %p99
      %p101 = scmp.ne.s32.totalorder %s93, %s95
      %p102 = scmp.eq.s32.totalorder %s29, 1
      %p103 = por %p101, %p102
      %p104 = scmp.ne.s32.totalorder %s95, %s96
      %p105 = scmp.eq.s32.totalorder %s29, 0
      %p106 = por %p104, %p105
      %p107 = scmp.ne.s32.totalorder %s95, %s96
      %p108 = scmp.eq.s32.totalorder %s30, 1
      %p109 = por %p107, %p108
      %p111 = scmp.ne.s32.totalorder %s96, %s110
      %p112 = scmp.eq.s32.totalorder %s30, 0
      %p113 = por %p111, %p112
      %s115 = sadd.s32 %s114, 1
      %p118 = scmp.eq.s32.totalorder %s24, 1
      %p119 = scmp.ne.s32.totalorder %s114, %s116
      %p120 = scmp.eq.s32.totalorder %s24, 0
      %p121 = por %p119, %p120
      %p122 = scmp.ne.s32.totalorder %s114, %s116
      %p123 = scmp.eq.s32.totalorder %s29, 1
      %p124 = por %p122, %p123
      %p125 = scmp.ne.s32.totalorder %s116, %s117
      %p126 = scmp.eq.s32.totalorder %s29, 0
      %p127 = por %p125, %p126
      %p128 = scmp.ne.s32.totalorder %s116, %s117
      %p129 = scmp.eq.s32.totalorder %s30, 1
      %p130 = por %p128, %p129
      %p132 = scmp.ne.s32.totalorder %s117, %s131
      %p133 = scmp.eq.s32.totalorder %s30, 0
      %p134 = por %p132, %p133
      %s136 = sadd.s32 %s135, 1
      %p139 = scmp.eq.s32.totalorder %s24, 1
      %p140 = scmp.ne.s32.totalorder %s135, %s137
      %p141 = scmp.eq.s32.totalorder %s24, 0
      %p142 = por %p140, %p141
      %p143 = scmp.ne.s32.totalorder %s135, %s137
      %p144 = scmp.eq.s32.totalorder %s29, 1
      %p145 = por %p143, %p144
      %p146 = scmp.ne.s32.totalorder %s137, %s138
      %p147 = scmp.eq.s32.totalorder %s29, 0
      %p148 = por %p146, %p147
      %p149 = scmp.ne.s32.totalorder %s137, %s138
      %p150 = scmp.eq.s32.totalorder %s30, 1
      %p151 = por %p149, %p150
      %p153 = scmp.ne.s32.totalorder %s138, %s152
      %p154 = scmp.eq.s32.totalorder %s30, 0
      %p155 = por %p153, %p154
      %s157 = sadd.s32 %s156, 1
      %p160 = scmp.eq.s32.totalorder %s24, 1
      %p161 = scmp.ne.s32.totalorder %s156, %s158
      %p162 = scmp.eq.s32.totalorder %s24, 0
      %p163 = por %p161, %p162
      %p164 = scmp.ne.s32.totalorder %s156, %s158
      %p165 = scmp.eq.s32.totalorder %s29, 1
      %p166 = por %p164, %p165
      %p167 = scmp.ne.s32.totalorder %s158, %s159
      %p168 = scmp.eq.s32.totalorder %s29, 0
      %p169 = por %p167, %p168
      %p170 = scmp.ne.s32.totalorder %s158, %s159
      %p171 = scmp.eq.s32.totalorder %s30, 1
      %p172 = por %p170, %p171
      %p174 = scmp.ne.s32.totalorder %s159, %s173
      %p175 = scmp.eq.s32.totalorder %s30, 0
      %p176 = por %p174, %p175
      %s178 = sadd.s32 %s177, 1
      %p181 = scmp.eq.s32.totalorder %s24, 1
      %p182 = scmp.ne.s32.totalorder %s177, %s179
      %p183 = scmp.eq.s32.totalorder %s24, 0
      %p184 = por %p182, %p183
      %p185 = scmp.ne.s32.totalorder %s177, %s179
      %p186 = scmp.eq.s32.totalorder %s29, 1
      %p187 = por %p185, %p186
      %p188 = scmp.ne.s32.totalorder %s179, %s180
      %p189 = scmp.eq.s32.totalorder %s29, 0
      %p190 = por %p188, %p189
      %p191 = scmp.ne.s32.totalorder %s179, %s180
      %p192 = scmp.eq.s32.totalorder %s30, 1
      %p193 = por %p191, %p192
      %p195 = scmp.ne.s32.totalorder %s180, %s194
      %p196 = scmp.eq.s32.totalorder %s30, 0
      %p197 = por %p195, %p196
      %s199 = sadd.s32 %s198, 1
      %p202 = scmp.eq.s32.totalorder %s24, 1
      %p203 = scmp.ne.s32.totalorder %s198, %s200
      %p204 = scmp.eq.s32.totalorder %s24, 0
      %p205 = por %p203, %p204
      %p206 = scmp.ne.s32.totalorder %s198, %s200
      %p207 = scmp.eq.s32.totalorder %s29, 1
      %p208 = por %p206, %p207
      %p209 = scmp.ne.s32.totalorder %s200, %s201
      %p210 = scmp.eq.s32.totalorder %s29, 0
      %p211 = por %p209, %p210
      %p212 = scmp.ne.s32.totalorder %s200, %s201
      %p213 = scmp.eq.s32.totalorder %s30, 1
      %p214 = por %p212, %p213
      %p216 = scmp.ne.s32.totalorder %s201, %s215
      %p217 = scmp.eq.s32.totalorder %s30, 0
      %p218 = por %p216, %p217
      %s220 = sadd.s32 %s219, 1
      %p223 = scmp.eq.s32.totalorder %s24, 1
      %p224 = scmp.ne.s32.totalorder %s219, %s221
      %p225 = scmp.eq.s32.totalorder %s24, 0
      %p226 = por %p224, %p225
      %p227 = scmp.ne.s32.totalorder %s219, %s221
      %p228 = scmp.eq.s32.totalorder %s29, 1
      %p229 = por %p227, %p228
      %p230 = scmp.ne.s32.totalorder %s221, %s222
      %p231 = scmp.eq.s32.totalorder %s29, 0
      %p232 = por %p230, %p231
      %p233 = scmp.ne.s32.totalorder %s221, %s222
      %p234 = scmp.eq.s32.totalorder %s30, 1
      %p235 = por %p233, %p234
      %p237 = scmp.ne.s32.totalorder %s222, %s236
      %p238 = scmp.eq.s32.totalorder %s30, 0
      %p239 = por %p237, %p238
      %s241 = sadd.s32 %s240, 1
      %p244 = scmp.eq.s32.totalorder %s24, 1
      %p245 = scmp.ne.s32.totalorder %s240, %s242
      %p246 = scmp.eq.s32.totalorder %s24, 0
      %p247 = por %p245, %p246
      %p248 = scmp.ne.s32.totalorder %s240, %s242
      %p249 = scmp.eq.s32.totalorder %s29, 1
      %p250 = por %p248, %p249
      %p251 = scmp.ne.s32.totalorder %s242, %s243
      %p252 = scmp.eq.s32.totalorder %s29, 0
      %p253 = por %p251, %p252
      %p254 = scmp.ne.s32.totalorder %s242, %s243
      %p255 = scmp.eq.s32.totalorder %s30, 1
      %p256 = por %p254, %p255
      %p258 = scmp.ne.s32.totalorder %s243, %s257
      %p259 = scmp.eq.s32.totalorder %s30, 0
      %p260 = por %p258, %p259
      %s262 = sadd.s32 %s261, 1
      %p265 = scmp.eq.s32.totalorder %s24, 1
      %p266 = scmp.ne.s32.totalorder %s261, %s263
      %p267 = scmp.eq.s32.totalorder %s24, 0
      %p268 = por %p266, %p267
      %p269 = scmp.ne.s32.totalorder %s261, %s263
      %p270 = scmp.eq.s32.totalorder %s29, 1
      %p271 = por %p269, %p270
      %p272 = scmp.ne.s32.totalorder %s263, %s264
      %p273 = scmp.eq.s32.totalorder %s29, 0
      %p274 = por %p272, %p273
      %p275 = scmp.ne.s32.totalorder %s263, %s264
      %p276 = scmp.eq.s32.totalorder %s30, 1
      %p277 = por %p275, %p276
      %p279 = scmp.ne.s32.totalorder %s264, %s278
      %p280 = scmp.eq.s32.totalorder %s30, 0
      %p281 = por %p279, %p280
      %s283 = sadd.s32 %s282, 1
      %p286 = scmp.eq.s32.totalorder %s24, 1
      %p287 = scmp.ne.s32.totalorder %s282, %s284
      %p288 = scmp.eq.s32.totalorder %s24, 0
      %p289 = por %p287, %p288
      %p290 = scmp.ne.s32.totalorder %s282, %s284
      %p291 = scmp.eq.s32.totalorder %s29, 1
      %p292 = por %p290, %p291
      %p293 = scmp.ne.s32.totalorder %s284, %s285
      %p294 = scmp.eq.s32.totalorder %s29, 0
      %p295 = por %p293, %p294
      %p296 = scmp.ne.s32.totalorder %s284, %s285
      %p297 = scmp.eq.s32.totalorder %s30, 1
      %p298 = por %p296, %p297
      %p300 = scmp.ne.s32.totalorder %s285, %s299
      %p301 = scmp.eq.s32.totalorder %s30, 0
      %p302 = por %p300, %p301
      %s303 = ssub.s32 %s32, %s39
      %s304 = ssub.s32 %s31, %s43
      %s305 = sor.u32 %s303, %s304
      %p306 = scmp.eq.s32.totalorder %s305, 0
      %s308 = sadd.s32 %s307, 1
      %s309 = scalar_select %p306, %s307, %s308
      %p312 = pneg %p306
      %p313 = scmp.eq.s32.totalorder %s24, 1
      %p314 = por %p312, %p313
      %p315 = scmp.ne.s32.totalorder %s307, %s310
      %p316 = scmp.eq.s32.totalorder %s24, 0
      %p317 = por %p315, %p316
      %p318 = scmp.ne.s32.totalorder %s307, %s310
      %p319 = scmp.eq.s32.totalorder %s29, 1
      %p320 = por %p318, %p319
      %p321 = scmp.ne.s32.totalorder %s310, %s311
      %p322 = scmp.eq.s32.totalorder %s29, 0
      %p323 = por %p321, %p322
      %p324 = scmp.ne.s32.totalorder %s310, %s311
      %p325 = scmp.eq.s32.totalorder %s30, 1
      %p326 = por %p324, %p325
      %p328 = scmp.ne.s32.totalorder %s311, %s327
      %p329 = scmp.eq.s32.totalorder %s30, 0
      %p330 = por %p328, %p329
      %p331 = scmp.le.s32.totalorder 1, %s24
      %p332 = scmp.lt.s32.totalorder %s24, 3
      %p333 = pnand %p331, %p332
      %p334 = pneg %p333
      // Predicated region
      $region9: #{tpu_custom_call.1} parent=5 // pred_check
        _
      $region10: #{tpu_custom_call.1} parent=5 // pred_check_branch
        %336 = sbr.rel (%p333) target = $region12
      $region11: #{tpu_custom_call.1} parent=5 // pred_region
        %s337 = ssub.s32 %s24, 1
        // Predicated region
        $region13: #{tpu_custom_call.1} parent=11 // pred_check
          %p338 = pneg %p85
        $region14: #{tpu_custom_call.1} parent=11 // pred_check_branch
          %340 = sbr.rel (%p338) target = $region16
        $region15: #{tpu_custom_call.1} parent=11 // pred_region
          _
        $region16: #{tpu_custom_call.1} parent=11 // pred_fallthru
          _
        // Predicated region
        $region17: #{tpu_custom_call.1} parent=11 // pred_check
          %p341 = pneg %p106
        $region18: #{tpu_custom_call.1} parent=11 // pred_check_branch
          %343 = sbr.rel (%p341) target = $region20
        $region19: #{tpu_custom_call.1} parent=11 // pred_region
          %s345 = ssub.s32 8192, 8192
          %346 = vsyncadd [#allocation8], %s345
          %s347 = sshll.u32 [#allocation7], 4
          %s348 = int_to_ptr.vmem [resolvable:$true] %s347
          %353 = dma.hbm_to_vmem [thread:$0]  %s2, 8192, %s348, [#allocation8], 512, 512, 32
        $region20: #{tpu_custom_call.1} parent=11 // pred_fallthru
          _
        // Predicated region
        $region21: #{tpu_custom_call.1} parent=11 // pred_check
          %p354 = pneg %p127
        $region22: #{tpu_custom_call.1} parent=11 // pred_check_branch
          %356 = sbr.rel (%p354) target = $region24
        $region23: #{tpu_custom_call.1} parent=11 // pred_region
          _
        $region24: #{tpu_custom_call.1} parent=11 // pred_fallthru
          _
        // Predicated region
        $region25: #{tpu_custom_call.1} parent=11 // pred_check
          %p357 = pneg %p148
        $region26: #{tpu_custom_call.1} parent=11 // pred_check_branch
          %359 = sbr.rel (%p357) target = $region28
        $region27: #{tpu_custom_call.1} parent=11 // pred_region
          %s361 = ssub.s32 8192, 8192
          %362 = vsyncadd [#allocation11], %s361
          %s363 = sshll.u32 [#allocation10], 4
          %s364 = int_to_ptr.vmem [resolvable:$true] %s363
          %369 = dma.hbm_to_vmem [thread:$0]  %s4, 8192, %s364, [#allocation11], 512, 512, 32
        $region28: #{tpu_custom_call.1} parent=11 // pred_fallthru
          _
        // Predicated region
        $region29: #{tpu_custom_call.1} parent=11 // pred_check
          %p370 = pneg %p169
        $region30: #{tpu_custom_call.1} parent=11 // pred_check_branch
          %372 = sbr.rel (%p370) target = $region32
        $region31: #{tpu_custom_call.1} parent=11 // pred_region
          %s374 = ssub.s32 8192, 8192
          %375 = vsyncadd [#allocation11], %s374
          %s376 = sshll.u32 [#allocation12], 4
          %s377 = int_to_ptr.vmem [resolvable:$true] %s376
          %382 = dma.hbm_to_vmem [thread:$0]  %s5, 8192, %s377, [#allocation11], 512, 512, 32
        $region32: #{tpu_custom_call.1} parent=11 // pred_fallthru
          _
        // Predicated region
        $region33: #{tpu_custom_call.1} parent=11 // pred_check
          %p383 = pneg %p190
        $region34: #{tpu_custom_call.1} parent=11 // pred_check_branch
          %385 = sbr.rel (%p383) target = $region36
        $region35: #{tpu_custom_call.1} parent=11 // pred_region
          _
        $region36: #{tpu_custom_call.1} parent=11 // pred_fallthru
          _
        // Predicated region
        $region37: #{tpu_custom_call.1} parent=11 // pred_check
          %p386 = pneg %p211
        $region38: #{tpu_custom_call.1} parent=11 // pred_check_branch
          %388 = sbr.rel (%p386) target = $region40
        $region39: #{tpu_custom_call.1} parent=11 // pred_region
          %s390 = ssub.s32 8192, 8192
          %391 = vsyncadd [#allocation14], %s390
          %s392 = sshll.u32 [#allocation13], 4
          %s393 = int_to_ptr.vmem [resolvable:$true] %s392
          %398 = dma.hbm_to_vmem [thread:$0]  %s7, 8192, %s393, [#allocation14], 512, 512, 32
        $region40: #{tpu_custom_call.1} parent=11 // pred_fallthru
          _
        // Predicated region
        $region41: #{tpu_custom_call.1} parent=11 // pred_check
          %p399 = pneg %p232
        $region42: #{tpu_custom_call.1} parent=11 // pred_check_branch
          %401 = sbr.rel (%p399) target = $region44
        $region43: #{tpu_custom_call.1} parent=11 // pred_region
          %s403 = ssub.s32 8192, 8192
          %404 = vsyncadd [#allocation14], %s403
          %s405 = sshll.u32 [#allocation15], 4
          %s406 = int_to_ptr.vmem [resolvable:$true] %s405
          %411 = dma.hbm_to_vmem [thread:$0]  %s8, 8192, %s406, [#allocation14], 512, 512, 32
        $region44: #{tpu_custom_call.1} parent=11 // pred_fallthru
          _
        // Predicated region
        $region45: #{tpu_custom_call.1} parent=11 // pred_check
          %p412 = pneg %p253
        $region46: #{tpu_custom_call.1} parent=11 // pred_check_branch
          %414 = sbr.rel (%p412) target = $region48
        $region47: #{tpu_custom_call.1} parent=11 // pred_region
          _
        $region48: #{tpu_custom_call.1} parent=11 // pred_fallthru
          _
        // Predicated region
        $region49: #{tpu_custom_call.1} parent=11 // pred_check
          %p415 = pneg %p274
        $region50: #{tpu_custom_call.1} parent=11 // pred_check_branch
          %417 = sbr.rel (%p415) target = $region52
        $region51: #{tpu_custom_call.1} parent=11 // pred_region
          _
        $region52: #{tpu_custom_call.1} parent=11 // pred_fallthru
          _
        // Predicated region
        $region53: #{tpu_custom_call.1} parent=11 // pred_check
          %p418 = pneg %p295
        $region54: #{tpu_custom_call.1} parent=11 // pred_check_branch
          %420 = sbr.rel (%p418) target = $region56
        $region55: #{tpu_custom_call.1} parent=11 // pred_region
          _
        $region56: #{tpu_custom_call.1} parent=11 // pred_fallthru
          _
      $region12: #{tpu_custom_call.1} parent=5 // pred_fallthru
        _
      %p421 = scmp.lt.s32.totalorder %s24, 2
      // Predicated region
      $region57: #{tpu_custom_call.1} parent=5 // pred_check
        %p422 = pneg %p421
      $region58: #{tpu_custom_call.1} parent=5 // pred_check_branch
        %424 = sbr.rel (%p422) target = $region60
      $region59: #{tpu_custom_call.1} parent=5 // pred_region
        // Predicated region
        $region61: #{tpu_custom_call.1} parent=59 // pred_check
          %p425 = pneg %p58
        $region62: #{tpu_custom_call.1} parent=59 // pred_check_branch
          %427 = sbr.rel (%p425) target = $region64
        $region63: #{tpu_custom_call.1} parent=59 // pred_region
          %s428 = smul.u32 8, %s32
          %p429 = scmp.lt.s32.totalorder %s428, 15
          %s430 = scalar_select %p429, %s428, 15
          %p431 = scmp.lt.s32.totalorder %s31, 0
          %s432 = scalar_select %p431, %s31, 0
          %s433 = sadd.s32 %s432, %s430
          %s434 = smul.addr %s433, 8
          %s435 = scalar_lea.vmem %s0, %s434
          %s436 = smul.u32 8, %s32
        $region64: #{tpu_custom_call.1} parent=59 // pred_fallthru
          _
      $region60: #{tpu_custom_call.1} parent=5 // pred_fallthru
        _
      %p437 = scmp.le.s32.totalorder 1, %s24
      %p438 = scmp.lt.s32.totalorder %s24, 3
      %p439 = pnand %p437, %p438
      %p440 = pneg %p439
      // Predicated region
      $region65: #{tpu_custom_call.1} parent=5 // pred_check
        _
      $region66: #{tpu_custom_call.1} parent=5 // pred_check_branch
        %442 = sbr.rel (%p439) target = $region68
      $region67: #{tpu_custom_call.1} parent=5 // pred_region
        %s443 = ssub.s32 %s24, 1
        // Predicated region
        $region69: #{tpu_custom_call.1} parent=67 // pred_check
          %p444 = pneg %p106
        $region70: #{tpu_custom_call.1} parent=67 // pred_check_branch
          %446 = sbr.rel (%p444) target = $region72
        $region71: #{tpu_custom_call.1} parent=67 // pred_region
          %447 = dma.done [#allocation8], 8192
        $region72: #{tpu_custom_call.1} parent=67 // pred_fallthru
          _
        // Predicated region
        $region73: #{tpu_custom_call.1} parent=67 // pred_check
          %p448 = pneg %p148
        $region74: #{tpu_custom_call.1} parent=67 // pred_check_branch
          %450 = sbr.rel (%p448) target = $region76
        $region75: #{tpu_custom_call.1} parent=67 // pred_region
          %451 = dma.done [#allocation11], 8192
        $region76: #{tpu_custom_call.1} parent=67 // pred_fallthru
          _
        // Predicated region
        $region77: #{tpu_custom_call.1} parent=67 // pred_check
          %p452 = pneg %p169
        $region78: #{tpu_custom_call.1} parent=67 // pred_check_branch
          %454 = sbr.rel (%p452) target = $region80
        $region79: #{tpu_custom_call.1} parent=67 // pred_region
          %455 = dma.done [#allocation11], 8192
        $region80: #{tpu_custom_call.1} parent=67 // pred_fallthru
          _
        // Predicated region
        $region81: #{tpu_custom_call.1} parent=67 // pred_check
          %p456 = pneg %p211
        $region82: #{tpu_custom_call.1} parent=67 // pred_check_branch
          %458 = sbr.rel (%p456) target = $region84
        $region83: #{tpu_custom_call.1} parent=67 // pred_region
          %459 = dma.done [#allocation14], 8192
        $region84: #{tpu_custom_call.1} parent=67 // pred_fallthru
          _
        // Predicated region
        $region85: #{tpu_custom_call.1} parent=67 // pred_check
          %p460 = pneg %p232
        $region86: #{tpu_custom_call.1} parent=67 // pred_check_branch
          %462 = sbr.rel (%p460) target = $region88
        $region87: #{tpu_custom_call.1} parent=67 // pred_region
          %463 = dma.done [#allocation14], 8192
        $region88: #{tpu_custom_call.1} parent=67 // pred_fallthru
          _
        %s464 = smul.u32 8, %s34
        %p465 = scmp.lt.s32.totalorder %s464, 15
        %s466 = scalar_select %p465, %s464, 15
        %p467 = scmp.lt.s32.totalorder %s33, 0
        %s468 = scalar_select %p467, %s33, 0
        %s469 = sadd.s32 %s468, %s466
        %s470 = smul.addr %s469, 8
        %s471 = scalar_lea.vmem %s0, %s470
        %p472 = pneg %p64
        %p473 = pneg %p61
        %p474 = pneg %p85
        %p475 = pneg %p82
        %p476 = pneg %p106
        %p477 = pneg %p103
        %p478 = pneg %p127
        %p479 = pneg %p124
        %p480 = pneg %p148
        %p481 = pneg %p145
        %p482 = pneg %p169
        %p483 = pneg %p166
        %p484 = pneg %p190
        %p485 = pneg %p187
        %p486 = pneg %p211
        %p487 = pneg %p208
        %p488 = pneg %p232
        %p489 = pneg %p229
        %p490 = pneg %p253
        %p491 = pneg %p250
        %p492 = pneg %p274
        %p493 = pneg %p271
        %p494 = pneg %p295
        %p495 = pneg %p292
        %p496 = pneg %p323
        %p497 = pneg %p320
        %s498 = sand.u32 %s310, 1
        %s499 = scalar_lea.sflag [#allocation9], %s498
        %s500 = sand.u32 %s310, 1
        %s501 = smul.addr %s500, 64
        %s502 = scalar_lea.vmem [#allocation16], %s501
        %s503 = smul.u32 8, %s34
        %p504 = scmp.lt.s32.totalorder %s503, 15
        %s505 = scalar_select %p504, %s503, 15
        %p506 = scmp.lt.s32.totalorder %s33, 0
        %s507 = scalar_select %p506, %s33, 0
        %s508 = sadd.s32 %s507, %s505
        %s509 = smul.addr %s508, 8
        %s510 = scalar_lea.vmem %s0, %s509
        %s511 = smul.u32 8, %s34
        %s512 = smul.u32 8, %s34
        %p513 = scmp.eq.s32.totalorder %s34, 0
        // Predicated region
        $region89: #{tpu_custom_call.1} parent=67 // pred_check
          %p514 = pneg %p513
        $region90: #{tpu_custom_call.1} parent=67 // pred_check_branch
          %516 = sbr.rel (%p514) target = $region92
        $region91: #{tpu_custom_call.1} parent=67 // pred_region
          %517 = vst [vmem:[#allocation5] sm:$0xff] 0.0
          %518 = vst [vmem:[#allocation5 + $0x8] sm:$0xff] 0.0
          %519 = vst [vmem:[#allocation5 + $0x10] sm:$0xff] 0.0
          %520 = vst [vmem:[#allocation6] sm:$0xff] 0.0
          %521 = vst [vmem:[#allocation6 + $0x8] sm:$0xff] 0.0
          %522 = vst [vmem:[#allocation6 + $0x10] sm:$0xff] 0.0
        $region92: #{tpu_custom_call.1} parent=67 // pred_fallthru
          _
        %v523 = vld [vmem:[%s1] sm:$0xff]
        %v524 = vld [vmem:[%s1 + $0x8] sm:$0xff]
        %v525 = vld [vmem:[%s1 + $0x10] sm:$0xff]
        %v526 = vld [vmem:[%s1 + $0x18] sm:$0xff]
        %v527 = vld [vmem:[#allocation7] sm:$0xff]
        %v528 = vld [vmem:[#allocation7 + $0x8] sm:$0xff]
        %v529 = vld [vmem:[#allocation7 + $0x10] sm:$0xff]
        %v530 = vld [vmem:[#allocation7 + $0x18] sm:$0xff]
        %v531 = vld [vmem:[#allocation7 + $0x20] sm:$0xff]
        %v532 = vld [vmem:[#allocation7 + $0x28] sm:$0xff]
        %v533 = vld [vmem:[#allocation7 + $0x30] sm:$0xff]
        %v534 = vld [vmem:[#allocation7 + $0x38] sm:$0xff]
        %v535 = vld [vmem:[#allocation7 + $0x40] sm:$0xff]
        %v536 = vld [vmem:[#allocation7 + $0x48] sm:$0xff]
        %v537 = vld [vmem:[#allocation7 + $0x50] sm:$0xff]
        %v538 = vld [vmem:[#allocation7 + $0x58] sm:$0xff]
        %v539 = vld [vmem:[#allocation7 + $0x60] sm:$0xff]
        %v540 = vld [vmem:[#allocation7 + $0x68] sm:$0xff]
        %v541 = vld [vmem:[#allocation7 + $0x70] sm:$0xff]
        %v542 = vld [vmem:[#allocation7 + $0x78] sm:$0xff]
        %v543 = vld [vmem:[#allocation7 + $0x80] sm:$0xff]
        %v544 = vld [vmem:[#allocation7 + $0x88] sm:$0xff]
        %v545 = vld [vmem:[#allocation7 + $0x90] sm:$0xff]
        %v546 = vld [vmem:[#allocation7 + $0x98] sm:$0xff]
        %v547 = vld [vmem:[#allocation7 + $0xa0] sm:$0xff]
        %v548 = vld [vmem:[#allocation7 + $0xa8] sm:$0xff]
        %v549 = vld [vmem:[#allocation7 + $0xb0] sm:$0xff]
        %v550 = vld [vmem:[#allocation7 + $0xb8] sm:$0xff]
        %v551 = vld [vmem:[#allocation7 + $0xc0] sm:$0xff]
        %v552 = vld [vmem:[#allocation7 + $0xc8] sm:$0xff]
        %v553 = vld [vmem:[#allocation7 + $0xd0] sm:$0xff]
        %v554 = vld [vmem:[#allocation7 + $0xd8] sm:$0xff]
        %v555 = vld [vmem:[#allocation7 + $0xe0] sm:$0xff]
        %v556 = vld [vmem:[#allocation7 + $0xe8] sm:$0xff]
        %v557 = vld [vmem:[#allocation7 + $0xf0] sm:$0xff]
        %v558 = vld [vmem:[#allocation7 + $0xf8] sm:$0xff]
        %v559 = vld [vmem:[#allocation7 + $0x100] sm:$0xff]
        %v560 = vld [vmem:[#allocation7 + $0x108] sm:$0xff]
        %v561 = vld [vmem:[#allocation7 + $0x110] sm:$0xff]
        %v562 = vld [vmem:[#allocation7 + $0x118] sm:$0xff]
        %v563 = vld [vmem:[#allocation7 + $0x120] sm:$0xff]
        %v564 = vld [vmem:[#allocation7 + $0x128] sm:$0xff]
        %v565 = vld [vmem:[#allocation7 + $0x130] sm:$0xff]
        %v566 = vld [vmem:[#allocation7 + $0x138] sm:$0xff]
        %v567 = vld [vmem:[#allocation7 + $0x140] sm:$0xff]
        %v568 = vld [vmem:[#allocation7 + $0x148] sm:$0xff]
        %v569 = vld [vmem:[#allocation7 + $0x150] sm:$0xff]
        %v570 = vld [vmem:[#allocation7 + $0x158] sm:$0xff]
        %v571 = vld [vmem:[#allocation7 + $0x160] sm:$0xff]
        %v572 = vld [vmem:[#allocation7 + $0x168] sm:$0xff]
        %v573 = vld [vmem:[#allocation7 + $0x170] sm:$0xff]
        %v574 = vld [vmem:[#allocation7 + $0x178] sm:$0xff]
        %v575 = vld [vmem:[#allocation7 + $0x180] sm:$0xff]
        %v576 = vld [vmem:[#allocation7 + $0x188] sm:$0xff]
        %v577 = vld [vmem:[#allocation7 + $0x190] sm:$0xff]
        %v578 = vld [vmem:[#allocation7 + $0x198] sm:$0xff]
        %v579 = vld [vmem:[#allocation7 + $0x1a0] sm:$0xff]
        %v580 = vld [vmem:[#allocation7 + $0x1a8] sm:$0xff]
        %v581 = vld [vmem:[#allocation7 + $0x1b0] sm:$0xff]
        %v582 = vld [vmem:[#allocation7 + $0x1b8] sm:$0xff]
        %v583 = vld [vmem:[#allocation7 + $0x1c0] sm:$0xff]
        %v584 = vld [vmem:[#allocation7 + $0x1c8] sm:$0xff]
        %v585 = vld [vmem:[#allocation7 + $0x1d0] sm:$0xff]
        %v586 = vld [vmem:[#allocation7 + $0x1d8] sm:$0xff]
        %v587 = vld [vmem:[#allocation7 + $0x1e0] sm:$0xff]
        %v588 = vld [vmem:[#allocation7 + $0x1e8] sm:$0xff]
        %v589 = vld [vmem:[#allocation7 + $0x1f0] sm:$0xff]
        %v590 = vld [vmem:[#allocation7 + $0x1f8] sm:$0xff]
        %v591 = vld [vmem:[%s3] sm:$0xf]
        %v592 = vld [vmem:[%s510] sm:$0xff]
        %v593 = vld [vmem:[%s510 + $0x8] sm:$0xff]
        %v594 = vld [vmem:[%s510 + $0x10] sm:$0xff]
        %v595 = vld [vmem:[%s510 + $0x18] sm:$0xff]
        %v596 = vld [vmem:[%s510 + $0x20] sm:$0xff]
        %v597 = vld [vmem:[%s510 + $0x28] sm:$0xff]
        %v598 = vld [vmem:[%s510 + $0x30] sm:$0xff]
        %v599 = vld [vmem:[%s510 + $0x38] sm:$0xff]
        %v601 = vlaneseq
        %v602 = vshrl.u32 %v601, 7
        %v603 = vsub.s32 0, %v602
        %v604 = vrot.slane %v591, %v603
        %v605 = vlaneseq
        %v606 = vshrl.u32 %v605, 7
        %v607 = vsub.s32 1, %v606
        %v608 = vrot.slane %v591, %v607
        %v609 = vlaneseq
        %v610 = vshrl.u32 %v609, 7
        %v611 = vsub.s32 2, %v610
        %v612 = vrot.slane %v591, %v611
        %v613 = vlaneseq
        %v614 = vshrl.u32 %v613, 7
        %v615 = vsub.s32 3, %v614
        %v616 = vrot.slane %v591, %v615
        %vm621 = vcmask 64512
        %v623 = vsel %vm621, %v592, 0
        %v626 = vsel %vm621, %v593, 0
        %v629 = vsel %vm621, %v594, 0
        %v632 = vsel %vm621, %v595, 0
        %v635 = vsel %vm621, %v596, 0
        %v638 = vsel %vm621, %v597, 0
        %v641 = vsel %vm621, %v598, 0
        %v644 = vsel %vm621, %v599, 0
        %646 = vmatprep.subr.mxu0 %v524
        %647 = vmatpush1.msra.mxu0 %v523
        %648 = vmatprep.subr.mxu0 0.0
        %649 = vmatpush1.msra.mxu0 0.0
        %650 = vmatprep.subr.mxu0 0.0
        %651 = vmatpush1.msra.mxu0 0.0
        %652 = vmatprep.subr.mxu0 0.0
        %653 = vmatpush1.msra.mxu0 0.0
        %654 = vmatprep.subr.mxu0 0.0
        %655 = vmatpush1.msra.mxu0 0.0
        %656 = vmatprep.subr.mxu0 0.0
        %657 = vmatpush1.msra.mxu0 0.0
        %658 = vmatprep.subr.mxu0 0.0
        %659 = vmatpush1.msra.mxu0 0.0
        %660 = vmatprep.subr.mxu0 0.0
        %661 = vmatpush1.msra.mxu0 0.0
        %662 = vmatprep.subr.mxu0 0.0
        %663 = vmatpush1.msra.mxu0 0.0
        %664 = vmatprep.subr.mxu0 0.0
        %665 = vmatpush1.msra.mxu0 0.0
        %666 = vmatprep.subr.mxu0 0.0
        %667 = vmatpush1.msra.mxu0 0.0
        %668 = vmatprep.subr.mxu0 0.0
        %669 = vmatpush1.msra.mxu0 0.0
        %670 = vmatprep.subr.mxu0 0.0
        %671 = vmatpush1.msra.mxu0 0.0
        %672 = vmatprep.subr.mxu0 0.0
        %673 = vmatpush1.msra.mxu0 0.0
        %674 = vmatprep.subr.mxu0 0.0
        %675 = vmatpush1.msra.mxu0 0.0
        %676 = vmatprep.subr.mxu0 0.0
        %677 = vmatpush1.msra.mxu0 0.0
        %678 = vmatprep.subr.mxu0 0.0
        %679 = vmatpush1.msra.mxu0 0.0
        %680 = vmatprep.subr.mxu0 0.0
        %681 = vmatpush1.msra.mxu0 0.0
        %682 = vmatprep.subr.mxu0 0.0
        %683 = vmatpush1.msra.mxu0 0.0
        %684 = vmatprep.subr.mxu0 0.0
        %685 = vmatpush1.msra.mxu0 0.0
        %686 = vmatprep.subr.mxu0 0.0
        %687 = vmatpush1.msra.mxu0 0.0
        %688 = vmatprep.subr.mxu0 0.0
        %689 = vmatpush1.msra.mxu0 0.0
        %690 = vmatprep.subr.mxu0 0.0
        %691 = vmatpush1.msra.mxu0 0.0
        %692 = vmatprep.subr.mxu0 0.0
        %693 = vmatpush1.msra.mxu0 0.0
        %694 = vmatprep.subr.mxu0 0.0
        %695 = vmatpush1.msra.mxu0 0.0
        %696 = vmatprep.subr.mxu0 0.0
        %697 = vmatpush1.msra.mxu0 0.0
        %698 = vmatprep.subr.mxu0 0.0
        %699 = vmatpush1.msra.mxu0 0.0
        %700 = vmatprep.subr.mxu0 0.0
        %701 = vmatpush1.msra.mxu0 0.0
        %702 = vmatprep.subr.mxu0 0.0
        %703 = vmatpush1.msra.mxu0 0.0
        %704 = vmatprep.subr.mxu0 0.0
        %705 = vmatpush1.msra.mxu0 0.0
        %706 = vmatprep.subr.mxu0 0.0
        %707 = vmatpush1.msra.mxu0 0.0
        %708 = vmatprep.subr.mxu0 0.0
        %709 = vmatpush1.msra.mxu0 0.0
        %710 = vmatprep.mubr.f32.mxu0 0.0
        %711 = vmatmul.mubr.f32.gmra.mrb[0].mxu0 %v623
        %v712 = vpop.f32.mrb[0].mxu0
        %v713 = vadd.f32 %v604, %v712
        %v714 = vpop.f32.mrb[0].mxu0
        %v715 = vadd.f32 %v608, %v714
        %716 = vmatprep.mubr.f32.mxu0 0.0
        %717 = vmatmul.mubr.f32.gmra.mrb[0].mxu0 %v626
        %v718 = vpop.f32.mrb[0].mxu0
        %v719 = vadd.f32 %v604, %v718
        %v720 = vpop.f32.mrb[0].mxu0
        %v721 = vadd.f32 %v608, %v720
        %722 = vmatprep.mubr.f32.mxu0 0.0
        %723 = vmatmul.mubr.f32.gmra.mrb[0].mxu0 %v629
        %v724 = vpop.f32.mrb[0].mxu0
        %v725 = vadd.f32 %v604, %v724
        %v726 = vpop.f32.mrb[0].mxu0
        %v727 = vadd.f32 %v608, %v726
        %728 = vmatprep.mubr.f32.mxu0 0.0
        %729 = vmatmul.mubr.f32.gmra.mrb[0].mxu0 %v632
        %v730 = vpop.f32.mrb[0].mxu0
        %v731 = vadd.f32 %v604, %v730
        %v732 = vpop.f32.mrb[0].mxu0
        %v733 = vadd.f32 %v608, %v732
        %734 = vmatprep.mubr.f32.mxu0 0.0
        %735 = vmatmul.mubr.f32.gmra.mrb[0].mxu0 %v635
        %v736 = vpop.f32.mrb[0].mxu0
        %v737 = vadd.f32 %v604, %v736
        %v738 = vpop.f32.mrb[0].mxu0
        %v739 = vadd.f32 %v608, %v738
        %740 = vmatprep.mubr.f32.mxu0 0.0
        %741 = vmatmul.mubr.f32.gmra.mrb[0].mxu0 %v638
        %v742 = vpop.f32.mrb[0].mxu0
        %v743 = vadd.f32 %v604, %v742
        %v744 = vpop.f32.mrb[0].mxu0
        %v745 = vadd.f32 %v608, %v744
        %746 = vmatprep.mubr.f32.mxu0 0.0
        %747 = vmatmul.mubr.f32.gmra.mrb[0].mxu0 %v641
        %v748 = vpop.f32.mrb[0].mxu0
        %v749 = vadd.f32 %v604, %v748
        %v750 = vpop.f32.mrb[0].mxu0
        %v751 = vadd.f32 %v608, %v750
        %752 = vmatprep.mubr.f32.mxu0 0.0
        %753 = vmatmul.mubr.f32.gmra.mrb[0].mxu0 %v644
        %v754 = vpop.f32.mrb[0].mxu0
        %v755 = vadd.f32 %v604, %v754
        %v756 = vpop.f32.mrb[0].mxu0
        %v757 = vadd.f32 %v608, %v756
        %758 = vdwg.mxu0
        %759 = vmatprep.subr.mxu0 %v526
        %760 = vmatpush1.msra.mxu0 %v525
        %761 = vmatprep.subr.mxu0 0.0
        %762 = vmatpush1.msra.mxu0 0.0
        %763 = vmatprep.subr.mxu0 0.0
        %764 = vmatpush1.msra.mxu0 0.0
        %765 = vmatprep.subr.mxu0 0.0
        %766 = vmatpush1.msra.mxu0 0.0
        %767 = vmatprep.subr.mxu0 0.0
        %768 = vmatpush1.msra.mxu0 0.0
        %769 = vmatprep.subr.mxu0 0.0
        %770 = vmatpush1.msra.mxu0 0.0
        %771 = vmatprep.subr.mxu0 0.0
        %772 = vmatpush1.msra.mxu0 0.0
        %773 = vmatprep.subr.mxu0 0.0
        %774 = vmatpush1.msra.mxu0 0.0
        %775 = vmatprep.subr.mxu0 0.0
        %776 = vmatpush1.msra.mxu0 0.0
        %777 = vmatprep.subr.mxu0 0.0
        %778 = vmatpush1.msra.mxu0 0.0
        %779 = vmatprep.subr.mxu0 0.0
        %780 = vmatpush1.msra.mxu0 0.0
        %781 = vmatprep.subr.mxu0 0.0
        %782 = vmatpush1.msra.mxu0 0.0
        %783 = vmatprep.subr.mxu0 0.0
        %784 = vmatpush1.msra.mxu0 0.0
        %785 = vmatprep.subr.mxu0 0.0
        %786 = vmatpush1.msra.mxu0 0.0
        %787 = vmatprep.subr.mxu0 0.0
        %788 = vmatpush1.msra.mxu0 0.0
        %789 = vmatprep.subr.mxu0 0.0
        %790 = vmatpush1.msra.mxu0 0.0
        %791 = vmatprep.subr.mxu0 0.0
        %792 = vmatpush1.msra.mxu0 0.0
        %793 = vmatprep.subr.mxu0 0.0
        %794 = vmatpush1.msra.mxu0 0.0
        %795 = vmatprep.subr.mxu0 0.0
        %796 = vmatpush1.msra.mxu0 0.0
        %797 = vmatprep.subr.mxu0 0.0
        %798 = vmatpush1.msra.mxu0 0.0
        %799 = vmatprep.subr.mxu0 0.0
        %800 = vmatpush1.msra.mxu0 0.0
        %801 = vmatprep.subr.mxu0 0.0
        %802 = vmatpush1.msra.mxu0 0.0
        %803 = vmatprep.subr.mxu0 0.0
        %804 = vmatpush1.msra.mxu0 0.0
        %805 = vmatprep.subr.mxu0 0.0
        %806 = vmatpush1.msra.mxu0 0.0
        %807 = vmatprep.subr.mxu0 0.0
        %808 = vmatpush1.msra.mxu0 0.0
        %809 = vmatprep.subr.mxu0 0.0
        %810 = vmatpush1.msra.mxu0 0.0
        %811 = vmatprep.subr.mxu0 0.0
        %812 = vmatpush1.msra.mxu0 0.0
        %813 = vmatprep.subr.mxu0 0.0
        %814 = vmatpush1.msra.mxu0 0.0
        %815 = vmatprep.subr.mxu0 0.0
        %816 = vmatpush1.msra.mxu0 0.0
        %817 = vmatprep.subr.mxu0 0.0
        %818 = vmatpush1.msra.mxu0 0.0
        %819 = vmatprep.subr.mxu0 0.0
        %820 = vmatpush1.msra.mxu0 0.0
        %821 = vmatprep.subr.mxu0 0.0
        %822 = vmatpush1.msra.mxu0 0.0
        %823 = vmatprep.mubr.f32.mxu0 0.0
        %824 = vmatmul.mubr.f32.gmra.mrb[0].mxu0 %v623
        %v825 = vpop.f32.mrb[0].mxu0
        %v826 = vadd.f32 %v612, %v825
        %v827 = vpop.f32.mrb[0].mxu0
        %v828 = vadd.f32 %v616, %v827
        %829 = vmatprep.mubr.f32.mxu0 0.0
        %830 = vmatmul.mubr.f32.gmra.mrb[0].mxu0 %v626
        %v831 = vpop.f32.mrb[0].mxu0
        %v832 = vadd.f32 %v612, %v831
        %v833 = vpop.f32.mrb[0].mxu0
        %v834 = vadd.f32 %v616, %v833
        %835 = vmatprep.mubr.f32.mxu0 0.0
        %836 = vmatmul.mubr.f32.gmra.mrb[0].mxu0 %v629
        %v837 = vpop.f32.mrb[0].mxu0
        %v838 = vadd.f32 %v612, %v837
        %v839 = vpop.f32.mrb[0].mxu0
        %v840 = vadd.f32 %v616, %v839
        %841 = vmatprep.mubr.f32.mxu0 0.0
        %842 = vmatmul.mubr.f32.gmra.mrb[0].mxu0 %v632
        %v843 = vpop.f32.mrb[0].mxu0
        %v844 = vadd.f32 %v612, %v843
        %v845 = vpop.f32.mrb[0].mxu0
        %v846 = vadd.f32 %v616, %v845
        %847 = vmatprep.mubr.f32.mxu0 0.0
        %848 = vmatmul.mubr.f32.gmra.mrb[0].mxu0 %v635
        %v849 = vpop.f32.mrb[0].mxu0
        %v850 = vadd.f32 %v612, %v849
        %v851 = vpop.f32.mrb[0].mxu0
        %v852 = vadd.f32 %v616, %v851
        %853 = vmatprep.mubr.f32.mxu0 0.0
        %854 = vmatmul.mubr.f32.gmra.mrb[0].mxu0 %v638
        %v855 = vpop.f32.mrb[0].mxu0
        %v856 = vadd.f32 %v612, %v855
        %v857 = vpop.f32.mrb[0].mxu0
        %v858 = vadd.f32 %v616, %v857
        %859 = vmatprep.mubr.f32.mxu0 0.0
        %860 = vmatmul.mubr.f32.gmra.mrb[0].mxu0 %v641
        %v861 = vpop.f32.mrb[0].mxu0
        %v862 = vadd.f32 %v612, %v861
        %v863 = vpop.f32.mrb[0].mxu0
        %v864 = vadd.f32 %v616, %v863
        %865 = vmatprep.mubr.f32.mxu0 0.0
        %866 = vmatmul.mubr.f32.gmra.mrb[0].mxu0 %v644
        %v867 = vpop.f32.mrb[0].mxu0
        %v868 = vadd.f32 %v612, %v867
        %v869 = vpop.f32.mrb[0].mxu0
        %v870 = vadd.f32 %v616, %v869
        %871 = vdwg.mxu0
        %872 = vst [vmem:[#allocation2] sm:$0xff] %v713
        %873 = vst [vmem:[#allocation2 + $0x8] sm:$0xff] %v715
        %874 = vst [vmem:[#allocation2 + $0x10] sm:$0xff] %v826
        %875 = vst [vmem:[#allocation2 + $0x18] sm:$0xff] %v828
        %876 = vst [vmem:[#allocation2 + $0x20] sm:$0xff] %v719
        %877 = vst [vmem:[#allocation2 + $0x28] sm:$0xff] %v721
        %878 = vst [vmem:[#allocation2 + $0x30] sm:$0xff] %v832
        %879 = vst [vmem:[#allocation2 + $0x38] sm:$0xff] %v834
        %880 = vst [vmem:[#allocation2 + $0x40] sm:$0xff] %v725
        %881 = vst [vmem:[#allocation2 + $0x48] sm:$0xff] %v727
        %882 = vst [vmem:[#allocation2 + $0x50] sm:$0xff] %v838
        %883 = vst [vmem:[#allocation2 + $0x58] sm:$0xff] %v840
        %884 = vst [vmem:[#allocation2 + $0x60] sm:$0xff] %v731
        %885 = vst [vmem:[#allocation2 + $0x68] sm:$0xff] %v733
        %886 = vst [vmem:[#allocation2 + $0x70] sm:$0xff] %v844
        %887 = vst [vmem:[#allocation2 + $0x78] sm:$0xff] %v846
        %888 = vst [vmem:[#allocation2 + $0x80] sm:$0xff] %v737
        %889 = vst [vmem:[#allocation2 + $0x88] sm:$0xff] %v739
        %890 = vst [vmem:[#allocation2 + $0x90] sm:$0xff] %v850
        %891 = vst [vmem:[#allocation2 + $0x98] sm:$0xff] %v852
        %892 = vst [vmem:[#allocation2 + $0xa0] sm:$0xff] %v743
        %893 = vst [vmem:[#allocation2 + $0xa8] sm:$0xff] %v745
        %894 = vst [vmem:[#allocation2 + $0xb0] sm:$0xff] %v856
        %895 = vst [vmem:[#allocation2 + $0xb8] sm:$0xff] %v858
        %896 = vst [vmem:[#allocation2 + $0xc0] sm:$0xff] %v749
        %897 = vst [vmem:[#allocation2 + $0xc8] sm:$0xff] %v751
        %898 = vst [vmem:[#allocation2 + $0xd0] sm:$0xff] %v862
        %899 = vst [vmem:[#allocation2 + $0xd8] sm:$0xff] %v864
        %900 = vst [vmem:[#allocation2 + $0xe0] sm:$0xff] %v755
        %901 = vst [vmem:[#allocation2 + $0xe8] sm:$0xff] %v757
        %902 = vst [vmem:[#allocation2 + $0xf0] sm:$0xff] %v868
        %903 = vst [vmem:[#allocation2 + $0xf8] sm:$0xff] %v870
        %v904 = vld [vmem:[#allocation5] sm:$0xff]
        %v905 = vld [vmem:[#allocation6] sm:$0xff]
        %v906 = vld [vmem:[#allocation2] sm:$0xff]
        %v907 = vld [vmem:[#allocation2 + $0x8] sm:$0xff]
        %v908 = vld [vmem:[#allocation2 + $0x10] sm:$0xff]
        %v909 = vld [vmem:[#allocation2 + $0x18] sm:$0xff]
        %910 = vmatprep.subr.mxu0 %v528
        %911 = vmatpush1.msra.mxu0 %v527
        %912 = vmatprep.subr.mxu0 %v532
        %913 = vmatpush1.msra.mxu0 %v531
        %914 = vmatprep.subr.mxu0 %v536
        %915 = vmatpush1.msra.mxu0 %v535
        %916 = vmatprep.subr.mxu0 %v540
        %917 = vmatpush1.msra.mxu0 %v539
        %918 = vmatprep.subr.mxu0 %v544
        %919 = vmatpush1.msra.mxu0 %v543
        %920 = vmatprep.subr.mxu0 %v548
        %921 = vmatpush1.msra.mxu0 %v547
        %922 = vmatprep.subr.mxu0 %v552
        %923 = vmatpush1.msra.mxu0 %v551
        %924 = vmatprep.subr.mxu0 %v556
        %925 = vmatpush1.msra.mxu0 %v555
        %926 = vmatprep.subr.mxu0 %v560
        %927 = vmatpush1.msra.mxu0 %v559
        %928 = vmatprep.subr.mxu0 %v564
        %929 = vmatpush1.msra.mxu0 %v563
        %930 = vmatprep.subr.mxu0 %v568
        %931 = vmatpush1.msra.mxu0 %v567
        %932 = vmatprep.subr.mxu0 %v572
        %933 = vmatpush1.msra.mxu0 %v571
        %934 = vmatprep.subr.mxu0 %v576
        %935 = vmatpush1.msra.mxu0 %v575
        %936 = vmatprep.subr.mxu0 %v580
        %937 = vmatpush1.msra.mxu0 %v579
        %938 = vmatprep.subr.mxu0 %v584
        %939 = vmatpush1.msra.mxu0 %v583
        %940 = vmatprep.subr.mxu0 %v588
        %941 = vmatpush1.msra.mxu0 %v587
        %942 = vmatprep.subr.mxu0 0.0
        %943 = vmatpush1.msra.mxu0 0.0
        %944 = vmatprep.subr.mxu0 0.0
        %945 = vmatpush1.msra.mxu0 0.0
        %946 = vmatprep.subr.mxu0 0.0
        %947 = vmatpush1.msra.mxu0 0.0
        %948 = vmatprep.subr.mxu0 0.0
        %949 = vmatpush1.msra.mxu0 0.0
        %950 = vmatprep.subr.mxu0 0.0
        %951 = vmatpush1.msra.mxu0 0.0
        %952 = vmatprep.subr.mxu0 0.0
        %953 = vmatpush1.msra.mxu0 0.0
        %954 = vmatprep.subr.mxu0 0.0
        %955 = vmatpush1.msra.mxu0 0.0
        %956 = vmatprep.subr.mxu0 0.0
        %957 = vmatpush1.msra.mxu0 0.0
        %958 = vmatprep.subr.mxu0 0.0
        %959 = vmatpush1.msra.mxu0 0.0
        %960 = vmatprep.subr.mxu0 0.0
        %961 = vmatpush1.msra.mxu0 0.0
        %962 = vmatprep.subr.mxu0 0.0
        %963 = vmatpush1.msra.mxu0 0.0
        %964 = vmatprep.subr.mxu0 0.0
        %965 = vmatpush1.msra.mxu0 0.0
        %966 = vmatprep.subr.mxu0 0.0
        %967 = vmatpush1.msra.mxu0 0.0
        %968 = vmatprep.subr.mxu0 0.0
        %969 = vmatpush1.msra.mxu0 0.0
        %970 = vmatprep.subr.mxu0 0.0
        %971 = vmatpush1.msra.mxu0 0.0
        %972 = vmatprep.subr.mxu0 0.0
        %973 = vmatpush1.msra.mxu0 0.0
        %974 = vmatprep.mubr.f32.mxu0 0.0
        %975 = vmatmul.mubr.f32.gmra.mrb[0].mxu0 %v904
        %v976 = vpop.f32.mrb[0].mxu0
        %v977 = vadd.f32 0.0, %v976
        %v978 = vpop.f32.mrb[0].mxu0
        %v979 = vadd.f32 0.0, %v978
        %980 = vdwg.mxu0
        %981 = vmatprep.subr.mxu0 %v530
        %982 = vmatpush1.msra.mxu0 %v529
        %983 = vmatprep.subr.mxu0 %v534
        %984 = vmatpush1.msra.mxu0 %v533
        %985 = vmatprep.subr.mxu0 %v538
        %986 = vmatpush1.msra.mxu0 %v537
        %987 = vmatprep.subr.mxu0 %v542
        %988 = vmatpush1.msra.mxu0 %v541
        %989 = vmatprep.subr.mxu0 %v546
        %990 = vmatpush1.msra.mxu0 %v545
        %991 = vmatprep.subr.mxu0 %v550
        %992 = vmatpush1.msra.mxu0 %v549
        %993 = vmatprep.subr.mxu0 %v554
        %994 = vmatpush1.msra.mxu0 %v553
        %995 = vmatprep.subr.mxu0 %v558
        %996 = vmatpush1.msra.mxu0 %v557
        %997 = vmatprep.subr.mxu0 %v562
        %998 = vmatpush1.msra.mxu0 %v561
        %999 = vmatprep.subr.mxu0 %v566
        %1000 = vmatpush1.msra.mxu0 %v565
        %1001 = vmatprep.subr.mxu0 %v570
        %1002 = vmatpush1.msra.mxu0 %v569
        %1003 = vmatprep.subr.mxu0 %v574
        %1004 = vmatpush1.msra.mxu0 %v573
        %1005 = vmatprep.subr.mxu0 %v578
        %1006 = vmatpush1.msra.mxu0 %v577
        %1007 = vmatprep.subr.mxu0 %v582
        %1008 = vmatpush1.msra.mxu0 %v581
        %1009 = vmatprep.subr.mxu0 %v586
        %1010 = vmatpush1.msra.mxu0 %v585
        %1011 = vmatprep.subr.mxu0 %v590
        %1012 = vmatpush1.msra.mxu0 %v589
        %1013 = vmatprep.subr.mxu0 0.0
        %1014 = vmatpush1.msra.mxu0 0.0
        %1015 = vmatprep.subr.mxu0 0.0
        %1016 = vmatpush1.msra.mxu0 0.0
        %1017 = vmatprep.subr.mxu0 0.0
        %1018 = vmatpush1.msra.mxu0 0.0
        %1019 = vmatprep.subr.mxu0 0.0
        %1020 = vmatpush1.msra.mxu0 0.0
        %1021 = vmatprep.subr.mxu0 0.0
        %1022 = vmatpush1.msra.mxu0 0.0
        %1023 = vmatprep.subr.mxu0 0.0
        %1024 = vmatpush1.msra.mxu0 0.0
        %1025 = vmatprep.subr.mxu0 0.0
        %1026 = vmatpush1.msra.mxu0 0.0
        %1027 = vmatprep.subr.mxu0 0.0
        %1028 = vmatpush1.msra.mxu0 0.0
        %1029 = vmatprep.subr.mxu0 0.0
        %1030 = vmatpush1.msra.mxu0 0.0
        %1031 = vmatprep.subr.mxu0 0.0
        %1032 = vmatpush1.msra.mxu0 0.0
        %1033 = vmatprep.subr.mxu0 0.0
        %1034 = vmatpush1.msra.mxu0 0.0
        %1035 = vmatprep.subr.mxu0 0.0
        %1036 = vmatpush1.msra.mxu0 0.0
        %1037 = vmatprep.subr.mxu0 0.0
        %1038 = vmatpush1.msra.mxu0 0.0
        %1039 = vmatprep.subr.mxu0 0.0
        %1040 = vmatpush1.msra.mxu0 0.0
        %1041 = vmatprep.subr.mxu0 0.0
        %1042 = vmatpush1.msra.mxu0 0.0
        %1043 = vmatprep.subr.mxu0 0.0
        %1044 = vmatpush1.msra.mxu0 0.0
        %1045 = vmatprep.mubr.f32.mxu0 0.0
        %1046 = vmatmul.mubr.f32.gmra.mrb[0].mxu0 %v904
        %v1047 = vpop.f32.mrb[0].mxu0
        %v1048 = vadd.f32 0.0, %v1047
        %v1049 = vpop.f32.mrb[0].mxu0
        %v1050 = vadd.f32 0.0, %v1049
        %1051 = vdwg.mxu0
        %v1052 = vadd.f32 %v906, %v977
        %v1053 = vadd.f32 %v907, %v979
        %v1054 = vadd.f32 %v908, %v1048
        %v1055 = vadd.f32 %v909, %v1050
        %v1056 = vxor.u32 %v1052, 2147483648
        %v1057 = vxor.u32 %v1053, 2147483648
        %v1058 = vxor.u32 %v1054, 2147483648
        %v1059 = vmul.f32 %v1056, 1.442695
        %v1060 = vpow.pop %v1059
        %v1061 = vmul.f32 %v1057, 1.442695
        %v1062 = vpow.pop %v1061
        %v1063 = vmul.f32 %v1058, 1.442695
        %v1064 = vpow.pop %v1063
        %v1065 = vadd.f32 %v1060, 1.0
        %v1066 = vadd.f32 %v1062, 1.0
        %v1067 = vadd.f32 %v1064, 1.0
        %v1068 = vrcp.pop %v1065
        %v1069 = vmul.f32 1.0, %v1068
        %v1070 = vrcp.pop %v1066
        %v1071 = vmul.f32 1.0, %v1070
        %v1072 = vrcp.pop %v1067
        %v1073 = vmul.f32 1.0, %v1072
        %v1074 = vtanh.pop %v1055
        %v1075 = vmul.f32 %v1071, %v905
        %v1076 = vmul.f32 %v1069, %v1074
        %v1077 = vadd.f32 %v1075, %v1076
        %v1078 = vtanh.pop %v1077
        %v1079 = vmul.f32 %v1073, %v1078
        %1080 = vst [vmem:[#allocation3] sm:$0xff] %v1079
        %s1081 = scalar_lea.vmem [#allocation2], 32
        %v1082 = vld [vmem:[%s1081] sm:$0xff]
        %v1083 = vld [vmem:[%s1081 + $0x8] sm:$0xff]
        %v1084 = vld [vmem:[%s1081 + $0x10] sm:$0xff]
        %v1085 = vld [vmem:[%s1081 + $0x18] sm:$0xff]
        %1086 = vmatprep.subr.mxu0 %v528
        %1087 = vmatpush1.msra.mxu0 %v527
        %1088 = vmatprep.subr.mxu0 %v532
        %1089 = vmatpush1.msra.mxu0 %v531
        %1090 = vmatprep.subr.mxu0 %v536
        %1091 = vmatpush1.msra.mxu0 %v535
        %1092 = vmatprep.subr.mxu0 %v540
        %1093 = vmatpush1.msra.mxu0 %v539
        %1094 = vmatprep.subr.mxu0 %v544
        %1095 = vmatpush1.msra.mxu0 %v543
        %1096 = vmatprep.subr.mxu0 %v548
        %1097 = vmatpush1.msra.mxu0 %v547
        %1098 = vmatprep.subr.mxu0 %v552
        %1099 = vmatpush1.msra.mxu0 %v551
        %1100 = vmatprep.subr.mxu0 %v556
        %1101 = vmatpush1.msra.mxu0 %v555
        %1102 = vmatprep.subr.mxu0 %v560
        %1103 = vmatpush1.msra.mxu0 %v559
        %1104 = vmatprep.subr.mxu0 %v564
        %1105 = vmatpush1.msra.mxu0 %v563
        %1106 = vmatprep.subr.mxu0 %v568
        %1107 = vmatpush1.msra.mxu0 %v567
        %1108 = vmatprep.subr.mxu0 %v572
        %1109 = vmatpush1.msra.mxu0 %v571
        %1110 = vmatprep.subr.mxu0 %v576
        %1111 = vmatpush1.msra.mxu0 %v575
        %1112 = vmatprep.subr.mxu0 %v580
        %1113 = vmatpush1.msra.mxu0 %v579
        %1114 = vmatprep.subr.mxu0 %v584
        %1115 = vmatpush1.msra.mxu0 %v583
        %1116 = vmatprep.subr.mxu0 %v588
        %1117 = vmatpush1.msra.mxu0 %v587
        %1118 = vmatprep.subr.mxu0 0.0
        %1119 = vmatpush1.msra.mxu0 0.0
        %1120 = vmatprep.subr.mxu0 0.0
        %1121 = vmatpush1.msra.mxu0 0.0
        %1122 = vmatprep.subr.mxu0 0.0
        %1123 = vmatpush1.msra.mxu0 0.0
        %1124 = vmatprep.subr.mxu0 0.0
        %1125 = vmatpush1.msra.mxu0 0.0
        %1126 = vmatprep.subr.mxu0 0.0
        %1127 = vmatpush1.msra.mxu0 0.0
        %1128 = vmatprep.subr.mxu0 0.0
        %1129 = vmatpush1.msra.mxu0 0.0
        %1130 = vmatprep.subr.mxu0 0.0
        %1131 = vmatpush1.msra.mxu0 0.0
        %1132 = vmatprep.subr.mxu0 0.0
        %1133 = vmatpush1.msra.mxu0 0.0
        %1134 = vmatprep.subr.mxu0 0.0
        %1135 = vmatpush1.msra.mxu0 0.0
        %1136 = vmatprep.subr.mxu0 0.0
        %1137 = vmatpush1.msra.mxu0 0.0
        %1138 = vmatprep.subr.mxu0 0.0
        %1139 = vmatpush1.msra.mxu0 0.0
        %1140 = vmatprep.subr.mxu0 0.0
        %1141 = vmatpush1.msra.mxu0 0.0
        %1142 = vmatprep.subr.mxu0 0.0
        %1143 = vmatpush1.msra.mxu0 0.0
        %1144 = vmatprep.subr.mxu0 0.0
        %1145 = vmatpush1.msra.mxu0 0.0
        %1146 = vmatprep.subr.mxu0 0.0
        %1147 = vmatpush1.msra.mxu0 0.0
        %1148 = vmatprep.subr.mxu0 0.0
        %1149 = vmatpush1.msra.mxu0 0.0
        %1150 = vmatprep.mubr.f32.mxu0 0.0
        %1151 = vmatmul.mubr.f32.gmra.mrb[0].mxu0 %v1079
        %v1152 = vpop.f32.mrb[0].mxu0
        %v1153 = vadd.f32 0.0, %v1152
        %v1154 = vpop.f32.mrb[0].mxu0
        %v1155 = vadd.f32 0.0, %v1154
        %1156 = vdwg.mxu0
        %1157 = vmatprep.subr.mxu0 %v530
        %1158 = vmatpush1.msra.mxu0 %v529
        %1159 = vmatprep.subr.mxu0 %v534
        %1160 = vmatpush1.msra.mxu0 %v533
        %1161 = vmatprep.subr.mxu0 %v538
        %1162 = vmatpush1.msra.mxu0 %v537
        %1163 = vmatprep.subr.mxu0 %v542
        %1164 = vmatpush1.msra.mxu0 %v541
        %1165 = vmatprep.subr.mxu0 %v546
        %1166 = vmatpush1.msra.mxu0 %v545
        %1167 = vmatprep.subr.mxu0 %v550
        %1168 = vmatpush1.msra.mxu0 %v549
        %1169 = vmatprep.subr.mxu0 %v554
        %1170 = vmatpush1.msra.mxu0 %v553
        %1171 = vmatprep.subr.mxu0 %v558
        %1172 = vmatpush1.msra.mxu0 %v557
        %1173 = vmatprep.subr.mxu0 %v562
        %1174 = vmatpush1.msra.mxu0 %v561
        %1175 = vmatprep.subr.mxu0 %v566
        %1176 = vmatpush1.msra.mxu0 %v565
        %1177 = vmatprep.subr.mxu0 %v570
        %1178 = vmatpush1.msra.mxu0 %v569
        %1179 = vmatprep.subr.mxu0 %v574
        %1180 = vmatpush1.msra.mxu0 %v573
        %1181 = vmatprep.subr.mxu0 %v578
        %1182 = vmatpush1.msra.mxu0 %v577
        %1183 = vmatprep.subr.mxu0 %v582
        %1184 = vmatpush1.msra.mxu0 %v581
        %1185 = vmatprep.subr.mxu0 %v586
        %1186 = vmatpush1.msra.mxu0 %v585
        %1187 = vmatprep.subr.mxu0 %v590
        %1188 = vmatpush1.msra.mxu0 %v589
        %1189 = vmatprep.subr.mxu0 0.0
        %1190 = vmatpush1.msra.mxu0 0.0
        %1191 = vmatprep.subr.mxu0 0.0
        %1192 = vmatpush1.msra.mxu0 0.0
        %1193 = vmatprep.subr.mxu0 0.0
        %1194 = vmatpush1.msra.mxu0 0.0
        %1195 = vmatprep.subr.mxu0 0.0
        %1196 = vmatpush1.msra.mxu0 0.0
        %1197 = vmatprep.subr.mxu0 0.0
        %1198 = vmatpush1.msra.mxu0 0.0
        %1199 = vmatprep.subr.mxu0 0.0
        %1200 = vmatpush1.msra.mxu0 0.0
        %1201 = vmatprep.subr.mxu0 0.0
        %1202 = vmatpush1.msra.mxu0 0.0
        %1203 = vmatprep.subr.mxu0 0.0
        %1204 = vmatpush1.msra.mxu0 0.0
        %1205 = vmatprep.subr.mxu0 0.0
        %1206 = vmatpush1.msra.mxu0 0.0
        %1207 = vmatprep.subr.mxu0 0.0
        %1208 = vmatpush1.msra.mxu0 0.0
        %1209 = vmatprep.subr.mxu0 0.0
        %1210 = vmatpush1.msra.mxu0 0.0
        %1211 = vmatprep.subr.mxu0 0.0
        %1212 = vmatpush1.msra.mxu0 0.0
        %1213 = vmatprep.subr.mxu0 0.0
        %1214 = vmatpush1.msra.mxu0 0.0
        %1215 = vmatprep.subr.mxu0 0.0
        %1216 = vmatpush1.msra.mxu0 0.0
        %1217 = vmatprep.subr.mxu0 0.0
        %1218 = vmatpush1.msra.mxu0 0.0
        %1219 = vmatprep.subr.mxu0 0.0
        %1220 = vmatpush1.msra.mxu0 0.0
        %1221 = vmatprep.mubr.f32.mxu0 0.0
        %1222 = vmatmul.mubr.f32.gmra.mrb[0].mxu0 %v1079
        %v1223 = vpop.f32.mrb[0].mxu0
        %v1224 = vadd.f32 0.0, %v1223
        %v1225 = vpop.f32.mrb[0].mxu0
        %v1226 = vadd.f32 0.0, %v1225
        %1227 = vdwg.mxu0
        %v1228 = vadd.f32 %v1082, %v1153
        %v1229 = vadd.f32 %v1083, %v1155
        %v1230 = vadd.f32 %v1084, %v1224
        %v1231 = vadd.f32 %v1085, %v1226
        %v1232 = vxor.u32 %v1228, 2147483648
        %v1233 = vxor.u32 %v1229, 2147483648
        %v1234 = vxor.u32 %v1230, 2147483648
        %v1235 = vmul.f32 %v1232, 1.442695
        %v1236 = vpow.pop %v1235
        %v1237 = vmul.f32 %v1233, 1.442695
        %v1238 = vpow.pop %v1237
        %v1239 = vmul.f32 %v1234, 1.442695
        %v1240 = vpow.pop %v1239
        %v1241 = vadd.f32 %v1236, 1.0
        %v1242 = vadd.f32 %v1238, 1.0
        %v1243 = vadd.f32 %v1240, 1.0
        %v1244 = vrcp.pop %v1241
        %v1245 = vmul.f32 1.0, %v1244
        %v1246 = vrcp.pop %v1242
        %v1247 = vmul.f32 1.0, %v1246
        %v1248 = vrcp.pop %v1243
        %v1249 = vmul.f32 1.0, %v1248
        %v1250 = vtanh.pop %v1231
        %v1251 = vmul.f32 %v1247, %v1077
        %v1252 = vmul.f32 %v1245, %v1250
        %v1253 = vadd.f32 %v1251, %v1252
        %v1254 = vtanh.pop %v1253
        %v1255 = vmul.f32 %v1249, %v1254
        %s1256 = scalar_lea.vmem [#allocation3], 8
        %1257 = vst [vmem:[%s1256] sm:$0xff] %v1255
        %s1258 = scalar_lea.vmem [#allocation2], 64
        %v1259 = vld [vmem:[%s1258] sm:$0xff]
        %v1260 = vld [vmem:[%s1258 + $0x8] sm:$0xff]
        %v1261 = vld [vmem:[%s1258 + $0x10] sm:$0xff]
        %v1262 = vld [vmem:[%s1258 + $0x18] sm:$0xff]
        %1263 = vmatprep.subr.mxu0 %v528
        %1264 = vmatpush1.msra.mxu0 %v527
        %1265 = vmatprep.subr.mxu0 %v532
        %1266 = vmatpush1.msra.mxu0 %v531
        %1267 = vmatprep.subr.mxu0 %v536
        %1268 = vmatpush1.msra.mxu0 %v535
        %1269 = vmatprep.subr.mxu0 %v540
        %1270 = vmatpush1.msra.mxu0 %v539
        %1271 = vmatprep.subr.mxu0 %v544
        %1272 = vmatpush1.msra.mxu0 %v543
        %1273 = vmatprep.subr.mxu0 %v548
        %1274 = vmatpush1.msra.mxu0 %v547
        %1275 = vmatprep.subr.mxu0 %v552
        %1276 = vmatpush1.msra.mxu0 %v551
        %1277 = vmatprep.subr.mxu0 %v556
        %1278 = vmatpush1.msra.mxu0 %v555
        %1279 = vmatprep.subr.mxu0 %v560
        %1280 = vmatpush1.msra.mxu0 %v559
        %1281 = vmatprep.subr.mxu0 %v564
        %1282 = vmatpush1.msra.mxu0 %v563
        %1283 = vmatprep.subr.mxu0 %v568
        %1284 = vmatpush1.msra.mxu0 %v567
        %1285 = vmatprep.subr.mxu0 %v572
        %1286 = vmatpush1.msra.mxu0 %v571
        %1287 = vmatprep.subr.mxu0 %v576
        %1288 = vmatpush1.msra.mxu0 %v575
        %1289 = vmatprep.subr.mxu0 %v580
        %1290 = vmatpush1.msra.mxu0 %v579
        %1291 = vmatprep.subr.mxu0 %v584
        %1292 = vmatpush1.msra.mxu0 %v583
        %1293 = vmatprep.subr.mxu0 %v588
        %1294 = vmatpush1.msra.mxu0 %v587
        %1295 = vmatprep.subr.mxu0 0.0
        %1296 = vmatpush1.msra.mxu0 0.0
        %1297 = vmatprep.subr.mxu0 0.0
        %1298 = vmatpush1.msra.mxu0 0.0
        %1299 = vmatprep.subr.mxu0 0.0
        %1300 = vmatpush1.msra.mxu0 0.0
        %1301 = vmatprep.subr.mxu0 0.0
        %1302 = vmatpush1.msra.mxu0 0.0
        %1303 = vmatprep.subr.mxu0 0.0
        %1304 = vmatpush1.msra.mxu0 0.0
        %1305 = vmatprep.subr.mxu0 0.0
        %1306 = vmatpush1.msra.mxu0 0.0
        %1307 = vmatprep.subr.mxu0 0.0
        %1308 = vmatpush1.msra.mxu0 0.0
        %1309 = vmatprep.subr.mxu0 0.0
        %1310 = vmatpush1.msra.mxu0 0.0
        %1311 = vmatprep.subr.mxu0 0.0
        %1312 = vmatpush1.msra.mxu0 0.0
        %1313 = vmatprep.subr.mxu0 0.0
        %1314 = vmatpush1.msra.mxu0 0.0
        %1315 = vmatprep.subr.mxu0 0.0
        %1316 = vmatpush1.msra.mxu0 0.0
        %1317 = vmatprep.subr.mxu0 0.0
        %1318 = vmatpush1.msra.mxu0 0.0
        %1319 = vmatprep.subr.mxu0 0.0
        %1320 = vmatpush1.msra.mxu0 0.0
        %1321 = vmatprep.subr.mxu0 0.0
        %1322 = vmatpush1.msra.mxu0 0.0
        %1323 = vmatprep.subr.mxu0 0.0
        %1324 = vmatpush1.msra.mxu0 0.0
        %1325 = vmatprep.subr.mxu0 0.0
        %1326 = vmatpush1.msra.mxu0 0.0
        %1327 = vmatprep.mubr.f32.mxu0 0.0
        %1328 = vmatmul.mubr.f32.gmra.mrb[0].mxu0 %v1255
        %v1329 = vpop.f32.mrb[0].mxu0
        %v1330 = vadd.f32 0.0, %v1329
        %v1331 = vpop.f32.mrb[0].mxu0
        %v1332 = vadd.f32 0.0, %v1331
        %1333 = vdwg.mxu0
        %1334 = vmatprep.subr.mxu0 %v530
        %1335 = vmatpush1.msra.mxu0 %v529
        %1336 = vmatprep.subr.mxu0 %v534
        %1337 = vmatpush1.msra.mxu0 %v533
        %1338 = vmatprep.subr.mxu0 %v538
        %1339 = vmatpush1.msra.mxu0 %v537
        %1340 = vmatprep.subr.mxu0 %v542
        %1341 = vmatpush1.msra.mxu0 %v541
        %1342 = vmatprep.subr.mxu0 %v546
        %1343 = vmatpush1.msra.mxu0 %v545
        %1344 = vmatprep.subr.mxu0 %v550
        %1345 = vmatpush1.msra.mxu0 %v549
        %1346 = vmatprep.subr.mxu0 %v554
        %1347 = vmatpush1.msra.mxu0 %v553
        %1348 = vmatprep.subr.mxu0 %v558
        %1349 = vmatpush1.msra.mxu0 %v557
        %1350 = vmatprep.subr.mxu0 %v562
        %1351 = vmatpush1.msra.mxu0 %v561
        %1352 = vmatprep.subr.mxu0 %v566
        %1353 = vmatpush1.msra.mxu0 %v565
        %1354 = vmatprep.subr.mxu0 %v570
        %1355 = vmatpush1.msra.mxu0 %v569
        %1356 = vmatprep.subr.mxu0 %v574
        %1357 = vmatpush1.msra.mxu0 %v573
        %1358 = vmatprep.subr.mxu0 %v578
        %1359 = vmatpush1.msra.mxu0 %v577
        %1360 = vmatprep.subr.mxu0 %v582
        %1361 = vmatpush1.msra.mxu0 %v581
        %1362 = vmatprep.subr.mxu0 %v586
        %1363 = vmatpush1.msra.mxu0 %v585
        %1364 = vmatprep.subr.mxu0 %v590
        %1365 = vmatpush1.msra.mxu0 %v589
        %1366 = vmatprep.subr.mxu0 0.0
        %1367 = vmatpush1.msra.mxu0 0.0
        %1368 = vmatprep.subr.mxu0 0.0
        %1369 = vmatpush1.msra.mxu0 0.0
        %1370 = vmatprep.subr.mxu0 0.0
        %1371 = vmatpush1.msra.mxu0 0.0
        %1372 = vmatprep.subr.mxu0 0.0
        %1373 = vmatpush1.msra.mxu0 0.0
        %1374 = vmatprep.subr.mxu0 0.0
        %1375 = vmatpush1.msra.mxu0 0.0
        %1376 = vmatprep.subr.mxu0 0.0
        %1377 = vmatpush1.msra.mxu0 0.0
        %1378 = vmatprep.subr.mxu0 0.0
        %1379 = vmatpush1.msra.mxu0 0.0
        %1380 = vmatprep.subr.mxu0 0.0
        %1381 = vmatpush1.msra.mxu0 0.0
        %1382 = vmatprep.subr.mxu0 0.0
        %1383 = vmatpush1.msra.mxu0 0.0
        %1384 = vmatprep.subr.mxu0 0.0
        %1385 = vmatpush1.msra.mxu0 0.0
        %1386 = vmatprep.subr.mxu0 0.0
        %1387 = vmatpush1.msra.mxu0 0.0
        %1388 = vmatprep.subr.mxu0 0.0
        %1389 = vmatpush1.msra.mxu0 0.0
        %1390 = vmatprep.subr.mxu0 0.0
        %1391 = vmatpush1.msra.mxu0 0.0
        %1392 = vmatprep.subr.mxu0 0.0
        %1393 = vmatpush1.msra.mxu0 0.0
        %1394 = vmatprep.subr.mxu0 0.0
        %1395 = vmatpush1.msra.mxu0 0.0
        %1396 = vmatprep.subr.mxu0 0.0
        %1397 = vmatpush1.msra.mxu0 0.0
        %1398 = vmatprep.mubr.f32.mxu0 0.0
        %1399 = vmatmul.mubr.f32.gmra.mrb[0].mxu0 %v1255
        %v1400 = vpop.f32.mrb[0].mxu0
        %v1401 = vadd.f32 0.0, %v1400
        %v1402 = vpop.f32.mrb[0].mxu0
        %v1403 = vadd.f32 0.0, %v1402
        %1404 = vdwg.mxu0
        %v1405 = vadd.f32 %v1259, %v1330
        %v1406 = vadd.f32 %v1260, %v1332
        %v1407 = vadd.f32 %v1261, %v1401
        %v1408 = vadd.f32 %v1262, %v1403
        %v1409 = vxor.u32 %v1405, 2147483648
        %v1410 = vxor.u32 %v1406, 2147483648
        %v1411 = vxor.u32 %v1407, 2147483648
        %v1412 = vmul.f32 %v1409, 1.442695
        %v1413 = vpow.pop %v1412
        %v1414 = vmul.f32 %v1410, 1.442695
        %v1415 = vpow.pop %v1414
        %v1416 = vmul.f32 %v1411, 1.442695
        %v1417 = vpow.pop %v1416
        %v1418 = vadd.f32 %v1413, 1.0
        %v1419 = vadd.f32 %v1415, 1.0
        %v1420 = vadd.f32 %v1417, 1.0
        %v1421 = vrcp.pop %v1418
        %v1422 = vmul.f32 1.0, %v1421
        %v1423 = vrcp.pop %v1419
        %v1424 = vmul.f32 1.0, %v1423
        %v1425 = vrcp.pop %v1420
        %v1426 = vmul.f32 1.0, %v1425
        %v1427 = vtanh.pop %v1408
        %v1428 = vmul.f32 %v1424, %v1253
        %v1429 = vmul.f32 %v1422, %v1427
        %v1430 = vadd.f32 %v1428, %v1429
        %v1431 = vtanh.pop %v1430
        %v1432 = vmul.f32 %v1426, %v1431
        %s1433 = scalar_lea.vmem [#allocation3], 16
        %1434 = vst [vmem:[%s1433] sm:$0xff] %v1432
        %s1435 = scalar_lea.vmem [#allocation2], 96
        %v1436 = vld [vmem:[%s1435] sm:$0xff]
        %v1437 = vld [vmem:[%s1435 + $0x8] sm:$0xff]
        %v1438 = vld [vmem:[%s1435 + $0x10] sm:$0xff]
        %v1439 = vld [vmem:[%s1435 + $0x18] sm:$0xff]
        %1440 = vmatprep.subr.mxu0 %v528
        %1441 = vmatpush1.msra.mxu0 %v527
        %1442 = vmatprep.subr.mxu0 %v532
        %1443 = vmatpush1.msra.mxu0 %v531
        %1444 = vmatprep.subr.mxu0 %v536
        %1445 = vmatpush1.msra.mxu0 %v535
        %1446 = vmatprep.subr.mxu0 %v540
        %1447 = vmatpush1.msra.mxu0 %v539
        %1448 = vmatprep.subr.mxu0 %v544
        %1449 = vmatpush1.msra.mxu0 %v543
        %1450 = vmatprep.subr.mxu0 %v548
        %1451 = vmatpush1.msra.mxu0 %v547
        %1452 = vmatprep.subr.mxu0 %v552
        %1453 = vmatpush1.msra.mxu0 %v551
        %1454 = vmatprep.subr.mxu0 %v556
        %1455 = vmatpush1.msra.mxu0 %v555
        %1456 = vmatprep.subr.mxu0 %v560
        %1457 = vmatpush1.msra.mxu0 %v559
        %1458 = vmatprep.subr.mxu0 %v564
        %1459 = vmatpush1.msra.mxu0 %v563
        %1460 = vmatprep.subr.mxu0 %v568
        %1461 = vmatpush1.msra.mxu0 %v567
        %1462 = vmatprep.subr.mxu0 %v572
        %1463 = vmatpush1.msra.mxu0 %v571
        %1464 = vmatprep.subr.mxu0 %v576
        %1465 = vmatpush1.msra.mxu0 %v575
        %1466 = vmatprep.subr.mxu0 %v580
        %1467 = vmatpush1.msra.mxu0 %v579
        %1468 = vmatprep.subr.mxu0 %v584
        %1469 = vmatpush1.msra.mxu0 %v583
        %1470 = vmatprep.subr.mxu0 %v588
        %1471 = vmatpush1.msra.mxu0 %v587
        %1472 = vmatprep.subr.mxu0 0.0
        %1473 = vmatpush1.msra.mxu0 0.0
        %1474 = vmatprep.subr.mxu0 0.0
        %1475 = vmatpush1.msra.mxu0 0.0
        %1476 = vmatprep.subr.mxu0 0.0
        %1477 = vmatpush1.msra.mxu0 0.0
        %1478 = vmatprep.subr.mxu0 0.0
        %1479 = vmatpush1.msra.mxu0 0.0
        %1480 = vmatprep.subr.mxu0 0.0
        %1481 = vmatpush1.msra.mxu0 0.0
        %1482 = vmatprep.subr.mxu0 0.0
        %1483 = vmatpush1.msra.mxu0 0.0
        %1484 = vmatprep.subr.mxu0 0.0
        %1485 = vmatpush1.msra.mxu0 0.0
        %1486 = vmatprep.subr.mxu0 0.0
        %1487 = vmatpush1.msra.mxu0 0.0
        %1488 = vmatprep.subr.mxu0 0.0
        %1489 = vmatpush1.msra.mxu0 0.0
        %1490 = vmatprep.subr.mxu0 0.0
        %1491 = vmatpush1.msra.mxu0 0.0
        %1492 = vmatprep.subr.mxu0 0.0
        %1493 = vmatpush1.msra.mxu0 0.0
        %1494 = vmatprep.subr.mxu0 0.0
        %1495 = vmatpush1.msra.mxu0 0.0
        %1496 = vmatprep.subr.mxu0 0.0
        %1497 = vmatpush1.msra.mxu0 0.0
        %1498 = vmatprep.subr.mxu0 0.0
        %1499 = vmatpush1.msra.mxu0 0.0
        %1500 = vmatprep.subr.mxu0 0.0
        %1501 = vmatpush1.msra.mxu0 0.0
        %1502 = vmatprep.subr.mxu0 0.0
        %1503 = vmatpush1.msra.mxu0 0.0
        %1504 = vmatprep.mubr.f32.mxu0 0.0
        %1505 = vmatmul.mubr.f32.gmra.mrb[0].mxu0 %v1432
        %v1506 = vpop.f32.mrb[0].mxu0
        %v1507 = vadd.f32 0.0, %v1506
        %v1508 = vpop.f32.mrb[0].mxu0
        %v1509 = vadd.f32 0.0, %v1508
        %1510 = vdwg.mxu0
        %1511 = vmatprep.subr.mxu0 %v530
        %1512 = vmatpush1.msra.mxu0 %v529
        %1513 = vmatprep.subr.mxu0 %v534
        %1514 = vmatpush1.msra.mxu0 %v533
        %1515 = vmatprep.subr.mxu0 %v538
        %1516 = vmatpush1.msra.mxu0 %v537
        %1517 = vmatprep.subr.mxu0 %v542
        %1518 = vmatpush1.msra.mxu0 %v541
        %1519 = vmatprep.subr.mxu0 %v546
        %1520 = vmatpush1.msra.mxu0 %v545
        %1521 = vmatprep.subr.mxu0 %v550
        %1522 = vmatpush1.msra.mxu0 %v549
        %1523 = vmatprep.subr.mxu0 %v554
        %1524 = vmatpush1.msra.mxu0 %v553
        %1525 = vmatprep.subr.mxu0 %v558
        %1526 = vmatpush1.msra.mxu0 %v557
        %1527 = vmatprep.subr.mxu0 %v562
        %1528 = vmatpush1.msra.mxu0 %v561
        %1529 = vmatprep.subr.mxu0 %v566
        %1530 = vmatpush1.msra.mxu0 %v565
        %1531 = vmatprep.subr.mxu0 %v570
        %1532 = vmatpush1.msra.mxu0 %v569
        %1533 = vmatprep.subr.mxu0 %v574
        %1534 = vmatpush1.msra.mxu0 %v573
        %1535 = vmatprep.subr.mxu0 %v578
        %1536 = vmatpush1.msra.mxu0 %v577
        %1537 = vmatprep.subr.mxu0 %v582
        %1538 = vmatpush1.msra.mxu0 %v581
        %1539 = vmatprep.subr.mxu0 %v586
        %1540 = vmatpush1.msra.mxu0 %v585
        %1541 = vmatprep.subr.mxu0 %v590
        %1542 = vmatpush1.msra.mxu0 %v589
        %1543 = vmatprep.subr.mxu0 0.0
        %1544 = vmatpush1.msra.mxu0 0.0
        %1545 = vmatprep.subr.mxu0 0.0
        %1546 = vmatpush1.msra.mxu0 0.0
        %1547 = vmatprep.subr.mxu0 0.0
        %1548 = vmatpush1.msra.mxu0 0.0
        %1549 = vmatprep.subr.mxu0 0.0
        %1550 = vmatpush1.msra.mxu0 0.0
        %1551 = vmatprep.subr.mxu0 0.0
        %1552 = vmatpush1.msra.mxu0 0.0
        %1553 = vmatprep.subr.mxu0 0.0
        %1554 = vmatpush1.msra.mxu0 0.0
        %1555 = vmatprep.subr.mxu0 0.0
        %1556 = vmatpush1.msra.mxu0 0.0
        %1557 = vmatprep.subr.mxu0 0.0
        %1558 = vmatpush1.msra.mxu0 0.0
        %1559 = vmatprep.subr.mxu0 0.0
        %1560 = vmatpush1.msra.mxu0 0.0
        %1561 = vmatprep.subr.mxu0 0.0
        %1562 = vmatpush1.msra.mxu0 0.0
        %1563 = vmatprep.subr.mxu0 0.0
        %1564 = vmatpush1.msra.mxu0 0.0
        %1565 = vmatprep.subr.mxu0 0.0
        %1566 = vmatpush1.msra.mxu0 0.0
        %1567 = vmatprep.subr.mxu0 0.0
        %1568 = vmatpush1.msra.mxu0 0.0
        %1569 = vmatprep.subr.mxu0 0.0
        %1570 = vmatpush1.msra.mxu0 0.0
        %1571 = vmatprep.subr.mxu0 0.0
        %1572 = vmatpush1.msra.mxu0 0.0
        %1573 = vmatprep.subr.mxu0 0.0
        %1574 = vmatpush1.msra.mxu0 0.0
        %1575 = vmatprep.mubr.f32.mxu0 0.0
        %1576 = vmatmul.mubr.f32.gmra.mrb[0].mxu0 %v1432
        %v1577 = vpop.f32.mrb[0].mxu0
        %v1578 = vadd.f32 0.0, %v1577
        %v1579 = vpop.f32.mrb[0].mxu0
        %v1580 = vadd.f32 0.0, %v1579
        %1581 = vdwg.mxu0
        %v1582 = vadd.f32 %v1436, %v1507
        %v1583 = vadd.f32 %v1437, %v1509
        %v1584 = vadd.f32 %v1438, %v1578
        %v1585 = vadd.f32 %v1439, %v1580
        %v1586 = vxor.u32 %v1582, 2147483648
        %v1587 = vxor.u32 %v1583, 2147483648
        %v1588 = vxor.u32 %v1584, 2147483648
        %v1589 = vmul.f32 %v1586, 1.442695
        %v1590 = vpow.pop %v1589
        %v1591 = vmul.f32 %v1587, 1.442695
        %v1592 = vpow.pop %v1591
        %v1593 = vmul.f32 %v1588, 1.442695
        %v1594 = vpow.pop %v1593
        %v1595 = vadd.f32 %v1590, 1.0
        %v1596 = vadd.f32 %v1592, 1.0
        %v1597 = vadd.f32 %v1594, 1.0
        %v1598 = vrcp.pop %v1595
        %v1599 = vmul.f32 1.0, %v1598
        %v1600 = vrcp.pop %v1596
        %v1601 = vmul.f32 1.0, %v1600
        %v1602 = vrcp.pop %v1597
        %v1603 = vmul.f32 1.0, %v1602
        %v1604 = vtanh.pop %v1585
        %v1605 = vmul.f32 %v1601, %v1430
        %v1606 = vmul.f32 %v1599, %v1604
        %v1607 = vadd.f32 %v1605, %v1606
        %v1608 = vtanh.pop %v1607
        %v1609 = vmul.f32 %v1603, %v1608
        %s1610 = scalar_lea.vmem [#allocation3], 24
        %1611 = vst [vmem:[%s1610] sm:$0xff] %v1609
        %s1612 = scalar_lea.vmem [#allocation2], 128
        %v1613 = vld [vmem:[%s1612] sm:$0xff]
        %v1614 = vld [vmem:[%s1612 + $0x8] sm:$0xff]
        %v1615 = vld [vmem:[%s1612 + $0x10] sm:$0xff]
        %v1616 = vld [vmem:[%s1612 + $0x18] sm:$0xff]
        %1617 = vmatprep.subr.mxu0 %v528
        %1618 = vmatpush1.msra.mxu0 %v527
        %1619 = vmatprep.subr.mxu0 %v532
        %1620 = vmatpush1.msra.mxu0 %v531
        %1621 = vmatprep.subr.mxu0 %v536
        %1622 = vmatpush1.msra.mxu0 %v535
        %1623 = vmatprep.subr.mxu0 %v540
        %1624 = vmatpush1.msra.mxu0 %v539
        %1625 = vmatprep.subr.mxu0 %v544
        %1626 = vmatpush1.msra.mxu0 %v543
        %1627 = vmatprep.subr.mxu0 %v548
        %1628 = vmatpush1.msra.mxu0 %v547
        %1629 = vmatprep.subr.mxu0 %v552
        %1630 = vmatpush1.msra.mxu0 %v551
        %1631 = vmatprep.subr.mxu0 %v556
        %1632 = vmatpush1.msra.mxu0 %v555
        %1633 = vmatprep.subr.mxu0 %v560
        %1634 = vmatpush1.msra.mxu0 %v559
        %1635 = vmatprep.subr.mxu0 %v564
        %1636 = vmatpush1.msra.mxu0 %v563
        %1637 = vmatprep.subr.mxu0 %v568
        %1638 = vmatpush1.msra.mxu0 %v567
        %1639 = vmatprep.subr.mxu0 %v572
        %1640 = vmatpush1.msra.mxu0 %v571
        %1641 = vmatprep.subr.mxu0 %v576
        %1642 = vmatpush1.msra.mxu0 %v575
        %1643 = vmatprep.subr.mxu0 %v580
        %1644 = vmatpush1.msra.mxu0 %v579
        %1645 = vmatprep.subr.mxu0 %v584
        %1646 = vmatpush1.msra.mxu0 %v583
        %1647 = vmatprep.subr.mxu0 %v588
        %1648 = vmatpush1.msra.mxu0 %v587
        %1649 = vmatprep.subr.mxu0 0.0
        %1650 = vmatpush1.msra.mxu0 0.0
        %1651 = vmatprep.subr.mxu0 0.0
        %1652 = vmatpush1.msra.mxu0 0.0
        %1653 = vmatprep.subr.mxu0 0.0
        %1654 = vmatpush1.msra.mxu0 0.0
        %1655 = vmatprep.subr.mxu0 0.0
        %1656 = vmatpush1.msra.mxu0 0.0
        %1657 = vmatprep.subr.mxu0 0.0
        %1658 = vmatpush1.msra.mxu0 0.0
        %1659 = vmatprep.subr.mxu0 0.0
        %1660 = vmatpush1.msra.mxu0 0.0
        %1661 = vmatprep.subr.mxu0 0.0
        %1662 = vmatpush1.msra.mxu0 0.0
        %1663 = vmatprep.subr.mxu0 0.0
        %1664 = vmatpush1.msra.mxu0 0.0
        %1665 = vmatprep.subr.mxu0 0.0
        %1666 = vmatpush1.msra.mxu0 0.0
        %1667 = vmatprep.subr.mxu0 0.0
        %1668 = vmatpush1.msra.mxu0 0.0
        %1669 = vmatprep.subr.mxu0 0.0
        %1670 = vmatpush1.msra.mxu0 0.0
        %1671 = vmatprep.subr.mxu0 0.0
        %1672 = vmatpush1.msra.mxu0 0.0
        %1673 = vmatprep.subr.mxu0 0.0
        %1674 = vmatpush1.msra.mxu0 0.0
        %1675 = vmatprep.subr.mxu0 0.0
        %1676 = vmatpush1.msra.mxu0 0.0
        %1677 = vmatprep.subr.mxu0 0.0
        %1678 = vmatpush1.msra.mxu0 0.0
        %1679 = vmatprep.subr.mxu0 0.0
        %1680 = vmatpush1.msra.mxu0 0.0
        %1681 = vmatprep.mubr.f32.mxu0 0.0
        %1682 = vmatmul.mubr.f32.gmra.mrb[0].mxu0 %v1609
        %v1683 = vpop.f32.mrb[0].mxu0
        %v1684 = vadd.f32 0.0, %v1683
        %v1685 = vpop.f32.mrb[0].mxu0
        %v1686 = vadd.f32 0.0, %v1685
        %1687 = vdwg.mxu0
        %1688 = vmatprep.subr.mxu0 %v530
        %1689 = vmatpush1.msra.mxu0 %v529
        %1690 = vmatprep.subr.mxu0 %v534
        %1691 = vmatpush1.msra.mxu0 %v533
        %1692 = vmatprep.subr.mxu0 %v538
        %1693 = vmatpush1.msra.mxu0 %v537
        %1694 = vmatprep.subr.mxu0 %v542
        %1695 = vmatpush1.msra.mxu0 %v541
        %1696 = vmatprep.subr.mxu0 %v546
        %1697 = vmatpush1.msra.mxu0 %v545
        %1698 = vmatprep.subr.mxu0 %v550
        %1699 = vmatpush1.msra.mxu0 %v549
        %1700 = vmatprep.subr.mxu0 %v554
        %1701 = vmatpush1.msra.mxu0 %v553
        %1702 = vmatprep.subr.mxu0 %v558
        %1703 = vmatpush1.msra.mxu0 %v557
        %1704 = vmatprep.subr.mxu0 %v562
        %1705 = vmatpush1.msra.mxu0 %v561
        %1706 = vmatprep.subr.mxu0 %v566
        %1707 = vmatpush1.msra.mxu0 %v565
        %1708 = vmatprep.subr.mxu0 %v570
        %1709 = vmatpush1.msra.mxu0 %v569
        %1710 = vmatprep.subr.mxu0 %v574
        %1711 = vmatpush1.msra.mxu0 %v573
        %1712 = vmatprep.subr.mxu0 %v578
        %1713 = vmatpush1.msra.mxu0 %v577
        %1714 = vmatprep.subr.mxu0 %v582
        %1715 = vmatpush1.msra.mxu0 %v581
        %1716 = vmatprep.subr.mxu0 %v586
        %1717 = vmatpush1.msra.mxu0 %v585
        %1718 = vmatprep.subr.mxu0 %v590
        %1719 = vmatpush1.msra.mxu0 %v589
        %1720 = vmatprep.subr.mxu0 0.0
        %1721 = vmatpush1.msra.mxu0 0.0
        %1722 = vmatprep.subr.mxu0 0.0
        %1723 = vmatpush1.msra.mxu0 0.0
        %1724 = vmatprep.subr.mxu0 0.0
        %1725 = vmatpush1.msra.mxu0 0.0
        %1726 = vmatprep.subr.mxu0 0.0
        %1727 = vmatpush1.msra.mxu0 0.0
        %1728 = vmatprep.subr.mxu0 0.0
        %1729 = vmatpush1.msra.mxu0 0.0
        %1730 = vmatprep.subr.mxu0 0.0
        %1731 = vmatpush1.msra.mxu0 0.0
        %1732 = vmatprep.subr.mxu0 0.0
        %1733 = vmatpush1.msra.mxu0 0.0
        %1734 = vmatprep.subr.mxu0 0.0
        %1735 = vmatpush1.msra.mxu0 0.0
        %1736 = vmatprep.subr.mxu0 0.0
        %1737 = vmatpush1.msra.mxu0 0.0
        %1738 = vmatprep.subr.mxu0 0.0
        %1739 = vmatpush1.msra.mxu0 0.0
        %1740 = vmatprep.subr.mxu0 0.0
        %1741 = vmatpush1.msra.mxu0 0.0
        %1742 = vmatprep.subr.mxu0 0.0
        %1743 = vmatpush1.msra.mxu0 0.0
        %1744 = vmatprep.subr.mxu0 0.0
        %1745 = vmatpush1.msra.mxu0 0.0
        %1746 = vmatprep.subr.mxu0 0.0
        %1747 = vmatpush1.msra.mxu0 0.0
        %1748 = vmatprep.subr.mxu0 0.0
        %1749 = vmatpush1.msra.mxu0 0.0
        %1750 = vmatprep.subr.mxu0 0.0
        %1751 = vmatpush1.msra.mxu0 0.0
        %1752 = vmatprep.mubr.f32.mxu0 0.0
        %1753 = vmatmul.mubr.f32.gmra.mrb[0].mxu0 %v1609
        %v1754 = vpop.f32.mrb[0].mxu0
        %v1755 = vadd.f32 0.0, %v1754
        %v1756 = vpop.f32.mrb[0].mxu0
        %v1757 = vadd.f32 0.0, %v1756
        %1758 = vdwg.mxu0
        %v1759 = vadd.f32 %v1613, %v1684
        %v1760 = vadd.f32 %v1614, %v1686
        %v1761 = vadd.f32 %v1615, %v1755
        %v1762 = vadd.f32 %v1616, %v1757
        %v1763 = vxor.u32 %v1759, 2147483648
        %v1764 = vxor.u32 %v1760, 2147483648
        %v1765 = vxor.u32 %v1761, 2147483648
        %v1766 = vmul.f32 %v1763, 1.442695
        %v1767 = vpow.pop %v1766
        %v1768 = vmul.f32 %v1764, 1.442695
        %v1769 = vpow.pop %v1768
        %v1770 = vmul.f32 %v1765, 1.442695
        %v1771 = vpow.pop %v1770
        %v1772 = vadd.f32 %v1767, 1.0
        %v1773 = vadd.f32 %v1769, 1.0
        %v1774 = vadd.f32 %v1771, 1.0
        %v1775 = vrcp.pop %v1772
        %v1776 = vmul.f32 1.0, %v1775
        %v1777 = vrcp.pop %v1773
        %v1778 = vmul.f32 1.0, %v1777
        %v1779 = vrcp.pop %v1774
        %v1780 = vmul.f32 1.0, %v1779
        %v1781 = vtanh.pop %v1762
        %v1782 = vmul.f32 %v1778, %v1607
        %v1783 = vmul.f32 %v1776, %v1781
        %v1784 = vadd.f32 %v1782, %v1783
        %v1785 = vtanh.pop %v1784
        %v1786 = vmul.f32 %v1780, %v1785
        %s1787 = scalar_lea.vmem [#allocation3], 32
        %1788 = vst [vmem:[%s1787] sm:$0xff] %v1786
        %s1789 = scalar_lea.vmem [#allocation2], 160
        %v1790 = vld [vmem:[%s1789] sm:$0xff]
        %v1791 = vld [vmem:[%s1789 + $0x8] sm:$0xff]
        %v1792 = vld [vmem:[%s1789 + $0x10] sm:$0xff]
        %v1793 = vld [vmem:[%s1789 + $0x18] sm:$0xff]
        %1794 = vmatprep.subr.mxu0 %v528
        %1795 = vmatpush1.msra.mxu0 %v527
        %1796 = vmatprep.subr.mxu0 %v532
        %1797 = vmatpush1.msra.mxu0 %v531
        %1798 = vmatprep.subr.mxu0 %v536
        %1799 = vmatpush1.msra.mxu0 %v535
        %1800 = vmatprep.subr.mxu0 %v540
        %1801 = vmatpush1.msra.mxu0 %v539
        %1802 = vmatprep.subr.mxu0 %v544
        %1803 = vmatpush1.msra.mxu0 %v543
        %1804 = vmatprep.subr.mxu0 %v548
        %1805 = vmatpush1.msra.mxu0 %v547
        %1806 = vmatprep.subr.mxu0 %v552
        %1807 = vmatpush1.msra.mxu0 %v551
        %1808 = vmatprep.subr.mxu0 %v556
        %1809 = vmatpush1.msra.mxu0 %v555
        %1810 = vmatprep.subr.mxu0 %v560
        %1811 = vmatpush1.msra.mxu0 %v559
        %1812 = vmatprep.subr.mxu0 %v564
        %1813 = vmatpush1.msra.mxu0 %v563
        %1814 = vmatprep.subr.mxu0 %v568
        %1815 = vmatpush1.msra.mxu0 %v567
        %1816 = vmatprep.subr.mxu0 %v572
        %1817 = vmatpush1.msra.mxu0 %v571
        %1818 = vmatprep.subr.mxu0 %v576
        %1819 = vmatpush1.msra.mxu0 %v575
        %1820 = vmatprep.subr.mxu0 %v580
        %1821 = vmatpush1.msra.mxu0 %v579
        %1822 = vmatprep.subr.mxu0 %v584
        %1823 = vmatpush1.msra.mxu0 %v583
        %1824 = vmatprep.subr.mxu0 %v588
        %1825 = vmatpush1.msra.mxu0 %v587
        %1826 = vmatprep.subr.mxu0 0.0
        %1827 = vmatpush1.msra.mxu0 0.0
        %1828 = vmatprep.subr.mxu0 0.0
        %1829 = vmatpush1.msra.mxu0 0.0
        %1830 = vmatprep.subr.mxu0 0.0
        %1831 = vmatpush1.msra.mxu0 0.0
        %1832 = vmatprep.subr.mxu0 0.0
        %1833 = vmatpush1.msra.mxu0 0.0
        %1834 = vmatprep.subr.mxu0 0.0
        %1835 = vmatpush1.msra.mxu0 0.0
        %1836 = vmatprep.subr.mxu0 0.0
        %1837 = vmatpush1.msra.mxu0 0.0
        %1838 = vmatprep.subr.mxu0 0.0
        %1839 = vmatpush1.msra.mxu0 0.0
        %1840 = vmatprep.subr.mxu0 0.0
        %1841 = vmatpush1.msra.mxu0 0.0
        %1842 = vmatprep.subr.mxu0 0.0
        %1843 = vmatpush1.msra.mxu0 0.0
        %1844 = vmatprep.subr.mxu0 0.0
        %1845 = vmatpush1.msra.mxu0 0.0
        %1846 = vmatprep.subr.mxu0 0.0
        %1847 = vmatpush1.msra.mxu0 0.0
        %1848 = vmatprep.subr.mxu0 0.0
        %1849 = vmatpush1.msra.mxu0 0.0
        %1850 = vmatprep.subr.mxu0 0.0
        %1851 = vmatpush1.msra.mxu0 0.0
        %1852 = vmatprep.subr.mxu0 0.0
        %1853 = vmatpush1.msra.mxu0 0.0
        %1854 = vmatprep.subr.mxu0 0.0
        %1855 = vmatpush1.msra.mxu0 0.0
        %1856 = vmatprep.subr.mxu0 0.0
        %1857 = vmatpush1.msra.mxu0 0.0
        %1858 = vmatprep.mubr.f32.mxu0 0.0
        %1859 = vmatmul.mubr.f32.gmra.mrb[0].mxu0 %v1786
        %v1860 = vpop.f32.mrb[0].mxu0
        %v1861 = vadd.f32 0.0, %v1860
        %v1862 = vpop.f32.mrb[0].mxu0
        %v1863 = vadd.f32 0.0, %v1862
        %1864 = vdwg.mxu0
        %1865 = vmatprep.subr.mxu0 %v530
        %1866 = vmatpush1.msra.mxu0 %v529
        %1867 = vmatprep.subr.mxu0 %v534
        %1868 = vmatpush1.msra.mxu0 %v533
        %1869 = vmatprep.subr.mxu0 %v538
        %1870 = vmatpush1.msra.mxu0 %v537
        %1871 = vmatprep.subr.mxu0 %v542
        %1872 = vmatpush1.msra.mxu0 %v541
        %1873 = vmatprep.subr.mxu0 %v546
        %1874 = vmatpush1.msra.mxu0 %v545
        %1875 = vmatprep.subr.mxu0 %v550
        %1876 = vmatpush1.msra.mxu0 %v549
        %1877 = vmatprep.subr.mxu0 %v554
        %1878 = vmatpush1.msra.mxu0 %v553
        %1879 = vmatprep.subr.mxu0 %v558
        %1880 = vmatpush1.msra.mxu0 %v557
        %1881 = vmatprep.subr.mxu0 %v562
        %1882 = vmatpush1.msra.mxu0 %v561
        %1883 = vmatprep.subr.mxu0 %v566
        %1884 = vmatpush1.msra.mxu0 %v565
        %1885 = vmatprep.subr.mxu0 %v570
        %1886 = vmatpush1.msra.mxu0 %v569
        %1887 = vmatprep.subr.mxu0 %v574
        %1888 = vmatpush1.msra.mxu0 %v573
        %1889 = vmatprep.subr.mxu0 %v578
        %1890 = vmatpush1.msra.mxu0 %v577
        %1891 = vmatprep.subr.mxu0 %v582
        %1892 = vmatpush1.msra.mxu0 %v581
        %1893 = vmatprep.subr.mxu0 %v586
        %1894 = vmatpush1.msra.mxu0 %v585
        %1895 = vmatprep.subr.mxu0 %v590
        %1896 = vmatpush1.msra.mxu0 %v589
        %1897 = vmatprep.subr.mxu0 0.0
        %1898 = vmatpush1.msra.mxu0 0.0
        %1899 = vmatprep.subr.mxu0 0.0
        %1900 = vmatpush1.msra.mxu0 0.0
        %1901 = vmatprep.subr.mxu0 0.0
        %1902 = vmatpush1.msra.mxu0 0.0
        %1903 = vmatprep.subr.mxu0 0.0
        %1904 = vmatpush1.msra.mxu0 0.0
        %1905 = vmatprep.subr.mxu0 0.0
        %1906 = vmatpush1.msra.mxu0 0.0
        %1907 = vmatprep.subr.mxu0 0.0
        %1908 = vmatpush1.msra.mxu0 0.0
        %1909 = vmatprep.subr.mxu0 0.0
        %1910 = vmatpush1.msra.mxu0 0.0
        %1911 = vmatprep.subr.mxu0 0.0
        %1912 = vmatpush1.msra.mxu0 0.0
        %1913 = vmatprep.subr.mxu0 0.0
        %1914 = vmatpush1.msra.mxu0 0.0
        %1915 = vmatprep.subr.mxu0 0.0
        %1916 = vmatpush1.msra.mxu0 0.0
        %1917 = vmatprep.subr.mxu0 0.0
        %1918 = vmatpush1.msra.mxu0 0.0
        %1919 = vmatprep.subr.mxu0 0.0
        %1920 = vmatpush1.msra.mxu0 0.0
        %1921 = vmatprep.subr.mxu0 0.0
        %1922 = vmatpush1.msra.mxu0 0.0
        %1923 = vmatprep.subr.mxu0 0.0
        %1924 = vmatpush1.msra.mxu0 0.0
        %1925 = vmatprep.subr.mxu0 0.0
        %1926 = vmatpush1.msra.mxu0 0.0
        %1927 = vmatprep.subr.mxu0 0.0
        %1928 = vmatpush1.msra.mxu0 0.0
        %1929 = vmatprep.mubr.f32.mxu0 0.0
        %1930 = vmatmul.mubr.f32.gmra.mrb[0].mxu0 %v1786
        %v1931 = vpop.f32.mrb[0].mxu0
        %v1932 = vadd.f32 0.0, %v1931
        %v1933 = vpop.f32.mrb[0].mxu0
        %v1934 = vadd.f32 0.0, %v1933
        %1935 = vdwg.mxu0
        %v1936 = vadd.f32 %v1790, %v1861
        %v1937 = vadd.f32 %v1791, %v1863
        %v1938 = vadd.f32 %v1792, %v1932
        %v1939 = vadd.f32 %v1793, %v1934
        %v1940 = vxor.u32 %v1936, 2147483648
        %v1941 = vxor.u32 %v1937, 2147483648
        %v1942 = vxor.u32 %v1938, 2147483648
        %v1943 = vmul.f32 %v1940, 1.442695
        %v1944 = vpow.pop %v1943
        %v1945 = vmul.f32 %v1941, 1.442695
        %v1946 = vpow.pop %v1945
        %v1947 = vmul.f32 %v1942, 1.442695
        %v1948 = vpow.pop %v1947
        %v1949 = vadd.f32 %v1944, 1.0
        %v1950 = vadd.f32 %v1946, 1.0
        %v1951 = vadd.f32 %v1948, 1.0
        %v1952 = vrcp.pop %v1949
        %v1953 = vmul.f32 1.0, %v1952
        %v1954 = vrcp.pop %v1950
        %v1955 = vmul.f32 1.0, %v1954
        %v1956 = vrcp.pop %v1951
        %v1957 = vmul.f32 1.0, %v1956
        %v1958 = vtanh.pop %v1939
        %v1959 = vmul.f32 %v1955, %v1784
        %v1960 = vmul.f32 %v1953, %v1958
        %v1961 = vadd.f32 %v1959, %v1960
        %v1962 = vtanh.pop %v1961
        %v1963 = vmul.f32 %v1957, %v1962
        %s1964 = scalar_lea.vmem [#allocation3], 40
        %1965 = vst [vmem:[%s1964] sm:$0xff] %v1963
        %s1966 = scalar_lea.vmem [#allocation2], 192
        %v1967 = vld [vmem:[%s1966] sm:$0xff]
        %v1968 = vld [vmem:[%s1966 + $0x8] sm:$0xff]
        %v1969 = vld [vmem:[%s1966 + $0x10] sm:$0xff]
        %v1970 = vld [vmem:[%s1966 + $0x18] sm:$0xff]
        %1971 = vmatprep.subr.mxu0 %v528
        %1972 = vmatpush1.msra.mxu0 %v527
        %1973 = vmatprep.subr.mxu0 %v532
        %1974 = vmatpush1.msra.mxu0 %v531
        %1975 = vmatprep.subr.mxu0 %v536
        %1976 = vmatpush1.msra.mxu0 %v535
        %1977 = vmatprep.subr.mxu0 %v540
        %1978 = vmatpush1.msra.mxu0 %v539
        %1979 = vmatprep.subr.mxu0 %v544
        %1980 = vmatpush1.msra.mxu0 %v543
        %1981 = vmatprep.subr.mxu0 %v548
        %1982 = vmatpush1.msra.mxu0 %v547
        %1983 = vmatprep.subr.mxu0 %v552
        %1984 = vmatpush1.msra.mxu0 %v551
        %1985 = vmatprep.subr.mxu0 %v556
        %1986 = vmatpush1.msra.mxu0 %v555
        %1987 = vmatprep.subr.mxu0 %v560
        %1988 = vmatpush1.msra.mxu0 %v559
        %1989 = vmatprep.subr.mxu0 %v564
        %1990 = vmatpush1.msra.mxu0 %v563
        %1991 = vmatprep.subr.mxu0 %v568
        %1992 = vmatpush1.msra.mxu0 %v567
        %1993 = vmatprep.subr.mxu0 %v572
        %1994 = vmatpush1.msra.mxu0 %v571
        %1995 = vmatprep.subr.mxu0 %v576
        %1996 = vmatpush1.msra.mxu0 %v575
        %1997 = vmatprep.subr.mxu0 %v580
        %1998 = vmatpush1.msra.mxu0 %v579
        %1999 = vmatprep.subr.mxu0 %v584
        %2000 = vmatpush1.msra.mxu0 %v583
        %2001 = vmatprep.subr.mxu0 %v588
        %2002 = vmatpush1.msra.mxu0 %v587
        %2003 = vmatprep.subr.mxu0 0.0
        %2004 = vmatpush1.msra.mxu0 0.0
        %2005 = vmatprep.subr.mxu0 0.0
        %2006 = vmatpush1.msra.mxu0 0.0
        %2007 = vmatprep.subr.mxu0 0.0
        %2008 = vmatpush1.msra.mxu0 0.0
        %2009 = vmatprep.subr.mxu0 0.0
        %2010 = vmatpush1.msra.mxu0 0.0
        %2011 = vmatprep.subr.mxu0 0.0
        %2012 = vmatpush1.msra.mxu0 0.0
        %2013 = vmatprep.subr.mxu0 0.0
        %2014 = vmatpush1.msra.mxu0 0.0
        %2015 = vmatprep.subr.mxu0 0.0
        %2016 = vmatpush1.msra.mxu0 0.0
        %2017 = vmatprep.subr.mxu0 0.0
        %2018 = vmatpush1.msra.mxu0 0.0
        %2019 = vmatprep.subr.mxu0 0.0
        %2020 = vmatpush1.msra.mxu0 0.0
        %2021 = vmatprep.subr.mxu0 0.0
        %2022 = vmatpush1.msra.mxu0 0.0
        %2023 = vmatprep.subr.mxu0 0.0
        %2024 = vmatpush1.msra.mxu0 0.0
        %2025 = vmatprep.subr.mxu0 0.0
        %2026 = vmatpush1.msra.mxu0 0.0
        %2027 = vmatprep.subr.mxu0 0.0
        %2028 = vmatpush1.msra.mxu0 0.0
        %2029 = vmatprep.subr.mxu0 0.0
        %2030 = vmatpush1.msra.mxu0 0.0
        %2031 = vmatprep.subr.mxu0 0.0
        %2032 = vmatpush1.msra.mxu0 0.0
        %2033 = vmatprep.subr.mxu0 0.0
        %2034 = vmatpush1.msra.mxu0 0.0
        %2035 = vmatprep.mubr.f32.mxu0 0.0
        %2036 = vmatmul.mubr.f32.gmra.mrb[0].mxu0 %v1963
        %v2037 = vpop.f32.mrb[0].mxu0
        %v2038 = vadd.f32 0.0, %v2037
        %v2039 = vpop.f32.mrb[0].mxu0
        %v2040 = vadd.f32 0.0, %v2039
        %2041 = vdwg.mxu0
        %2042 = vmatprep.subr.mxu0 %v530
        %2043 = vmatpush1.msra.mxu0 %v529
        %2044 = vmatprep.subr.mxu0 %v534
        %2045 = vmatpush1.msra.mxu0 %v533
        %2046 = vmatprep.subr.mxu0 %v538
        %2047 = vmatpush1.msra.mxu0 %v537
        %2048 = vmatprep.subr.mxu0 %v542
        %2049 = vmatpush1.msra.mxu0 %v541
        %2050 = vmatprep.subr.mxu0 %v546
        %2051 = vmatpush1.msra.mxu0 %v545
        %2052 = vmatprep.subr.mxu0 %v550
        %2053 = vmatpush1.msra.mxu0 %v549
        %2054 = vmatprep.subr.mxu0 %v554
        %2055 = vmatpush1.msra.mxu0 %v553
        %2056 = vmatprep.subr.mxu0 %v558
        %2057 = vmatpush1.msra.mxu0 %v557
        %2058 = vmatprep.subr.mxu0 %v562
        %2059 = vmatpush1.msra.mxu0 %v561
        %2060 = vmatprep.subr.mxu0 %v566
        %2061 = vmatpush1.msra.mxu0 %v565
        %2062 = vmatprep.subr.mxu0 %v570
        %2063 = vmatpush1.msra.mxu0 %v569
        %2064 = vmatprep.subr.mxu0 %v574
        %2065 = vmatpush1.msra.mxu0 %v573
        %2066 = vmatprep.subr.mxu0 %v578
        %2067 = vmatpush1.msra.mxu0 %v577
        %2068 = vmatprep.subr.mxu0 %v582
        %2069 = vmatpush1.msra.mxu0 %v581
        %2070 = vmatprep.subr.mxu0 %v586
        %2071 = vmatpush1.msra.mxu0 %v585
        %2072 = vmatprep.subr.mxu0 %v590
        %2073 = vmatpush1.msra.mxu0 %v589
        %2074 = vmatprep.subr.mxu0 0.0
        %2075 = vmatpush1.msra.mxu0 0.0
        %2076 = vmatprep.subr.mxu0 0.0
        %2077 = vmatpush1.msra.mxu0 0.0
        %2078 = vmatprep.subr.mxu0 0.0
        %2079 = vmatpush1.msra.mxu0 0.0
        %2080 = vmatprep.subr.mxu0 0.0
        %2081 = vmatpush1.msra.mxu0 0.0
        %2082 = vmatprep.subr.mxu0 0.0
        %2083 = vmatpush1.msra.mxu0 0.0
        %2084 = vmatprep.subr.mxu0 0.0
        %2085 = vmatpush1.msra.mxu0 0.0
        %2086 = vmatprep.subr.mxu0 0.0
        %2087 = vmatpush1.msra.mxu0 0.0
        %2088 = vmatprep.subr.mxu0 0.0
        %2089 = vmatpush1.msra.mxu0 0.0
        %2090 = vmatprep.subr.mxu0 0.0
        %2091 = vmatpush1.msra.mxu0 0.0
        %2092 = vmatprep.subr.mxu0 0.0
        %2093 = vmatpush1.msra.mxu0 0.0
        %2094 = vmatprep.subr.mxu0 0.0
        %2095 = vmatpush1.msra.mxu0 0.0
        %2096 = vmatprep.subr.mxu0 0.0
        %2097 = vmatpush1.msra.mxu0 0.0
        %2098 = vmatprep.subr.mxu0 0.0
        %2099 = vmatpush1.msra.mxu0 0.0
        %2100 = vmatprep.subr.mxu0 0.0
        %2101 = vmatpush1.msra.mxu0 0.0
        %2102 = vmatprep.subr.mxu0 0.0
        %2103 = vmatpush1.msra.mxu0 0.0
        %2104 = vmatprep.subr.mxu0 0.0
        %2105 = vmatpush1.msra.mxu0 0.0
        %2106 = vmatprep.mubr.f32.mxu0 0.0
        %2107 = vmatmul.mubr.f32.gmra.mrb[0].mxu0 %v1963
        %v2108 = vpop.f32.mrb[0].mxu0
        %v2109 = vadd.f32 0.0, %v2108
        %v2110 = vpop.f32.mrb[0].mxu0
        %v2111 = vadd.f32 0.0, %v2110
        %2112 = vdwg.mxu0
        %v2113 = vadd.f32 %v1967, %v2038
        %v2114 = vadd.f32 %v1968, %v2040
        %v2115 = vadd.f32 %v1969, %v2109
        %v2116 = vadd.f32 %v1970, %v2111
        %v2117 = vxor.u32 %v2113, 2147483648
        %v2118 = vxor.u32 %v2114, 2147483648
        %v2119 = vxor.u32 %v2115, 2147483648
        %v2120 = vmul.f32 %v2117, 1.442695
        %v2121 = vpow.pop %v2120
        %v2122 = vmul.f32 %v2118, 1.442695
        %v2123 = vpow.pop %v2122
        %v2124 = vmul.f32 %v2119, 1.442695
        %v2125 = vpow.pop %v2124
        %v2126 = vadd.f32 %v2121, 1.0
        %v2127 = vadd.f32 %v2123, 1.0
        %v2128 = vadd.f32 %v2125, 1.0
        %v2129 = vrcp.pop %v2126
        %v2130 = vmul.f32 1.0, %v2129
        %v2131 = vrcp.pop %v2127
        %v2132 = vmul.f32 1.0, %v2131
        %v2133 = vrcp.pop %v2128
        %v2134 = vmul.f32 1.0, %v2133
        %v2135 = vtanh.pop %v2116
        %v2136 = vmul.f32 %v2132, %v1961
        %v2137 = vmul.f32 %v2130, %v2135
        %v2138 = vadd.f32 %v2136, %v2137
        %v2139 = vtanh.pop %v2138
        %v2140 = vmul.f32 %v2134, %v2139
        %s2141 = scalar_lea.vmem [#allocation3], 48
        %2142 = vst [vmem:[%s2141] sm:$0xff] %v2140
        %s2143 = scalar_lea.vmem [#allocation2], 224
        %v2144 = vld [vmem:[%s2143] sm:$0xff]
        %v2145 = vld [vmem:[%s2143 + $0x8] sm:$0xff]
        %v2146 = vld [vmem:[%s2143 + $0x10] sm:$0xff]
        %v2147 = vld [vmem:[%s2143 + $0x18] sm:$0xff]
        %2148 = vmatprep.subr.mxu0 %v528
        %2149 = vmatpush1.msra.mxu0 %v527
        %2150 = vmatprep.subr.mxu0 %v532
        %2151 = vmatpush1.msra.mxu0 %v531
        %2152 = vmatprep.subr.mxu0 %v536
        %2153 = vmatpush1.msra.mxu0 %v535
        %2154 = vmatprep.subr.mxu0 %v540
        %2155 = vmatpush1.msra.mxu0 %v539
        %2156 = vmatprep.subr.mxu0 %v544
        %2157 = vmatpush1.msra.mxu0 %v543
        %2158 = vmatprep.subr.mxu0 %v548
        %2159 = vmatpush1.msra.mxu0 %v547
        %2160 = vmatprep.subr.mxu0 %v552
        %2161 = vmatpush1.msra.mxu0 %v551
        %2162 = vmatprep.subr.mxu0 %v556
        %2163 = vmatpush1.msra.mxu0 %v555
        %2164 = vmatprep.subr.mxu0 %v560
        %2165 = vmatpush1.msra.mxu0 %v559
        %2166 = vmatprep.subr.mxu0 %v564
        %2167 = vmatpush1.msra.mxu0 %v563
        %2168 = vmatprep.subr.mxu0 %v568
        %2169 = vmatpush1.msra.mxu0 %v567
        %2170 = vmatprep.subr.mxu0 %v572
        %2171 = vmatpush1.msra.mxu0 %v571
        %2172 = vmatprep.subr.mxu0 %v576
        %2173 = vmatpush1.msra.mxu0 %v575
        %2174 = vmatprep.subr.mxu0 %v580
        %2175 = vmatpush1.msra.mxu0 %v579
        %2176 = vmatprep.subr.mxu0 %v584
        %2177 = vmatpush1.msra.mxu0 %v583
        %2178 = vmatprep.subr.mxu0 %v588
        %2179 = vmatpush1.msra.mxu0 %v587
        %2180 = vmatprep.subr.mxu0 0.0
        %2181 = vmatpush1.msra.mxu0 0.0
        %2182 = vmatprep.subr.mxu0 0.0
        %2183 = vmatpush1.msra.mxu0 0.0
        %2184 = vmatprep.subr.mxu0 0.0
        %2185 = vmatpush1.msra.mxu0 0.0
        %2186 = vmatprep.subr.mxu0 0.0
        %2187 = vmatpush1.msra.mxu0 0.0
        %2188 = vmatprep.subr.mxu0 0.0
        %2189 = vmatpush1.msra.mxu0 0.0
        %2190 = vmatprep.subr.mxu0 0.0
        %2191 = vmatpush1.msra.mxu0 0.0
        %2192 = vmatprep.subr.mxu0 0.0
        %2193 = vmatpush1.msra.mxu0 0.0
        %2194 = vmatprep.subr.mxu0 0.0
        %2195 = vmatpush1.msra.mxu0 0.0
        %2196 = vmatprep.subr.mxu0 0.0
        %2197 = vmatpush1.msra.mxu0 0.0
        %2198 = vmatprep.subr.mxu0 0.0
        %2199 = vmatpush1.msra.mxu0 0.0
        %2200 = vmatprep.subr.mxu0 0.0
        %2201 = vmatpush1.msra.mxu0 0.0
        %2202 = vmatprep.subr.mxu0 0.0
        %2203 = vmatpush1.msra.mxu0 0.0
        %2204 = vmatprep.subr.mxu0 0.0
        %2205 = vmatpush1.msra.mxu0 0.0
        %2206 = vmatprep.subr.mxu0 0.0
        %2207 = vmatpush1.msra.mxu0 0.0
        %2208 = vmatprep.subr.mxu0 0.0
        %2209 = vmatpush1.msra.mxu0 0.0
        %2210 = vmatprep.subr.mxu0 0.0
        %2211 = vmatpush1.msra.mxu0 0.0
        %2212 = vmatprep.mubr.f32.mxu0 0.0
        %2213 = vmatmul.mubr.f32.gmra.mrb[0].mxu0 %v2140
        %v2214 = vpop.f32.mrb[0].mxu0
        %v2215 = vadd.f32 0.0, %v2214
        %v2216 = vpop.f32.mrb[0].mxu0
        %v2217 = vadd.f32 0.0, %v2216
        %2218 = vdwg.mxu0
        %2219 = vmatprep.subr.mxu0 %v530
        %2220 = vmatpush1.msra.mxu0 %v529
        %2221 = vmatprep.subr.mxu0 %v534
        %2222 = vmatpush1.msra.mxu0 %v533
        %2223 = vmatprep.subr.mxu0 %v538
        %2224 = vmatpush1.msra.mxu0 %v537
        %2225 = vmatprep.subr.mxu0 %v542
        %2226 = vmatpush1.msra.mxu0 %v541
        %2227 = vmatprep.subr.mxu0 %v546
        %2228 = vmatpush1.msra.mxu0 %v545
        %2229 = vmatprep.subr.mxu0 %v550
        %2230 = vmatpush1.msra.mxu0 %v549
        %2231 = vmatprep.subr.mxu0 %v554
        %2232 = vmatpush1.msra.mxu0 %v553
        %2233 = vmatprep.subr.mxu0 %v558
        %2234 = vmatpush1.msra.mxu0 %v557
        %2235 = vmatprep.subr.mxu0 %v562
        %2236 = vmatpush1.msra.mxu0 %v561
        %2237 = vmatprep.subr.mxu0 %v566
        %2238 = vmatpush1.msra.mxu0 %v565
        %2239 = vmatprep.subr.mxu0 %v570
        %2240 = vmatpush1.msra.mxu0 %v569
        %2241 = vmatprep.subr.mxu0 %v574
        %2242 = vmatpush1.msra.mxu0 %v573
        %2243 = vmatprep.subr.mxu0 %v578
        %2244 = vmatpush1.msra.mxu0 %v577
        %2245 = vmatprep.subr.mxu0 %v582
        %2246 = vmatpush1.msra.mxu0 %v581
        %2247 = vmatprep.subr.mxu0 %v586
        %2248 = vmatpush1.msra.mxu0 %v585
        %2249 = vmatprep.subr.mxu0 %v590
        %2250 = vmatpush1.msra.mxu0 %v589
        %2251 = vmatprep.subr.mxu0 0.0
        %2252 = vmatpush1.msra.mxu0 0.0
        %2253 = vmatprep.subr.mxu0 0.0
        %2254 = vmatpush1.msra.mxu0 0.0
        %2255 = vmatprep.subr.mxu0 0.0
        %2256 = vmatpush1.msra.mxu0 0.0
        %2257 = vmatprep.subr.mxu0 0.0
        %2258 = vmatpush1.msra.mxu0 0.0
        %2259 = vmatprep.subr.mxu0 0.0
        %2260 = vmatpush1.msra.mxu0 0.0
        %2261 = vmatprep.subr.mxu0 0.0
        %2262 = vmatpush1.msra.mxu0 0.0
        %2263 = vmatprep.subr.mxu0 0.0
        %2264 = vmatpush1.msra.mxu0 0.0
        %2265 = vmatprep.subr.mxu0 0.0
        %2266 = vmatpush1.msra.mxu0 0.0
        %2267 = vmatprep.subr.mxu0 0.0
        %2268 = vmatpush1.msra.mxu0 0.0
        %2269 = vmatprep.subr.mxu0 0.0
        %2270 = vmatpush1.msra.mxu0 0.0
        %2271 = vmatprep.subr.mxu0 0.0
        %2272 = vmatpush1.msra.mxu0 0.0
        %2273 = vmatprep.subr.mxu0 0.0
        %2274 = vmatpush1.msra.mxu0 0.0
        %2275 = vmatprep.subr.mxu0 0.0
        %2276 = vmatpush1.msra.mxu0 0.0
        %2277 = vmatprep.subr.mxu0 0.0
        %2278 = vmatpush1.msra.mxu0 0.0
        %2279 = vmatprep.subr.mxu0 0.0
        %2280 = vmatpush1.msra.mxu0 0.0
        %2281 = vmatprep.subr.mxu0 0.0
        %2282 = vmatpush1.msra.mxu0 0.0
        %2283 = vmatprep.mubr.f32.mxu0 0.0
        %2284 = vmatmul.mubr.f32.gmra.mrb[0].mxu0 %v2140
        %v2285 = vpop.f32.mrb[0].mxu0
        %v2286 = vadd.f32 0.0, %v2285
        %v2287 = vpop.f32.mrb[0].mxu0
        %v2288 = vadd.f32 0.0, %v2287
        %2289 = vdwg.mxu0
        %v2290 = vadd.f32 %v2144, %v2215
        %v2291 = vadd.f32 %v2145, %v2217
        %v2292 = vadd.f32 %v2146, %v2286
        %v2293 = vadd.f32 %v2147, %v2288
        %v2294 = vxor.u32 %v2290, 2147483648
        %v2295 = vxor.u32 %v2291, 2147483648
        %v2296 = vxor.u32 %v2292, 2147483648
        %v2297 = vmul.f32 %v2294, 1.442695
        %v2298 = vpow.pop %v2297
        %v2299 = vmul.f32 %v2295, 1.442695
        %v2300 = vpow.pop %v2299
        %v2301 = vmul.f32 %v2296, 1.442695
        %v2302 = vpow.pop %v2301
        %v2303 = vadd.f32 %v2298, 1.0
        %v2304 = vadd.f32 %v2300, 1.0
        %v2305 = vadd.f32 %v2302, 1.0
        %v2306 = vrcp.pop %v2303
        %v2307 = vmul.f32 1.0, %v2306
        %v2308 = vrcp.pop %v2304
        %v2309 = vmul.f32 1.0, %v2308
        %v2310 = vrcp.pop %v2305
        %v2311 = vmul.f32 1.0, %v2310
        %v2312 = vtanh.pop %v2293
        %v2313 = vmul.f32 %v2309, %v2138
        %v2314 = vmul.f32 %v2307, %v2312
        %v2315 = vadd.f32 %v2313, %v2314
        %v2316 = vtanh.pop %v2315
        %v2317 = vmul.f32 %v2311, %v2316
        %s2318 = scalar_lea.vmem [#allocation3], 56
        %2319 = vst [vmem:[%s2318] sm:$0xff] %v2317
        %2320 = vst [vmem:[#allocation5] sm:$0xff] %v2317
        %2321 = vst [vmem:[#allocation6] sm:$0xff] %v2315
        %v2322 = vld [vmem:[#allocation10] sm:$0xff]
        %v2323 = vld [vmem:[#allocation10 + $0x8] sm:$0xff]
        %v2324 = vld [vmem:[#allocation10 + $0x10] sm:$0xff]
        %v2325 = vld [vmem:[#allocation10 + $0x18] sm:$0xff]
        %v2326 = vld [vmem:[#allocation10 + $0x20] sm:$0xff]
        %v2327 = vld [vmem:[#allocation10 + $0x28] sm:$0xff]
        %v2328 = vld [vmem:[#allocation10 + $0x30] sm:$0xff]
        %v2329 = vld [vmem:[#allocation10 + $0x38] sm:$0xff]
        %v2330 = vld [vmem:[#allocation10 + $0x40] sm:$0xff]
        %v2331 = vld [vmem:[#allocation10 + $0x48] sm:$0xff]
        %v2332 = vld [vmem:[#allocation10 + $0x50] sm:$0xff]
        %v2333 = vld [vmem:[#allocation10 + $0x58] sm:$0xff]
        %v2334 = vld [vmem:[#allocation10 + $0x60] sm:$0xff]
        %v2335 = vld [vmem:[#allocation10 + $0x68] sm:$0xff]
        %v2336 = vld [vmem:[#allocation10 + $0x70] sm:$0xff]
        %v2337 = vld [vmem:[#allocation10 + $0x78] sm:$0xff]
        %v2338 = vld [vmem:[#allocation10 + $0x80] sm:$0xff]
        %v2339 = vld [vmem:[#allocation10 + $0x88] sm:$0xff]
        %v2340 = vld [vmem:[#allocation10 + $0x90] sm:$0xff]
        %v2341 = vld [vmem:[#allocation10 + $0x98] sm:$0xff]
        %v2342 = vld [vmem:[#allocation10 + $0xa0] sm:$0xff]
        %v2343 = vld [vmem:[#allocation10 + $0xa8] sm:$0xff]
        %v2344 = vld [vmem:[#allocation10 + $0xb0] sm:$0xff]
        %v2345 = vld [vmem:[#allocation10 + $0xb8] sm:$0xff]
        %v2346 = vld [vmem:[#allocation10 + $0xc0] sm:$0xff]
        %v2347 = vld [vmem:[#allocation10 + $0xc8] sm:$0xff]
        %v2348 = vld [vmem:[#allocation10 + $0xd0] sm:$0xff]
        %v2349 = vld [vmem:[#allocation10 + $0xd8] sm:$0xff]
        %v2350 = vld [vmem:[#allocation10 + $0xe0] sm:$0xff]
        %v2351 = vld [vmem:[#allocation10 + $0xe8] sm:$0xff]
        %v2352 = vld [vmem:[#allocation10 + $0xf0] sm:$0xff]
        %v2353 = vld [vmem:[#allocation10 + $0xf8] sm:$0xff]
        %v2354 = vld [vmem:[#allocation10 + $0x100] sm:$0xff]
        %v2355 = vld [vmem:[#allocation10 + $0x108] sm:$0xff]
        %v2356 = vld [vmem:[#allocation10 + $0x110] sm:$0xff]
        %v2357 = vld [vmem:[#allocation10 + $0x118] sm:$0xff]
        %v2358 = vld [vmem:[#allocation10 + $0x120] sm:$0xff]
        %v2359 = vld [vmem:[#allocation10 + $0x128] sm:$0xff]
        %v2360 = vld [vmem:[#allocation10 + $0x130] sm:$0xff]
        %v2361 = vld [vmem:[#allocation10 + $0x138] sm:$0xff]
        %v2362 = vld [vmem:[#allocation10 + $0x140] sm:$0xff]
        %v2363 = vld [vmem:[#allocation10 + $0x148] sm:$0xff]
        %v2364 = vld [vmem:[#allocation10 + $0x150] sm:$0xff]
        %v2365 = vld [vmem:[#allocation10 + $0x158] sm:$0xff]
        %v2366 = vld [vmem:[#allocation10 + $0x160] sm:$0xff]
        %v2367 = vld [vmem:[#allocation10 + $0x168] sm:$0xff]
        %v2368 = vld [vmem:[#allocation10 + $0x170] sm:$0xff]
        %v2369 = vld [vmem:[#allocation10 + $0x178] sm:$0xff]
        %v2370 = vld [vmem:[#allocation10 + $0x180] sm:$0xff]
        %v2371 = vld [vmem:[#allocation10 + $0x188] sm:$0xff]
        %v2372 = vld [vmem:[#allocation10 + $0x190] sm:$0xff]
        %v2373 = vld [vmem:[#allocation10 + $0x198] sm:$0xff]
        %v2374 = vld [vmem:[#allocation10 + $0x1a0] sm:$0xff]
        %v2375 = vld [vmem:[#allocation10 + $0x1a8] sm:$0xff]
        %v2376 = vld [vmem:[#allocation10 + $0x1b0] sm:$0xff]
        %v2377 = vld [vmem:[#allocation10 + $0x1b8] sm:$0xff]
        %v2378 = vld [vmem:[#allocation10 + $0x1c0] sm:$0xff]
        %v2379 = vld [vmem:[#allocation10 + $0x1c8] sm:$0xff]
        %v2380 = vld [vmem:[#allocation10 + $0x1d0] sm:$0xff]
        %v2381 = vld [vmem:[#allocation10 + $0x1d8] sm:$0xff]
        %v2382 = vld [vmem:[#allocation10 + $0x1e0] sm:$0xff]
        %v2383 = vld [vmem:[#allocation10 + $0x1e8] sm:$0xff]
        %v2384 = vld [vmem:[#allocation10 + $0x1f0] sm:$0xff]
        %v2385 = vld [vmem:[#allocation10 + $0x1f8] sm:$0xff]
        %v2386 = vld [vmem:[#allocation12] sm:$0xff]
        %v2387 = vld [vmem:[#allocation12 + $0x8] sm:$0xff]
        %v2388 = vld [vmem:[#allocation12 + $0x10] sm:$0xff]
        %v2389 = vld [vmem:[#allocation12 + $0x18] sm:$0xff]
        %v2390 = vld [vmem:[#allocation12 + $0x20] sm:$0xff]
        %v2391 = vld [vmem:[#allocation12 + $0x28] sm:$0xff]
        %v2392 = vld [vmem:[#allocation12 + $0x30] sm:$0xff]
        %v2393 = vld [vmem:[#allocation12 + $0x38] sm:$0xff]
        %v2394 = vld [vmem:[#allocation12 + $0x40] sm:$0xff]
        %v2395 = vld [vmem:[#allocation12 + $0x48] sm:$0xff]
        %v2396 = vld [vmem:[#allocation12 + $0x50] sm:$0xff]
        %v2397 = vld [vmem:[#allocation12 + $0x58] sm:$0xff]
        %v2398 = vld [vmem:[#allocation12 + $0x60] sm:$0xff]
        %v2399 = vld [vmem:[#allocation12 + $0x68] sm:$0xff]
        %v2400 = vld [vmem:[#allocation12 + $0x70] sm:$0xff]
        %v2401 = vld [vmem:[#allocation12 + $0x78] sm:$0xff]
        %v2402 = vld [vmem:[#allocation12 + $0x80] sm:$0xff]
        %v2403 = vld [vmem:[#allocation12 + $0x88] sm:$0xff]
        %v2404 = vld [vmem:[#allocation12 + $0x90] sm:$0xff]
        %v2405 = vld [vmem:[#allocation12 + $0x98] sm:$0xff]
        %v2406 = vld [vmem:[#allocation12 + $0xa0] sm:$0xff]
        %v2407 = vld [vmem:[#allocation12 + $0xa8] sm:$0xff]
        %v2408 = vld [vmem:[#allocation12 + $0xb0] sm:$0xff]
        %v2409 = vld [vmem:[#allocation12 + $0xb8] sm:$0xff]
        %v2410 = vld [vmem:[#allocation12 + $0xc0] sm:$0xff]
        %v2411 = vld [vmem:[#allocation12 + $0xc8] sm:$0xff]
        %v2412 = vld [vmem:[#allocation12 + $0xd0] sm:$0xff]
        %v2413 = vld [vmem:[#allocation12 + $0xd8] sm:$0xff]
        %v2414 = vld [vmem:[#allocation12 + $0xe0] sm:$0xff]
        %v2415 = vld [vmem:[#allocation12 + $0xe8] sm:$0xff]
        %v2416 = vld [vmem:[#allocation12 + $0xf0] sm:$0xff]
        %v2417 = vld [vmem:[#allocation12 + $0xf8] sm:$0xff]
        %v2418 = vld [vmem:[#allocation12 + $0x100] sm:$0xff]
        %v2419 = vld [vmem:[#allocation12 + $0x108] sm:$0xff]
        %v2420 = vld [vmem:[#allocation12 + $0x110] sm:$0xff]
        %v2421 = vld [vmem:[#allocation12 + $0x118] sm:$0xff]
        %v2422 = vld [vmem:[#allocation12 + $0x120] sm:$0xff]
        %v2423 = vld [vmem:[#allocation12 + $0x128] sm:$0xff]
        %v2424 = vld [vmem:[#allocation12 + $0x130] sm:$0xff]
        %v2425 = vld [vmem:[#allocation12 + $0x138] sm:$0xff]
        %v2426 = vld [vmem:[#allocation12 + $0x140] sm:$0xff]
        %v2427 = vld [vmem:[#allocation12 + $0x148] sm:$0xff]
        %v2428 = vld [vmem:[#allocation12 + $0x150] sm:$0xff]
        %v2429 = vld [vmem:[#allocation12 + $0x158] sm:$0xff]
        %v2430 = vld [vmem:[#allocation12 + $0x160] sm:$0xff]
        %v2431 = vld [vmem:[#allocation12 + $0x168] sm:$0xff]
        %v2432 = vld [vmem:[#allocation12 + $0x170] sm:$0xff]
        %v2433 = vld [vmem:[#allocation12 + $0x178] sm:$0xff]
        %v2434 = vld [vmem:[#allocation12 + $0x180] sm:$0xff]
        %v2435 = vld [vmem:[#allocation12 + $0x188] sm:$0xff]
        %v2436 = vld [vmem:[#allocation12 + $0x190] sm:$0xff]
        %v2437 = vld [vmem:[#allocation12 + $0x198] sm:$0xff]
        %v2438 = vld [vmem:[#allocation12 + $0x1a0] sm:$0xff]
        %v2439 = vld [vmem:[#allocation12 + $0x1a8] sm:$0xff]
        %v2440 = vld [vmem:[#allocation12 + $0x1b0] sm:$0xff]
        %v2441 = vld [vmem:[#allocation12 + $0x1b8] sm:$0xff]
        %v2442 = vld [vmem:[#allocation12 + $0x1c0] sm:$0xff]
        %v2443 = vld [vmem:[#allocation12 + $0x1c8] sm:$0xff]
        %v2444 = vld [vmem:[#allocation12 + $0x1d0] sm:$0xff]
        %v2445 = vld [vmem:[#allocation12 + $0x1d8] sm:$0xff]
        %v2446 = vld [vmem:[#allocation12 + $0x1e0] sm:$0xff]
        %v2447 = vld [vmem:[#allocation12 + $0x1e8] sm:$0xff]
        %v2448 = vld [vmem:[#allocation12 + $0x1f0] sm:$0xff]
        %v2449 = vld [vmem:[#allocation12 + $0x1f8] sm:$0xff]
        %v2450 = vld [vmem:[%s6] sm:$0xf]
        %v2451 = vld [vmem:[#allocation3] sm:$0xff]
        %v2452 = vld [vmem:[#allocation3 + $0x8] sm:$0xff]
        %v2453 = vld [vmem:[#allocation3 + $0x10] sm:$0xff]
        %v2454 = vld [vmem:[#allocation3 + $0x18] sm:$0xff]
        %v2455 = vld [vmem:[#allocation3 + $0x20] sm:$0xff]
        %v2456 = vld [vmem:[#allocation3 + $0x28] sm:$0xff]
        %v2457 = vld [vmem:[#allocation3 + $0x30] sm:$0xff]
        %v2458 = vld [vmem:[#allocation3 + $0x38] sm:$0xff]
        %v2460 = vlaneseq
        %v2461 = vshrl.u32 %v2460, 7
        %v2462 = vsub.s32 0, %v2461
        %v2463 = vrot.slane %v2450, %v2462
        %v2464 = vlaneseq
        %v2465 = vshrl.u32 %v2464, 7
        %v2466 = vsub.s32 1, %v2465
        %v2467 = vrot.slane %v2450, %v2466
        %v2468 = vlaneseq
        %v2469 = vshrl.u32 %v2468, 7
        %v2470 = vsub.s32 2, %v2469
        %v2471 = vrot.slane %v2450, %v2470
        %v2472 = vlaneseq
        %v2473 = vshrl.u32 %v2472, 7
        %v2474 = vsub.s32 3, %v2473
        %v2475 = vrot.slane %v2450, %v2474
        %2480 = vmatprep.subr.mxu0 %v2323
        %2481 = vmatpush1.msra.mxu0 %v2322
        %2482 = vmatprep.subr.mxu0 %v2327
        %2483 = vmatpush1.msra.mxu0 %v2326
        %2484 = vmatprep.subr.mxu0 %v2331
        %2485 = vmatpush1.msra.mxu0 %v2330
        %2486 = vmatprep.subr.mxu0 %v2335
        %2487 = vmatpush1.msra.mxu0 %v2334
        %2488 = vmatprep.subr.mxu0 %v2339
        %2489 = vmatpush1.msra.mxu0 %v2338
        %2490 = vmatprep.subr.mxu0 %v2343
        %2491 = vmatpush1.msra.mxu0 %v2342
        %2492 = vmatprep.subr.mxu0 %v2347
        %2493 = vmatpush1.msra.mxu0 %v2346
        %2494 = vmatprep.subr.mxu0 %v2351
        %2495 = vmatpush1.msra.mxu0 %v2350
        %2496 = vmatprep.subr.mxu0 %v2355
        %2497 = vmatpush1.msra.mxu0 %v2354
        %2498 = vmatprep.subr.mxu0 %v2359
        %2499 = vmatpush1.msra.mxu0 %v2358
        %2500 = vmatprep.subr.mxu0 %v2363
        %2501 = vmatpush1.msra.mxu0 %v2362
        %2502 = vmatprep.subr.mxu0 %v2367
        %2503 = vmatpush1.msra.mxu0 %v2366
        %2504 = vmatprep.subr.mxu0 %v2371
        %2505 = vmatpush1.msra.mxu0 %v2370
        %2506 = vmatprep.subr.mxu0 %v2375
        %2507 = vmatpush1.msra.mxu0 %v2374
        %2508 = vmatprep.subr.mxu0 %v2379
        %2509 = vmatpush1.msra.mxu0 %v2378
        %2510 = vmatprep.subr.mxu0 %v2383
        %2511 = vmatpush1.msra.mxu0 %v2382
        %2512 = vmatprep.subr.mxu0 0.0
        %2513 = vmatpush1.msra.mxu0 0.0
        %2514 = vmatprep.subr.mxu0 0.0
        %2515 = vmatpush1.msra.mxu0 0.0
        %2516 = vmatprep.subr.mxu0 0.0
        %2517 = vmatpush1.msra.mxu0 0.0
        %2518 = vmatprep.subr.mxu0 0.0
        %2519 = vmatpush1.msra.mxu0 0.0
        %2520 = vmatprep.subr.mxu0 0.0
        %2521 = vmatpush1.msra.mxu0 0.0
        %2522 = vmatprep.subr.mxu0 0.0
        %2523 = vmatpush1.msra.mxu0 0.0
        %2524 = vmatprep.subr.mxu0 0.0
        %2525 = vmatpush1.msra.mxu0 0.0
        %2526 = vmatprep.subr.mxu0 0.0
        %2527 = vmatpush1.msra.mxu0 0.0
        %2528 = vmatprep.subr.mxu0 0.0
        %2529 = vmatpush1.msra.mxu0 0.0
        %2530 = vmatprep.subr.mxu0 0.0
        %2531 = vmatpush1.msra.mxu0 0.0
        %2532 = vmatprep.subr.mxu0 0.0
        %2533 = vmatpush1.msra.mxu0 0.0
        %2534 = vmatprep.subr.mxu0 0.0
        %2535 = vmatpush1.msra.mxu0 0.0
        %2536 = vmatprep.subr.mxu0 0.0
        %2537 = vmatpush1.msra.mxu0 0.0
        %2538 = vmatprep.subr.mxu0 0.0
        %2539 = vmatpush1.msra.mxu0 0.0
        %2540 = vmatprep.subr.mxu0 0.0
        %2541 = vmatpush1.msra.mxu0 0.0
        %2542 = vmatprep.subr.mxu0 0.0
        %2543 = vmatpush1.msra.mxu0 0.0
        %2544 = vmatprep.mubr.f32.mxu0 0.0
        %2545 = vmatmul.mubr.f32.gmra.mrb[0].mxu0 %v2451
        %v2546 = vpop.f32.mrb[0].mxu0
        %v2547 = vadd.f32 %v2463, %v2546
        %v2548 = vpop.f32.mrb[0].mxu0
        %v2549 = vadd.f32 %v2467, %v2548
        %2550 = vmatprep.mubr.f32.mxu0 0.0
        %2551 = vmatmul.mubr.f32.gmra.mrb[0].mxu0 %v2452
        %v2552 = vpop.f32.mrb[0].mxu0
        %v2553 = vadd.f32 %v2463, %v2552
        %v2554 = vpop.f32.mrb[0].mxu0
        %v2555 = vadd.f32 %v2467, %v2554
        %2556 = vmatprep.mubr.f32.mxu0 0.0
        %2557 = vmatmul.mubr.f32.gmra.mrb[0].mxu0 %v2453
        %v2558 = vpop.f32.mrb[0].mxu0
        %v2559 = vadd.f32 %v2463, %v2558
        %v2560 = vpop.f32.mrb[0].mxu0
        %v2561 = vadd.f32 %v2467, %v2560
        %2562 = vmatprep.mubr.f32.mxu0 0.0
        %2563 = vmatmul.mubr.f32.gmra.mrb[0].mxu0 %v2454
        %v2564 = vpop.f32.mrb[0].mxu0
        %v2565 = vadd.f32 %v2463, %v2564
        %v2566 = vpop.f32.mrb[0].mxu0
        %v2567 = vadd.f32 %v2467, %v2566
        %2568 = vmatprep.mubr.f32.mxu0 0.0
        %2569 = vmatmul.mubr.f32.gmra.mrb[0].mxu0 %v2455
        %v2570 = vpop.f32.mrb[0].mxu0
        %v2571 = vadd.f32 %v2463, %v2570
        %v2572 = vpop.f32.mrb[0].mxu0
        %v2573 = vadd.f32 %v2467, %v2572
        %2574 = vmatprep.mubr.f32.mxu0 0.0
        %2575 = vmatmul.mubr.f32.gmra.mrb[0].mxu0 %v2456
        %v2576 = vpop.f32.mrb[0].mxu0
        %v2577 = vadd.f32 %v2463, %v2576
        %v2578 = vpop.f32.mrb[0].mxu0
        %v2579 = vadd.f32 %v2467, %v2578
        %2580 = vmatprep.mubr.f32.mxu0 0.0
        %2581 = vmatmul.mubr.f32.gmra.mrb[0].mxu0 %v2457
        %v2582 = vpop.f32.mrb[0].mxu0
        %v2583 = vadd.f32 %v2463, %v2582
        %v2584 = vpop.f32.mrb[0].mxu0
        %v2585 = vadd.f32 %v2467, %v2584
        %2586 = vmatprep.mubr.f32.mxu0 0.0
        %2587 = vmatmul.mubr.f32.gmra.mrb[0].mxu0 %v2458
        %v2588 = vpop.f32.mrb[0].mxu0
        %v2589 = vadd.f32 %v2463, %v2588
        %v2590 = vpop.f32.mrb[0].mxu0
        %v2591 = vadd.f32 %v2467, %v2590
        %2592 = vdwg.mxu0
        %2593 = vmatprep.subr.mxu0 %v2325
        %2594 = vmatpush1.msra.mxu0 %v2324
        %2595 = vmatprep.subr.mxu0 %v2329
        %2596 = vmatpush1.msra.mxu0 %v2328
        %2597 = vmatprep.subr.mxu0 %v2333
        %2598 = vmatpush1.msra.mxu0 %v2332
        %2599 = vmatprep.subr.mxu0 %v2337
        %2600 = vmatpush1.msra.mxu0 %v2336
        %2601 = vmatprep.subr.mxu0 %v2341
        %2602 = vmatpush1.msra.mxu0 %v2340
        %2603 = vmatprep.subr.mxu0 %v2345
        %2604 = vmatpush1.msra.mxu0 %v2344
        %2605 = vmatprep.subr.mxu0 %v2349
        %2606 = vmatpush1.msra.mxu0 %v2348
        %2607 = vmatprep.subr.mxu0 %v2353
        %2608 = vmatpush1.msra.mxu0 %v2352
        %2609 = vmatprep.subr.mxu0 %v2357
        %2610 = vmatpush1.msra.mxu0 %v2356
        %2611 = vmatprep.subr.mxu0 %v2361
        %2612 = vmatpush1.msra.mxu0 %v2360
        %2613 = vmatprep.subr.mxu0 %v2365
        %2614 = vmatpush1.msra.mxu0 %v2364
        %2615 = vmatprep.subr.mxu0 %v2369
        %2616 = vmatpush1.msra.mxu0 %v2368
        %2617 = vmatprep.subr.mxu0 %v2373
        %2618 = vmatpush1.msra.mxu0 %v2372
        %2619 = vmatprep.subr.mxu0 %v2377
        %2620 = vmatpush1.msra.mxu0 %v2376
        %2621 = vmatprep.subr.mxu0 %v2381
        %2622 = vmatpush1.msra.mxu0 %v2380
        %2623 = vmatprep.subr.mxu0 %v2385
        %2624 = vmatpush1.msra.mxu0 %v2384
        %2625 = vmatprep.subr.mxu0 0.0
        %2626 = vmatpush1.msra.mxu0 0.0
        %2627 = vmatprep.subr.mxu0 0.0
        %2628 = vmatpush1.msra.mxu0 0.0
        %2629 = vmatprep.subr.mxu0 0.0
        %2630 = vmatpush1.msra.mxu0 0.0
        %2631 = vmatprep.subr.mxu0 0.0
        %2632 = vmatpush1.msra.mxu0 0.0
        %2633 = vmatprep.subr.mxu0 0.0
        %2634 = vmatpush1.msra.mxu0 0.0
        %2635 = vmatprep.subr.mxu0 0.0
        %2636 = vmatpush1.msra.mxu0 0.0
        %2637 = vmatprep.subr.mxu0 0.0
        %2638 = vmatpush1.msra.mxu0 0.0
        %2639 = vmatprep.subr.mxu0 0.0
        %2640 = vmatpush1.msra.mxu0 0.0
        %2641 = vmatprep.subr.mxu0 0.0
        %2642 = vmatpush1.msra.mxu0 0.0
        %2643 = vmatprep.subr.mxu0 0.0
        %2644 = vmatpush1.msra.mxu0 0.0
        %2645 = vmatprep.subr.mxu0 0.0
        %2646 = vmatpush1.msra.mxu0 0.0
        %2647 = vmatprep.subr.mxu0 0.0
        %2648 = vmatpush1.msra.mxu0 0.0
        %2649 = vmatprep.subr.mxu0 0.0
        %2650 = vmatpush1.msra.mxu0 0.0
        %2651 = vmatprep.subr.mxu0 0.0
        %2652 = vmatpush1.msra.mxu0 0.0
        %2653 = vmatprep.subr.mxu0 0.0
        %2654 = vmatpush1.msra.mxu0 0.0
        %2655 = vmatprep.subr.mxu0 0.0
        %2656 = vmatpush1.msra.mxu0 0.0
        %2657 = vmatprep.mubr.f32.mxu0 0.0
        %2658 = vmatmul.mubr.f32.gmra.mrb[0].mxu0 %v2451
        %v2659 = vpop.f32.mrb[0].mxu0
        %v2660 = vadd.f32 %v2471, %v2659
        %v2661 = vpop.f32.mrb[0].mxu0
        %v2662 = vadd.f32 %v2475, %v2661
        %2663 = vmatprep.mubr.f32.mxu0 0.0
        %2664 = vmatmul.mubr.f32.gmra.mrb[0].mxu0 %v2452
        %v2665 = vpop.f32.mrb[0].mxu0
        %v2666 = vadd.f32 %v2471, %v2665
        %v2667 = vpop.f32.mrb[0].mxu0
        %v2668 = vadd.f32 %v2475, %v2667
        %2669 = vmatprep.mubr.f32.mxu0 0.0
        %2670 = vmatmul.mubr.f32.gmra.mrb[0].mxu0 %v2453
        %v2671 = vpop.f32.mrb[0].mxu0
        %v2672 = vadd.f32 %v2471, %v2671
        %v2673 = vpop.f32.mrb[0].mxu0
        %v2674 = vadd.f32 %v2475, %v2673
        %2675 = vmatprep.mubr.f32.mxu0 0.0
        %2676 = vmatmul.mubr.f32.gmra.mrb[0].mxu0 %v2454
        %v2677 = vpop.f32.mrb[0].mxu0
        %v2678 = vadd.f32 %v2471, %v2677
        %v2679 = vpop.f32.mrb[0].mxu0
        %v2680 = vadd.f32 %v2475, %v2679
        %2681 = vmatprep.mubr.f32.mxu0 0.0
        %2682 = vmatmul.mubr.f32.gmra.mrb[0].mxu0 %v2455
        %v2683 = vpop.f32.mrb[0].mxu0
        %v2684 = vadd.f32 %v2471, %v2683
        %v2685 = vpop.f32.mrb[0].mxu0
        %v2686 = vadd.f32 %v2475, %v2685
        %2687 = vmatprep.mubr.f32.mxu0 0.0
        %2688 = vmatmul.mubr.f32.gmra.mrb[0].mxu0 %v2456
        %v2689 = vpop.f32.mrb[0].mxu0
        %v2690 = vadd.f32 %v2471, %v2689
        %v2691 = vpop.f32.mrb[0].mxu0
        %v2692 = vadd.f32 %v2475, %v2691
        %2693 = vmatprep.mubr.f32.mxu0 0.0
        %2694 = vmatmul.mubr.f32.gmra.mrb[0].mxu0 %v2457
        %v2695 = vpop.f32.mrb[0].mxu0
        %v2696 = vadd.f32 %v2471, %v2695
        %v2697 = vpop.f32.mrb[0].mxu0
        %v2698 = vadd.f32 %v2475, %v2697
        %2699 = vmatprep.mubr.f32.mxu0 0.0
        %2700 = vmatmul.mubr.f32.gmra.mrb[0].mxu0 %v2458
        %v2701 = vpop.f32.mrb[0].mxu0
        %v2702 = vadd.f32 %v2471, %v2701
        %v2703 = vpop.f32.mrb[0].mxu0
        %v2704 = vadd.f32 %v2475, %v2703
        %2705 = vdwg.mxu0
        %2706 = vst [vmem:[#allocation2] sm:$0xff] %v2547
        %2707 = vst [vmem:[#allocation2 + $0x8] sm:$0xff] %v2549
        %2708 = vst [vmem:[#allocation2 + $0x10] sm:$0xff] %v2660
        %2709 = vst [vmem:[#allocation2 + $0x18] sm:$0xff] %v2662
        %2710 = vst [vmem:[#allocation2 + $0x20] sm:$0xff] %v2553
        %2711 = vst [vmem:[#allocation2 + $0x28] sm:$0xff] %v2555
        %2712 = vst [vmem:[#allocation2 + $0x30] sm:$0xff] %v2666
        %2713 = vst [vmem:[#allocation2 + $0x38] sm:$0xff] %v2668
        %2714 = vst [vmem:[#allocation2 + $0x40] sm:$0xff] %v2559
        %2715 = vst [vmem:[#allocation2 + $0x48] sm:$0xff] %v2561
        %2716 = vst [vmem:[#allocation2 + $0x50] sm:$0xff] %v2672
        %2717 = vst [vmem:[#allocation2 + $0x58] sm:$0xff] %v2674
        %2718 = vst [vmem:[#allocation2 + $0x60] sm:$0xff] %v2565
        %2719 = vst [vmem:[#allocation2 + $0x68] sm:$0xff] %v2567
        %2720 = vst [vmem:[#allocation2 + $0x70] sm:$0xff] %v2678
        %2721 = vst [vmem:[#allocation2 + $0x78] sm:$0xff] %v2680
        %2722 = vst [vmem:[#allocation2 + $0x80] sm:$0xff] %v2571
        %2723 = vst [vmem:[#allocation2 + $0x88] sm:$0xff] %v2573
        %2724 = vst [vmem:[#allocation2 + $0x90] sm:$0xff] %v2684
        %2725 = vst [vmem:[#allocation2 + $0x98] sm:$0xff] %v2686
        %2726 = vst [vmem:[#allocation2 + $0xa0] sm:$0xff] %v2577
        %2727 = vst [vmem:[#allocation2 + $0xa8] sm:$0xff] %v2579
        %2728 = vst [vmem:[#allocation2 + $0xb0] sm:$0xff] %v2690
        %2729 = vst [vmem:[#allocation2 + $0xb8] sm:$0xff] %v2692
        %2730 = vst [vmem:[#allocation2 + $0xc0] sm:$0xff] %v2583
        %2731 = vst [vmem:[#allocation2 + $0xc8] sm:$0xff] %v2585
        %2732 = vst [vmem:[#allocation2 + $0xd0] sm:$0xff] %v2696
        %2733 = vst [vmem:[#allocation2 + $0xd8] sm:$0xff] %v2698
        %2734 = vst [vmem:[#allocation2 + $0xe0] sm:$0xff] %v2589
        %2735 = vst [vmem:[#allocation2 + $0xe8] sm:$0xff] %v2591
        %2736 = vst [vmem:[#allocation2 + $0xf0] sm:$0xff] %v2702
        %2737 = vst [vmem:[#allocation2 + $0xf8] sm:$0xff] %v2704
        %s2738 = scalar_lea.vmem [#allocation5], 8
        %v2739 = vld [vmem:[%s2738] sm:$0xff]
        %s2740 = scalar_lea.vmem [#allocation6], 8
        %v2741 = vld [vmem:[%s2740] sm:$0xff]
        %v2742 = vld [vmem:[#allocation2] sm:$0xff]
        %v2743 = vld [vmem:[#allocation2 + $0x8] sm:$0xff]
        %v2744 = vld [vmem:[#allocation2 + $0x10] sm:$0xff]
        %v2745 = vld [vmem:[#allocation2 + $0x18] sm:$0xff]
        %2746 = vmatprep.subr.mxu0 %v2387
        %2747 = vmatpush1.msra.mxu0 %v2386
        %2748 = vmatprep.subr.mxu0 %v2391
        %2749 = vmatpush1.msra.mxu0 %v2390
        %2750 = vmatprep.subr.mxu0 %v2395
        %2751 = vmatpush1.msra.mxu0 %v2394
        %2752 = vmatprep.subr.mxu0 %v2399
        %2753 = vmatpush1.msra.mxu0 %v2398
        %2754 = vmatprep.subr.mxu0 %v2403
        %2755 = vmatpush1.msra.mxu0 %v2402
        %2756 = vmatprep.subr.mxu0 %v2407
        %2757 = vmatpush1.msra.mxu0 %v2406
        %2758 = vmatprep.subr.mxu0 %v2411
        %2759 = vmatpush1.msra.mxu0 %v2410
        %2760 = vmatprep.subr.mxu0 %v2415
        %2761 = vmatpush1.msra.mxu0 %v2414
        %2762 = vmatprep.subr.mxu0 %v2419
        %2763 = vmatpush1.msra.mxu0 %v2418
        %2764 = vmatprep.subr.mxu0 %v2423
        %2765 = vmatpush1.msra.mxu0 %v2422
        %2766 = vmatprep.subr.mxu0 %v2427
        %2767 = vmatpush1.msra.mxu0 %v2426
        %2768 = vmatprep.subr.mxu0 %v2431
        %2769 = vmatpush1.msra.mxu0 %v2430
        %2770 = vmatprep.subr.mxu0 %v2435
        %2771 = vmatpush1.msra.mxu0 %v2434
        %2772 = vmatprep.subr.mxu0 %v2439
        %2773 = vmatpush1.msra.mxu0 %v2438
        %2774 = vmatprep.subr.mxu0 %v2443
        %2775 = vmatpush1.msra.mxu0 %v2442
        %2776 = vmatprep.subr.mxu0 %v2447
        %2777 = vmatpush1.msra.mxu0 %v2446
        %2778 = vmatprep.subr.mxu0 0.0
        %2779 = vmatpush1.msra.mxu0 0.0
        %2780 = vmatprep.subr.mxu0 0.0
        %2781 = vmatpush1.msra.mxu0 0.0
        %2782 = vmatprep.subr.mxu0 0.0
        %2783 = vmatpush1.msra.mxu0 0.0
        %2784 = vmatprep.subr.mxu0 0.0
        %2785 = vmatpush1.msra.mxu0 0.0
        %2786 = vmatprep.subr.mxu0 0.0
        %2787 = vmatpush1.msra.mxu0 0.0
        %2788 = vmatprep.subr.mxu0 0.0
        %2789 = vmatpush1.msra.mxu0 0.0
        %2790 = vmatprep.subr.mxu0 0.0
        %2791 = vmatpush1.msra.mxu0 0.0
        %2792 = vmatprep.subr.mxu0 0.0
        %2793 = vmatpush1.msra.mxu0 0.0
        %2794 = vmatprep.subr.mxu0 0.0
        %2795 = vmatpush1.msra.mxu0 0.0
        %2796 = vmatprep.subr.mxu0 0.0
        %2797 = vmatpush1.msra.mxu0 0.0
        %2798 = vmatprep.subr.mxu0 0.0
        %2799 = vmatpush1.msra.mxu0 0.0
        %2800 = vmatprep.subr.mxu0 0.0
        %2801 = vmatpush1.msra.mxu0 0.0
        %2802 = vmatprep.subr.mxu0 0.0
        %2803 = vmatpush1.msra.mxu0 0.0
        %2804 = vmatprep.subr.mxu0 0.0
        %2805 = vmatpush1.msra.mxu0 0.0
        %2806 = vmatprep.subr.mxu0 0.0
        %2807 = vmatpush1.msra.mxu0 0.0
        %2808 = vmatprep.subr.mxu0 0.0
        %2809 = vmatpush1.msra.mxu0 0.0
        %2810 = vmatprep.mubr.f32.mxu0 0.0
        %2811 = vmatmul.mubr.f32.gmra.mrb[0].mxu0 %v2739
        %v2812 = vpop.f32.mrb[0].mxu0
        %v2813 = vadd.f32 0.0, %v2812
        %v2814 = vpop.f32.mrb[0].mxu0
        %v2815 = vadd.f32 0.0, %v2814
        %2816 = vdwg.mxu0
        %2817 = vmatprep.subr.mxu0 %v2389
        %2818 = vmatpush1.msra.mxu0 %v2388
        %2819 = vmatprep.subr.mxu0 %v2393
        %2820 = vmatpush1.msra.mxu0 %v2392
        %2821 = vmatprep.subr.mxu0 %v2397
        %2822 = vmatpush1.msra.mxu0 %v2396
        %2823 = vmatprep.subr.mxu0 %v2401
        %2824 = vmatpush1.msra.mxu0 %v2400
        %2825 = vmatprep.subr.mxu0 %v2405
        %2826 = vmatpush1.msra.mxu0 %v2404
        %2827 = vmatprep.subr.mxu0 %v2409
        %2828 = vmatpush1.msra.mxu0 %v2408
        %2829 = vmatprep.subr.mxu0 %v2413
        %2830 = vmatpush1.msra.mxu0 %v2412
        %2831 = vmatprep.subr.mxu0 %v2417
        %2832 = vmatpush1.msra.mxu0 %v2416
        %2833 = vmatprep.subr.mxu0 %v2421
        %2834 = vmatpush1.msra.mxu0 %v2420
        %2835 = vmatprep.subr.mxu0 %v2425
        %2836 = vmatpush1.msra.mxu0 %v2424
        %2837 = vmatprep.subr.mxu0 %v2429
        %2838 = vmatpush1.msra.mxu0 %v2428
        %2839 = vmatprep.subr.mxu0 %v2433
        %2840 = vmatpush1.msra.mxu0 %v2432
        %2841 = vmatprep.subr.mxu0 %v2437
        %2842 = vmatpush1.msra.mxu0 %v2436
        %2843 = vmatprep.subr.mxu0 %v2441
        %2844 = vmatpush1.msra.mxu0 %v2440
        %2845 = vmatprep.subr.mxu0 %v2445
        %2846 = vmatpush1.msra.mxu0 %v2444
        %2847 = vmatprep.subr.mxu0 %v2449
        %2848 = vmatpush1.msra.mxu0 %v2448
        %2849 = vmatprep.subr.mxu0 0.0
        %2850 = vmatpush1.msra.mxu0 0.0
        %2851 = vmatprep.subr.mxu0 0.0
        %2852 = vmatpush1.msra.mxu0 0.0
        %2853 = vmatprep.subr.mxu0 0.0
        %2854 = vmatpush1.msra.mxu0 0.0
        %2855 = vmatprep.subr.mxu0 0.0
        %2856 = vmatpush1.msra.mxu0 0.0
        %2857 = vmatprep.subr.mxu0 0.0
        %2858 = vmatpush1.msra.mxu0 0.0
        %2859 = vmatprep.subr.mxu0 0.0
        %2860 = vmatpush1.msra.mxu0 0.0
        %2861 = vmatprep.subr.mxu0 0.0
        %2862 = vmatpush1.msra.mxu0 0.0
        %2863 = vmatprep.subr.mxu0 0.0
        %2864 = vmatpush1.msra.mxu0 0.0
        %2865 = vmatprep.subr.mxu0 0.0
        %2866 = vmatpush1.msra.mxu0 0.0
        %2867 = vmatprep.subr.mxu0 0.0
        %2868 = vmatpush1.msra.mxu0 0.0
        %2869 = vmatprep.subr.mxu0 0.0
        %2870 = vmatpush1.msra.mxu0 0.0
        %2871 = vmatprep.subr.mxu0 0.0
        %2872 = vmatpush1.msra.mxu0 0.0
        %2873 = vmatprep.subr.mxu0 0.0
        %2874 = vmatpush1.msra.mxu0 0.0
        %2875 = vmatprep.subr.mxu0 0.0
        %2876 = vmatpush1.msra.mxu0 0.0
        %2877 = vmatprep.subr.mxu0 0.0
        %2878 = vmatpush1.msra.mxu0 0.0
        %2879 = vmatprep.subr.mxu0 0.0
        %2880 = vmatpush1.msra.mxu0 0.0
        %2881 = vmatprep.mubr.f32.mxu0 0.0
        %2882 = vmatmul.mubr.f32.gmra.mrb[0].mxu0 %v2739
        %v2883 = vpop.f32.mrb[0].mxu0
        %v2884 = vadd.f32 0.0, %v2883
        %v2885 = vpop.f32.mrb[0].mxu0
        %v2886 = vadd.f32 0.0, %v2885
        %2887 = vdwg.mxu0
        %v2888 = vadd.f32 %v2742, %v2813
        %v2889 = vadd.f32 %v2743, %v2815
        %v2890 = vadd.f32 %v2744, %v2884
        %v2891 = vadd.f32 %v2745, %v2886
        %v2892 = vxor.u32 %v2888, 2147483648
        %v2893 = vxor.u32 %v2889, 2147483648
        %v2894 = vxor.u32 %v2890, 2147483648
        %v2895 = vmul.f32 %v2892, 1.442695
        %v2896 = vpow.pop %v2895
        %v2897 = vmul.f32 %v2893, 1.442695
        %v2898 = vpow.pop %v2897
        %v2899 = vmul.f32 %v2894, 1.442695
        %v2900 = vpow.pop %v2899
        %v2901 = vadd.f32 %v2896, 1.0
        %v2902 = vadd.f32 %v2898, 1.0
        %v2903 = vadd.f32 %v2900, 1.0
        %v2904 = vrcp.pop %v2901
        %v2905 = vmul.f32 1.0, %v2904
        %v2906 = vrcp.pop %v2902
        %v2907 = vmul.f32 1.0, %v2906
        %v2908 = vrcp.pop %v2903
        %v2909 = vmul.f32 1.0, %v2908
        %v2910 = vtanh.pop %v2891
        %v2911 = vmul.f32 %v2907, %v2741
        %v2912 = vmul.f32 %v2905, %v2910
        %v2913 = vadd.f32 %v2911, %v2912
        %v2914 = vtanh.pop %v2913
        %v2915 = vmul.f32 %v2909, %v2914
        %2916 = vst [vmem:[#allocation4] sm:$0xff] %v2915
        %v2917 = vld [vmem:[%s1081] sm:$0xff]
        %v2918 = vld [vmem:[%s1081 + $0x8] sm:$0xff]
        %v2919 = vld [vmem:[%s1081 + $0x10] sm:$0xff]
        %v2920 = vld [vmem:[%s1081 + $0x18] sm:$0xff]
        %2921 = vmatprep.subr.mxu0 %v2387
        %2922 = vmatpush1.msra.mxu0 %v2386
        %2923 = vmatprep.subr.mxu0 %v2391
        %2924 = vmatpush1.msra.mxu0 %v2390
        %2925 = vmatprep.subr.mxu0 %v2395
        %2926 = vmatpush1.msra.mxu0 %v2394
        %2927 = vmatprep.subr.mxu0 %v2399
        %2928 = vmatpush1.msra.mxu0 %v2398
        %2929 = vmatprep.subr.mxu0 %v2403
        %2930 = vmatpush1.msra.mxu0 %v2402
        %2931 = vmatprep.subr.mxu0 %v2407
        %2932 = vmatpush1.msra.mxu0 %v2406
        %2933 = vmatprep.subr.mxu0 %v2411
        %2934 = vmatpush1.msra.mxu0 %v2410
        %2935 = vmatprep.subr.mxu0 %v2415
        %2936 = vmatpush1.msra.mxu0 %v2414
        %2937 = vmatprep.subr.mxu0 %v2419
        %2938 = vmatpush1.msra.mxu0 %v2418
        %2939 = vmatprep.subr.mxu0 %v2423
        %2940 = vmatpush1.msra.mxu0 %v2422
        %2941 = vmatprep.subr.mxu0 %v2427
        %2942 = vmatpush1.msra.mxu0 %v2426
        %2943 = vmatprep.subr.mxu0 %v2431
        %2944 = vmatpush1.msra.mxu0 %v2430
        %2945 = vmatprep.subr.mxu0 %v2435
        %2946 = vmatpush1.msra.mxu0 %v2434
        %2947 = vmatprep.subr.mxu0 %v2439
        %2948 = vmatpush1.msra.mxu0 %v2438
        %2949 = vmatprep.subr.mxu0 %v2443
        %2950 = vmatpush1.msra.mxu0 %v2442
        %2951 = vmatprep.subr.mxu0 %v2447
        %2952 = vmatpush1.msra.mxu0 %v2446
        %2953 = vmatprep.subr.mxu0 0.0
        %2954 = vmatpush1.msra.mxu0 0.0
        %2955 = vmatprep.subr.mxu0 0.0
        %2956 = vmatpush1.msra.mxu0 0.0
        %2957 = vmatprep.subr.mxu0 0.0
        %2958 = vmatpush1.msra.mxu0 0.0
        %2959 = vmatprep.subr.mxu0 0.0
        %2960 = vmatpush1.msra.mxu0 0.0
        %2961 = vmatprep.subr.mxu0 0.0
        %2962 = vmatpush1.msra.mxu0 0.0
        %2963 = vmatprep.subr.mxu0 0.0
        %2964 = vmatpush1.msra.mxu0 0.0
        %2965 = vmatprep.subr.mxu0 0.0
        %2966 = vmatpush1.msra.mxu0 0.0
        %2967 = vmatprep.subr.mxu0 0.0
        %2968 = vmatpush1.msra.mxu0 0.0
        %2969 = vmatprep.subr.mxu0 0.0
        %2970 = vmatpush1.msra.mxu0 0.0
        %2971 = vmatprep.subr.mxu0 0.0
        %2972 = vmatpush1.msra.mxu0 0.0
        %2973 = vmatprep.subr.mxu0 0.0
        %2974 = vmatpush1.msra.mxu0 0.0
        %2975 = vmatprep.subr.mxu0 0.0
        %2976 = vmatpush1.msra.mxu0 0.0
        %2977 = vmatprep.subr.mxu0 0.0
        %2978 = vmatpush1.msra.mxu0 0.0
        %2979 = vmatprep.subr.mxu0 0.0
        %2980 = vmatpush1.msra.mxu0 0.0
        %2981 = vmatprep.subr.mxu0 0.0
        %2982 = vmatpush1.msra.mxu0 0.0
        %2983 = vmatprep.subr.mxu0 0.0
        %2984 = vmatpush1.msra.mxu0 0.0
        %2985 = vmatprep.mubr.f32.mxu0 0.0
        %2986 = vmatmul.mubr.f32.gmra.mrb[0].mxu0 %v2915
        %v2987 = vpop.f32.mrb[0].mxu0
        %v2988 = vadd.f32 0.0, %v2987
        %v2989 = vpop.f32.mrb[0].mxu0
        %v2990 = vadd.f32 0.0, %v2989
        %2991 = vdwg.mxu0
        %2992 = vmatprep.subr.mxu0 %v2389
        %2993 = vmatpush1.msra.mxu0 %v2388
        %2994 = vmatprep.subr.mxu0 %v2393
        %2995 = vmatpush1.msra.mxu0 %v2392
        %2996 = vmatprep.subr.mxu0 %v2397
        %2997 = vmatpush1.msra.mxu0 %v2396
        %2998 = vmatprep.subr.mxu0 %v2401
        %2999 = vmatpush1.msra.mxu0 %v2400
        %3000 = vmatprep.subr.mxu0 %v2405
        %3001 = vmatpush1.msra.mxu0 %v2404
        %3002 = vmatprep.subr.mxu0 %v2409
        %3003 = vmatpush1.msra.mxu0 %v2408
        %3004 = vmatprep.subr.mxu0 %v2413
        %3005 = vmatpush1.msra.mxu0 %v2412
        %3006 = vmatprep.subr.mxu0 %v2417
        %3007 = vmatpush1.msra.mxu0 %v2416
        %3008 = vmatprep.subr.mxu0 %v2421
        %3009 = vmatpush1.msra.mxu0 %v2420
        %3010 = vmatprep.subr.mxu0 %v2425
        %3011 = vmatpush1.msra.mxu0 %v2424
        %3012 = vmatprep.subr.mxu0 %v2429
        %3013 = vmatpush1.msra.mxu0 %v2428
        %3014 = vmatprep.subr.mxu0 %v2433
        %3015 = vmatpush1.msra.mxu0 %v2432
        %3016 = vmatprep.subr.mxu0 %v2437
        %3017 = vmatpush1.msra.mxu0 %v2436
        %3018 = vmatprep.subr.mxu0 %v2441
        %3019 = vmatpush1.msra.mxu0 %v2440
        %3020 = vmatprep.subr.mxu0 %v2445
        %3021 = vmatpush1.msra.mxu0 %v2444
        %3022 = vmatprep.subr.mxu0 %v2449
        %3023 = vmatpush1.msra.mxu0 %v2448
        %3024 = vmatprep.subr.mxu0 0.0
        %3025 = vmatpush1.msra.mxu0 0.0
        %3026 = vmatprep.subr.mxu0 0.0
        %3027 = vmatpush1.msra.mxu0 0.0
        %3028 = vmatprep.subr.mxu0 0.0
        %3029 = vmatpush1.msra.mxu0 0.0
        %3030 = vmatprep.subr.mxu0 0.0
        %3031 = vmatpush1.msra.mxu0 0.0
        %3032 = vmatprep.subr.mxu0 0.0
        %3033 = vmatpush1.msra.mxu0 0.0
        %3034 = vmatprep.subr.mxu0 0.0
        %3035 = vmatpush1.msra.mxu0 0.0
        %3036 = vmatprep.subr.mxu0 0.0
        %3037 = vmatpush1.msra.mxu0 0.0
        %3038 = vmatprep.subr.mxu0 0.0
        %3039 = vmatpush1.msra.mxu0 0.0
        %3040 = vmatprep.subr.mxu0 0.0
        %3041 = vmatpush1.msra.mxu0 0.0
        %3042 = vmatprep.subr.mxu0 0.0
        %3043 = vmatpush1.msra.mxu0 0.0
        %3044 = vmatprep.subr.mxu0 0.0
        %3045 = vmatpush1.msra.mxu0 0.0
        %3046 = vmatprep.subr.mxu0 0.0
        %3047 = vmatpush1.msra.mxu0 0.0
        %3048 = vmatprep.subr.mxu0 0.0
        %3049 = vmatpush1.msra.mxu0 0.0
        %3050 = vmatprep.subr.mxu0 0.0
        %3051 = vmatpush1.msra.mxu0 0.0
        %3052 = vmatprep.subr.mxu0 0.0
        %3053 = vmatpush1.msra.mxu0 0.0
        %3054 = vmatprep.subr.mxu0 0.0
        %3055 = vmatpush1.msra.mxu0 0.0
        %3056 = vmatprep.mubr.f32.mxu0 0.0
        %3057 = vmatmul.mubr.f32.gmra.mrb[0].mxu0 %v2915
        %v3058 = vpop.f32.mrb[0].mxu0
        %v3059 = vadd.f32 0.0, %v3058
        %v3060 = vpop.f32.mrb[0].mxu0
        %v3061 = vadd.f32 0.0, %v3060
        %3062 = vdwg.mxu0
        %v3063 = vadd.f32 %v2917, %v2988
        %v3064 = vadd.f32 %v2918, %v2990
        %v3065 = vadd.f32 %v2919, %v3059
        %v3066 = vadd.f32 %v2920, %v3061
        %v3067 = vxor.u32 %v3063, 2147483648
        %v3068 = vxor.u32 %v3064, 2147483648
        %v3069 = vxor.u32 %v3065, 2147483648
        %v3070 = vmul.f32 %v3067, 1.442695
        %v3071 = vpow.pop %v3070
        %v3072 = vmul.f32 %v3068, 1.442695
        %v3073 = vpow.pop %v3072
        %v3074 = vmul.f32 %v3069, 1.442695
        %v3075 = vpow.pop %v3074
        %v3076 = vadd.f32 %v3071, 1.0
        %v3077 = vadd.f32 %v3073, 1.0
        %v3078 = vadd.f32 %v3075, 1.0
        %v3079 = vrcp.pop %v3076
        %v3080 = vmul.f32 1.0, %v3079
        %v3081 = vrcp.pop %v3077
        %v3082 = vmul.f32 1.0, %v3081
        %v3083 = vrcp.pop %v3078
        %v3084 = vmul.f32 1.0, %v3083
        %v3085 = vtanh.pop %v3066
        %v3086 = vmul.f32 %v3082, %v2913
        %v3087 = vmul.f32 %v3080, %v3085
        %v3088 = vadd.f32 %v3086, %v3087
        %v3089 = vtanh.pop %v3088
        %v3090 = vmul.f32 %v3084, %v3089
        %s3091 = scalar_lea.vmem [#allocation4], 8
        %3092 = vst [vmem:[%s3091] sm:$0xff] %v3090
        %v3093 = vld [vmem:[%s1258] sm:$0xff]
        %v3094 = vld [vmem:[%s1258 + $0x8] sm:$0xff]
        %v3095 = vld [vmem:[%s1258 + $0x10] sm:$0xff]
        %v3096 = vld [vmem:[%s1258 + $0x18] sm:$0xff]
        %3097 = vmatprep.subr.mxu0 %v2387
        %3098 = vmatpush1.msra.mxu0 %v2386
        %3099 = vmatprep.subr.mxu0 %v2391
        %3100 = vmatpush1.msra.mxu0 %v2390
        %3101 = vmatprep.subr.mxu0 %v2395
        %3102 = vmatpush1.msra.mxu0 %v2394
        %3103 = vmatprep.subr.mxu0 %v2399
        %3104 = vmatpush1.msra.mxu0 %v2398
        %3105 = vmatprep.subr.mxu0 %v2403
        %3106 = vmatpush1.msra.mxu0 %v2402
        %3107 = vmatprep.subr.mxu0 %v2407
        %3108 = vmatpush1.msra.mxu0 %v2406
        %3109 = vmatprep.subr.mxu0 %v2411
        %3110 = vmatpush1.msra.mxu0 %v2410
        %3111 = vmatprep.subr.mxu0 %v2415
        %3112 = vmatpush1.msra.mxu0 %v2414
        %3113 = vmatprep.subr.mxu0 %v2419
        %3114 = vmatpush1.msra.mxu0 %v2418
        %3115 = vmatprep.subr.mxu0 %v2423
        %3116 = vmatpush1.msra.mxu0 %v2422
        %3117 = vmatprep.subr.mxu0 %v2427
        %3118 = vmatpush1.msra.mxu0 %v2426
        %3119 = vmatprep.subr.mxu0 %v2431
        %3120 = vmatpush1.msra.mxu0 %v2430
        %3121 = vmatprep.subr.mxu0 %v2435
        %3122 = vmatpush1.msra.mxu0 %v2434
        %3123 = vmatprep.subr.mxu0 %v2439
        %3124 = vmatpush1.msra.mxu0 %v2438
        %3125 = vmatprep.subr.mxu0 %v2443
        %3126 = vmatpush1.msra.mxu0 %v2442
        %3127 = vmatprep.subr.mxu0 %v2447
        %3128 = vmatpush1.msra.mxu0 %v2446
        %3129 = vmatprep.subr.mxu0 0.0
        %3130 = vmatpush1.msra.mxu0 0.0
        %3131 = vmatprep.subr.mxu0 0.0
        %3132 = vmatpush1.msra.mxu0 0.0
        %3133 = vmatprep.subr.mxu0 0.0
        %3134 = vmatpush1.msra.mxu0 0.0
        %3135 = vmatprep.subr.mxu0 0.0
        %3136 = vmatpush1.msra.mxu0 0.0
        %3137 = vmatprep.subr.mxu0 0.0
        %3138 = vmatpush1.msra.mxu0 0.0
        %3139 = vmatprep.subr.mxu0 0.0
        %3140 = vmatpush1.msra.mxu0 0.0
        %3141 = vmatprep.subr.mxu0 0.0
        %3142 = vmatpush1.msra.mxu0 0.0
        %3143 = vmatprep.subr.mxu0 0.0
        %3144 = vmatpush1.msra.mxu0 0.0
        %3145 = vmatprep.subr.mxu0 0.0
        %3146 = vmatpush1.msra.mxu0 0.0
        %3147 = vmatprep.subr.mxu0 0.0
        %3148 = vmatpush1.msra.mxu0 0.0
        %3149 = vmatprep.subr.mxu0 0.0
        %3150 = vmatpush1.msra.mxu0 0.0
        %3151 = vmatprep.subr.mxu0 0.0
        %3152 = vmatpush1.msra.mxu0 0.0
        %3153 = vmatprep.subr.mxu0 0.0
        %3154 = vmatpush1.msra.mxu0 0.0
        %3155 = vmatprep.subr.mxu0 0.0
        %3156 = vmatpush1.msra.mxu0 0.0
        %3157 = vmatprep.subr.mxu0 0.0
        %3158 = vmatpush1.msra.mxu0 0.0
        %3159 = vmatprep.subr.mxu0 0.0
        %3160 = vmatpush1.msra.mxu0 0.0
        %3161 = vmatprep.mubr.f32.mxu0 0.0
        %3162 = vmatmul.mubr.f32.gmra.mrb[0].mxu0 %v3090
        %v3163 = vpop.f32.mrb[0].mxu0
        %v3164 = vadd.f32 0.0, %v3163
        %v3165 = vpop.f32.mrb[0].mxu0
        %v3166 = vadd.f32 0.0, %v3165
        %3167 = vdwg.mxu0
        %3168 = vmatprep.subr.mxu0 %v2389
        %3169 = vmatpush1.msra.mxu0 %v2388
        %3170 = vmatprep.subr.mxu0 %v2393
        %3171 = vmatpush1.msra.mxu0 %v2392
        %3172 = vmatprep.subr.mxu0 %v2397
        %3173 = vmatpush1.msra.mxu0 %v2396
        %3174 = vmatprep.subr.mxu0 %v2401
        %3175 = vmatpush1.msra.mxu0 %v2400
        %3176 = vmatprep.subr.mxu0 %v2405
        %3177 = vmatpush1.msra.mxu0 %v2404
        %3178 = vmatprep.subr.mxu0 %v2409
        %3179 = vmatpush1.msra.mxu0 %v2408
        %3180 = vmatprep.subr.mxu0 %v2413
        %3181 = vmatpush1.msra.mxu0 %v2412
        %3182 = vmatprep.subr.mxu0 %v2417
        %3183 = vmatpush1.msra.mxu0 %v2416
        %3184 = vmatprep.subr.mxu0 %v2421
        %3185 = vmatpush1.msra.mxu0 %v2420
        %3186 = vmatprep.subr.mxu0 %v2425
        %3187 = vmatpush1.msra.mxu0 %v2424
        %3188 = vmatprep.subr.mxu0 %v2429
        %3189 = vmatpush1.msra.mxu0 %v2428
        %3190 = vmatprep.subr.mxu0 %v2433
        %3191 = vmatpush1.msra.mxu0 %v2432
        %3192 = vmatprep.subr.mxu0 %v2437
        %3193 = vmatpush1.msra.mxu0 %v2436
        %3194 = vmatprep.subr.mxu0 %v2441
        %3195 = vmatpush1.msra.mxu0 %v2440
        %3196 = vmatprep.subr.mxu0 %v2445
        %3197 = vmatpush1.msra.mxu0 %v2444
        %3198 = vmatprep.subr.mxu0 %v2449
        %3199 = vmatpush1.msra.mxu0 %v2448
        %3200 = vmatprep.subr.mxu0 0.0
        %3201 = vmatpush1.msra.mxu0 0.0
        %3202 = vmatprep.subr.mxu0 0.0
        %3203 = vmatpush1.msra.mxu0 0.0
        %3204 = vmatprep.subr.mxu0 0.0
        %3205 = vmatpush1.msra.mxu0 0.0
        %3206 = vmatprep.subr.mxu0 0.0
        %3207 = vmatpush1.msra.mxu0 0.0
        %3208 = vmatprep.subr.mxu0 0.0
        %3209 = vmatpush1.msra.mxu0 0.0
        %3210 = vmatprep.subr.mxu0 0.0
        %3211 = vmatpush1.msra.mxu0 0.0
        %3212 = vmatprep.subr.mxu0 0.0
        %3213 = vmatpush1.msra.mxu0 0.0
        %3214 = vmatprep.subr.mxu0 0.0
        %3215 = vmatpush1.msra.mxu0 0.0
        %3216 = vmatprep.subr.mxu0 0.0
        %3217 = vmatpush1.msra.mxu0 0.0
        %3218 = vmatprep.subr.mxu0 0.0
        %3219 = vmatpush1.msra.mxu0 0.0
        %3220 = vmatprep.subr.mxu0 0.0
        %3221 = vmatpush1.msra.mxu0 0.0
        %3222 = vmatprep.subr.mxu0 0.0
        %3223 = vmatpush1.msra.mxu0 0.0
        %3224 = vmatprep.subr.mxu0 0.0
        %3225 = vmatpush1.msra.mxu0 0.0
        %3226 = vmatprep.subr.mxu0 0.0
        %3227 = vmatpush1.msra.mxu0 0.0
        %3228 = vmatprep.subr.mxu0 0.0
        %3229 = vmatpush1.msra.mxu0 0.0
        %3230 = vmatprep.subr.mxu0 0.0
        %3231 = vmatpush1.msra.mxu0 0.0
        %3232 = vmatprep.mubr.f32.mxu0 0.0
        %3233 = vmatmul.mubr.f32.gmra.mrb[0].mxu0 %v3090
        %v3234 = vpop.f32.mrb[0].mxu0
        %v3235 = vadd.f32 0.0, %v3234
        %v3236 = vpop.f32.mrb[0].mxu0
        %v3237 = vadd.f32 0.0, %v3236
        %3238 = vdwg.mxu0
        %v3239 = vadd.f32 %v3093, %v3164
        %v3240 = vadd.f32 %v3094, %v3166
        %v3241 = vadd.f32 %v3095, %v3235
        %v3242 = vadd.f32 %v3096, %v3237
        %v3243 = vxor.u32 %v3239, 2147483648
        %v3244 = vxor.u32 %v3240, 2147483648
        %v3245 = vxor.u32 %v3241, 2147483648
        %v3246 = vmul.f32 %v3243, 1.442695
        %v3247 = vpow.pop %v3246
        %v3248 = vmul.f32 %v3244, 1.442695
        %v3249 = vpow.pop %v3248
        %v3250 = vmul.f32 %v3245, 1.442695
        %v3251 = vpow.pop %v3250
        %v3252 = vadd.f32 %v3247, 1.0
        %v3253 = vadd.f32 %v3249, 1.0
        %v3254 = vadd.f32 %v3251, 1.0
        %v3255 = vrcp.pop %v3252
        %v3256 = vmul.f32 1.0, %v3255
        %v3257 = vrcp.pop %v3253
        %v3258 = vmul.f32 1.0, %v3257
        %v3259 = vrcp.pop %v3254
        %v3260 = vmul.f32 1.0, %v3259
        %v3261 = vtanh.pop %v3242
        %v3262 = vmul.f32 %v3258, %v3088
        %v3263 = vmul.f32 %v3256, %v3261
        %v3264 = vadd.f32 %v3262, %v3263
        %v3265 = vtanh.pop %v3264
        %v3266 = vmul.f32 %v3260, %v3265
        %s3267 = scalar_lea.vmem [#allocation4], 16
        %3268 = vst [vmem:[%s3267] sm:$0xff] %v3266
        %v3269 = vld [vmem:[%s1435] sm:$0xff]
        %v3270 = vld [vmem:[%s1435 + $0x8] sm:$0xff]
        %v3271 = vld [vmem:[%s1435 + $0x10] sm:$0xff]
        %v3272 = vld [vmem:[%s1435 + $0x18] sm:$0xff]
        %3273 = vmatprep.subr.mxu0 %v2387
        %3274 = vmatpush1.msra.mxu0 %v2386
        %3275 = vmatprep.subr.mxu0 %v2391
        %3276 = vmatpush1.msra.mxu0 %v2390
        %3277 = vmatprep.subr.mxu0 %v2395
        %3278 = vmatpush1.msra.mxu0 %v2394
        %3279 = vmatprep.subr.mxu0 %v2399
        %3280 = vmatpush1.msra.mxu0 %v2398
        %3281 = vmatprep.subr.mxu0 %v2403
        %3282 = vmatpush1.msra.mxu0 %v2402
        %3283 = vmatprep.subr.mxu0 %v2407
        %3284 = vmatpush1.msra.mxu0 %v2406
        %3285 = vmatprep.subr.mxu0 %v2411
        %3286 = vmatpush1.msra.mxu0 %v2410
        %3287 = vmatprep.subr.mxu0 %v2415
        %3288 = vmatpush1.msra.mxu0 %v2414
        %3289 = vmatprep.subr.mxu0 %v2419
        %3290 = vmatpush1.msra.mxu0 %v2418
        %3291 = vmatprep.subr.mxu0 %v2423
        %3292 = vmatpush1.msra.mxu0 %v2422
        %3293 = vmatprep.subr.mxu0 %v2427
        %3294 = vmatpush1.msra.mxu0 %v2426
        %3295 = vmatprep.subr.mxu0 %v2431
        %3296 = vmatpush1.msra.mxu0 %v2430
        %3297 = vmatprep.subr.mxu0 %v2435
        %3298 = vmatpush1.msra.mxu0 %v2434
        %3299 = vmatprep.subr.mxu0 %v2439
        %3300 = vmatpush1.msra.mxu0 %v2438
        %3301 = vmatprep.subr.mxu0 %v2443
        %3302 = vmatpush1.msra.mxu0 %v2442
        %3303 = vmatprep.subr.mxu0 %v2447
        %3304 = vmatpush1.msra.mxu0 %v2446
        %3305 = vmatprep.subr.mxu0 0.0
        %3306 = vmatpush1.msra.mxu0 0.0
        %3307 = vmatprep.subr.mxu0 0.0
        %3308 = vmatpush1.msra.mxu0 0.0
        %3309 = vmatprep.subr.mxu0 0.0
        %3310 = vmatpush1.msra.mxu0 0.0
        %3311 = vmatprep.subr.mxu0 0.0
        %3312 = vmatpush1.msra.mxu0 0.0
        %3313 = vmatprep.subr.mxu0 0.0
        %3314 = vmatpush1.msra.mxu0 0.0
        %3315 = vmatprep.subr.mxu0 0.0
        %3316 = vmatpush1.msra.mxu0 0.0
        %3317 = vmatprep.subr.mxu0 0.0
        %3318 = vmatpush1.msra.mxu0 0.0
        %3319 = vmatprep.subr.mxu0 0.0
        %3320 = vmatpush1.msra.mxu0 0.0
        %3321 = vmatprep.subr.mxu0 0.0
        %3322 = vmatpush1.msra.mxu0 0.0
        %3323 = vmatprep.subr.mxu0 0.0
        %3324 = vmatpush1.msra.mxu0 0.0
        %3325 = vmatprep.subr.mxu0 0.0
        %3326 = vmatpush1.msra.mxu0 0.0
        %3327 = vmatprep.subr.mxu0 0.0
        %3328 = vmatpush1.msra.mxu0 0.0
        %3329 = vmatprep.subr.mxu0 0.0
        %3330 = vmatpush1.msra.mxu0 0.0
        %3331 = vmatprep.subr.mxu0 0.0
        %3332 = vmatpush1.msra.mxu0 0.0
        %3333 = vmatprep.subr.mxu0 0.0
        %3334 = vmatpush1.msra.mxu0 0.0
        %3335 = vmatprep.subr.mxu0 0.0
        %3336 = vmatpush1.msra.mxu0 0.0
        %3337 = vmatprep.mubr.f32.mxu0 0.0
        %3338 = vmatmul.mubr.f32.gmra.mrb[0].mxu0 %v3266
        %v3339 = vpop.f32.mrb[0].mxu0
        %v3340 = vadd.f32 0.0, %v3339
        %v3341 = vpop.f32.mrb[0].mxu0
        %v3342 = vadd.f32 0.0, %v3341
        %3343 = vdwg.mxu0
        %3344 = vmatprep.subr.mxu0 %v2389
        %3345 = vmatpush1.msra.mxu0 %v2388
        %3346 = vmatprep.subr.mxu0 %v2393
        %3347 = vmatpush1.msra.mxu0 %v2392
        %3348 = vmatprep.subr.mxu0 %v2397
        %3349 = vmatpush1.msra.mxu0 %v2396
        %3350 = vmatprep.subr.mxu0 %v2401
        %3351 = vmatpush1.msra.mxu0 %v2400
        %3352 = vmatprep.subr.mxu0 %v2405
        %3353 = vmatpush1.msra.mxu0 %v2404
        %3354 = vmatprep.subr.mxu0 %v2409
        %3355 = vmatpush1.msra.mxu0 %v2408
        %3356 = vmatprep.subr.mxu0 %v2413
        %3357 = vmatpush1.msra.mxu0 %v2412
        %3358 = vmatprep.subr.mxu0 %v2417
        %3359 = vmatpush1.msra.mxu0 %v2416
        %3360 = vmatprep.subr.mxu0 %v2421
        %3361 = vmatpush1.msra.mxu0 %v2420
        %3362 = vmatprep.subr.mxu0 %v2425
        %3363 = vmatpush1.msra.mxu0 %v2424
        %3364 = vmatprep.subr.mxu0 %v2429
        %3365 = vmatpush1.msra.mxu0 %v2428
        %3366 = vmatprep.subr.mxu0 %v2433
        %3367 = vmatpush1.msra.mxu0 %v2432
        %3368 = vmatprep.subr.mxu0 %v2437
        %3369 = vmatpush1.msra.mxu0 %v2436
        %3370 = vmatprep.subr.mxu0 %v2441
        %3371 = vmatpush1.msra.mxu0 %v2440
        %3372 = vmatprep.subr.mxu0 %v2445
        %3373 = vmatpush1.msra.mxu0 %v2444
        %3374 = vmatprep.subr.mxu0 %v2449
        %3375 = vmatpush1.msra.mxu0 %v2448
        %3376 = vmatprep.subr.mxu0 0.0
        %3377 = vmatpush1.msra.mxu0 0.0
        %3378 = vmatprep.subr.mxu0 0.0
        %3379 = vmatpush1.msra.mxu0 0.0
        %3380 = vmatprep.subr.mxu0 0.0
        %3381 = vmatpush1.msra.mxu0 0.0
        %3382 = vmatprep.subr.mxu0 0.0
        %3383 = vmatpush1.msra.mxu0 0.0
        %3384 = vmatprep.subr.mxu0 0.0
        %3385 = vmatpush1.msra.mxu0 0.0
        %3386 = vmatprep.subr.mxu0 0.0
        %3387 = vmatpush1.msra.mxu0 0.0
        %3388 = vmatprep.subr.mxu0 0.0
        %3389 = vmatpush1.msra.mxu0 0.0
        %3390 = vmatprep.subr.mxu0 0.0
        %3391 = vmatpush1.msra.mxu0 0.0
        %3392 = vmatprep.subr.mxu0 0.0
        %3393 = vmatpush1.msra.mxu0 0.0
        %3394 = vmatprep.subr.mxu0 0.0
        %3395 = vmatpush1.msra.mxu0 0.0
        %3396 = vmatprep.subr.mxu0 0.0
        %3397 = vmatpush1.msra.mxu0 0.0
        %3398 = vmatprep.subr.mxu0 0.0
        %3399 = vmatpush1.msra.mxu0 0.0
        %3400 = vmatprep.subr.mxu0 0.0
        %3401 = vmatpush1.msra.mxu0 0.0
        %3402 = vmatprep.subr.mxu0 0.0
        %3403 = vmatpush1.msra.mxu0 0.0
        %3404 = vmatprep.subr.mxu0 0.0
        %3405 = vmatpush1.msra.mxu0 0.0
        %3406 = vmatprep.subr.mxu0 0.0
        %3407 = vmatpush1.msra.mxu0 0.0
        %3408 = vmatprep.mubr.f32.mxu0 0.0
        %3409 = vmatmul.mubr.f32.gmra.mrb[0].mxu0 %v3266
        %v3410 = vpop.f32.mrb[0].mxu0
        %v3411 = vadd.f32 0.0, %v3410
        %v3412 = vpop.f32.mrb[0].mxu0
        %v3413 = vadd.f32 0.0, %v3412
        %3414 = vdwg.mxu0
        %v3415 = vadd.f32 %v3269, %v3340
        %v3416 = vadd.f32 %v3270, %v3342
        %v3417 = vadd.f32 %v3271, %v3411
        %v3418 = vadd.f32 %v3272, %v3413
        %v3419 = vxor.u32 %v3415, 2147483648
        %v3420 = vxor.u32 %v3416, 2147483648
        %v3421 = vxor.u32 %v3417, 2147483648
        %v3422 = vmul.f32 %v3419, 1.442695
        %v3423 = vpow.pop %v3422
        %v3424 = vmul.f32 %v3420, 1.442695
        %v3425 = vpow.pop %v3424
        %v3426 = vmul.f32 %v3421, 1.442695
        %v3427 = vpow.pop %v3426
        %v3428 = vadd.f32 %v3423, 1.0
        %v3429 = vadd.f32 %v3425, 1.0
        %v3430 = vadd.f32 %v3427, 1.0
        %v3431 = vrcp.pop %v3428
        %v3432 = vmul.f32 1.0, %v3431
        %v3433 = vrcp.pop %v3429
        %v3434 = vmul.f32 1.0, %v3433
        %v3435 = vrcp.pop %v3430
        %v3436 = vmul.f32 1.0, %v3435
        %v3437 = vtanh.pop %v3418
        %v3438 = vmul.f32 %v3434, %v3264
        %v3439 = vmul.f32 %v3432, %v3437
        %v3440 = vadd.f32 %v3438, %v3439
        %v3441 = vtanh.pop %v3440
        %v3442 = vmul.f32 %v3436, %v3441
        %s3443 = scalar_lea.vmem [#allocation4], 24
        %3444 = vst [vmem:[%s3443] sm:$0xff] %v3442
        %v3445 = vld [vmem:[%s1612] sm:$0xff]
        %v3446 = vld [vmem:[%s1612 + $0x8] sm:$0xff]
        %v3447 = vld [vmem:[%s1612 + $0x10] sm:$0xff]
        %v3448 = vld [vmem:[%s1612 + $0x18] sm:$0xff]
        %3449 = vmatprep.subr.mxu0 %v2387
        %3450 = vmatpush1.msra.mxu0 %v2386
        %3451 = vmatprep.subr.mxu0 %v2391
        %3452 = vmatpush1.msra.mxu0 %v2390
        %3453 = vmatprep.subr.mxu0 %v2395
        %3454 = vmatpush1.msra.mxu0 %v2394
        %3455 = vmatprep.subr.mxu0 %v2399
        %3456 = vmatpush1.msra.mxu0 %v2398
        %3457 = vmatprep.subr.mxu0 %v2403
        %3458 = vmatpush1.msra.mxu0 %v2402
        %3459 = vmatprep.subr.mxu0 %v2407
        %3460 = vmatpush1.msra.mxu0 %v2406
        %3461 = vmatprep.subr.mxu0 %v2411
        %3462 = vmatpush1.msra.mxu0 %v2410
        %3463 = vmatprep.subr.mxu0 %v2415
        %3464 = vmatpush1.msra.mxu0 %v2414
        %3465 = vmatprep.subr.mxu0 %v2419
        %3466 = vmatpush1.msra.mxu0 %v2418
        %3467 = vmatprep.subr.mxu0 %v2423
        %3468 = vmatpush1.msra.mxu0 %v2422
        %3469 = vmatprep.subr.mxu0 %v2427
        %3470 = vmatpush1.msra.mxu0 %v2426
        %3471 = vmatprep.subr.mxu0 %v2431
        %3472 = vmatpush1.msra.mxu0 %v2430
        %3473 = vmatprep.subr.mxu0 %v2435
        %3474 = vmatpush1.msra.mxu0 %v2434
        %3475 = vmatprep.subr.mxu0 %v2439
        %3476 = vmatpush1.msra.mxu0 %v2438
        %3477 = vmatprep.subr.mxu0 %v2443
        %3478 = vmatpush1.msra.mxu0 %v2442
        %3479 = vmatprep.subr.mxu0 %v2447
        %3480 = vmatpush1.msra.mxu0 %v2446
        %3481 = vmatprep.subr.mxu0 0.0
        %3482 = vmatpush1.msra.mxu0 0.0
        %3483 = vmatprep.subr.mxu0 0.0
        %3484 = vmatpush1.msra.mxu0 0.0
        %3485 = vmatprep.subr.mxu0 0.0
        %3486 = vmatpush1.msra.mxu0 0.0
        %3487 = vmatprep.subr.mxu0 0.0
        %3488 = vmatpush1.msra.mxu0 0.0
        %3489 = vmatprep.subr.mxu0 0.0
        %3490 = vmatpush1.msra.mxu0 0.0
        %3491 = vmatprep.subr.mxu0 0.0
        %3492 = vmatpush1.msra.mxu0 0.0
        %3493 = vmatprep.subr.mxu0 0.0
        %3494 = vmatpush1.msra.mxu0 0.0
        %3495 = vmatprep.subr.mxu0 0.0
        %3496 = vmatpush1.msra.mxu0 0.0
        %3497 = vmatprep.subr.mxu0 0.0
        %3498 = vmatpush1.msra.mxu0 0.0
        %3499 = vmatprep.subr.mxu0 0.0
        %3500 = vmatpush1.msra.mxu0 0.0
        %3501 = vmatprep.subr.mxu0 0.0
        %3502 = vmatpush1.msra.mxu0 0.0
        %3503 = vmatprep.subr.mxu0 0.0
        %3504 = vmatpush1.msra.mxu0 0.0
        %3505 = vmatprep.subr.mxu0 0.0
        %3506 = vmatpush1.msra.mxu0 0.0
        %3507 = vmatprep.subr.mxu0 0.0
        %3508 = vmatpush1.msra.mxu0 0.0
        %3509 = vmatprep.subr.mxu0 0.0
        %3510 = vmatpush1.msra.mxu0 0.0
        %3511 = vmatprep.subr.mxu0 0.0
        %3512 = vmatpush1.msra.mxu0 0.0
        %3513 = vmatprep.mubr.f32.mxu0 0.0
        %3514 = vmatmul.mubr.f32.gmra.mrb[0].mxu0 %v3442
        %v3515 = vpop.f32.mrb[0].mxu0
        %v3516 = vadd.f32 0.0, %v3515
        %v3517 = vpop.f32.mrb[0].mxu0
        %v3518 = vadd.f32 0.0, %v3517
        %3519 = vdwg.mxu0
        %3520 = vmatprep.subr.mxu0 %v2389
        %3521 = vmatpush1.msra.mxu0 %v2388
        %3522 = vmatprep.subr.mxu0 %v2393
        %3523 = vmatpush1.msra.mxu0 %v2392
        %3524 = vmatprep.subr.mxu0 %v2397
        %3525 = vmatpush1.msra.mxu0 %v2396
        %3526 = vmatprep.subr.mxu0 %v2401
        %3527 = vmatpush1.msra.mxu0 %v2400
        %3528 = vmatprep.subr.mxu0 %v2405
        %3529 = vmatpush1.msra.mxu0 %v2404
        %3530 = vmatprep.subr.mxu0 %v2409
        %3531 = vmatpush1.msra.mxu0 %v2408
        %3532 = vmatprep.subr.mxu0 %v2413
        %3533 = vmatpush1.msra.mxu0 %v2412
        %3534 = vmatprep.subr.mxu0 %v2417
        %3535 = vmatpush1.msra.mxu0 %v2416
        %3536 = vmatprep.subr.mxu0 %v2421
        %3537 = vmatpush1.msra.mxu0 %v2420
        %3538 = vmatprep.subr.mxu0 %v2425
        %3539 = vmatpush1.msra.mxu0 %v2424
        %3540 = vmatprep.subr.mxu0 %v2429
        %3541 = vmatpush1.msra.mxu0 %v2428
        %3542 = vmatprep.subr.mxu0 %v2433
        %3543 = vmatpush1.msra.mxu0 %v2432
        %3544 = vmatprep.subr.mxu0 %v2437
        %3545 = vmatpush1.msra.mxu0 %v2436
        %3546 = vmatprep.subr.mxu0 %v2441
        %3547 = vmatpush1.msra.mxu0 %v2440
        %3548 = vmatprep.subr.mxu0 %v2445
        %3549 = vmatpush1.msra.mxu0 %v2444
        %3550 = vmatprep.subr.mxu0 %v2449
        %3551 = vmatpush1.msra.mxu0 %v2448
        %3552 = vmatprep.subr.mxu0 0.0
        %3553 = vmatpush1.msra.mxu0 0.0
        %3554 = vmatprep.subr.mxu0 0.0
        %3555 = vmatpush1.msra.mxu0 0.0
        %3556 = vmatprep.subr.mxu0 0.0
        %3557 = vmatpush1.msra.mxu0 0.0
        %3558 = vmatprep.subr.mxu0 0.0
        %3559 = vmatpush1.msra.mxu0 0.0
        %3560 = vmatprep.subr.mxu0 0.0
        %3561 = vmatpush1.msra.mxu0 0.0
        %3562 = vmatprep.subr.mxu0 0.0
        %3563 = vmatpush1.msra.mxu0 0.0
        %3564 = vmatprep.subr.mxu0 0.0
        %3565 = vmatpush1.msra.mxu0 0.0
        %3566 = vmatprep.subr.mxu0 0.0
        %3567 = vmatpush1.msra.mxu0 0.0
        %3568 = vmatprep.subr.mxu0 0.0
        %3569 = vmatpush1.msra.mxu0 0.0
        %3570 = vmatprep.subr.mxu0 0.0
        %3571 = vmatpush1.msra.mxu0 0.0
        %3572 = vmatprep.subr.mxu0 0.0
        %3573 = vmatpush1.msra.mxu0 0.0
        %3574 = vmatprep.subr.mxu0 0.0
        %3575 = vmatpush1.msra.mxu0 0.0
        %3576 = vmatprep.subr.mxu0 0.0
        %3577 = vmatpush1.msra.mxu0 0.0
        %3578 = vmatprep.subr.mxu0 0.0
        %3579 = vmatpush1.msra.mxu0 0.0
        %3580 = vmatprep.subr.mxu0 0.0
        %3581 = vmatpush1.msra.mxu0 0.0
        %3582 = vmatprep.subr.mxu0 0.0
        %3583 = vmatpush1.msra.mxu0 0.0
        %3584 = vmatprep.mubr.f32.mxu0 0.0
        %3585 = vmatmul.mubr.f32.gmra.mrb[0].mxu0 %v3442
        %v3586 = vpop.f32.mrb[0].mxu0
        %v3587 = vadd.f32 0.0, %v3586
        %v3588 = vpop.f32.mrb[0].mxu0
        %v3589 = vadd.f32 0.0, %v3588
        %3590 = vdwg.mxu0
        %v3591 = vadd.f32 %v3445, %v3516
        %v3592 = vadd.f32 %v3446, %v3518
        %v3593 = vadd.f32 %v3447, %v3587
        %v3594 = vadd.f32 %v3448, %v3589
        %v3595 = vxor.u32 %v3591, 2147483648
        %v3596 = vxor.u32 %v3592, 2147483648
        %v3597 = vxor.u32 %v3593, 2147483648
        %v3598 = vmul.f32 %v3595, 1.442695
        %v3599 = vpow.pop %v3598
        %v3600 = vmul.f32 %v3596, 1.442695
        %v3601 = vpow.pop %v3600
        %v3602 = vmul.f32 %v3597, 1.442695
        %v3603 = vpow.pop %v3602
        %v3604 = vadd.f32 %v3599, 1.0
        %v3605 = vadd.f32 %v3601, 1.0
        %v3606 = vadd.f32 %v3603, 1.0
        %v3607 = vrcp.pop %v3604
        %v3608 = vmul.f32 1.0, %v3607
        %v3609 = vrcp.pop %v3605
        %v3610 = vmul.f32 1.0, %v3609
        %v3611 = vrcp.pop %v3606
        %v3612 = vmul.f32 1.0, %v3611
        %v3613 = vtanh.pop %v3594
        %v3614 = vmul.f32 %v3610, %v3440
        %v3615 = vmul.f32 %v3608, %v3613
        %v3616 = vadd.f32 %v3614, %v3615
        %v3617 = vtanh.pop %v3616
        %v3618 = vmul.f32 %v3612, %v3617
        %s3619 = scalar_lea.vmem [#allocation4], 32
        %3620 = vst [vmem:[%s3619] sm:$0xff] %v3618
        %v3621 = vld [vmem:[%s1789] sm:$0xff]
        %v3622 = vld [vmem:[%s1789 + $0x8] sm:$0xff]
        %v3623 = vld [vmem:[%s1789 + $0x10] sm:$0xff]
        %v3624 = vld [vmem:[%s1789 + $0x18] sm:$0xff]
        %3625 = vmatprep.subr.mxu0 %v2387
        %3626 = vmatpush1.msra.mxu0 %v2386
        %3627 = vmatprep.subr.mxu0 %v2391
        %3628 = vmatpush1.msra.mxu0 %v2390
        %3629 = vmatprep.subr.mxu0 %v2395
        %3630 = vmatpush1.msra.mxu0 %v2394
        %3631 = vmatprep.subr.mxu0 %v2399
        %3632 = vmatpush1.msra.mxu0 %v2398
        %3633 = vmatprep.subr.mxu0 %v2403
        %3634 = vmatpush1.msra.mxu0 %v2402
        %3635 = vmatprep.subr.mxu0 %v2407
        %3636 = vmatpush1.msra.mxu0 %v2406
        %3637 = vmatprep.subr.mxu0 %v2411
        %3638 = vmatpush1.msra.mxu0 %v2410
        %3639 = vmatprep.subr.mxu0 %v2415
        %3640 = vmatpush1.msra.mxu0 %v2414
        %3641 = vmatprep.subr.mxu0 %v2419
        %3642 = vmatpush1.msra.mxu0 %v2418
        %3643 = vmatprep.subr.mxu0 %v2423
        %3644 = vmatpush1.msra.mxu0 %v2422
        %3645 = vmatprep.subr.mxu0 %v2427
        %3646 = vmatpush1.msra.mxu0 %v2426
        %3647 = vmatprep.subr.mxu0 %v2431
        %3648 = vmatpush1.msra.mxu0 %v2430
        %3649 = vmatprep.subr.mxu0 %v2435
        %3650 = vmatpush1.msra.mxu0 %v2434
        %3651 = vmatprep.subr.mxu0 %v2439
        %3652 = vmatpush1.msra.mxu0 %v2438
        %3653 = vmatprep.subr.mxu0 %v2443
        %3654 = vmatpush1.msra.mxu0 %v2442
        %3655 = vmatprep.subr.mxu0 %v2447
        %3656 = vmatpush1.msra.mxu0 %v2446
        %3657 = vmatprep.subr.mxu0 0.0
        %3658 = vmatpush1.msra.mxu0 0.0
        %3659 = vmatprep.subr.mxu0 0.0
        %3660 = vmatpush1.msra.mxu0 0.0
        %3661 = vmatprep.subr.mxu0 0.0
        %3662 = vmatpush1.msra.mxu0 0.0
        %3663 = vmatprep.subr.mxu0 0.0
        %3664 = vmatpush1.msra.mxu0 0.0
        %3665 = vmatprep.subr.mxu0 0.0
        %3666 = vmatpush1.msra.mxu0 0.0
        %3667 = vmatprep.subr.mxu0 0.0
        %3668 = vmatpush1.msra.mxu0 0.0
        %3669 = vmatprep.subr.mxu0 0.0
        %3670 = vmatpush1.msra.mxu0 0.0
        %3671 = vmatprep.subr.mxu0 0.0
        %3672 = vmatpush1.msra.mxu0 0.0
        %3673 = vmatprep.subr.mxu0 0.0
        %3674 = vmatpush1.msra.mxu0 0.0
        %3675 = vmatprep.subr.mxu0 0.0
        %3676 = vmatpush1.msra.mxu0 0.0
        %3677 = vmatprep.subr.mxu0 0.0
        %3678 = vmatpush1.msra.mxu0 0.0
        %3679 = vmatprep.subr.mxu0 0.0
        %3680 = vmatpush1.msra.mxu0 0.0
        %3681 = vmatprep.subr.mxu0 0.0
        %3682 = vmatpush1.msra.mxu0 0.0
        %3683 = vmatprep.subr.mxu0 0.0
        %3684 = vmatpush1.msra.mxu0 0.0
        %3685 = vmatprep.subr.mxu0 0.0
        %3686 = vmatpush1.msra.mxu0 0.0
        %3687 = vmatprep.subr.mxu0 0.0
        %3688 = vmatpush1.msra.mxu0 0.0
        %3689 = vmatprep.mubr.f32.mxu0 0.0
        %3690 = vmatmul.mubr.f32.gmra.mrb[0].mxu0 %v3618
        %v3691 = vpop.f32.mrb[0].mxu0
        %v3692 = vadd.f32 0.0, %v3691
        %v3693 = vpop.f32.mrb[0].mxu0
        %v3694 = vadd.f32 0.0, %v3693
        %3695 = vdwg.mxu0
        %3696 = vmatprep.subr.mxu0 %v2389
        %3697 = vmatpush1.msra.mxu0 %v2388
        %3698 = vmatprep.subr.mxu0 %v2393
        %3699 = vmatpush1.msra.mxu0 %v2392
        %3700 = vmatprep.subr.mxu0 %v2397
        %3701 = vmatpush1.msra.mxu0 %v2396
        %3702 = vmatprep.subr.mxu0 %v2401
        %3703 = vmatpush1.msra.mxu0 %v2400
        %3704 = vmatprep.subr.mxu0 %v2405
        %3705 = vmatpush1.msra.mxu0 %v2404
        %3706 = vmatprep.subr.mxu0 %v2409
        %3707 = vmatpush1.msra.mxu0 %v2408
        %3708 = vmatprep.subr.mxu0 %v2413
        %3709 = vmatpush1.msra.mxu0 %v2412
        %3710 = vmatprep.subr.mxu0 %v2417
        %3711 = vmatpush1.msra.mxu0 %v2416
        %3712 = vmatprep.subr.mxu0 %v2421
        %3713 = vmatpush1.msra.mxu0 %v2420
        %3714 = vmatprep.subr.mxu0 %v2425
        %3715 = vmatpush1.msra.mxu0 %v2424
        %3716 = vmatprep.subr.mxu0 %v2429
        %3717 = vmatpush1.msra.mxu0 %v2428
        %3718 = vmatprep.subr.mxu0 %v2433
        %3719 = vmatpush1.msra.mxu0 %v2432
        %3720 = vmatprep.subr.mxu0 %v2437
        %3721 = vmatpush1.msra.mxu0 %v2436
        %3722 = vmatprep.subr.mxu0 %v2441
        %3723 = vmatpush1.msra.mxu0 %v2440
        %3724 = vmatprep.subr.mxu0 %v2445
        %3725 = vmatpush1.msra.mxu0 %v2444
        %3726 = vmatprep.subr.mxu0 %v2449
        %3727 = vmatpush1.msra.mxu0 %v2448
        %3728 = vmatprep.subr.mxu0 0.0
        %3729 = vmatpush1.msra.mxu0 0.0
        %3730 = vmatprep.subr.mxu0 0.0
        %3731 = vmatpush1.msra.mxu0 0.0
        %3732 = vmatprep.subr.mxu0 0.0
        %3733 = vmatpush1.msra.mxu0 0.0
        %3734 = vmatprep.subr.mxu0 0.0
        %3735 = vmatpush1.msra.mxu0 0.0
        %3736 = vmatprep.subr.mxu0 0.0
        %3737 = vmatpush1.msra.mxu0 0.0
        %3738 = vmatprep.subr.mxu0 0.0
        %3739 = vmatpush1.msra.mxu0 0.0
        %3740 = vmatprep.subr.mxu0 0.0
        %3741 = vmatpush1.msra.mxu0 0.0
        %3742 = vmatprep.subr.mxu0 0.0
        %3743 = vmatpush1.msra.mxu0 0.0
        %3744 = vmatprep.subr.mxu0 0.0
        %3745 = vmatpush1.msra.mxu0 0.0
        %3746 = vmatprep.subr.mxu0 0.0
        %3747 = vmatpush1.msra.mxu0 0.0
        %3748 = vmatprep.subr.mxu0 0.0
        %3749 = vmatpush1.msra.mxu0 0.0
        %3750 = vmatprep.subr.mxu0 0.0
        %3751 = vmatpush1.msra.mxu0 0.0
        %3752 = vmatprep.subr.mxu0 0.0
        %3753 = vmatpush1.msra.mxu0 0.0
        %3754 = vmatprep.subr.mxu0 0.0
        %3755 = vmatpush1.msra.mxu0 0.0
        %3756 = vmatprep.subr.mxu0 0.0
        %3757 = vmatpush1.msra.mxu0 0.0
        %3758 = vmatprep.subr.mxu0 0.0
        %3759 = vmatpush1.msra.mxu0 0.0
        %3760 = vmatprep.mubr.f32.mxu0 0.0
        %3761 = vmatmul.mubr.f32.gmra.mrb[0].mxu0 %v3618
        %v3762 = vpop.f32.mrb[0].mxu0
        %v3763 = vadd.f32 0.0, %v3762
        %v3764 = vpop.f32.mrb[0].mxu0
        %v3765 = vadd.f32 0.0, %v3764
        %3766 = vdwg.mxu0
        %v3767 = vadd.f32 %v3621, %v3692
        %v3768 = vadd.f32 %v3622, %v3694
        %v3769 = vadd.f32 %v3623, %v3763
        %v3770 = vadd.f32 %v3624, %v3765
        %v3771 = vxor.u32 %v3767, 2147483648
        %v3772 = vxor.u32 %v3768, 2147483648
        %v3773 = vxor.u32 %v3769, 2147483648
        %v3774 = vmul.f32 %v3771, 1.442695
        %v3775 = vpow.pop %v3774
        %v3776 = vmul.f32 %v3772, 1.442695
        %v3777 = vpow.pop %v3776
        %v3778 = vmul.f32 %v3773, 1.442695
        %v3779 = vpow.pop %v3778
        %v3780 = vadd.f32 %v3775, 1.0
        %v3781 = vadd.f32 %v3777, 1.0
        %v3782 = vadd.f32 %v3779, 1.0
        %v3783 = vrcp.pop %v3780
        %v3784 = vmul.f32 1.0, %v3783
        %v3785 = vrcp.pop %v3781
        %v3786 = vmul.f32 1.0, %v3785
        %v3787 = vrcp.pop %v3782
        %v3788 = vmul.f32 1.0, %v3787
        %v3789 = vtanh.pop %v3770
        %v3790 = vmul.f32 %v3786, %v3616
        %v3791 = vmul.f32 %v3784, %v3789
        %v3792 = vadd.f32 %v3790, %v3791
        %v3793 = vtanh.pop %v3792
        %v3794 = vmul.f32 %v3788, %v3793
        %s3795 = scalar_lea.vmem [#allocation4], 40
        %3796 = vst [vmem:[%s3795] sm:$0xff] %v3794
        %v3797 = vld [vmem:[%s1966] sm:$0xff]
        %v3798 = vld [vmem:[%s1966 + $0x8] sm:$0xff]
        %v3799 = vld [vmem:[%s1966 + $0x10] sm:$0xff]
        %v3800 = vld [vmem:[%s1966 + $0x18] sm:$0xff]
        %3801 = vmatprep.subr.mxu0 %v2387
        %3802 = vmatpush1.msra.mxu0 %v2386
        %3803 = vmatprep.subr.mxu0 %v2391
        %3804 = vmatpush1.msra.mxu0 %v2390
        %3805 = vmatprep.subr.mxu0 %v2395
        %3806 = vmatpush1.msra.mxu0 %v2394
        %3807 = vmatprep.subr.mxu0 %v2399
        %3808 = vmatpush1.msra.mxu0 %v2398
        %3809 = vmatprep.subr.mxu0 %v2403
        %3810 = vmatpush1.msra.mxu0 %v2402
        %3811 = vmatprep.subr.mxu0 %v2407
        %3812 = vmatpush1.msra.mxu0 %v2406
        %3813 = vmatprep.subr.mxu0 %v2411
        %3814 = vmatpush1.msra.mxu0 %v2410
        %3815 = vmatprep.subr.mxu0 %v2415
        %3816 = vmatpush1.msra.mxu0 %v2414
        %3817 = vmatprep.subr.mxu0 %v2419
        %3818 = vmatpush1.msra.mxu0 %v2418
        %3819 = vmatprep.subr.mxu0 %v2423
        %3820 = vmatpush1.msra.mxu0 %v2422
        %3821 = vmatprep.subr.mxu0 %v2427
        %3822 = vmatpush1.msra.mxu0 %v2426
        %3823 = vmatprep.subr.mxu0 %v2431
        %3824 = vmatpush1.msra.mxu0 %v2430
        %3825 = vmatprep.subr.mxu0 %v2435
        %3826 = vmatpush1.msra.mxu0 %v2434
        %3827 = vmatprep.subr.mxu0 %v2439
        %3828 = vmatpush1.msra.mxu0 %v2438
        %3829 = vmatprep.subr.mxu0 %v2443
        %3830 = vmatpush1.msra.mxu0 %v2442
        %3831 = vmatprep.subr.mxu0 %v2447
        %3832 = vmatpush1.msra.mxu0 %v2446
        %3833 = vmatprep.subr.mxu0 0.0
        %3834 = vmatpush1.msra.mxu0 0.0
        %3835 = vmatprep.subr.mxu0 0.0
        %3836 = vmatpush1.msra.mxu0 0.0
        %3837 = vmatprep.subr.mxu0 0.0
        %3838 = vmatpush1.msra.mxu0 0.0
        %3839 = vmatprep.subr.mxu0 0.0
        %3840 = vmatpush1.msra.mxu0 0.0
        %3841 = vmatprep.subr.mxu0 0.0
        %3842 = vmatpush1.msra.mxu0 0.0
        %3843 = vmatprep.subr.mxu0 0.0
        %3844 = vmatpush1.msra.mxu0 0.0
        %3845 = vmatprep.subr.mxu0 0.0
        %3846 = vmatpush1.msra.mxu0 0.0
        %3847 = vmatprep.subr.mxu0 0.0
        %3848 = vmatpush1.msra.mxu0 0.0
        %3849 = vmatprep.subr.mxu0 0.0
        %3850 = vmatpush1.msra.mxu0 0.0
        %3851 = vmatprep.subr.mxu0 0.0
        %3852 = vmatpush1.msra.mxu0 0.0
        %3853 = vmatprep.subr.mxu0 0.0
        %3854 = vmatpush1.msra.mxu0 0.0
        %3855 = vmatprep.subr.mxu0 0.0
        %3856 = vmatpush1.msra.mxu0 0.0
        %3857 = vmatprep.subr.mxu0 0.0
        %3858 = vmatpush1.msra.mxu0 0.0
        %3859 = vmatprep.subr.mxu0 0.0
        %3860 = vmatpush1.msra.mxu0 0.0
        %3861 = vmatprep.subr.mxu0 0.0
        %3862 = vmatpush1.msra.mxu0 0.0
        %3863 = vmatprep.subr.mxu0 0.0
        %3864 = vmatpush1.msra.mxu0 0.0
        %3865 = vmatprep.mubr.f32.mxu0 0.0
        %3866 = vmatmul.mubr.f32.gmra.mrb[0].mxu0 %v3794
        %v3867 = vpop.f32.mrb[0].mxu0
        %v3868 = vadd.f32 0.0, %v3867
        %v3869 = vpop.f32.mrb[0].mxu0
        %v3870 = vadd.f32 0.0, %v3869
        %3871 = vdwg.mxu0
        %3872 = vmatprep.subr.mxu0 %v2389
        %3873 = vmatpush1.msra.mxu0 %v2388
        %3874 = vmatprep.subr.mxu0 %v2393
        %3875 = vmatpush1.msra.mxu0 %v2392
        %3876 = vmatprep.subr.mxu0 %v2397
        %3877 = vmatpush1.msra.mxu0 %v2396
        %3878 = vmatprep.subr.mxu0 %v2401
        %3879 = vmatpush1.msra.mxu0 %v2400
        %3880 = vmatprep.subr.mxu0 %v2405
        %3881 = vmatpush1.msra.mxu0 %v2404
        %3882 = vmatprep.subr.mxu0 %v2409
        %3883 = vmatpush1.msra.mxu0 %v2408
        %3884 = vmatprep.subr.mxu0 %v2413
        %3885 = vmatpush1.msra.mxu0 %v2412
        %3886 = vmatprep.subr.mxu0 %v2417
        %3887 = vmatpush1.msra.mxu0 %v2416
        %3888 = vmatprep.subr.mxu0 %v2421
        %3889 = vmatpush1.msra.mxu0 %v2420
        %3890 = vmatprep.subr.mxu0 %v2425
        %3891 = vmatpush1.msra.mxu0 %v2424
        %3892 = vmatprep.subr.mxu0 %v2429
        %3893 = vmatpush1.msra.mxu0 %v2428
        %3894 = vmatprep.subr.mxu0 %v2433
        %3895 = vmatpush1.msra.mxu0 %v2432
        %3896 = vmatprep.subr.mxu0 %v2437
        %3897 = vmatpush1.msra.mxu0 %v2436
        %3898 = vmatprep.subr.mxu0 %v2441
        %3899 = vmatpush1.msra.mxu0 %v2440
        %3900 = vmatprep.subr.mxu0 %v2445
        %3901 = vmatpush1.msra.mxu0 %v2444
        %3902 = vmatprep.subr.mxu0 %v2449
        %3903 = vmatpush1.msra.mxu0 %v2448
        %3904 = vmatprep.subr.mxu0 0.0
        %3905 = vmatpush1.msra.mxu0 0.0
        %3906 = vmatprep.subr.mxu0 0.0
        %3907 = vmatpush1.msra.mxu0 0.0
        %3908 = vmatprep.subr.mxu0 0.0
        %3909 = vmatpush1.msra.mxu0 0.0
        %3910 = vmatprep.subr.mxu0 0.0
        %3911 = vmatpush1.msra.mxu0 0.0
        %3912 = vmatprep.subr.mxu0 0.0
        %3913 = vmatpush1.msra.mxu0 0.0
        %3914 = vmatprep.subr.mxu0 0.0
        %3915 = vmatpush1.msra.mxu0 0.0
        %3916 = vmatprep.subr.mxu0 0.0
        %3917 = vmatpush1.msra.mxu0 0.0
        %3918 = vmatprep.subr.mxu0 0.0
        %3919 = vmatpush1.msra.mxu0 0.0
        %3920 = vmatprep.subr.mxu0 0.0
        %3921 = vmatpush1.msra.mxu0 0.0
        %3922 = vmatprep.subr.mxu0 0.0
        %3923 = vmatpush1.msra.mxu0 0.0
        %3924 = vmatprep.subr.mxu0 0.0
        %3925 = vmatpush1.msra.mxu0 0.0
        %3926 = vmatprep.subr.mxu0 0.0
        %3927 = vmatpush1.msra.mxu0 0.0
        %3928 = vmatprep.subr.mxu0 0.0
        %3929 = vmatpush1.msra.mxu0 0.0
        %3930 = vmatprep.subr.mxu0 0.0
        %3931 = vmatpush1.msra.mxu0 0.0
        %3932 = vmatprep.subr.mxu0 0.0
        %3933 = vmatpush1.msra.mxu0 0.0
        %3934 = vmatprep.subr.mxu0 0.0
        %3935 = vmatpush1.msra.mxu0 0.0
        %3936 = vmatprep.mubr.f32.mxu0 0.0
        %3937 = vmatmul.mubr.f32.gmra.mrb[0].mxu0 %v3794
        %v3938 = vpop.f32.mrb[0].mxu0
        %v3939 = vadd.f32 0.0, %v3938
        %v3940 = vpop.f32.mrb[0].mxu0
        %v3941 = vadd.f32 0.0, %v3940
        %3942 = vdwg.mxu0
        %v3943 = vadd.f32 %v3797, %v3868
        %v3944 = vadd.f32 %v3798, %v3870
        %v3945 = vadd.f32 %v3799, %v3939
        %v3946 = vadd.f32 %v3800, %v3941
        %v3947 = vxor.u32 %v3943, 2147483648
        %v3948 = vxor.u32 %v3944, 2147483648
        %v3949 = vxor.u32 %v3945, 2147483648
        %v3950 = vmul.f32 %v3947, 1.442695
        %v3951 = vpow.pop %v3950
        %v3952 = vmul.f32 %v3948, 1.442695
        %v3953 = vpow.pop %v3952
        %v3954 = vmul.f32 %v3949, 1.442695
        %v3955 = vpow.pop %v3954
        %v3956 = vadd.f32 %v3951, 1.0
        %v3957 = vadd.f32 %v3953, 1.0
        %v3958 = vadd.f32 %v3955, 1.0
        %v3959 = vrcp.pop %v3956
        %v3960 = vmul.f32 1.0, %v3959
        %v3961 = vrcp.pop %v3957
        %v3962 = vmul.f32 1.0, %v3961
        %v3963 = vrcp.pop %v3958
        %v3964 = vmul.f32 1.0, %v3963
        %v3965 = vtanh.pop %v3946
        %v3966 = vmul.f32 %v3962, %v3792
        %v3967 = vmul.f32 %v3960, %v3965
        %v3968 = vadd.f32 %v3966, %v3967
        %v3969 = vtanh.pop %v3968
        %v3970 = vmul.f32 %v3964, %v3969
        %s3971 = scalar_lea.vmem [#allocation4], 48
        %3972 = vst [vmem:[%s3971] sm:$0xff] %v3970
        %v3973 = vld [vmem:[%s2143] sm:$0xff]
        %v3974 = vld [vmem:[%s2143 + $0x8] sm:$0xff]
        %v3975 = vld [vmem:[%s2143 + $0x10] sm:$0xff]
        %v3976 = vld [vmem:[%s2143 + $0x18] sm:$0xff]
        %3977 = vmatprep.subr.mxu0 %v2387
        %3978 = vmatpush1.msra.mxu0 %v2386
        %3979 = vmatprep.subr.mxu0 %v2391
        %3980 = vmatpush1.msra.mxu0 %v2390
        %3981 = vmatprep.subr.mxu0 %v2395
        %3982 = vmatpush1.msra.mxu0 %v2394
        %3983 = vmatprep.subr.mxu0 %v2399
        %3984 = vmatpush1.msra.mxu0 %v2398
        %3985 = vmatprep.subr.mxu0 %v2403
        %3986 = vmatpush1.msra.mxu0 %v2402
        %3987 = vmatprep.subr.mxu0 %v2407
        %3988 = vmatpush1.msra.mxu0 %v2406
        %3989 = vmatprep.subr.mxu0 %v2411
        %3990 = vmatpush1.msra.mxu0 %v2410
        %3991 = vmatprep.subr.mxu0 %v2415
        %3992 = vmatpush1.msra.mxu0 %v2414
        %3993 = vmatprep.subr.mxu0 %v2419
        %3994 = vmatpush1.msra.mxu0 %v2418
        %3995 = vmatprep.subr.mxu0 %v2423
        %3996 = vmatpush1.msra.mxu0 %v2422
        %3997 = vmatprep.subr.mxu0 %v2427
        %3998 = vmatpush1.msra.mxu0 %v2426
        %3999 = vmatprep.subr.mxu0 %v2431
        %4000 = vmatpush1.msra.mxu0 %v2430
        %4001 = vmatprep.subr.mxu0 %v2435
        %4002 = vmatpush1.msra.mxu0 %v2434
        %4003 = vmatprep.subr.mxu0 %v2439
        %4004 = vmatpush1.msra.mxu0 %v2438
        %4005 = vmatprep.subr.mxu0 %v2443
        %4006 = vmatpush1.msra.mxu0 %v2442
        %4007 = vmatprep.subr.mxu0 %v2447
        %4008 = vmatpush1.msra.mxu0 %v2446
        %4009 = vmatprep.subr.mxu0 0.0
        %4010 = vmatpush1.msra.mxu0 0.0
        %4011 = vmatprep.subr.mxu0 0.0
        %4012 = vmatpush1.msra.mxu0 0.0
        %4013 = vmatprep.subr.mxu0 0.0
        %4014 = vmatpush1.msra.mxu0 0.0
        %4015 = vmatprep.subr.mxu0 0.0
        %4016 = vmatpush1.msra.mxu0 0.0
        %4017 = vmatprep.subr.mxu0 0.0
        %4018 = vmatpush1.msra.mxu0 0.0
        %4019 = vmatprep.subr.mxu0 0.0
        %4020 = vmatpush1.msra.mxu0 0.0
        %4021 = vmatprep.subr.mxu0 0.0
        %4022 = vmatpush1.msra.mxu0 0.0
        %4023 = vmatprep.subr.mxu0 0.0
        %4024 = vmatpush1.msra.mxu0 0.0
        %4025 = vmatprep.subr.mxu0 0.0
        %4026 = vmatpush1.msra.mxu0 0.0
        %4027 = vmatprep.subr.mxu0 0.0
        %4028 = vmatpush1.msra.mxu0 0.0
        %4029 = vmatprep.subr.mxu0 0.0
        %4030 = vmatpush1.msra.mxu0 0.0
        %4031 = vmatprep.subr.mxu0 0.0
        %4032 = vmatpush1.msra.mxu0 0.0
        %4033 = vmatprep.subr.mxu0 0.0
        %4034 = vmatpush1.msra.mxu0 0.0
        %4035 = vmatprep.subr.mxu0 0.0
        %4036 = vmatpush1.msra.mxu0 0.0
        %4037 = vmatprep.subr.mxu0 0.0
        %4038 = vmatpush1.msra.mxu0 0.0
        %4039 = vmatprep.subr.mxu0 0.0
        %4040 = vmatpush1.msra.mxu0 0.0
        %4041 = vmatprep.mubr.f32.mxu0 0.0
        %4042 = vmatmul.mubr.f32.gmra.mrb[0].mxu0 %v3970
        %v4043 = vpop.f32.mrb[0].mxu0
        %v4044 = vadd.f32 0.0, %v4043
        %v4045 = vpop.f32.mrb[0].mxu0
        %v4046 = vadd.f32 0.0, %v4045
        %4047 = vdwg.mxu0
        %4048 = vmatprep.subr.mxu0 %v2389
        %4049 = vmatpush1.msra.mxu0 %v2388
        %4050 = vmatprep.subr.mxu0 %v2393
        %4051 = vmatpush1.msra.mxu0 %v2392
        %4052 = vmatprep.subr.mxu0 %v2397
        %4053 = vmatpush1.msra.mxu0 %v2396
        %4054 = vmatprep.subr.mxu0 %v2401
        %4055 = vmatpush1.msra.mxu0 %v2400
        %4056 = vmatprep.subr.mxu0 %v2405
        %4057 = vmatpush1.msra.mxu0 %v2404
        %4058 = vmatprep.subr.mxu0 %v2409
        %4059 = vmatpush1.msra.mxu0 %v2408
        %4060 = vmatprep.subr.mxu0 %v2413
        %4061 = vmatpush1.msra.mxu0 %v2412
        %4062 = vmatprep.subr.mxu0 %v2417
        %4063 = vmatpush1.msra.mxu0 %v2416
        %4064 = vmatprep.subr.mxu0 %v2421
        %4065 = vmatpush1.msra.mxu0 %v2420
        %4066 = vmatprep.subr.mxu0 %v2425
        %4067 = vmatpush1.msra.mxu0 %v2424
        %4068 = vmatprep.subr.mxu0 %v2429
        %4069 = vmatpush1.msra.mxu0 %v2428
        %4070 = vmatprep.subr.mxu0 %v2433
        %4071 = vmatpush1.msra.mxu0 %v2432
        %4072 = vmatprep.subr.mxu0 %v2437
        %4073 = vmatpush1.msra.mxu0 %v2436
        %4074 = vmatprep.subr.mxu0 %v2441
        %4075 = vmatpush1.msra.mxu0 %v2440
        %4076 = vmatprep.subr.mxu0 %v2445
        %4077 = vmatpush1.msra.mxu0 %v2444
        %4078 = vmatprep.subr.mxu0 %v2449
        %4079 = vmatpush1.msra.mxu0 %v2448
        %4080 = vmatprep.subr.mxu0 0.0
        %4081 = vmatpush1.msra.mxu0 0.0
        %4082 = vmatprep.subr.mxu0 0.0
        %4083 = vmatpush1.msra.mxu0 0.0
        %4084 = vmatprep.subr.mxu0 0.0
        %4085 = vmatpush1.msra.mxu0 0.0
        %4086 = vmatprep.subr.mxu0 0.0
        %4087 = vmatpush1.msra.mxu0 0.0
        %4088 = vmatprep.subr.mxu0 0.0
        %4089 = vmatpush1.msra.mxu0 0.0
        %4090 = vmatprep.subr.mxu0 0.0
        %4091 = vmatpush1.msra.mxu0 0.0
        %4092 = vmatprep.subr.mxu0 0.0
        %4093 = vmatpush1.msra.mxu0 0.0
        %4094 = vmatprep.subr.mxu0 0.0
        %4095 = vmatpush1.msra.mxu0 0.0
        %4096 = vmatprep.subr.mxu0 0.0
        %4097 = vmatpush1.msra.mxu0 0.0
        %4098 = vmatprep.subr.mxu0 0.0
        %4099 = vmatpush1.msra.mxu0 0.0
        %4100 = vmatprep.subr.mxu0 0.0
        %4101 = vmatpush1.msra.mxu0 0.0
        %4102 = vmatprep.subr.mxu0 0.0
        %4103 = vmatpush1.msra.mxu0 0.0
        %4104 = vmatprep.subr.mxu0 0.0
        %4105 = vmatpush1.msra.mxu0 0.0
        %4106 = vmatprep.subr.mxu0 0.0
        %4107 = vmatpush1.msra.mxu0 0.0
        %4108 = vmatprep.subr.mxu0 0.0
        %4109 = vmatpush1.msra.mxu0 0.0
        %4110 = vmatprep.subr.mxu0 0.0
        %4111 = vmatpush1.msra.mxu0 0.0
        %4112 = vmatprep.mubr.f32.mxu0 0.0
        %4113 = vmatmul.mubr.f32.gmra.mrb[0].mxu0 %v3970
        %v4114 = vpop.f32.mrb[0].mxu0
        %v4115 = vadd.f32 0.0, %v4114
        %v4116 = vpop.f32.mrb[0].mxu0
        %v4117 = vadd.f32 0.0, %v4116
        %4118 = vdwg.mxu0
        %v4119 = vadd.f32 %v3973, %v4044
        %v4120 = vadd.f32 %v3974, %v4046
        %v4121 = vadd.f32 %v3975, %v4115
        %v4122 = vadd.f32 %v3976, %v4117
        %v4123 = vxor.u32 %v4119, 2147483648
        %v4124 = vxor.u32 %v4120, 2147483648
        %v4125 = vxor.u32 %v4121, 2147483648
        %v4126 = vmul.f32 %v4123, 1.442695
        %v4127 = vpow.pop %v4126
        %v4128 = vmul.f32 %v4124, 1.442695
        %v4129 = vpow.pop %v4128
        %v4130 = vmul.f32 %v4125, 1.442695
        %v4131 = vpow.pop %v4130
        %v4132 = vadd.f32 %v4127, 1.0
        %v4133 = vadd.f32 %v4129, 1.0
        %v4134 = vadd.f32 %v4131, 1.0
        %v4135 = vrcp.pop %v4132
        %v4136 = vmul.f32 1.0, %v4135
        %v4137 = vrcp.pop %v4133
        %v4138 = vmul.f32 1.0, %v4137
        %v4139 = vrcp.pop %v4134
        %v4140 = vmul.f32 1.0, %v4139
        %v4141 = vtanh.pop %v4122
        %v4142 = vmul.f32 %v4138, %v3968
        %v4143 = vmul.f32 %v4136, %v4141
        %v4144 = vadd.f32 %v4142, %v4143
        %v4145 = vtanh.pop %v4144
        %v4146 = vmul.f32 %v4140, %v4145
        %s4147 = scalar_lea.vmem [#allocation4], 56
        %4148 = vst [vmem:[%s4147] sm:$0xff] %v4146
        %4149 = vst [vmem:[%s2738] sm:$0xff] %v4146
        %4150 = vst [vmem:[%s2740] sm:$0xff] %v4144
        %v4151 = vld [vmem:[#allocation13] sm:$0xff]
        %v4152 = vld [vmem:[#allocation13 + $0x8] sm:$0xff]
        %v4153 = vld [vmem:[#allocation13 + $0x10] sm:$0xff]
        %v4154 = vld [vmem:[#allocation13 + $0x18] sm:$0xff]
        %v4155 = vld [vmem:[#allocation13 + $0x20] sm:$0xff]
        %v4156 = vld [vmem:[#allocation13 + $0x28] sm:$0xff]
        %v4157 = vld [vmem:[#allocation13 + $0x30] sm:$0xff]
        %v4158 = vld [vmem:[#allocation13 + $0x38] sm:$0xff]
        %v4159 = vld [vmem:[#allocation13 + $0x40] sm:$0xff]
        %v4160 = vld [vmem:[#allocation13 + $0x48] sm:$0xff]
        %v4161 = vld [vmem:[#allocation13 + $0x50] sm:$0xff]
        %v4162 = vld [vmem:[#allocation13 + $0x58] sm:$0xff]
        %v4163 = vld [vmem:[#allocation13 + $0x60] sm:$0xff]
        %v4164 = vld [vmem:[#allocation13 + $0x68] sm:$0xff]
        %v4165 = vld [vmem:[#allocation13 + $0x70] sm:$0xff]
        %v4166 = vld [vmem:[#allocation13 + $0x78] sm:$0xff]
        %v4167 = vld [vmem:[#allocation13 + $0x80] sm:$0xff]
        %v4168 = vld [vmem:[#allocation13 + $0x88] sm:$0xff]
        %v4169 = vld [vmem:[#allocation13 + $0x90] sm:$0xff]
        %v4170 = vld [vmem:[#allocation13 + $0x98] sm:$0xff]
        %v4171 = vld [vmem:[#allocation13 + $0xa0] sm:$0xff]
        %v4172 = vld [vmem:[#allocation13 + $0xa8] sm:$0xff]
        %v4173 = vld [vmem:[#allocation13 + $0xb0] sm:$0xff]
        %v4174 = vld [vmem:[#allocation13 + $0xb8] sm:$0xff]
        %v4175 = vld [vmem:[#allocation13 + $0xc0] sm:$0xff]
        %v4176 = vld [vmem:[#allocation13 + $0xc8] sm:$0xff]
        %v4177 = vld [vmem:[#allocation13 + $0xd0] sm:$0xff]
        %v4178 = vld [vmem:[#allocation13 + $0xd8] sm:$0xff]
        %v4179 = vld [vmem:[#allocation13 + $0xe0] sm:$0xff]
        %v4180 = vld [vmem:[#allocation13 + $0xe8] sm:$0xff]
        %v4181 = vld [vmem:[#allocation13 + $0xf0] sm:$0xff]
        %v4182 = vld [vmem:[#allocation13 + $0xf8] sm:$0xff]
        %v4183 = vld [vmem:[#allocation13 + $0x100] sm:$0xff]
        %v4184 = vld [vmem:[#allocation13 + $0x108] sm:$0xff]
        %v4185 = vld [vmem:[#allocation13 + $0x110] sm:$0xff]
        %v4186 = vld [vmem:[#allocation13 + $0x118] sm:$0xff]
        %v4187 = vld [vmem:[#allocation13 + $0x120] sm:$0xff]
        %v4188 = vld [vmem:[#allocation13 + $0x128] sm:$0xff]
        %v4189 = vld [vmem:[#allocation13 + $0x130] sm:$0xff]
        %v4190 = vld [vmem:[#allocation13 + $0x138] sm:$0xff]
        %v4191 = vld [vmem:[#allocation13 + $0x140] sm:$0xff]
        %v4192 = vld [vmem:[#allocation13 + $0x148] sm:$0xff]
        %v4193 = vld [vmem:[#allocation13 + $0x150] sm:$0xff]
        %v4194 = vld [vmem:[#allocation13 + $0x158] sm:$0xff]
        %v4195 = vld [vmem:[#allocation13 + $0x160] sm:$0xff]
        %v4196 = vld [vmem:[#allocation13 + $0x168] sm:$0xff]
        %v4197 = vld [vmem:[#allocation13 + $0x170] sm:$0xff]
        %v4198 = vld [vmem:[#allocation13 + $0x178] sm:$0xff]
        %v4199 = vld [vmem:[#allocation13 + $0x180] sm:$0xff]
        %v4200 = vld [vmem:[#allocation13 + $0x188] sm:$0xff]
        %v4201 = vld [vmem:[#allocation13 + $0x190] sm:$0xff]
        %v4202 = vld [vmem:[#allocation13 + $0x198] sm:$0xff]
        %v4203 = vld [vmem:[#allocation13 + $0x1a0] sm:$0xff]
        %v4204 = vld [vmem:[#allocation13 + $0x1a8] sm:$0xff]
        %v4205 = vld [vmem:[#allocation13 + $0x1b0] sm:$0xff]
        %v4206 = vld [vmem:[#allocation13 + $0x1b8] sm:$0xff]
        %v4207 = vld [vmem:[#allocation13 + $0x1c0] sm:$0xff]
        %v4208 = vld [vmem:[#allocation13 + $0x1c8] sm:$0xff]
        %v4209 = vld [vmem:[#allocation13 + $0x1d0] sm:$0xff]
        %v4210 = vld [vmem:[#allocation13 + $0x1d8] sm:$0xff]
        %v4211 = vld [vmem:[#allocation13 + $0x1e0] sm:$0xff]
        %v4212 = vld [vmem:[#allocation13 + $0x1e8] sm:$0xff]
        %v4213 = vld [vmem:[#allocation13 + $0x1f0] sm:$0xff]
        %v4214 = vld [vmem:[#allocation13 + $0x1f8] sm:$0xff]
        %v4215 = vld [vmem:[#allocation15] sm:$0xff]
        %v4216 = vld [vmem:[#allocation15 + $0x8] sm:$0xff]
        %v4217 = vld [vmem:[#allocation15 + $0x10] sm:$0xff]
        %v4218 = vld [vmem:[#allocation15 + $0x18] sm:$0xff]
        %v4219 = vld [vmem:[#allocation15 + $0x20] sm:$0xff]
        %v4220 = vld [vmem:[#allocation15 + $0x28] sm:$0xff]
        %v4221 = vld [vmem:[#allocation15 + $0x30] sm:$0xff]
        %v4222 = vld [vmem:[#allocation15 + $0x38] sm:$0xff]
        %v4223 = vld [vmem:[#allocation15 + $0x40] sm:$0xff]
        %v4224 = vld [vmem:[#allocation15 + $0x48] sm:$0xff]
        %v4225 = vld [vmem:[#allocation15 + $0x50] sm:$0xff]
        %v4226 = vld [vmem:[#allocation15 + $0x58] sm:$0xff]
        %v4227 = vld [vmem:[#allocation15 + $0x60] sm:$0xff]
        %v4228 = vld [vmem:[#allocation15 + $0x68] sm:$0xff]
        %v4229 = vld [vmem:[#allocation15 + $0x70] sm:$0xff]
        %v4230 = vld [vmem:[#allocation15 + $0x78] sm:$0xff]
        %v4231 = vld [vmem:[#allocation15 + $0x80] sm:$0xff]
        %v4232 = vld [vmem:[#allocation15 + $0x88] sm:$0xff]
        %v4233 = vld [vmem:[#allocation15 + $0x90] sm:$0xff]
        %v4234 = vld [vmem:[#allocation15 + $0x98] sm:$0xff]
        %v4235 = vld [vmem:[#allocation15 + $0xa0] sm:$0xff]
        %v4236 = vld [vmem:[#allocation15 + $0xa8] sm:$0xff]
        %v4237 = vld [vmem:[#allocation15 + $0xb0] sm:$0xff]
        %v4238 = vld [vmem:[#allocation15 + $0xb8] sm:$0xff]
        %v4239 = vld [vmem:[#allocation15 + $0xc0] sm:$0xff]
        %v4240 = vld [vmem:[#allocation15 + $0xc8] sm:$0xff]
        %v4241 = vld [vmem:[#allocation15 + $0xd0] sm:$0xff]
        %v4242 = vld [vmem:[#allocation15 + $0xd8] sm:$0xff]
        %v4243 = vld [vmem:[#allocation15 + $0xe0] sm:$0xff]
        %v4244 = vld [vmem:[#allocation15 + $0xe8] sm:$0xff]
        %v4245 = vld [vmem:[#allocation15 + $0xf0] sm:$0xff]
        %v4246 = vld [vmem:[#allocation15 + $0xf8] sm:$0xff]
        %v4247 = vld [vmem:[#allocation15 + $0x100] sm:$0xff]
        %v4248 = vld [vmem:[#allocation15 + $0x108] sm:$0xff]
        %v4249 = vld [vmem:[#allocation15 + $0x110] sm:$0xff]
        %v4250 = vld [vmem:[#allocation15 + $0x118] sm:$0xff]
        %v4251 = vld [vmem:[#allocation15 + $0x120] sm:$0xff]
        %v4252 = vld [vmem:[#allocation15 + $0x128] sm:$0xff]
        %v4253 = vld [vmem:[#allocation15 + $0x130] sm:$0xff]
        %v4254 = vld [vmem:[#allocation15 + $0x138] sm:$0xff]
        %v4255 = vld [vmem:[#allocation15 + $0x140] sm:$0xff]
        %v4256 = vld [vmem:[#allocation15 + $0x148] sm:$0xff]
        %v4257 = vld [vmem:[#allocation15 + $0x150] sm:$0xff]
        %v4258 = vld [vmem:[#allocation15 + $0x158] sm:$0xff]
        %v4259 = vld [vmem:[#allocation15 + $0x160] sm:$0xff]
        %v4260 = vld [vmem:[#allocation15 + $0x168] sm:$0xff]
        %v4261 = vld [vmem:[#allocation15 + $0x170] sm:$0xff]
        %v4262 = vld [vmem:[#allocation15 + $0x178] sm:$0xff]
        %v4263 = vld [vmem:[#allocation15 + $0x180] sm:$0xff]
        %v4264 = vld [vmem:[#allocation15 + $0x188] sm:$0xff]
        %v4265 = vld [vmem:[#allocation15 + $0x190] sm:$0xff]
        %v4266 = vld [vmem:[#allocation15 + $0x198] sm:$0xff]
        %v4267 = vld [vmem:[#allocation15 + $0x1a0] sm:$0xff]
        %v4268 = vld [vmem:[#allocation15 + $0x1a8] sm:$0xff]
        %v4269 = vld [vmem:[#allocation15 + $0x1b0] sm:$0xff]
        %v4270 = vld [vmem:[#allocation15 + $0x1b8] sm:$0xff]
        %v4271 = vld [vmem:[#allocation15 + $0x1c0] sm:$0xff]
        %v4272 = vld [vmem:[#allocation15 + $0x1c8] sm:$0xff]
        %v4273 = vld [vmem:[#allocation15 + $0x1d0] sm:$0xff]
        %v4274 = vld [vmem:[#allocation15 + $0x1d8] sm:$0xff]
        %v4275 = vld [vmem:[#allocation15 + $0x1e0] sm:$0xff]
        %v4276 = vld [vmem:[#allocation15 + $0x1e8] sm:$0xff]
        %v4277 = vld [vmem:[#allocation15 + $0x1f0] sm:$0xff]
        %v4278 = vld [vmem:[#allocation15 + $0x1f8] sm:$0xff]
        %v4279 = vld [vmem:[%s9] sm:$0xf]
        %v4280 = vld [vmem:[#allocation4] sm:$0xff]
        %v4281 = vld [vmem:[#allocation4 + $0x8] sm:$0xff]
        %v4282 = vld [vmem:[#allocation4 + $0x10] sm:$0xff]
        %v4283 = vld [vmem:[#allocation4 + $0x18] sm:$0xff]
        %v4284 = vld [vmem:[#allocation4 + $0x20] sm:$0xff]
        %v4285 = vld [vmem:[#allocation4 + $0x28] sm:$0xff]
        %v4286 = vld [vmem:[#allocation4 + $0x30] sm:$0xff]
        %v4287 = vld [vmem:[#allocation4 + $0x38] sm:$0xff]
        %v4289 = vlaneseq
        %v4290 = vshrl.u32 %v4289, 7
        %v4291 = vsub.s32 0, %v4290
        %v4292 = vrot.slane %v4279, %v4291
        %v4293 = vlaneseq
        %v4294 = vshrl.u32 %v4293, 7
        %v4295 = vsub.s32 1, %v4294
        %v4296 = vrot.slane %v4279, %v4295
        %v4297 = vlaneseq
        %v4298 = vshrl.u32 %v4297, 7
        %v4299 = vsub.s32 2, %v4298
        %v4300 = vrot.slane %v4279, %v4299
        %v4301 = vlaneseq
        %v4302 = vshrl.u32 %v4301, 7
        %v4303 = vsub.s32 3, %v4302
        %v4304 = vrot.slane %v4279, %v4303
        %4309 = vmatprep.subr.mxu0 %v4152
        %4310 = vmatpush1.msra.mxu0 %v4151
        %4311 = vmatprep.subr.mxu0 %v4156
        %4312 = vmatpush1.msra.mxu0 %v4155
        %4313 = vmatprep.subr.mxu0 %v4160
        %4314 = vmatpush1.msra.mxu0 %v4159
        %4315 = vmatprep.subr.mxu0 %v4164
        %4316 = vmatpush1.msra.mxu0 %v4163
        %4317 = vmatprep.subr.mxu0 %v4168
        %4318 = vmatpush1.msra.mxu0 %v4167
        %4319 = vmatprep.subr.mxu0 %v4172
        %4320 = vmatpush1.msra.mxu0 %v4171
        %4321 = vmatprep.subr.mxu0 %v4176
        %4322 = vmatpush1.msra.mxu0 %v4175
        %4323 = vmatprep.subr.mxu0 %v4180
        %4324 = vmatpush1.msra.mxu0 %v4179
        %4325 = vmatprep.subr.mxu0 %v4184
        %4326 = vmatpush1.msra.mxu0 %v4183
        %4327 = vmatprep.subr.mxu0 %v4188
        %4328 = vmatpush1.msra.mxu0 %v4187
        %4329 = vmatprep.subr.mxu0 %v4192
        %4330 = vmatpush1.msra.mxu0 %v4191
        %4331 = vmatprep.subr.mxu0 %v4196
        %4332 = vmatpush1.msra.mxu0 %v4195
        %4333 = vmatprep.subr.mxu0 %v4200
        %4334 = vmatpush1.msra.mxu0 %v4199
        %4335 = vmatprep.subr.mxu0 %v4204
        %4336 = vmatpush1.msra.mxu0 %v4203
        %4337 = vmatprep.subr.mxu0 %v4208
        %4338 = vmatpush1.msra.mxu0 %v4207
        %4339 = vmatprep.subr.mxu0 %v4212
        %4340 = vmatpush1.msra.mxu0 %v4211
        %4341 = vmatprep.subr.mxu0 0.0
        %4342 = vmatpush1.msra.mxu0 0.0
        %4343 = vmatprep.subr.mxu0 0.0
        %4344 = vmatpush1.msra.mxu0 0.0
        %4345 = vmatprep.subr.mxu0 0.0
        %4346 = vmatpush1.msra.mxu0 0.0
        %4347 = vmatprep.subr.mxu0 0.0
        %4348 = vmatpush1.msra.mxu0 0.0
        %4349 = vmatprep.subr.mxu0 0.0
        %4350 = vmatpush1.msra.mxu0 0.0
        %4351 = vmatprep.subr.mxu0 0.0
        %4352 = vmatpush1.msra.mxu0 0.0
        %4353 = vmatprep.subr.mxu0 0.0
        %4354 = vmatpush1.msra.mxu0 0.0
        %4355 = vmatprep.subr.mxu0 0.0
        %4356 = vmatpush1.msra.mxu0 0.0
        %4357 = vmatprep.subr.mxu0 0.0
        %4358 = vmatpush1.msra.mxu0 0.0
        %4359 = vmatprep.subr.mxu0 0.0
        %4360 = vmatpush1.msra.mxu0 0.0
        %4361 = vmatprep.subr.mxu0 0.0
        %4362 = vmatpush1.msra.mxu0 0.0
        %4363 = vmatprep.subr.mxu0 0.0
        %4364 = vmatpush1.msra.mxu0 0.0
        %4365 = vmatprep.subr.mxu0 0.0
        %4366 = vmatpush1.msra.mxu0 0.0
        %4367 = vmatprep.subr.mxu0 0.0
        %4368 = vmatpush1.msra.mxu0 0.0
        %4369 = vmatprep.subr.mxu0 0.0
        %4370 = vmatpush1.msra.mxu0 0.0
        %4371 = vmatprep.subr.mxu0 0.0
        %4372 = vmatpush1.msra.mxu0 0.0
        %4373 = vmatprep.mubr.f32.mxu0 0.0
        %4374 = vmatmul.mubr.f32.gmra.mrb[0].mxu0 %v4280
        %v4375 = vpop.f32.mrb[0].mxu0
        %v4376 = vadd.f32 %v4292, %v4375
        %v4377 = vpop.f32.mrb[0].mxu0
        %v4378 = vadd.f32 %v4296, %v4377
        %4379 = vmatprep.mubr.f32.mxu0 0.0
        %4380 = vmatmul.mubr.f32.gmra.mrb[0].mxu0 %v4281
        %v4381 = vpop.f32.mrb[0].mxu0
        %v4382 = vadd.f32 %v4292, %v4381
        %v4383 = vpop.f32.mrb[0].mxu0
        %v4384 = vadd.f32 %v4296, %v4383
        %4385 = vmatprep.mubr.f32.mxu0 0.0
        %4386 = vmatmul.mubr.f32.gmra.mrb[0].mxu0 %v4282
        %v4387 = vpop.f32.mrb[0].mxu0
        %v4388 = vadd.f32 %v4292, %v4387
        %v4389 = vpop.f32.mrb[0].mxu0
        %v4390 = vadd.f32 %v4296, %v4389
        %4391 = vmatprep.mubr.f32.mxu0 0.0
        %4392 = vmatmul.mubr.f32.gmra.mrb[0].mxu0 %v4283
        %v4393 = vpop.f32.mrb[0].mxu0
        %v4394 = vadd.f32 %v4292, %v4393
        %v4395 = vpop.f32.mrb[0].mxu0
        %v4396 = vadd.f32 %v4296, %v4395
        %4397 = vmatprep.mubr.f32.mxu0 0.0
        %4398 = vmatmul.mubr.f32.gmra.mrb[0].mxu0 %v4284
        %v4399 = vpop.f32.mrb[0].mxu0
        %v4400 = vadd.f32 %v4292, %v4399
        %v4401 = vpop.f32.mrb[0].mxu0
        %v4402 = vadd.f32 %v4296, %v4401
        %4403 = vmatprep.mubr.f32.mxu0 0.0
        %4404 = vmatmul.mubr.f32.gmra.mrb[0].mxu0 %v4285
        %v4405 = vpop.f32.mrb[0].mxu0
        %v4406 = vadd.f32 %v4292, %v4405
        %v4407 = vpop.f32.mrb[0].mxu0
        %v4408 = vadd.f32 %v4296, %v4407
        %4409 = vmatprep.mubr.f32.mxu0 0.0
        %4410 = vmatmul.mubr.f32.gmra.mrb[0].mxu0 %v4286
        %v4411 = vpop.f32.mrb[0].mxu0
        %v4412 = vadd.f32 %v4292, %v4411
        %v4413 = vpop.f32.mrb[0].mxu0
        %v4414 = vadd.f32 %v4296, %v4413
        %4415 = vmatprep.mubr.f32.mxu0 0.0
        %4416 = vmatmul.mubr.f32.gmra.mrb[0].mxu0 %v4287
        %v4417 = vpop.f32.mrb[0].mxu0
        %v4418 = vadd.f32 %v4292, %v4417
        %v4419 = vpop.f32.mrb[0].mxu0
        %v4420 = vadd.f32 %v4296, %v4419
        %4421 = vdwg.mxu0
        %4422 = vmatprep.subr.mxu0 %v4154
        %4423 = vmatpush1.msra.mxu0 %v4153
        %4424 = vmatprep.subr.mxu0 %v4158
        %4425 = vmatpush1.msra.mxu0 %v4157
        %4426 = vmatprep.subr.mxu0 %v4162
        %4427 = vmatpush1.msra.mxu0 %v4161
        %4428 = vmatprep.subr.mxu0 %v4166
        %4429 = vmatpush1.msra.mxu0 %v4165
        %4430 = vmatprep.subr.mxu0 %v4170
        %4431 = vmatpush1.msra.mxu0 %v4169
        %4432 = vmatprep.subr.mxu0 %v4174
        %4433 = vmatpush1.msra.mxu0 %v4173
        %4434 = vmatprep.subr.mxu0 %v4178
        %4435 = vmatpush1.msra.mxu0 %v4177
        %4436 = vmatprep.subr.mxu0 %v4182
        %4437 = vmatpush1.msra.mxu0 %v4181
        %4438 = vmatprep.subr.mxu0 %v4186
        %4439 = vmatpush1.msra.mxu0 %v4185
        %4440 = vmatprep.subr.mxu0 %v4190
        %4441 = vmatpush1.msra.mxu0 %v4189
        %4442 = vmatprep.subr.mxu0 %v4194
        %4443 = vmatpush1.msra.mxu0 %v4193
        %4444 = vmatprep.subr.mxu0 %v4198
        %4445 = vmatpush1.msra.mxu0 %v4197
        %4446 = vmatprep.subr.mxu0 %v4202
        %4447 = vmatpush1.msra.mxu0 %v4201
        %4448 = vmatprep.subr.mxu0 %v4206
        %4449 = vmatpush1.msra.mxu0 %v4205
        %4450 = vmatprep.subr.mxu0 %v4210
        %4451 = vmatpush1.msra.mxu0 %v4209
        %4452 = vmatprep.subr.mxu0 %v4214
        %4453 = vmatpush1.msra.mxu0 %v4213
        %4454 = vmatprep.subr.mxu0 0.0
        %4455 = vmatpush1.msra.mxu0 0.0
        %4456 = vmatprep.subr.mxu0 0.0
        %4457 = vmatpush1.msra.mxu0 0.0
        %4458 = vmatprep.subr.mxu0 0.0
        %4459 = vmatpush1.msra.mxu0 0.0
        %4460 = vmatprep.subr.mxu0 0.0
        %4461 = vmatpush1.msra.mxu0 0.0
        %4462 = vmatprep.subr.mxu0 0.0
        %4463 = vmatpush1.msra.mxu0 0.0
        %4464 = vmatprep.subr.mxu0 0.0
        %4465 = vmatpush1.msra.mxu0 0.0
        %4466 = vmatprep.subr.mxu0 0.0
        %4467 = vmatpush1.msra.mxu0 0.0
        %4468 = vmatprep.subr.mxu0 0.0
        %4469 = vmatpush1.msra.mxu0 0.0
        %4470 = vmatprep.subr.mxu0 0.0
        %4471 = vmatpush1.msra.mxu0 0.0
        %4472 = vmatprep.subr.mxu0 0.0
        %4473 = vmatpush1.msra.mxu0 0.0
        %4474 = vmatprep.subr.mxu0 0.0
        %4475 = vmatpush1.msra.mxu0 0.0
        %4476 = vmatprep.subr.mxu0 0.0
        %4477 = vmatpush1.msra.mxu0 0.0
        %4478 = vmatprep.subr.mxu0 0.0
        %4479 = vmatpush1.msra.mxu0 0.0
        %4480 = vmatprep.subr.mxu0 0.0
        %4481 = vmatpush1.msra.mxu0 0.0
        %4482 = vmatprep.subr.mxu0 0.0
        %4483 = vmatpush1.msra.mxu0 0.0
        %4484 = vmatprep.subr.mxu0 0.0
        %4485 = vmatpush1.msra.mxu0 0.0
        %4486 = vmatprep.mubr.f32.mxu0 0.0
        %4487 = vmatmul.mubr.f32.gmra.mrb[0].mxu0 %v4280
        %v4488 = vpop.f32.mrb[0].mxu0
        %v4489 = vadd.f32 %v4300, %v4488
        %v4490 = vpop.f32.mrb[0].mxu0
        %v4491 = vadd.f32 %v4304, %v4490
        %4492 = vmatprep.mubr.f32.mxu0 0.0
        %4493 = vmatmul.mubr.f32.gmra.mrb[0].mxu0 %v4281
        %v4494 = vpop.f32.mrb[0].mxu0
        %v4495 = vadd.f32 %v4300, %v4494
        %v4496 = vpop.f32.mrb[0].mxu0
        %v4497 = vadd.f32 %v4304, %v4496
        %4498 = vmatprep.mubr.f32.mxu0 0.0
        %4499 = vmatmul.mubr.f32.gmra.mrb[0].mxu0 %v4282
        %v4500 = vpop.f32.mrb[0].mxu0
        %v4501 = vadd.f32 %v4300, %v4500
        %v4502 = vpop.f32.mrb[0].mxu0
        %v4503 = vadd.f32 %v4304, %v4502
        %4504 = vmatprep.mubr.f32.mxu0 0.0
        %4505 = vmatmul.mubr.f32.gmra.mrb[0].mxu0 %v4283
        %v4506 = vpop.f32.mrb[0].mxu0
        %v4507 = vadd.f32 %v4300, %v4506
        %v4508 = vpop.f32.mrb[0].mxu0
        %v4509 = vadd.f32 %v4304, %v4508
        %4510 = vmatprep.mubr.f32.mxu0 0.0
        %4511 = vmatmul.mubr.f32.gmra.mrb[0].mxu0 %v4284
        %v4512 = vpop.f32.mrb[0].mxu0
        %v4513 = vadd.f32 %v4300, %v4512
        %v4514 = vpop.f32.mrb[0].mxu0
        %v4515 = vadd.f32 %v4304, %v4514
        %4516 = vmatprep.mubr.f32.mxu0 0.0
        %4517 = vmatmul.mubr.f32.gmra.mrb[0].mxu0 %v4285
        %v4518 = vpop.f32.mrb[0].mxu0
        %v4519 = vadd.f32 %v4300, %v4518
        %v4520 = vpop.f32.mrb[0].mxu0
        %v4521 = vadd.f32 %v4304, %v4520
        %4522 = vmatprep.mubr.f32.mxu0 0.0
        %4523 = vmatmul.mubr.f32.gmra.mrb[0].mxu0 %v4286
        %v4524 = vpop.f32.mrb[0].mxu0
        %v4525 = vadd.f32 %v4300, %v4524
        %v4526 = vpop.f32.mrb[0].mxu0
        %v4527 = vadd.f32 %v4304, %v4526
        %4528 = vmatprep.mubr.f32.mxu0 0.0
        %4529 = vmatmul.mubr.f32.gmra.mrb[0].mxu0 %v4287
        %v4530 = vpop.f32.mrb[0].mxu0
        %v4531 = vadd.f32 %v4300, %v4530
        %v4532 = vpop.f32.mrb[0].mxu0
        %v4533 = vadd.f32 %v4304, %v4532
        %4534 = vdwg.mxu0
        %4535 = vst [vmem:[#allocation2] sm:$0xff] %v4376
        %4536 = vst [vmem:[#allocation2 + $0x8] sm:$0xff] %v4378
        %4537 = vst [vmem:[#allocation2 + $0x10] sm:$0xff] %v4489
        %4538 = vst [vmem:[#allocation2 + $0x18] sm:$0xff] %v4491
        %4539 = vst [vmem:[#allocation2 + $0x20] sm:$0xff] %v4382
        %4540 = vst [vmem:[#allocation2 + $0x28] sm:$0xff] %v4384
        %4541 = vst [vmem:[#allocation2 + $0x30] sm:$0xff] %v4495
        %4542 = vst [vmem:[#allocation2 + $0x38] sm:$0xff] %v4497
        %4543 = vst [vmem:[#allocation2 + $0x40] sm:$0xff] %v4388
        %4544 = vst [vmem:[#allocation2 + $0x48] sm:$0xff] %v4390
        %4545 = vst [vmem:[#allocation2 + $0x50] sm:$0xff] %v4501
        %4546 = vst [vmem:[#allocation2 + $0x58] sm:$0xff] %v4503
        %4547 = vst [vmem:[#allocation2 + $0x60] sm:$0xff] %v4394
        %4548 = vst [vmem:[#allocation2 + $0x68] sm:$0xff] %v4396
        %4549 = vst [vmem:[#allocation2 + $0x70] sm:$0xff] %v4507
        %4550 = vst [vmem:[#allocation2 + $0x78] sm:$0xff] %v4509
        %4551 = vst [vmem:[#allocation2 + $0x80] sm:$0xff] %v4400
        %4552 = vst [vmem:[#allocation2 + $0x88] sm:$0xff] %v4402
        %4553 = vst [vmem:[#allocation2 + $0x90] sm:$0xff] %v4513
        %4554 = vst [vmem:[#allocation2 + $0x98] sm:$0xff] %v4515
        %4555 = vst [vmem:[#allocation2 + $0xa0] sm:$0xff] %v4406
        %4556 = vst [vmem:[#allocation2 + $0xa8] sm:$0xff] %v4408
        %4557 = vst [vmem:[#allocation2 + $0xb0] sm:$0xff] %v4519
        %4558 = vst [vmem:[#allocation2 + $0xb8] sm:$0xff] %v4521
        %4559 = vst [vmem:[#allocation2 + $0xc0] sm:$0xff] %v4412
        %4560 = vst [vmem:[#allocation2 + $0xc8] sm:$0xff] %v4414
        %4561 = vst [vmem:[#allocation2 + $0xd0] sm:$0xff] %v4525
        %4562 = vst [vmem:[#allocation2 + $0xd8] sm:$0xff] %v4527
        %4563 = vst [vmem:[#allocation2 + $0xe0] sm:$0xff] %v4418
        %4564 = vst [vmem:[#allocation2 + $0xe8] sm:$0xff] %v4420
        %4565 = vst [vmem:[#allocation2 + $0xf0] sm:$0xff] %v4531
        %4566 = vst [vmem:[#allocation2 + $0xf8] sm:$0xff] %v4533
        %s4567 = scalar_lea.vmem [#allocation5], 16
        %v4568 = vld [vmem:[%s4567] sm:$0xff]
        %s4569 = scalar_lea.vmem [#allocation6], 16
        %v4570 = vld [vmem:[%s4569] sm:$0xff]
        %v4571 = vld [vmem:[#allocation2] sm:$0xff]
        %v4572 = vld [vmem:[#allocation2 + $0x8] sm:$0xff]
        %v4573 = vld [vmem:[#allocation2 + $0x10] sm:$0xff]
        %v4574 = vld [vmem:[#allocation2 + $0x18] sm:$0xff]
        %4575 = vmatprep.subr.mxu0 %v4216
        %4576 = vmatpush1.msra.mxu0 %v4215
        %4577 = vmatprep.subr.mxu0 %v4220
        %4578 = vmatpush1.msra.mxu0 %v4219
        %4579 = vmatprep.subr.mxu0 %v4224
        %4580 = vmatpush1.msra.mxu0 %v4223
        %4581 = vmatprep.subr.mxu0 %v4228
        %4582 = vmatpush1.msra.mxu0 %v4227
        %4583 = vmatprep.subr.mxu0 %v4232
        %4584 = vmatpush1.msra.mxu0 %v4231
        %4585 = vmatprep.subr.mxu0 %v4236
        %4586 = vmatpush1.msra.mxu0 %v4235
        %4587 = vmatprep.subr.mxu0 %v4240
        %4588 = vmatpush1.msra.mxu0 %v4239
        %4589 = vmatprep.subr.mxu0 %v4244
        %4590 = vmatpush1.msra.mxu0 %v4243
        %4591 = vmatprep.subr.mxu0 %v4248
        %4592 = vmatpush1.msra.mxu0 %v4247
        %4593 = vmatprep.subr.mxu0 %v4252
        %4594 = vmatpush1.msra.mxu0 %v4251
        %4595 = vmatprep.subr.mxu0 %v4256
        %4596 = vmatpush1.msra.mxu0 %v4255
        %4597 = vmatprep.subr.mxu0 %v4260
        %4598 = vmatpush1.msra.mxu0 %v4259
        %4599 = vmatprep.subr.mxu0 %v4264
        %4600 = vmatpush1.msra.mxu0 %v4263
        %4601 = vmatprep.subr.mxu0 %v4268
        %4602 = vmatpush1.msra.mxu0 %v4267
        %4603 = vmatprep.subr.mxu0 %v4272
        %4604 = vmatpush1.msra.mxu0 %v4271
        %4605 = vmatprep.subr.mxu0 %v4276
        %4606 = vmatpush1.msra.mxu0 %v4275
        %4607 = vmatprep.subr.mxu0 0.0
        %4608 = vmatpush1.msra.mxu0 0.0
        %4609 = vmatprep.subr.mxu0 0.0
        %4610 = vmatpush1.msra.mxu0 0.0
        %4611 = vmatprep.subr.mxu0 0.0
        %4612 = vmatpush1.msra.mxu0 0.0
        %4613 = vmatprep.subr.mxu0 0.0
        %4614 = vmatpush1.msra.mxu0 0.0
        %4615 = vmatprep.subr.mxu0 0.0
        %4616 = vmatpush1.msra.mxu0 0.0
        %4617 = vmatprep.subr.mxu0 0.0
        %4618 = vmatpush1.msra.mxu0 0.0
        %4619 = vmatprep.subr.mxu0 0.0
        %4620 = vmatpush1.msra.mxu0 0.0
        %4621 = vmatprep.subr.mxu0 0.0
        %4622 = vmatpush1.msra.mxu0 0.0
        %4623 = vmatprep.subr.mxu0 0.0
        %4624 = vmatpush1.msra.mxu0 0.0
        %4625 = vmatprep.subr.mxu0 0.0
        %4626 = vmatpush1.msra.mxu0 0.0
        %4627 = vmatprep.subr.mxu0 0.0
        %4628 = vmatpush1.msra.mxu0 0.0
        %4629 = vmatprep.subr.mxu0 0.0
        %4630 = vmatpush1.msra.mxu0 0.0
        %4631 = vmatprep.subr.mxu0 0.0
        %4632 = vmatpush1.msra.mxu0 0.0
        %4633 = vmatprep.subr.mxu0 0.0
        %4634 = vmatpush1.msra.mxu0 0.0
        %4635 = vmatprep.subr.mxu0 0.0
        %4636 = vmatpush1.msra.mxu0 0.0
        %4637 = vmatprep.subr.mxu0 0.0
        %4638 = vmatpush1.msra.mxu0 0.0
        %4639 = vmatprep.mubr.f32.mxu0 0.0
        %4640 = vmatmul.mubr.f32.gmra.mrb[0].mxu0 %v4568
        %v4641 = vpop.f32.mrb[0].mxu0
        %v4642 = vadd.f32 0.0, %v4641
        %v4643 = vpop.f32.mrb[0].mxu0
        %v4644 = vadd.f32 0.0, %v4643
        %4645 = vdwg.mxu0
        %4646 = vmatprep.subr.mxu0 %v4218
        %4647 = vmatpush1.msra.mxu0 %v4217
        %4648 = vmatprep.subr.mxu0 %v4222
        %4649 = vmatpush1.msra.mxu0 %v4221
        %4650 = vmatprep.subr.mxu0 %v4226
        %4651 = vmatpush1.msra.mxu0 %v4225
        %4652 = vmatprep.subr.mxu0 %v4230
        %4653 = vmatpush1.msra.mxu0 %v4229
        %4654 = vmatprep.subr.mxu0 %v4234
        %4655 = vmatpush1.msra.mxu0 %v4233
        %4656 = vmatprep.subr.mxu0 %v4238
        %4657 = vmatpush1.msra.mxu0 %v4237
        %4658 = vmatprep.subr.mxu0 %v4242
        %4659 = vmatpush1.msra.mxu0 %v4241
        %4660 = vmatprep.subr.mxu0 %v4246
        %4661 = vmatpush1.msra.mxu0 %v4245
        %4662 = vmatprep.subr.mxu0 %v4250
        %4663 = vmatpush1.msra.mxu0 %v4249
        %4664 = vmatprep.subr.mxu0 %v4254
        %4665 = vmatpush1.msra.mxu0 %v4253
        %4666 = vmatprep.subr.mxu0 %v4258
        %4667 = vmatpush1.msra.mxu0 %v4257
        %4668 = vmatprep.subr.mxu0 %v4262
        %4669 = vmatpush1.msra.mxu0 %v4261
        %4670 = vmatprep.subr.mxu0 %v4266
        %4671 = vmatpush1.msra.mxu0 %v4265
        %4672 = vmatprep.subr.mxu0 %v4270
        %4673 = vmatpush1.msra.mxu0 %v4269
        %4674 = vmatprep.subr.mxu0 %v4274
        %4675 = vmatpush1.msra.mxu0 %v4273
        %4676 = vmatprep.subr.mxu0 %v4278
        %4677 = vmatpush1.msra.mxu0 %v4277
        %4678 = vmatprep.subr.mxu0 0.0
        %4679 = vmatpush1.msra.mxu0 0.0
        %4680 = vmatprep.subr.mxu0 0.0
        %4681 = vmatpush1.msra.mxu0 0.0
        %4682 = vmatprep.subr.mxu0 0.0
        %4683 = vmatpush1.msra.mxu0 0.0
        %4684 = vmatprep.subr.mxu0 0.0
        %4685 = vmatpush1.msra.mxu0 0.0
        %4686 = vmatprep.subr.mxu0 0.0
        %4687 = vmatpush1.msra.mxu0 0.0
        %4688 = vmatprep.subr.mxu0 0.0
        %4689 = vmatpush1.msra.mxu0 0.0
        %4690 = vmatprep.subr.mxu0 0.0
        %4691 = vmatpush1.msra.mxu0 0.0
        %4692 = vmatprep.subr.mxu0 0.0
        %4693 = vmatpush1.msra.mxu0 0.0
        %4694 = vmatprep.subr.mxu0 0.0
        %4695 = vmatpush1.msra.mxu0 0.0
        %4696 = vmatprep.subr.mxu0 0.0
        %4697 = vmatpush1.msra.mxu0 0.0
        %4698 = vmatprep.subr.mxu0 0.0
        %4699 = vmatpush1.msra.mxu0 0.0
        %4700 = vmatprep.subr.mxu0 0.0
        %4701 = vmatpush1.msra.mxu0 0.0
        %4702 = vmatprep.subr.mxu0 0.0
        %4703 = vmatpush1.msra.mxu0 0.0
        %4704 = vmatprep.subr.mxu0 0.0
        %4705 = vmatpush1.msra.mxu0 0.0
        %4706 = vmatprep.subr.mxu0 0.0
        %4707 = vmatpush1.msra.mxu0 0.0
        %4708 = vmatprep.subr.mxu0 0.0
        %4709 = vmatpush1.msra.mxu0 0.0
        %4710 = vmatprep.mubr.f32.mxu0 0.0
        %4711 = vmatmul.mubr.f32.gmra.mrb[0].mxu0 %v4568
        %v4712 = vpop.f32.mrb[0].mxu0
        %v4713 = vadd.f32 0.0, %v4712
        %v4714 = vpop.f32.mrb[0].mxu0
        %v4715 = vadd.f32 0.0, %v4714
        %4716 = vdwg.mxu0
        %v4717 = vadd.f32 %v4571, %v4642
        %v4718 = vadd.f32 %v4572, %v4644
        %v4719 = vadd.f32 %v4573, %v4713
        %v4720 = vadd.f32 %v4574, %v4715
        %v4721 = vxor.u32 %v4717, 2147483648
        %v4722 = vxor.u32 %v4718, 2147483648
        %v4723 = vxor.u32 %v4719, 2147483648
        %v4724 = vmul.f32 %v4721, 1.442695
        %v4725 = vpow.pop %v4724
        %v4726 = vmul.f32 %v4722, 1.442695
        %v4727 = vpow.pop %v4726
        %v4728 = vmul.f32 %v4723, 1.442695
        %v4729 = vpow.pop %v4728
        %v4730 = vadd.f32 %v4725, 1.0
        %v4731 = vadd.f32 %v4727, 1.0
        %v4732 = vadd.f32 %v4729, 1.0
        %v4733 = vrcp.pop %v4730
        %v4734 = vmul.f32 1.0, %v4733
        %v4735 = vrcp.pop %v4731
        %v4736 = vmul.f32 1.0, %v4735
        %v4737 = vrcp.pop %v4732
        %v4738 = vmul.f32 1.0, %v4737
        %v4739 = vtanh.pop %v4720
        %v4740 = vmul.f32 %v4736, %v4570
        %v4741 = vmul.f32 %v4734, %v4739
        %v4742 = vadd.f32 %v4740, %v4741
        %v4743 = vtanh.pop %v4742
        %v4744 = vmul.f32 %v4738, %v4743
        %4745 = vst [vmem:[#allocation3] sm:$0xff] %v4744
        %v4746 = vld [vmem:[%s1081] sm:$0xff]
        %v4747 = vld [vmem:[%s1081 + $0x8] sm:$0xff]
        %v4748 = vld [vmem:[%s1081 + $0x10] sm:$0xff]
        %v4749 = vld [vmem:[%s1081 + $0x18] sm:$0xff]
        %4750 = vmatprep.subr.mxu0 %v4216
        %4751 = vmatpush1.msra.mxu0 %v4215
        %4752 = vmatprep.subr.mxu0 %v4220
        %4753 = vmatpush1.msra.mxu0 %v4219
        %4754 = vmatprep.subr.mxu0 %v4224
        %4755 = vmatpush1.msra.mxu0 %v4223
        %4756 = vmatprep.subr.mxu0 %v4228
        %4757 = vmatpush1.msra.mxu0 %v4227
        %4758 = vmatprep.subr.mxu0 %v4232
        %4759 = vmatpush1.msra.mxu0 %v4231
        %4760 = vmatprep.subr.mxu0 %v4236
        %4761 = vmatpush1.msra.mxu0 %v4235
        %4762 = vmatprep.subr.mxu0 %v4240
        %4763 = vmatpush1.msra.mxu0 %v4239
        %4764 = vmatprep.subr.mxu0 %v4244
        %4765 = vmatpush1.msra.mxu0 %v4243
        %4766 = vmatprep.subr.mxu0 %v4248
        %4767 = vmatpush1.msra.mxu0 %v4247
        %4768 = vmatprep.subr.mxu0 %v4252
        %4769 = vmatpush1.msra.mxu0 %v4251
        %4770 = vmatprep.subr.mxu0 %v4256
        %4771 = vmatpush1.msra.mxu0 %v4255
        %4772 = vmatprep.subr.mxu0 %v4260
        %4773 = vmatpush1.msra.mxu0 %v4259
        %4774 = vmatprep.subr.mxu0 %v4264
        %4775 = vmatpush1.msra.mxu0 %v4263
        %4776 = vmatprep.subr.mxu0 %v4268
        %4777 = vmatpush1.msra.mxu0 %v4267
        %4778 = vmatprep.subr.mxu0 %v4272
        %4779 = vmatpush1.msra.mxu0 %v4271
        %4780 = vmatprep.subr.mxu0 %v4276
        %4781 = vmatpush1.msra.mxu0 %v4275
        %4782 = vmatprep.subr.mxu0 0.0
        %4783 = vmatpush1.msra.mxu0 0.0
        %4784 = vmatprep.subr.mxu0 0.0
        %4785 = vmatpush1.msra.mxu0 0.0
        %4786 = vmatprep.subr.mxu0 0.0
        %4787 = vmatpush1.msra.mxu0 0.0
        %4788 = vmatprep.subr.mxu0 0.0
        %4789 = vmatpush1.msra.mxu0 0.0
        %4790 = vmatprep.subr.mxu0 0.0
        %4791 = vmatpush1.msra.mxu0 0.0
        %4792 = vmatprep.subr.mxu0 0.0
        %4793 = vmatpush1.msra.mxu0 0.0
        %4794 = vmatprep.subr.mxu0 0.0
        %4795 = vmatpush1.msra.mxu0 0.0
        %4796 = vmatprep.subr.mxu0 0.0
        %4797 = vmatpush1.msra.mxu0 0.0
        %4798 = vmatprep.subr.mxu0 0.0
        %4799 = vmatpush1.msra.mxu0 0.0
        %4800 = vmatprep.subr.mxu0 0.0
        %4801 = vmatpush1.msra.mxu0 0.0
        %4802 = vmatprep.subr.mxu0 0.0
        %4803 = vmatpush1.msra.mxu0 0.0
        %4804 = vmatprep.subr.mxu0 0.0
        %4805 = vmatpush1.msra.mxu0 0.0
        %4806 = vmatprep.subr.mxu0 0.0
        %4807 = vmatpush1.msra.mxu0 0.0
        %4808 = vmatprep.subr.mxu0 0.0
        %4809 = vmatpush1.msra.mxu0 0.0
        %4810 = vmatprep.subr.mxu0 0.0
        %4811 = vmatpush1.msra.mxu0 0.0
        %4812 = vmatprep.subr.mxu0 0.0
        %4813 = vmatpush1.msra.mxu0 0.0
        %4814 = vmatprep.mubr.f32.mxu0 0.0
        %4815 = vmatmul.mubr.f32.gmra.mrb[0].mxu0 %v4744
        %v4816 = vpop.f32.mrb[0].mxu0
        %v4817 = vadd.f32 0.0, %v4816
        %v4818 = vpop.f32.mrb[0].mxu0
        %v4819 = vadd.f32 0.0, %v4818
        %4820 = vdwg.mxu0
        %4821 = vmatprep.subr.mxu0 %v4218
        %4822 = vmatpush1.msra.mxu0 %v4217
        %4823 = vmatprep.subr.mxu0 %v4222
        %4824 = vmatpush1.msra.mxu0 %v4221
        %4825 = vmatprep.subr.mxu0 %v4226
        %4826 = vmatpush1.msra.mxu0 %v4225
        %4827 = vmatprep.subr.mxu0 %v4230
        %4828 = vmatpush1.msra.mxu0 %v4229
        %4829 = vmatprep.subr.mxu0 %v4234
        %4830 = vmatpush1.msra.mxu0 %v4233
        %4831 = vmatprep.subr.mxu0 %v4238
        %4832 = vmatpush1.msra.mxu0 %v4237
        %4833 = vmatprep.subr.mxu0 %v4242
        %4834 = vmatpush1.msra.mxu0 %v4241
        %4835 = vmatprep.subr.mxu0 %v4246
        %4836 = vmatpush1.msra.mxu0 %v4245
        %4837 = vmatprep.subr.mxu0 %v4250
        %4838 = vmatpush1.msra.mxu0 %v4249
        %4839 = vmatprep.subr.mxu0 %v4254
        %4840 = vmatpush1.msra.mxu0 %v4253
        %4841 = vmatprep.subr.mxu0 %v4258
        %4842 = vmatpush1.msra.mxu0 %v4257
        %4843 = vmatprep.subr.mxu0 %v4262
        %4844 = vmatpush1.msra.mxu0 %v4261
        %4845 = vmatprep.subr.mxu0 %v4266
        %4846 = vmatpush1.msra.mxu0 %v4265
        %4847 = vmatprep.subr.mxu0 %v4270
        %4848 = vmatpush1.msra.mxu0 %v4269
        %4849 = vmatprep.subr.mxu0 %v4274
        %4850 = vmatpush1.msra.mxu0 %v4273
        %4851 = vmatprep.subr.mxu0 %v4278
        %4852 = vmatpush1.msra.mxu0 %v4277
        %4853 = vmatprep.subr.mxu0 0.0
        %4854 = vmatpush1.msra.mxu0 0.0
        %4855 = vmatprep.subr.mxu0 0.0
        %4856 = vmatpush1.msra.mxu0 0.0
        %4857 = vmatprep.subr.mxu0 0.0
        %4858 = vmatpush1.msra.mxu0 0.0
        %4859 = vmatprep.subr.mxu0 0.0
        %4860 = vmatpush1.msra.mxu0 0.0
        %4861 = vmatprep.subr.mxu0 0.0
        %4862 = vmatpush1.msra.mxu0 0.0
        %4863 = vmatprep.subr.mxu0 0.0
        %4864 = vmatpush1.msra.mxu0 0.0
        %4865 = vmatprep.subr.mxu0 0.0
        %4866 = vmatpush1.msra.mxu0 0.0
        %4867 = vmatprep.subr.mxu0 0.0
        %4868 = vmatpush1.msra.mxu0 0.0
        %4869 = vmatprep.subr.mxu0 0.0
        %4870 = vmatpush1.msra.mxu0 0.0
        %4871 = vmatprep.subr.mxu0 0.0
        %4872 = vmatpush1.msra.mxu0 0.0
        %4873 = vmatprep.subr.mxu0 0.0
        %4874 = vmatpush1.msra.mxu0 0.0
        %4875 = vmatprep.subr.mxu0 0.0
        %4876 = vmatpush1.msra.mxu0 0.0
        %4877 = vmatprep.subr.mxu0 0.0
        %4878 = vmatpush1.msra.mxu0 0.0
        %4879 = vmatprep.subr.mxu0 0.0
        %4880 = vmatpush1.msra.mxu0 0.0
        %4881 = vmatprep.subr.mxu0 0.0
        %4882 = vmatpush1.msra.mxu0 0.0
        %4883 = vmatprep.subr.mxu0 0.0
        %4884 = vmatpush1.msra.mxu0 0.0
        %4885 = vmatprep.mubr.f32.mxu0 0.0
        %4886 = vmatmul.mubr.f32.gmra.mrb[0].mxu0 %v4744
        %v4887 = vpop.f32.mrb[0].mxu0
        %v4888 = vadd.f32 0.0, %v4887
        %v4889 = vpop.f32.mrb[0].mxu0
        %v4890 = vadd.f32 0.0, %v4889
        %4891 = vdwg.mxu0
        %v4892 = vadd.f32 %v4746, %v4817
        %v4893 = vadd.f32 %v4747, %v4819
        %v4894 = vadd.f32 %v4748, %v4888
        %v4895 = vadd.f32 %v4749, %v4890
        %v4896 = vxor.u32 %v4892, 2147483648
        %v4897 = vxor.u32 %v4893, 2147483648
        %v4898 = vxor.u32 %v4894, 2147483648
        %v4899 = vmul.f32 %v4896, 1.442695
        %v4900 = vpow.pop %v4899
        %v4901 = vmul.f32 %v4897, 1.442695
        %v4902 = vpow.pop %v4901
        %v4903 = vmul.f32 %v4898, 1.442695
        %v4904 = vpow.pop %v4903
        %v4905 = vadd.f32 %v4900, 1.0
        %v4906 = vadd.f32 %v4902, 1.0
        %v4907 = vadd.f32 %v4904, 1.0
        %v4908 = vrcp.pop %v4905
        %v4909 = vmul.f32 1.0, %v4908
        %v4910 = vrcp.pop %v4906
        %v4911 = vmul.f32 1.0, %v4910
        %v4912 = vrcp.pop %v4907
        %v4913 = vmul.f32 1.0, %v4912
        %v4914 = vtanh.pop %v4895
        %v4915 = vmul.f32 %v4911, %v4742
        %v4916 = vmul.f32 %v4909, %v4914
        %v4917 = vadd.f32 %v4915, %v4916
        %v4918 = vtanh.pop %v4917
        %v4919 = vmul.f32 %v4913, %v4918
        %4920 = vst [vmem:[%s1256] sm:$0xff] %v4919
        %v4921 = vld [vmem:[%s1258] sm:$0xff]
        %v4922 = vld [vmem:[%s1258 + $0x8] sm:$0xff]
        %v4923 = vld [vmem:[%s1258 + $0x10] sm:$0xff]
        %v4924 = vld [vmem:[%s1258 + $0x18] sm:$0xff]
        %4925 = vmatprep.subr.mxu0 %v4216
        %4926 = vmatpush1.msra.mxu0 %v4215
        %4927 = vmatprep.subr.mxu0 %v4220
        %4928 = vmatpush1.msra.mxu0 %v4219
        %4929 = vmatprep.subr.mxu0 %v4224
        %4930 = vmatpush1.msra.mxu0 %v4223
        %4931 = vmatprep.subr.mxu0 %v4228
        %4932 = vmatpush1.msra.mxu0 %v4227
        %4933 = vmatprep.subr.mxu0 %v4232
        %4934 = vmatpush1.msra.mxu0 %v4231
        %4935 = vmatprep.subr.mxu0 %v4236
        %4936 = vmatpush1.msra.mxu0 %v4235
        %4937 = vmatprep.subr.mxu0 %v4240
        %4938 = vmatpush1.msra.mxu0 %v4239
        %4939 = vmatprep.subr.mxu0 %v4244
        %4940 = vmatpush1.msra.mxu0 %v4243
        %4941 = vmatprep.subr.mxu0 %v4248
        %4942 = vmatpush1.msra.mxu0 %v4247
        %4943 = vmatprep.subr.mxu0 %v4252
        %4944 = vmatpush1.msra.mxu0 %v4251
        %4945 = vmatprep.subr.mxu0 %v4256
        %4946 = vmatpush1.msra.mxu0 %v4255
        %4947 = vmatprep.subr.mxu0 %v4260
        %4948 = vmatpush1.msra.mxu0 %v4259
        %4949 = vmatprep.subr.mxu0 %v4264
        %4950 = vmatpush1.msra.mxu0 %v4263
        %4951 = vmatprep.subr.mxu0 %v4268
        %4952 = vmatpush1.msra.mxu0 %v4267
        %4953 = vmatprep.subr.mxu0 %v4272
        %4954 = vmatpush1.msra.mxu0 %v4271
        %4955 = vmatprep.subr.mxu0 %v4276
        %4956 = vmatpush1.msra.mxu0 %v4275
        %4957 = vmatprep.subr.mxu0 0.0
        %4958 = vmatpush1.msra.mxu0 0.0
        %4959 = vmatprep.subr.mxu0 0.0
        %4960 = vmatpush1.msra.mxu0 0.0
        %4961 = vmatprep.subr.mxu0 0.0
        %4962 = vmatpush1.msra.mxu0 0.0
        %4963 = vmatprep.subr.mxu0 0.0
        %4964 = vmatpush1.msra.mxu0 0.0
        %4965 = vmatprep.subr.mxu0 0.0
        %4966 = vmatpush1.msra.mxu0 0.0
        %4967 = vmatprep.subr.mxu0 0.0
        %4968 = vmatpush1.msra.mxu0 0.0
        %4969 = vmatprep.subr.mxu0 0.0
        %4970 = vmatpush1.msra.mxu0 0.0
        %4971 = vmatprep.subr.mxu0 0.0
        %4972 = vmatpush1.msra.mxu0 0.0
        %4973 = vmatprep.subr.mxu0 0.0
        %4974 = vmatpush1.msra.mxu0 0.0
        %4975 = vmatprep.subr.mxu0 0.0
        %4976 = vmatpush1.msra.mxu0 0.0
        %4977 = vmatprep.subr.mxu0 0.0
        %4978 = vmatpush1.msra.mxu0 0.0
        %4979 = vmatprep.subr.mxu0 0.0
        %4980 = vmatpush1.msra.mxu0 0.0
        %4981 = vmatprep.subr.mxu0 0.0
        %4982 = vmatpush1.msra.mxu0 0.0
        %4983 = vmatprep.subr.mxu0 0.0
        %4984 = vmatpush1.msra.mxu0 0.0
        %4985 = vmatprep.subr.mxu0 0.0
        %4986 = vmatpush1.msra.mxu0 0.0
        %4987 = vmatprep.subr.mxu0 0.0
        %4988 = vmatpush1.msra.mxu0 0.0
        %4989 = vmatprep.mubr.f32.mxu0 0.0
        %4990 = vmatmul.mubr.f32.gmra.mrb[0].mxu0 %v4919
        %v4991 = vpop.f32.mrb[0].mxu0
        %v4992 = vadd.f32 0.0, %v4991
        %v4993 = vpop.f32.mrb[0].mxu0
        %v4994 = vadd.f32 0.0, %v4993
        %4995 = vdwg.mxu0
        %4996 = vmatprep.subr.mxu0 %v4218
        %4997 = vmatpush1.msra.mxu0 %v4217
        %4998 = vmatprep.subr.mxu0 %v4222
        %4999 = vmatpush1.msra.mxu0 %v4221
        %5000 = vmatprep.subr.mxu0 %v4226
        %5001 = vmatpush1.msra.mxu0 %v4225
        %5002 = vmatprep.subr.mxu0 %v4230
        %5003 = vmatpush1.msra.mxu0 %v4229
        %5004 = vmatprep.subr.mxu0 %v4234
        %5005 = vmatpush1.msra.mxu0 %v4233
        %5006 = vmatprep.subr.mxu0 %v4238
        %5007 = vmatpush1.msra.mxu0 %v4237
        %5008 = vmatprep.subr.mxu0 %v4242
        %5009 = vmatpush1.msra.mxu0 %v4241
        %5010 = vmatprep.subr.mxu0 %v4246
        %5011 = vmatpush1.msra.mxu0 %v4245
        %5012 = vmatprep.subr.mxu0 %v4250
        %5013 = vmatpush1.msra.mxu0 %v4249
        %5014 = vmatprep.subr.mxu0 %v4254
        %5015 = vmatpush1.msra.mxu0 %v4253
        %5016 = vmatprep.subr.mxu0 %v4258
        %5017 = vmatpush1.msra.mxu0 %v4257
        %5018 = vmatprep.subr.mxu0 %v4262
        %5019 = vmatpush1.msra.mxu0 %v4261
        %5020 = vmatprep.subr.mxu0 %v4266
        %5021 = vmatpush1.msra.mxu0 %v4265
        %5022 = vmatprep.subr.mxu0 %v4270
        %5023 = vmatpush1.msra.mxu0 %v4269
        %5024 = vmatprep.subr.mxu0 %v4274
        %5025 = vmatpush1.msra.mxu0 %v4273
        %5026 = vmatprep.subr.mxu0 %v4278
        %5027 = vmatpush1.msra.mxu0 %v4277
        %5028 = vmatprep.subr.mxu0 0.0
        %5029 = vmatpush1.msra.mxu0 0.0
        %5030 = vmatprep.subr.mxu0 0.0
        %5031 = vmatpush1.msra.mxu0 0.0
        %5032 = vmatprep.subr.mxu0 0.0
        %5033 = vmatpush1.msra.mxu0 0.0
        %5034 = vmatprep.subr.mxu0 0.0
        %5035 = vmatpush1.msra.mxu0 0.0
        %5036 = vmatprep.subr.mxu0 0.0
        %5037 = vmatpush1.msra.mxu0 0.0
        %5038 = vmatprep.subr.mxu0 0.0
        %5039 = vmatpush1.msra.mxu0 0.0
        %5040 = vmatprep.subr.mxu0 0.0
        %5041 = vmatpush1.msra.mxu0 0.0
        %5042 = vmatprep.subr.mxu0 0.0
        %5043 = vmatpush1.msra.mxu0 0.0
        %5044 = vmatprep.subr.mxu0 0.0
        %5045 = vmatpush1.msra.mxu0 0.0
        %5046 = vmatprep.subr.mxu0 0.0
        %5047 = vmatpush1.msra.mxu0 0.0
        %5048 = vmatprep.subr.mxu0 0.0
        %5049 = vmatpush1.msra.mxu0 0.0
        %5050 = vmatprep.subr.mxu0 0.0
        %5051 = vmatpush1.msra.mxu0 0.0
        %5052 = vmatprep.subr.mxu0 0.0
        %5053 = vmatpush1.msra.mxu0 0.0
        %5054 = vmatprep.subr.mxu0 0.0
        %5055 = vmatpush1.msra.mxu0 0.0
        %5056 = vmatprep.subr.mxu0 0.0
        %5057 = vmatpush1.msra.mxu0 0.0
        %5058 = vmatprep.subr.mxu0 0.0
        %5059 = vmatpush1.msra.mxu0 0.0
        %5060 = vmatprep.mubr.f32.mxu0 0.0
        %5061 = vmatmul.mubr.f32.gmra.mrb[0].mxu0 %v4919
        %v5062 = vpop.f32.mrb[0].mxu0
        %v5063 = vadd.f32 0.0, %v5062
        %v5064 = vpop.f32.mrb[0].mxu0
        %v5065 = vadd.f32 0.0, %v5064
        %5066 = vdwg.mxu0
        %v5067 = vadd.f32 %v4921, %v4992
        %v5068 = vadd.f32 %v4922, %v4994
        %v5069 = vadd.f32 %v4923, %v5063
        %v5070 = vadd.f32 %v4924, %v5065
        %v5071 = vxor.u32 %v5067, 2147483648
        %v5072 = vxor.u32 %v5068, 2147483648
        %v5073 = vxor.u32 %v5069, 2147483648
        %v5074 = vmul.f32 %v5071, 1.442695
        %v5075 = vpow.pop %v5074
        %v5076 = vmul.f32 %v5072, 1.442695
        %v5077 = vpow.pop %v5076
        %v5078 = vmul.f32 %v5073, 1.442695
        %v5079 = vpow.pop %v5078
        %v5080 = vadd.f32 %v5075, 1.0
        %v5081 = vadd.f32 %v5077, 1.0
        %v5082 = vadd.f32 %v5079, 1.0
        %v5083 = vrcp.pop %v5080
        %v5084 = vmul.f32 1.0, %v5083
        %v5085 = vrcp.pop %v5081
        %v5086 = vmul.f32 1.0, %v5085
        %v5087 = vrcp.pop %v5082
        %v5088 = vmul.f32 1.0, %v5087
        %v5089 = vtanh.pop %v5070
        %v5090 = vmul.f32 %v5086, %v4917
        %v5091 = vmul.f32 %v5084, %v5089
        %v5092 = vadd.f32 %v5090, %v5091
        %v5093 = vtanh.pop %v5092
        %v5094 = vmul.f32 %v5088, %v5093
        %5095 = vst [vmem:[%s1433] sm:$0xff] %v5094
        %v5096 = vld [vmem:[%s1435] sm:$0xff]
        %v5097 = vld [vmem:[%s1435 + $0x8] sm:$0xff]
        %v5098 = vld [vmem:[%s1435 + $0x10] sm:$0xff]
        %v5099 = vld [vmem:[%s1435 + $0x18] sm:$0xff]
        %5100 = vmatprep.subr.mxu0 %v4216
        %5101 = vmatpush1.msra.mxu0 %v4215
        %5102 = vmatprep.subr.mxu0 %v4220
        %5103 = vmatpush1.msra.mxu0 %v4219
        %5104 = vmatprep.subr.mxu0 %v4224
        %5105 = vmatpush1.msra.mxu0 %v4223
        %5106 = vmatprep.subr.mxu0 %v4228
        %5107 = vmatpush1.msra.mxu0 %v4227
        %5108 = vmatprep.subr.mxu0 %v4232
        %5109 = vmatpush1.msra.mxu0 %v4231
        %5110 = vmatprep.subr.mxu0 %v4236
        %5111 = vmatpush1.msra.mxu0 %v4235
        %5112 = vmatprep.subr.mxu0 %v4240
        %5113 = vmatpush1.msra.mxu0 %v4239
        %5114 = vmatprep.subr.mxu0 %v4244
        %5115 = vmatpush1.msra.mxu0 %v4243
        %5116 = vmatprep.subr.mxu0 %v4248
        %5117 = vmatpush1.msra.mxu0 %v4247
        %5118 = vmatprep.subr.mxu0 %v4252
        %5119 = vmatpush1.msra.mxu0 %v4251
        %5120 = vmatprep.subr.mxu0 %v4256
        %5121 = vmatpush1.msra.mxu0 %v4255
        %5122 = vmatprep.subr.mxu0 %v4260
        %5123 = vmatpush1.msra.mxu0 %v4259
        %5124 = vmatprep.subr.mxu0 %v4264
        %5125 = vmatpush1.msra.mxu0 %v4263
        %5126 = vmatprep.subr.mxu0 %v4268
        %5127 = vmatpush1.msra.mxu0 %v4267
        %5128 = vmatprep.subr.mxu0 %v4272
        %5129 = vmatpush1.msra.mxu0 %v4271
        %5130 = vmatprep.subr.mxu0 %v4276
        %5131 = vmatpush1.msra.mxu0 %v4275
        %5132 = vmatprep.subr.mxu0 0.0
        %5133 = vmatpush1.msra.mxu0 0.0
        %5134 = vmatprep.subr.mxu0 0.0
        %5135 = vmatpush1.msra.mxu0 0.0
        %5136 = vmatprep.subr.mxu0 0.0
        %5137 = vmatpush1.msra.mxu0 0.0
        %5138 = vmatprep.subr.mxu0 0.0
        %5139 = vmatpush1.msra.mxu0 0.0
        %5140 = vmatprep.subr.mxu0 0.0
        %5141 = vmatpush1.msra.mxu0 0.0
        %5142 = vmatprep.subr.mxu0 0.0
        %5143 = vmatpush1.msra.mxu0 0.0
        %5144 = vmatprep.subr.mxu0 0.0
        %5145 = vmatpush1.msra.mxu0 0.0
        %5146 = vmatprep.subr.mxu0 0.0
        %5147 = vmatpush1.msra.mxu0 0.0
        %5148 = vmatprep.subr.mxu0 0.0
        %5149 = vmatpush1.msra.mxu0 0.0
        %5150 = vmatprep.subr.mxu0 0.0
        %5151 = vmatpush1.msra.mxu0 0.0
        %5152 = vmatprep.subr.mxu0 0.0
        %5153 = vmatpush1.msra.mxu0 0.0
        %5154 = vmatprep.subr.mxu0 0.0
        %5155 = vmatpush1.msra.mxu0 0.0
        %5156 = vmatprep.subr.mxu0 0.0
        %5157 = vmatpush1.msra.mxu0 0.0
        %5158 = vmatprep.subr.mxu0 0.0
        %5159 = vmatpush1.msra.mxu0 0.0
        %5160 = vmatprep.subr.mxu0 0.0
        %5161 = vmatpush1.msra.mxu0 0.0
        %5162 = vmatprep.subr.mxu0 0.0
        %5163 = vmatpush1.msra.mxu0 0.0
        %5164 = vmatprep.mubr.f32.mxu0 0.0
        %5165 = vmatmul.mubr.f32.gmra.mrb[0].mxu0 %v5094
        %v5166 = vpop.f32.mrb[0].mxu0
        %v5167 = vadd.f32 0.0, %v5166
        %v5168 = vpop.f32.mrb[0].mxu0
        %v5169 = vadd.f32 0.0, %v5168
        %5170 = vdwg.mxu0
        %5171 = vmatprep.subr.mxu0 %v4218
        %5172 = vmatpush1.msra.mxu0 %v4217
        %5173 = vmatprep.subr.mxu0 %v4222
        %5174 = vmatpush1.msra.mxu0 %v4221
        %5175 = vmatprep.subr.mxu0 %v4226
        %5176 = vmatpush1.msra.mxu0 %v4225
        %5177 = vmatprep.subr.mxu0 %v4230
        %5178 = vmatpush1.msra.mxu0 %v4229
        %5179 = vmatprep.subr.mxu0 %v4234
        %5180 = vmatpush1.msra.mxu0 %v4233
        %5181 = vmatprep.subr.mxu0 %v4238
        %5182 = vmatpush1.msra.mxu0 %v4237
        %5183 = vmatprep.subr.mxu0 %v4242
        %5184 = vmatpush1.msra.mxu0 %v4241
        %5185 = vmatprep.subr.mxu0 %v4246
        %5186 = vmatpush1.msra.mxu0 %v4245
        %5187 = vmatprep.subr.mxu0 %v4250
        %5188 = vmatpush1.msra.mxu0 %v4249
        %5189 = vmatprep.subr.mxu0 %v4254
        %5190 = vmatpush1.msra.mxu0 %v4253
        %5191 = vmatprep.subr.mxu0 %v4258
        %5192 = vmatpush1.msra.mxu0 %v4257
        %5193 = vmatprep.subr.mxu0 %v4262
        %5194 = vmatpush1.msra.mxu0 %v4261
        %5195 = vmatprep.subr.mxu0 %v4266
        %5196 = vmatpush1.msra.mxu0 %v4265
        %5197 = vmatprep.subr.mxu0 %v4270
        %5198 = vmatpush1.msra.mxu0 %v4269
        %5199 = vmatprep.subr.mxu0 %v4274
        %5200 = vmatpush1.msra.mxu0 %v4273
        %5201 = vmatprep.subr.mxu0 %v4278
        %5202 = vmatpush1.msra.mxu0 %v4277
        %5203 = vmatprep.subr.mxu0 0.0
        %5204 = vmatpush1.msra.mxu0 0.0
        %5205 = vmatprep.subr.mxu0 0.0
        %5206 = vmatpush1.msra.mxu0 0.0
        %5207 = vmatprep.subr.mxu0 0.0
        %5208 = vmatpush1.msra.mxu0 0.0
        %5209 = vmatprep.subr.mxu0 0.0
        %5210 = vmatpush1.msra.mxu0 0.0
        %5211 = vmatprep.subr.mxu0 0.0
        %5212 = vmatpush1.msra.mxu0 0.0
        %5213 = vmatprep.subr.mxu0 0.0
        %5214 = vmatpush1.msra.mxu0 0.0
        %5215 = vmatprep.subr.mxu0 0.0
        %5216 = vmatpush1.msra.mxu0 0.0
        %5217 = vmatprep.subr.mxu0 0.0
        %5218 = vmatpush1.msra.mxu0 0.0
        %5219 = vmatprep.subr.mxu0 0.0
        %5220 = vmatpush1.msra.mxu0 0.0
        %5221 = vmatprep.subr.mxu0 0.0
        %5222 = vmatpush1.msra.mxu0 0.0
        %5223 = vmatprep.subr.mxu0 0.0
        %5224 = vmatpush1.msra.mxu0 0.0
        %5225 = vmatprep.subr.mxu0 0.0
        %5226 = vmatpush1.msra.mxu0 0.0
        %5227 = vmatprep.subr.mxu0 0.0
        %5228 = vmatpush1.msra.mxu0 0.0
        %5229 = vmatprep.subr.mxu0 0.0
        %5230 = vmatpush1.msra.mxu0 0.0
        %5231 = vmatprep.subr.mxu0 0.0
        %5232 = vmatpush1.msra.mxu0 0.0
        %5233 = vmatprep.subr.mxu0 0.0
        %5234 = vmatpush1.msra.mxu0 0.0
        %5235 = vmatprep.mubr.f32.mxu0 0.0
        %5236 = vmatmul.mubr.f32.gmra.mrb[0].mxu0 %v5094
        %v5237 = vpop.f32.mrb[0].mxu0
        %v5238 = vadd.f32 0.0, %v5237
        %v5239 = vpop.f32.mrb[0].mxu0
        %v5240 = vadd.f32 0.0, %v5239
        %5241 = vdwg.mxu0
        %v5242 = vadd.f32 %v5096, %v5167
        %v5243 = vadd.f32 %v5097, %v5169
        %v5244 = vadd.f32 %v5098, %v5238
        %v5245 = vadd.f32 %v5099, %v5240
        %v5246 = vxor.u32 %v5242, 2147483648
        %v5247 = vxor.u32 %v5243, 2147483648
        %v5248 = vxor.u32 %v5244, 2147483648
        %v5249 = vmul.f32 %v5246, 1.442695
        %v5250 = vpow.pop %v5249
        %v5251 = vmul.f32 %v5247, 1.442695
        %v5252 = vpow.pop %v5251
        %v5253 = vmul.f32 %v5248, 1.442695
        %v5254 = vpow.pop %v5253
        %v5255 = vadd.f32 %v5250, 1.0
        %v5256 = vadd.f32 %v5252, 1.0
        %v5257 = vadd.f32 %v5254, 1.0
        %v5258 = vrcp.pop %v5255
        %v5259 = vmul.f32 1.0, %v5258
        %v5260 = vrcp.pop %v5256
        %v5261 = vmul.f32 1.0, %v5260
        %v5262 = vrcp.pop %v5257
        %v5263 = vmul.f32 1.0, %v5262
        %v5264 = vtanh.pop %v5245
        %v5265 = vmul.f32 %v5261, %v5092
        %v5266 = vmul.f32 %v5259, %v5264
        %v5267 = vadd.f32 %v5265, %v5266
        %v5268 = vtanh.pop %v5267
        %v5269 = vmul.f32 %v5263, %v5268
        %5270 = vst [vmem:[%s1610] sm:$0xff] %v5269
        %v5271 = vld [vmem:[%s1612] sm:$0xff]
        %v5272 = vld [vmem:[%s1612 + $0x8] sm:$0xff]
        %v5273 = vld [vmem:[%s1612 + $0x10] sm:$0xff]
        %v5274 = vld [vmem:[%s1612 + $0x18] sm:$0xff]
        %5275 = vmatprep.subr.mxu0 %v4216
        %5276 = vmatpush1.msra.mxu0 %v4215
        %5277 = vmatprep.subr.mxu0 %v4220
        %5278 = vmatpush1.msra.mxu0 %v4219
        %5279 = vmatprep.subr.mxu0 %v4224
        %5280 = vmatpush1.msra.mxu0 %v4223
        %5281 = vmatprep.subr.mxu0 %v4228
        %5282 = vmatpush1.msra.mxu0 %v4227
        %5283 = vmatprep.subr.mxu0 %v4232
        %5284 = vmatpush1.msra.mxu0 %v4231
        %5285 = vmatprep.subr.mxu0 %v4236
        %5286 = vmatpush1.msra.mxu0 %v4235
        %5287 = vmatprep.subr.mxu0 %v4240
        %5288 = vmatpush1.msra.mxu0 %v4239
        %5289 = vmatprep.subr.mxu0 %v4244
        %5290 = vmatpush1.msra.mxu0 %v4243
        %5291 = vmatprep.subr.mxu0 %v4248
        %5292 = vmatpush1.msra.mxu0 %v4247
        %5293 = vmatprep.subr.mxu0 %v4252
        %5294 = vmatpush1.msra.mxu0 %v4251
        %5295 = vmatprep.subr.mxu0 %v4256
        %5296 = vmatpush1.msra.mxu0 %v4255
        %5297 = vmatprep.subr.mxu0 %v4260
        %5298 = vmatpush1.msra.mxu0 %v4259
        %5299 = vmatprep.subr.mxu0 %v4264
        %5300 = vmatpush1.msra.mxu0 %v4263
        %5301 = vmatprep.subr.mxu0 %v4268
        %5302 = vmatpush1.msra.mxu0 %v4267
        %5303 = vmatprep.subr.mxu0 %v4272
        %5304 = vmatpush1.msra.mxu0 %v4271
        %5305 = vmatprep.subr.mxu0 %v4276
        %5306 = vmatpush1.msra.mxu0 %v4275
        %5307 = vmatprep.subr.mxu0 0.0
        %5308 = vmatpush1.msra.mxu0 0.0
        %5309 = vmatprep.subr.mxu0 0.0
        %5310 = vmatpush1.msra.mxu0 0.0
        %5311 = vmatprep.subr.mxu0 0.0
        %5312 = vmatpush1.msra.mxu0 0.0
        %5313 = vmatprep.subr.mxu0 0.0
        %5314 = vmatpush1.msra.mxu0 0.0
        %5315 = vmatprep.subr.mxu0 0.0
        %5316 = vmatpush1.msra.mxu0 0.0
        %5317 = vmatprep.subr.mxu0 0.0
        %5318 = vmatpush1.msra.mxu0 0.0
        %5319 = vmatprep.subr.mxu0 0.0
        %5320 = vmatpush1.msra.mxu0 0.0
        %5321 = vmatprep.subr.mxu0 0.0
        %5322 = vmatpush1.msra.mxu0 0.0
        %5323 = vmatprep.subr.mxu0 0.0
        %5324 = vmatpush1.msra.mxu0 0.0
        %5325 = vmatprep.subr.mxu0 0.0
        %5326 = vmatpush1.msra.mxu0 0.0
        %5327 = vmatprep.subr.mxu0 0.0
        %5328 = vmatpush1.msra.mxu0 0.0
        %5329 = vmatprep.subr.mxu0 0.0
        %5330 = vmatpush1.msra.mxu0 0.0
        %5331 = vmatprep.subr.mxu0 0.0
        %5332 = vmatpush1.msra.mxu0 0.0
        %5333 = vmatprep.subr.mxu0 0.0
        %5334 = vmatpush1.msra.mxu0 0.0
        %5335 = vmatprep.subr.mxu0 0.0
        %5336 = vmatpush1.msra.mxu0 0.0
        %5337 = vmatprep.subr.mxu0 0.0
        %5338 = vmatpush1.msra.mxu0 0.0
        %5339 = vmatprep.mubr.f32.mxu0 0.0
        %5340 = vmatmul.mubr.f32.gmra.mrb[0].mxu0 %v5269
        %v5341 = vpop.f32.mrb[0].mxu0
        %v5342 = vadd.f32 0.0, %v5341
        %v5343 = vpop.f32.mrb[0].mxu0
        %v5344 = vadd.f32 0.0, %v5343
        %5345 = vdwg.mxu0
        %5346 = vmatprep.subr.mxu0 %v4218
        %5347 = vmatpush1.msra.mxu0 %v4217
        %5348 = vmatprep.subr.mxu0 %v4222
        %5349 = vmatpush1.msra.mxu0 %v4221
        %5350 = vmatprep.subr.mxu0 %v4226
        %5351 = vmatpush1.msra.mxu0 %v4225
        %5352 = vmatprep.subr.mxu0 %v4230
        %5353 = vmatpush1.msra.mxu0 %v4229
        %5354 = vmatprep.subr.mxu0 %v4234
        %5355 = vmatpush1.msra.mxu0 %v4233
        %5356 = vmatprep.subr.mxu0 %v4238
        %5357 = vmatpush1.msra.mxu0 %v4237
        %5358 = vmatprep.subr.mxu0 %v4242
        %5359 = vmatpush1.msra.mxu0 %v4241
        %5360 = vmatprep.subr.mxu0 %v4246
        %5361 = vmatpush1.msra.mxu0 %v4245
        %5362 = vmatprep.subr.mxu0 %v4250
        %5363 = vmatpush1.msra.mxu0 %v4249
        %5364 = vmatprep.subr.mxu0 %v4254
        %5365 = vmatpush1.msra.mxu0 %v4253
        %5366 = vmatprep.subr.mxu0 %v4258
        %5367 = vmatpush1.msra.mxu0 %v4257
        %5368 = vmatprep.subr.mxu0 %v4262
        %5369 = vmatpush1.msra.mxu0 %v4261
        %5370 = vmatprep.subr.mxu0 %v4266
        %5371 = vmatpush1.msra.mxu0 %v4265
        %5372 = vmatprep.subr.mxu0 %v4270
        %5373 = vmatpush1.msra.mxu0 %v4269
        %5374 = vmatprep.subr.mxu0 %v4274
        %5375 = vmatpush1.msra.mxu0 %v4273
        %5376 = vmatprep.subr.mxu0 %v4278
        %5377 = vmatpush1.msra.mxu0 %v4277
        %5378 = vmatprep.subr.mxu0 0.0
        %5379 = vmatpush1.msra.mxu0 0.0
        %5380 = vmatprep.subr.mxu0 0.0
        %5381 = vmatpush1.msra.mxu0 0.0
        %5382 = vmatprep.subr.mxu0 0.0
        %5383 = vmatpush1.msra.mxu0 0.0
        %5384 = vmatprep.subr.mxu0 0.0
        %5385 = vmatpush1.msra.mxu0 0.0
        %5386 = vmatprep.subr.mxu0 0.0
        %5387 = vmatpush1.msra.mxu0 0.0
        %5388 = vmatprep.subr.mxu0 0.0
        %5389 = vmatpush1.msra.mxu0 0.0
        %5390 = vmatprep.subr.mxu0 0.0
        %5391 = vmatpush1.msra.mxu0 0.0
        %5392 = vmatprep.subr.mxu0 0.0
        %5393 = vmatpush1.msra.mxu0 0.0
        %5394 = vmatprep.subr.mxu0 0.0
        %5395 = vmatpush1.msra.mxu0 0.0
        %5396 = vmatprep.subr.mxu0 0.0
        %5397 = vmatpush1.msra.mxu0 0.0
        %5398 = vmatprep.subr.mxu0 0.0
        %5399 = vmatpush1.msra.mxu0 0.0
        %5400 = vmatprep.subr.mxu0 0.0
        %5401 = vmatpush1.msra.mxu0 0.0
        %5402 = vmatprep.subr.mxu0 0.0
        %5403 = vmatpush1.msra.mxu0 0.0
        %5404 = vmatprep.subr.mxu0 0.0
        %5405 = vmatpush1.msra.mxu0 0.0
        %5406 = vmatprep.subr.mxu0 0.0
        %5407 = vmatpush1.msra.mxu0 0.0
        %5408 = vmatprep.subr.mxu0 0.0
        %5409 = vmatpush1.msra.mxu0 0.0
        %5410 = vmatprep.mubr.f32.mxu0 0.0
        %5411 = vmatmul.mubr.f32.gmra.mrb[0].mxu0 %v5269
        %v5412 = vpop.f32.mrb[0].mxu0
        %v5413 = vadd.f32 0.0, %v5412
        %v5414 = vpop.f32.mrb[0].mxu0
        %v5415 = vadd.f32 0.0, %v5414
        %5416 = vdwg.mxu0
        %v5417 = vadd.f32 %v5271, %v5342
        %v5418 = vadd.f32 %v5272, %v5344
        %v5419 = vadd.f32 %v5273, %v5413
        %v5420 = vadd.f32 %v5274, %v5415
        %v5421 = vxor.u32 %v5417, 2147483648
        %v5422 = vxor.u32 %v5418, 2147483648
        %v5423 = vxor.u32 %v5419, 2147483648
        %v5424 = vmul.f32 %v5421, 1.442695
        %v5425 = vpow.pop %v5424
        %v5426 = vmul.f32 %v5422, 1.442695
        %v5427 = vpow.pop %v5426
        %v5428 = vmul.f32 %v5423, 1.442695
        %v5429 = vpow.pop %v5428
        %v5430 = vadd.f32 %v5425, 1.0
        %v5431 = vadd.f32 %v5427, 1.0
        %v5432 = vadd.f32 %v5429, 1.0
        %v5433 = vrcp.pop %v5430
        %v5434 = vmul.f32 1.0, %v5433
        %v5435 = vrcp.pop %v5431
        %v5436 = vmul.f32 1.0, %v5435
        %v5437 = vrcp.pop %v5432
        %v5438 = vmul.f32 1.0, %v5437
        %v5439 = vtanh.pop %v5420
        %v5440 = vmul.f32 %v5436, %v5267
        %v5441 = vmul.f32 %v5434, %v5439
        %v5442 = vadd.f32 %v5440, %v5441
        %v5443 = vtanh.pop %v5442
        %v5444 = vmul.f32 %v5438, %v5443
        %5445 = vst [vmem:[%s1787] sm:$0xff] %v5444
        %v5446 = vld [vmem:[%s1789] sm:$0xff]
        %v5447 = vld [vmem:[%s1789 + $0x8] sm:$0xff]
        %v5448 = vld [vmem:[%s1789 + $0x10] sm:$0xff]
        %v5449 = vld [vmem:[%s1789 + $0x18] sm:$0xff]
        %5450 = vmatprep.subr.mxu0 %v4216
        %5451 = vmatpush1.msra.mxu0 %v4215
        %5452 = vmatprep.subr.mxu0 %v4220
        %5453 = vmatpush1.msra.mxu0 %v4219
        %5454 = vmatprep.subr.mxu0 %v4224
        %5455 = vmatpush1.msra.mxu0 %v4223
        %5456 = vmatprep.subr.mxu0 %v4228
        %5457 = vmatpush1.msra.mxu0 %v4227
        %5458 = vmatprep.subr.mxu0 %v4232
        %5459 = vmatpush1.msra.mxu0 %v4231
        %5460 = vmatprep.subr.mxu0 %v4236
        %5461 = vmatpush1.msra.mxu0 %v4235
        %5462 = vmatprep.subr.mxu0 %v4240
        %5463 = vmatpush1.msra.mxu0 %v4239
        %5464 = vmatprep.subr.mxu0 %v4244
        %5465 = vmatpush1.msra.mxu0 %v4243
        %5466 = vmatprep.subr.mxu0 %v4248
        %5467 = vmatpush1.msra.mxu0 %v4247
        %5468 = vmatprep.subr.mxu0 %v4252
        %5469 = vmatpush1.msra.mxu0 %v4251
        %5470 = vmatprep.subr.mxu0 %v4256
        %5471 = vmatpush1.msra.mxu0 %v4255
        %5472 = vmatprep.subr.mxu0 %v4260
        %5473 = vmatpush1.msra.mxu0 %v4259
        %5474 = vmatprep.subr.mxu0 %v4264
        %5475 = vmatpush1.msra.mxu0 %v4263
        %5476 = vmatprep.subr.mxu0 %v4268
        %5477 = vmatpush1.msra.mxu0 %v4267
        %5478 = vmatprep.subr.mxu0 %v4272
        %5479 = vmatpush1.msra.mxu0 %v4271
        %5480 = vmatprep.subr.mxu0 %v4276
        %5481 = vmatpush1.msra.mxu0 %v4275
        %5482 = vmatprep.subr.mxu0 0.0
        %5483 = vmatpush1.msra.mxu0 0.0
        %5484 = vmatprep.subr.mxu0 0.0
        %5485 = vmatpush1.msra.mxu0 0.0
        %5486 = vmatprep.subr.mxu0 0.0
        %5487 = vmatpush1.msra.mxu0 0.0
        %5488 = vmatprep.subr.mxu0 0.0
        %5489 = vmatpush1.msra.mxu0 0.0
        %5490 = vmatprep.subr.mxu0 0.0
        %5491 = vmatpush1.msra.mxu0 0.0
        %5492 = vmatprep.subr.mxu0 0.0
        %5493 = vmatpush1.msra.mxu0 0.0
        %5494 = vmatprep.subr.mxu0 0.0
        %5495 = vmatpush1.msra.mxu0 0.0
        %5496 = vmatprep.subr.mxu0 0.0
        %5497 = vmatpush1.msra.mxu0 0.0
        %5498 = vmatprep.subr.mxu0 0.0
        %5499 = vmatpush1.msra.mxu0 0.0
        %5500 = vmatprep.subr.mxu0 0.0
        %5501 = vmatpush1.msra.mxu0 0.0
        %5502 = vmatprep.subr.mxu0 0.0
        %5503 = vmatpush1.msra.mxu0 0.0
        %5504 = vmatprep.subr.mxu0 0.0
        %5505 = vmatpush1.msra.mxu0 0.0
        %5506 = vmatprep.subr.mxu0 0.0
        %5507 = vmatpush1.msra.mxu0 0.0
        %5508 = vmatprep.subr.mxu0 0.0
        %5509 = vmatpush1.msra.mxu0 0.0
        %5510 = vmatprep.subr.mxu0 0.0
        %5511 = vmatpush1.msra.mxu0 0.0
        %5512 = vmatprep.subr.mxu0 0.0
        %5513 = vmatpush1.msra.mxu0 0.0
        %5514 = vmatprep.mubr.f32.mxu0 0.0
        %5515 = vmatmul.mubr.f32.gmra.mrb[0].mxu0 %v5444
        %v5516 = vpop.f32.mrb[0].mxu0
        %v5517 = vadd.f32 0.0, %v5516
        %v5518 = vpop.f32.mrb[0].mxu0
        %v5519 = vadd.f32 0.0, %v5518
        %5520 = vdwg.mxu0
        %5521 = vmatprep.subr.mxu0 %v4218
        %5522 = vmatpush1.msra.mxu0 %v4217
        %5523 = vmatprep.subr.mxu0 %v4222
        %5524 = vmatpush1.msra.mxu0 %v4221
        %5525 = vmatprep.subr.mxu0 %v4226
        %5526 = vmatpush1.msra.mxu0 %v4225
        %5527 = vmatprep.subr.mxu0 %v4230
        %5528 = vmatpush1.msra.mxu0 %v4229
        %5529 = vmatprep.subr.mxu0 %v4234
        %5530 = vmatpush1.msra.mxu0 %v4233
        %5531 = vmatprep.subr.mxu0 %v4238
        %5532 = vmatpush1.msra.mxu0 %v4237
        %5533 = vmatprep.subr.mxu0 %v4242
        %5534 = vmatpush1.msra.mxu0 %v4241
        %5535 = vmatprep.subr.mxu0 %v4246
        %5536 = vmatpush1.msra.mxu0 %v4245
        %5537 = vmatprep.subr.mxu0 %v4250
        %5538 = vmatpush1.msra.mxu0 %v4249
        %5539 = vmatprep.subr.mxu0 %v4254
        %5540 = vmatpush1.msra.mxu0 %v4253
        %5541 = vmatprep.subr.mxu0 %v4258
        %5542 = vmatpush1.msra.mxu0 %v4257
        %5543 = vmatprep.subr.mxu0 %v4262
        %5544 = vmatpush1.msra.mxu0 %v4261
        %5545 = vmatprep.subr.mxu0 %v4266
        %5546 = vmatpush1.msra.mxu0 %v4265
        %5547 = vmatprep.subr.mxu0 %v4270
        %5548 = vmatpush1.msra.mxu0 %v4269
        %5549 = vmatprep.subr.mxu0 %v4274
        %5550 = vmatpush1.msra.mxu0 %v4273
        %5551 = vmatprep.subr.mxu0 %v4278
        %5552 = vmatpush1.msra.mxu0 %v4277
        %5553 = vmatprep.subr.mxu0 0.0
        %5554 = vmatpush1.msra.mxu0 0.0
        %5555 = vmatprep.subr.mxu0 0.0
        %5556 = vmatpush1.msra.mxu0 0.0
        %5557 = vmatprep.subr.mxu0 0.0
        %5558 = vmatpush1.msra.mxu0 0.0
        %5559 = vmatprep.subr.mxu0 0.0
        %5560 = vmatpush1.msra.mxu0 0.0
        %5561 = vmatprep.subr.mxu0 0.0
        %5562 = vmatpush1.msra.mxu0 0.0
        %5563 = vmatprep.subr.mxu0 0.0
        %5564 = vmatpush1.msra.mxu0 0.0
        %5565 = vmatprep.subr.mxu0 0.0
        %5566 = vmatpush1.msra.mxu0 0.0
        %5567 = vmatprep.subr.mxu0 0.0
        %5568 = vmatpush1.msra.mxu0 0.0
        %5569 = vmatprep.subr.mxu0 0.0
        %5570 = vmatpush1.msra.mxu0 0.0
        %5571 = vmatprep.subr.mxu0 0.0
        %5572 = vmatpush1.msra.mxu0 0.0
        %5573 = vmatprep.subr.mxu0 0.0
        %5574 = vmatpush1.msra.mxu0 0.0
        %5575 = vmatprep.subr.mxu0 0.0
        %5576 = vmatpush1.msra.mxu0 0.0
        %5577 = vmatprep.subr.mxu0 0.0
        %5578 = vmatpush1.msra.mxu0 0.0
        %5579 = vmatprep.subr.mxu0 0.0
        %5580 = vmatpush1.msra.mxu0 0.0
        %5581 = vmatprep.subr.mxu0 0.0
        %5582 = vmatpush1.msra.mxu0 0.0
        %5583 = vmatprep.subr.mxu0 0.0
        %5584 = vmatpush1.msra.mxu0 0.0
        %5585 = vmatprep.mubr.f32.mxu0 0.0
        %5586 = vmatmul.mubr.f32.gmra.mrb[0].mxu0 %v5444
        %v5587 = vpop.f32.mrb[0].mxu0
        %v5588 = vadd.f32 0.0, %v5587
        %v5589 = vpop.f32.mrb[0].mxu0
        %v5590 = vadd.f32 0.0, %v5589
        %5591 = vdwg.mxu0
        %v5592 = vadd.f32 %v5446, %v5517
        %v5593 = vadd.f32 %v5447, %v5519
        %v5594 = vadd.f32 %v5448, %v5588
        %v5595 = vadd.f32 %v5449, %v5590
        %v5596 = vxor.u32 %v5592, 2147483648
        %v5597 = vxor.u32 %v5593, 2147483648
        %v5598 = vxor.u32 %v5594, 2147483648
        %v5599 = vmul.f32 %v5596, 1.442695
        %v5600 = vpow.pop %v5599
        %v5601 = vmul.f32 %v5597, 1.442695
        %v5602 = vpow.pop %v5601
        %v5603 = vmul.f32 %v5598, 1.442695
        %v5604 = vpow.pop %v5603
        %v5605 = vadd.f32 %v5600, 1.0
        %v5606 = vadd.f32 %v5602, 1.0
        %v5607 = vadd.f32 %v5604, 1.0
        %v5608 = vrcp.pop %v5605
        %v5609 = vmul.f32 1.0, %v5608
        %v5610 = vrcp.pop %v5606
        %v5611 = vmul.f32 1.0, %v5610
        %v5612 = vrcp.pop %v5607
        %v5613 = vmul.f32 1.0, %v5612
        %v5614 = vtanh.pop %v5595
        %v5615 = vmul.f32 %v5611, %v5442
        %v5616 = vmul.f32 %v5609, %v5614
        %v5617 = vadd.f32 %v5615, %v5616
        %v5618 = vtanh.pop %v5617
        %v5619 = vmul.f32 %v5613, %v5618
        %5620 = vst [vmem:[%s1964] sm:$0xff] %v5619
        %v5621 = vld [vmem:[%s1966] sm:$0xff]
        %v5622 = vld [vmem:[%s1966 + $0x8] sm:$0xff]
        %v5623 = vld [vmem:[%s1966 + $0x10] sm:$0xff]
        %v5624 = vld [vmem:[%s1966 + $0x18] sm:$0xff]
        %5625 = vmatprep.subr.mxu0 %v4216
        %5626 = vmatpush1.msra.mxu0 %v4215
        %5627 = vmatprep.subr.mxu0 %v4220
        %5628 = vmatpush1.msra.mxu0 %v4219
        %5629 = vmatprep.subr.mxu0 %v4224
        %5630 = vmatpush1.msra.mxu0 %v4223
        %5631 = vmatprep.subr.mxu0 %v4228
        %5632 = vmatpush1.msra.mxu0 %v4227
        %5633 = vmatprep.subr.mxu0 %v4232
        %5634 = vmatpush1.msra.mxu0 %v4231
        %5635 = vmatprep.subr.mxu0 %v4236
        %5636 = vmatpush1.msra.mxu0 %v4235
        %5637 = vmatprep.subr.mxu0 %v4240
        %5638 = vmatpush1.msra.mxu0 %v4239
        %5639 = vmatprep.subr.mxu0 %v4244
        %5640 = vmatpush1.msra.mxu0 %v4243
        %5641 = vmatprep.subr.mxu0 %v4248
        %5642 = vmatpush1.msra.mxu0 %v4247
        %5643 = vmatprep.subr.mxu0 %v4252
        %5644 = vmatpush1.msra.mxu0 %v4251
        %5645 = vmatprep.subr.mxu0 %v4256
        %5646 = vmatpush1.msra.mxu0 %v4255
        %5647 = vmatprep.subr.mxu0 %v4260
        %5648 = vmatpush1.msra.mxu0 %v4259
        %5649 = vmatprep.subr.mxu0 %v4264
        %5650 = vmatpush1.msra.mxu0 %v4263
        %5651 = vmatprep.subr.mxu0 %v4268
        %5652 = vmatpush1.msra.mxu0 %v4267
        %5653 = vmatprep.subr.mxu0 %v4272
        %5654 = vmatpush1.msra.mxu0 %v4271
        %5655 = vmatprep.subr.mxu0 %v4276
        %5656 = vmatpush1.msra.mxu0 %v4275
        %5657 = vmatprep.subr.mxu0 0.0
        %5658 = vmatpush1.msra.mxu0 0.0
        %5659 = vmatprep.subr.mxu0 0.0
        %5660 = vmatpush1.msra.mxu0 0.0
        %5661 = vmatprep.subr.mxu0 0.0
        %5662 = vmatpush1.msra.mxu0 0.0
        %5663 = vmatprep.subr.mxu0 0.0
        %5664 = vmatpush1.msra.mxu0 0.0
        %5665 = vmatprep.subr.mxu0 0.0
        %5666 = vmatpush1.msra.mxu0 0.0
        %5667 = vmatprep.subr.mxu0 0.0
        %5668 = vmatpush1.msra.mxu0 0.0
        %5669 = vmatprep.subr.mxu0 0.0
        %5670 = vmatpush1.msra.mxu0 0.0
        %5671 = vmatprep.subr.mxu0 0.0
        %5672 = vmatpush1.msra.mxu0 0.0
        %5673 = vmatprep.subr.mxu0 0.0
        %5674 = vmatpush1.msra.mxu0 0.0
        %5675 = vmatprep.subr.mxu0 0.0
        %5676 = vmatpush1.msra.mxu0 0.0
        %5677 = vmatprep.subr.mxu0 0.0
        %5678 = vmatpush1.msra.mxu0 0.0
        %5679 = vmatprep.subr.mxu0 0.0
        %5680 = vmatpush1.msra.mxu0 0.0
        %5681 = vmatprep.subr.mxu0 0.0
        %5682 = vmatpush1.msra.mxu0 0.0
        %5683 = vmatprep.subr.mxu0 0.0
        %5684 = vmatpush1.msra.mxu0 0.0
        %5685 = vmatprep.subr.mxu0 0.0
        %5686 = vmatpush1.msra.mxu0 0.0
        %5687 = vmatprep.subr.mxu0 0.0
        %5688 = vmatpush1.msra.mxu0 0.0
        %5689 = vmatprep.mubr.f32.mxu0 0.0
        %5690 = vmatmul.mubr.f32.gmra.mrb[0].mxu0 %v5619
        %v5691 = vpop.f32.mrb[0].mxu0
        %v5692 = vadd.f32 0.0, %v5691
        %v5693 = vpop.f32.mrb[0].mxu0
        %v5694 = vadd.f32 0.0, %v5693
        %5695 = vdwg.mxu0
        %5696 = vmatprep.subr.mxu0 %v4218
        %5697 = vmatpush1.msra.mxu0 %v4217
        %5698 = vmatprep.subr.mxu0 %v4222
        %5699 = vmatpush1.msra.mxu0 %v4221
        %5700 = vmatprep.subr.mxu0 %v4226
        %5701 = vmatpush1.msra.mxu0 %v4225
        %5702 = vmatprep.subr.mxu0 %v4230
        %5703 = vmatpush1.msra.mxu0 %v4229
        %5704 = vmatprep.subr.mxu0 %v4234
        %5705 = vmatpush1.msra.mxu0 %v4233
        %5706 = vmatprep.subr.mxu0 %v4238
        %5707 = vmatpush1.msra.mxu0 %v4237
        %5708 = vmatprep.subr.mxu0 %v4242
        %5709 = vmatpush1.msra.mxu0 %v4241
        %5710 = vmatprep.subr.mxu0 %v4246
        %5711 = vmatpush1.msra.mxu0 %v4245
        %5712 = vmatprep.subr.mxu0 %v4250
        %5713 = vmatpush1.msra.mxu0 %v4249
        %5714 = vmatprep.subr.mxu0 %v4254
        %5715 = vmatpush1.msra.mxu0 %v4253
        %5716 = vmatprep.subr.mxu0 %v4258
        %5717 = vmatpush1.msra.mxu0 %v4257
        %5718 = vmatprep.subr.mxu0 %v4262
        %5719 = vmatpush1.msra.mxu0 %v4261
        %5720 = vmatprep.subr.mxu0 %v4266
        %5721 = vmatpush1.msra.mxu0 %v4265
        %5722 = vmatprep.subr.mxu0 %v4270
        %5723 = vmatpush1.msra.mxu0 %v4269
        %5724 = vmatprep.subr.mxu0 %v4274
        %5725 = vmatpush1.msra.mxu0 %v4273
        %5726 = vmatprep.subr.mxu0 %v4278
        %5727 = vmatpush1.msra.mxu0 %v4277
        %5728 = vmatprep.subr.mxu0 0.0
        %5729 = vmatpush1.msra.mxu0 0.0
        %5730 = vmatprep.subr.mxu0 0.0
        %5731 = vmatpush1.msra.mxu0 0.0
        %5732 = vmatprep.subr.mxu0 0.0
        %5733 = vmatpush1.msra.mxu0 0.0
        %5734 = vmatprep.subr.mxu0 0.0
        %5735 = vmatpush1.msra.mxu0 0.0
        %5736 = vmatprep.subr.mxu0 0.0
        %5737 = vmatpush1.msra.mxu0 0.0
        %5738 = vmatprep.subr.mxu0 0.0
        %5739 = vmatpush1.msra.mxu0 0.0
        %5740 = vmatprep.subr.mxu0 0.0
        %5741 = vmatpush1.msra.mxu0 0.0
        %5742 = vmatprep.subr.mxu0 0.0
        %5743 = vmatpush1.msra.mxu0 0.0
        %5744 = vmatprep.subr.mxu0 0.0
        %5745 = vmatpush1.msra.mxu0 0.0
        %5746 = vmatprep.subr.mxu0 0.0
        %5747 = vmatpush1.msra.mxu0 0.0
        %5748 = vmatprep.subr.mxu0 0.0
        %5749 = vmatpush1.msra.mxu0 0.0
        %5750 = vmatprep.subr.mxu0 0.0
        %5751 = vmatpush1.msra.mxu0 0.0
        %5752 = vmatprep.subr.mxu0 0.0
        %5753 = vmatpush1.msra.mxu0 0.0
        %5754 = vmatprep.subr.mxu0 0.0
        %5755 = vmatpush1.msra.mxu0 0.0
        %5756 = vmatprep.subr.mxu0 0.0
        %5757 = vmatpush1.msra.mxu0 0.0
        %5758 = vmatprep.subr.mxu0 0.0
        %5759 = vmatpush1.msra.mxu0 0.0
        %5760 = vmatprep.mubr.f32.mxu0 0.0
        %5761 = vmatmul.mubr.f32.gmra.mrb[0].mxu0 %v5619
        %v5762 = vpop.f32.mrb[0].mxu0
        %v5763 = vadd.f32 0.0, %v5762
        %v5764 = vpop.f32.mrb[0].mxu0
        %v5765 = vadd.f32 0.0, %v5764
        %5766 = vdwg.mxu0
        %v5767 = vadd.f32 %v5621, %v5692
        %v5768 = vadd.f32 %v5622, %v5694
        %v5769 = vadd.f32 %v5623, %v5763
        %v5770 = vadd.f32 %v5624, %v5765
        %v5771 = vxor.u32 %v5767, 2147483648
        %v5772 = vxor.u32 %v5768, 2147483648
        %v5773 = vxor.u32 %v5769, 2147483648
        %v5774 = vmul.f32 %v5771, 1.442695
        %v5775 = vpow.pop %v5774
        %v5776 = vmul.f32 %v5772, 1.442695
        %v5777 = vpow.pop %v5776
        %v5778 = vmul.f32 %v5773, 1.442695
        %v5779 = vpow.pop %v5778
        %v5780 = vadd.f32 %v5775, 1.0
        %v5781 = vadd.f32 %v5777, 1.0
        %v5782 = vadd.f32 %v5779, 1.0
        %v5783 = vrcp.pop %v5780
        %v5784 = vmul.f32 1.0, %v5783
        %v5785 = vrcp.pop %v5781
        %v5786 = vmul.f32 1.0, %v5785
        %v5787 = vrcp.pop %v5782
        %v5788 = vmul.f32 1.0, %v5787
        %v5789 = vtanh.pop %v5770
        %v5790 = vmul.f32 %v5786, %v5617
        %v5791 = vmul.f32 %v5784, %v5789
        %v5792 = vadd.f32 %v5790, %v5791
        %v5793 = vtanh.pop %v5792
        %v5794 = vmul.f32 %v5788, %v5793
        %5795 = vst [vmem:[%s2141] sm:$0xff] %v5794
        %v5796 = vld [vmem:[%s2143] sm:$0xff]
        %v5797 = vld [vmem:[%s2143 + $0x8] sm:$0xff]
        %v5798 = vld [vmem:[%s2143 + $0x10] sm:$0xff]
        %v5799 = vld [vmem:[%s2143 + $0x18] sm:$0xff]
        %5800 = vmatprep.subr.mxu0 %v4216
        %5801 = vmatpush1.msra.mxu0 %v4215
        %5802 = vmatprep.subr.mxu0 %v4220
        %5803 = vmatpush1.msra.mxu0 %v4219
        %5804 = vmatprep.subr.mxu0 %v4224
        %5805 = vmatpush1.msra.mxu0 %v4223
        %5806 = vmatprep.subr.mxu0 %v4228
        %5807 = vmatpush1.msra.mxu0 %v4227
        %5808 = vmatprep.subr.mxu0 %v4232
        %5809 = vmatpush1.msra.mxu0 %v4231
        %5810 = vmatprep.subr.mxu0 %v4236
        %5811 = vmatpush1.msra.mxu0 %v4235
        %5812 = vmatprep.subr.mxu0 %v4240
        %5813 = vmatpush1.msra.mxu0 %v4239
        %5814 = vmatprep.subr.mxu0 %v4244
        %5815 = vmatpush1.msra.mxu0 %v4243
        %5816 = vmatprep.subr.mxu0 %v4248
        %5817 = vmatpush1.msra.mxu0 %v4247
        %5818 = vmatprep.subr.mxu0 %v4252
        %5819 = vmatpush1.msra.mxu0 %v4251
        %5820 = vmatprep.subr.mxu0 %v4256
        %5821 = vmatpush1.msra.mxu0 %v4255
        %5822 = vmatprep.subr.mxu0 %v4260
        %5823 = vmatpush1.msra.mxu0 %v4259
        %5824 = vmatprep.subr.mxu0 %v4264
        %5825 = vmatpush1.msra.mxu0 %v4263
        %5826 = vmatprep.subr.mxu0 %v4268
        %5827 = vmatpush1.msra.mxu0 %v4267
        %5828 = vmatprep.subr.mxu0 %v4272
        %5829 = vmatpush1.msra.mxu0 %v4271
        %5830 = vmatprep.subr.mxu0 %v4276
        %5831 = vmatpush1.msra.mxu0 %v4275
        %5832 = vmatprep.subr.mxu0 0.0
        %5833 = vmatpush1.msra.mxu0 0.0
        %5834 = vmatprep.subr.mxu0 0.0
        %5835 = vmatpush1.msra.mxu0 0.0
        %5836 = vmatprep.subr.mxu0 0.0
        %5837 = vmatpush1.msra.mxu0 0.0
        %5838 = vmatprep.subr.mxu0 0.0
        %5839 = vmatpush1.msra.mxu0 0.0
        %5840 = vmatprep.subr.mxu0 0.0
        %5841 = vmatpush1.msra.mxu0 0.0
        %5842 = vmatprep.subr.mxu0 0.0
        %5843 = vmatpush1.msra.mxu0 0.0
        %5844 = vmatprep.subr.mxu0 0.0
        %5845 = vmatpush1.msra.mxu0 0.0
        %5846 = vmatprep.subr.mxu0 0.0
        %5847 = vmatpush1.msra.mxu0 0.0
        %5848 = vmatprep.subr.mxu0 0.0
        %5849 = vmatpush1.msra.mxu0 0.0
        %5850 = vmatprep.subr.mxu0 0.0
        %5851 = vmatpush1.msra.mxu0 0.0
        %5852 = vmatprep.subr.mxu0 0.0
        %5853 = vmatpush1.msra.mxu0 0.0
        %5854 = vmatprep.subr.mxu0 0.0
        %5855 = vmatpush1.msra.mxu0 0.0
        %5856 = vmatprep.subr.mxu0 0.0
        %5857 = vmatpush1.msra.mxu0 0.0
        %5858 = vmatprep.subr.mxu0 0.0
        %5859 = vmatpush1.msra.mxu0 0.0
        %5860 = vmatprep.subr.mxu0 0.0
        %5861 = vmatpush1.msra.mxu0 0.0
        %5862 = vmatprep.subr.mxu0 0.0
        %5863 = vmatpush1.msra.mxu0 0.0
        %5864 = vmatprep.mubr.f32.mxu0 0.0
        %5865 = vmatmul.mubr.f32.gmra.mrb[0].mxu0 %v5794
        %v5866 = vpop.f32.mrb[0].mxu0
        %v5867 = vadd.f32 0.0, %v5866
        %v5868 = vpop.f32.mrb[0].mxu0
        %v5869 = vadd.f32 0.0, %v5868
        %5870 = vdwg.mxu0
        %5871 = vmatprep.subr.mxu0 %v4218
        %5872 = vmatpush1.msra.mxu0 %v4217
        %5873 = vmatprep.subr.mxu0 %v4222
        %5874 = vmatpush1.msra.mxu0 %v4221
        %5875 = vmatprep.subr.mxu0 %v4226
        %5876 = vmatpush1.msra.mxu0 %v4225
        %5877 = vmatprep.subr.mxu0 %v4230
        %5878 = vmatpush1.msra.mxu0 %v4229
        %5879 = vmatprep.subr.mxu0 %v4234
        %5880 = vmatpush1.msra.mxu0 %v4233
        %5881 = vmatprep.subr.mxu0 %v4238
        %5882 = vmatpush1.msra.mxu0 %v4237
        %5883 = vmatprep.subr.mxu0 %v4242
        %5884 = vmatpush1.msra.mxu0 %v4241
        %5885 = vmatprep.subr.mxu0 %v4246
        %5886 = vmatpush1.msra.mxu0 %v4245
        %5887 = vmatprep.subr.mxu0 %v4250
        %5888 = vmatpush1.msra.mxu0 %v4249
        %5889 = vmatprep.subr.mxu0 %v4254
        %5890 = vmatpush1.msra.mxu0 %v4253
        %5891 = vmatprep.subr.mxu0 %v4258
        %5892 = vmatpush1.msra.mxu0 %v4257
        %5893 = vmatprep.subr.mxu0 %v4262
        %5894 = vmatpush1.msra.mxu0 %v4261
        %5895 = vmatprep.subr.mxu0 %v4266
        %5896 = vmatpush1.msra.mxu0 %v4265
        %5897 = vmatprep.subr.mxu0 %v4270
        %5898 = vmatpush1.msra.mxu0 %v4269
        %5899 = vmatprep.subr.mxu0 %v4274
        %5900 = vmatpush1.msra.mxu0 %v4273
        %5901 = vmatprep.subr.mxu0 %v4278
        %5902 = vmatpush1.msra.mxu0 %v4277
        %5903 = vmatprep.subr.mxu0 0.0
        %5904 = vmatpush1.msra.mxu0 0.0
        %5905 = vmatprep.subr.mxu0 0.0
        %5906 = vmatpush1.msra.mxu0 0.0
        %5907 = vmatprep.subr.mxu0 0.0
        %5908 = vmatpush1.msra.mxu0 0.0
        %5909 = vmatprep.subr.mxu0 0.0
        %5910 = vmatpush1.msra.mxu0 0.0
        %5911 = vmatprep.subr.mxu0 0.0
        %5912 = vmatpush1.msra.mxu0 0.0
        %5913 = vmatprep.subr.mxu0 0.0
        %5914 = vmatpush1.msra.mxu0 0.0
        %5915 = vmatprep.subr.mxu0 0.0
        %5916 = vmatpush1.msra.mxu0 0.0
        %5917 = vmatprep.subr.mxu0 0.0
        %5918 = vmatpush1.msra.mxu0 0.0
        %5919 = vmatprep.subr.mxu0 0.0
        %5920 = vmatpush1.msra.mxu0 0.0
        %5921 = vmatprep.subr.mxu0 0.0
        %5922 = vmatpush1.msra.mxu0 0.0
        %5923 = vmatprep.subr.mxu0 0.0
        %5924 = vmatpush1.msra.mxu0 0.0
        %5925 = vmatprep.subr.mxu0 0.0
        %5926 = vmatpush1.msra.mxu0 0.0
        %5927 = vmatprep.subr.mxu0 0.0
        %5928 = vmatpush1.msra.mxu0 0.0
        %5929 = vmatprep.subr.mxu0 0.0
        %5930 = vmatpush1.msra.mxu0 0.0
        %5931 = vmatprep.subr.mxu0 0.0
        %5932 = vmatpush1.msra.mxu0 0.0
        %5933 = vmatprep.subr.mxu0 0.0
        %5934 = vmatpush1.msra.mxu0 0.0
        %5935 = vmatprep.mubr.f32.mxu0 0.0
        %5936 = vmatmul.mubr.f32.gmra.mrb[0].mxu0 %v5794
        %v5937 = vpop.f32.mrb[0].mxu0
        %v5938 = vadd.f32 0.0, %v5937
        %v5939 = vpop.f32.mrb[0].mxu0
        %v5940 = vadd.f32 0.0, %v5939
        %5941 = vdwg.mxu0
        %v5942 = vadd.f32 %v5796, %v5867
        %v5943 = vadd.f32 %v5797, %v5869
        %v5944 = vadd.f32 %v5798, %v5938
        %v5945 = vadd.f32 %v5799, %v5940
        %v5946 = vxor.u32 %v5942, 2147483648
        %v5947 = vxor.u32 %v5943, 2147483648
        %v5948 = vxor.u32 %v5944, 2147483648
        %v5949 = vmul.f32 %v5946, 1.442695
        %v5950 = vpow.pop %v5949
        %v5951 = vmul.f32 %v5947, 1.442695
        %v5952 = vpow.pop %v5951
        %v5953 = vmul.f32 %v5948, 1.442695
        %v5954 = vpow.pop %v5953
        %v5955 = vadd.f32 %v5950, 1.0
        %v5956 = vadd.f32 %v5952, 1.0
        %v5957 = vadd.f32 %v5954, 1.0
        %v5958 = vrcp.pop %v5955
        %v5959 = vmul.f32 1.0, %v5958
        %v5960 = vrcp.pop %v5956
        %v5961 = vmul.f32 1.0, %v5960
        %v5962 = vrcp.pop %v5957
        %v5963 = vmul.f32 1.0, %v5962
        %v5964 = vtanh.pop %v5945
        %v5965 = vmul.f32 %v5961, %v5792
        %v5966 = vmul.f32 %v5959, %v5964
        %v5967 = vadd.f32 %v5965, %v5966
        %v5968 = vtanh.pop %v5967
        %v5969 = vmul.f32 %v5963, %v5968
        %5970 = vst [vmem:[%s2318] sm:$0xff] %v5969
        %5971 = vst [vmem:[%s4567] sm:$0xff] %v5969
        %5972 = vst [vmem:[%s4569] sm:$0xff] %v5967
        %v5973 = vld [vmem:[%s10] sm:$0xff]
        %v5974 = vld [vmem:[%s10 + $0x8] sm:$0xff]
        %v5975 = vld [vmem:[%s10 + $0x10] sm:$0xff]
        %v5976 = vld [vmem:[%s10 + $0x18] sm:$0xff]
        %v5977 = vld [vmem:[%s10 + $0x20] sm:$0xff]
        %v5978 = vld [vmem:[%s10 + $0x28] sm:$0xff]
        %v5979 = vld [vmem:[%s10 + $0x30] sm:$0xff]
        %v5980 = vld [vmem:[%s10 + $0x38] sm:$0xff]
        %v5981 = vld [vmem:[%s10 + $0x40] sm:$0xff]
        %v5982 = vld [vmem:[%s10 + $0x48] sm:$0xff]
        %v5983 = vld [vmem:[%s10 + $0x50] sm:$0xff]
        %v5984 = vld [vmem:[%s10 + $0x58] sm:$0xff]
        %v5985 = vld [vmem:[%s10 + $0x60] sm:$0xff]
        %v5986 = vld [vmem:[%s10 + $0x68] sm:$0xff]
        %v5987 = vld [vmem:[%s10 + $0x70] sm:$0xff]
        %v5988 = vld [vmem:[%s10 + $0x78] sm:$0xff]
        %v5989 = vld [vmem:[#allocation3] sm:$0xff]
        %v5990 = vld [vmem:[#allocation3 + $0x8] sm:$0xff]
        %v5991 = vld [vmem:[#allocation3 + $0x10] sm:$0xff]
        %v5992 = vld [vmem:[#allocation3 + $0x18] sm:$0xff]
        %v5993 = vld [vmem:[#allocation3 + $0x20] sm:$0xff]
        %v5994 = vld [vmem:[#allocation3 + $0x28] sm:$0xff]
        %v5995 = vld [vmem:[#allocation3 + $0x30] sm:$0xff]
        %v5996 = vld [vmem:[#allocation3 + $0x38] sm:$0xff]
        %v5997 = vld [vmem:[%s11] sm:$0x1]
        %v5999 = vlaneseq
        %v6000 = vshrl.u32 %v5999, 7
        %v6001 = vsub.s32 0, %v6000
        %v6002 = vrot.slane %v5997, %v6001
        %6004 = vmatprep.subr.mxu0 0.0
        %6005 = vmatpush1.msra.mxu0 %v5973
        %6006 = vmatprep.subr.mxu0 0.0
        %6007 = vmatpush1.msra.mxu0 %v5974
        %6008 = vmatprep.subr.mxu0 0.0
        %6009 = vmatpush1.msra.mxu0 %v5975
        %6010 = vmatprep.subr.mxu0 0.0
        %6011 = vmatpush1.msra.mxu0 %v5976
        %6012 = vmatprep.subr.mxu0 0.0
        %6013 = vmatpush1.msra.mxu0 %v5977
        %6014 = vmatprep.subr.mxu0 0.0
        %6015 = vmatpush1.msra.mxu0 %v5978
        %6016 = vmatprep.subr.mxu0 0.0
        %6017 = vmatpush1.msra.mxu0 %v5979
        %6018 = vmatprep.subr.mxu0 0.0
        %6019 = vmatpush1.msra.mxu0 %v5980
        %6020 = vmatprep.subr.mxu0 0.0
        %6021 = vmatpush1.msra.mxu0 %v5981
        %6022 = vmatprep.subr.mxu0 0.0
        %6023 = vmatpush1.msra.mxu0 %v5982
        %6024 = vmatprep.subr.mxu0 0.0
        %6025 = vmatpush1.msra.mxu0 %v5983
        %6026 = vmatprep.subr.mxu0 0.0
        %6027 = vmatpush1.msra.mxu0 %v5984
        %6028 = vmatprep.subr.mxu0 0.0
        %6029 = vmatpush1.msra.mxu0 %v5985
        %6030 = vmatprep.subr.mxu0 0.0
        %6031 = vmatpush1.msra.mxu0 %v5986
        %6032 = vmatprep.subr.mxu0 0.0
        %6033 = vmatpush1.msra.mxu0 %v5987
        %6034 = vmatprep.subr.mxu0 0.0
        %6035 = vmatpush1.msra.mxu0 %v5988
        %6036 = vmatprep.subr.mxu0 0.0
        %6037 = vmatpush1.msra.mxu0 0.0
        %6038 = vmatprep.subr.mxu0 0.0
        %6039 = vmatpush1.msra.mxu0 0.0
        %6040 = vmatprep.subr.mxu0 0.0
        %6041 = vmatpush1.msra.mxu0 0.0
        %6042 = vmatprep.subr.mxu0 0.0
        %6043 = vmatpush1.msra.mxu0 0.0
        %6044 = vmatprep.subr.mxu0 0.0
        %6045 = vmatpush1.msra.mxu0 0.0
        %6046 = vmatprep.subr.mxu0 0.0
        %6047 = vmatpush1.msra.mxu0 0.0
        %6048 = vmatprep.subr.mxu0 0.0
        %6049 = vmatpush1.msra.mxu0 0.0
        %6050 = vmatprep.subr.mxu0 0.0
        %6051 = vmatpush1.msra.mxu0 0.0
        %6052 = vmatprep.subr.mxu0 0.0
        %6053 = vmatpush1.msra.mxu0 0.0
        %6054 = vmatprep.subr.mxu0 0.0
        %6055 = vmatpush1.msra.mxu0 0.0
        %6056 = vmatprep.subr.mxu0 0.0
        %6057 = vmatpush1.msra.mxu0 0.0
        %6058 = vmatprep.subr.mxu0 0.0
        %6059 = vmatpush1.msra.mxu0 0.0
        %6060 = vmatprep.subr.mxu0 0.0
        %6061 = vmatpush1.msra.mxu0 0.0
        %6062 = vmatprep.subr.mxu0 0.0
        %6063 = vmatpush1.msra.mxu0 0.0
        %6064 = vmatprep.subr.mxu0 0.0
        %6065 = vmatpush1.msra.mxu0 0.0
        %6066 = vmatprep.subr.mxu0 0.0
        %6067 = vmatpush1.msra.mxu0 0.0
        %6068 = vmatprep.mubr.f32.mxu0 0.0
        %6069 = vmatmul.mubr.f32.gmra.mrb[0].mxu0 %v5989
        %v6070 = vpop.f32.mrb[0].mxu0
        %v6071 = vadd.f32 %v6002, %v6070
        %v6072 = vpop.f32.mrb[0].mxu0
        %6073 = vmatprep.mubr.f32.mxu0 0.0
        %6074 = vmatmul.mubr.f32.gmra.mrb[0].mxu0 %v5990
        %v6075 = vpop.f32.mrb[0].mxu0
        %v6076 = vadd.f32 %v6002, %v6075
        %v6077 = vpop.f32.mrb[0].mxu0
        %6078 = vmatprep.mubr.f32.mxu0 0.0
        %6079 = vmatmul.mubr.f32.gmra.mrb[0].mxu0 %v5991
        %v6080 = vpop.f32.mrb[0].mxu0
        %v6081 = vadd.f32 %v6002, %v6080
        %v6082 = vpop.f32.mrb[0].mxu0
        %6083 = vmatprep.mubr.f32.mxu0 0.0
        %6084 = vmatmul.mubr.f32.gmra.mrb[0].mxu0 %v5992
        %v6085 = vpop.f32.mrb[0].mxu0
        %v6086 = vadd.f32 %v6002, %v6085
        %v6087 = vpop.f32.mrb[0].mxu0
        %6088 = vmatprep.mubr.f32.mxu0 0.0
        %6089 = vmatmul.mubr.f32.gmra.mrb[0].mxu0 %v5993
        %v6090 = vpop.f32.mrb[0].mxu0
        %v6091 = vadd.f32 %v6002, %v6090
        %v6092 = vpop.f32.mrb[0].mxu0
        %6093 = vmatprep.mubr.f32.mxu0 0.0
        %6094 = vmatmul.mubr.f32.gmra.mrb[0].mxu0 %v5994
        %v6095 = vpop.f32.mrb[0].mxu0
        %v6096 = vadd.f32 %v6002, %v6095
        %v6097 = vpop.f32.mrb[0].mxu0
        %6098 = vmatprep.mubr.f32.mxu0 0.0
        %6099 = vmatmul.mubr.f32.gmra.mrb[0].mxu0 %v5995
        %v6100 = vpop.f32.mrb[0].mxu0
        %v6101 = vadd.f32 %v6002, %v6100
        %v6102 = vpop.f32.mrb[0].mxu0
        %6103 = vmatprep.mubr.f32.mxu0 0.0
        %6104 = vmatmul.mubr.f32.gmra.mrb[0].mxu0 %v5996
        %v6105 = vpop.f32.mrb[0].mxu0
        %v6106 = vadd.f32 %v6002, %v6105
        %v6107 = vpop.f32.mrb[0].mxu0
        %6108 = vdwg.mxu0
        %v6109 = vxor.u32 %v6071, 2147483648
        %v6110 = vxor.u32 %v6076, 2147483648
        %v6111 = vxor.u32 %v6081, 2147483648
        %v6112 = vxor.u32 %v6086, 2147483648
        %v6113 = vxor.u32 %v6091, 2147483648
        %v6114 = vxor.u32 %v6096, 2147483648
        %v6115 = vxor.u32 %v6101, 2147483648
        %v6116 = vxor.u32 %v6106, 2147483648
        %v6117 = vmul.f32 %v6109, 1.442695
        %v6118 = vpow.pop %v6117
        %v6119 = vmul.f32 %v6110, 1.442695
        %v6120 = vpow.pop %v6119
        %v6121 = vmul.f32 %v6111, 1.442695
        %v6122 = vpow.pop %v6121
        %v6123 = vmul.f32 %v6112, 1.442695
        %v6124 = vpow.pop %v6123
        %v6125 = vmul.f32 %v6113, 1.442695
        %v6126 = vpow.pop %v6125
        %v6127 = vmul.f32 %v6114, 1.442695
        %v6128 = vpow.pop %v6127
        %v6129 = vmul.f32 %v6115, 1.442695
        %v6130 = vpow.pop %v6129
        %v6131 = vmul.f32 %v6116, 1.442695
        %v6132 = vpow.pop %v6131
        %v6133 = vadd.f32 %v6118, 1.0
        %v6134 = vadd.f32 %v6120, 1.0
        %v6135 = vadd.f32 %v6122, 1.0
        %v6136 = vadd.f32 %v6124, 1.0
        %v6137 = vadd.f32 %v6126, 1.0
        %v6138 = vadd.f32 %v6128, 1.0
        %v6139 = vadd.f32 %v6130, 1.0
        %v6140 = vadd.f32 %v6132, 1.0
        %v6141 = vrcp.pop %v6133
        %v6142 = vmul.f32 1.0, %v6141
        %v6143 = vrcp.pop %v6134
        %v6144 = vmul.f32 1.0, %v6143
        %v6145 = vrcp.pop %v6135
        %v6146 = vmul.f32 1.0, %v6145
        %v6147 = vrcp.pop %v6136
        %v6148 = vmul.f32 1.0, %v6147
        %v6149 = vrcp.pop %v6137
        %v6150 = vmul.f32 1.0, %v6149
        %v6151 = vrcp.pop %v6138
        %v6152 = vmul.f32 1.0, %v6151
        %v6153 = vrcp.pop %v6139
        %v6154 = vmul.f32 1.0, %v6153
        %v6155 = vrcp.pop %v6140
        %v6156 = vmul.f32 1.0, %v6155
        %6157 = vst [vmem:[%s502] sm:$0xff] %v6142
        %6158 = vst [vmem:[%s502 + $0x8] sm:$0xff] %v6144
        %6159 = vst [vmem:[%s502 + $0x10] sm:$0xff] %v6146
        %6160 = vst [vmem:[%s502 + $0x18] sm:$0xff] %v6148
        %6161 = vst [vmem:[%s502 + $0x20] sm:$0xff] %v6150
        %6162 = vst [vmem:[%s502 + $0x28] sm:$0xff] %v6152
        %6163 = vst [vmem:[%s502 + $0x30] sm:$0xff] %v6154
        %6164 = vst [vmem:[%s502 + $0x38] sm:$0xff] %v6156
        %s6165 = sand.u32 %s310, 1
        %s6166 = scalar_lea.sflag [#allocation9], %s6165
        %s6167 = sand.u32 %s310, 1
        %s6168 = smul.addr %s6167, 64
        %s6169 = scalar_lea.vmem [#allocation16], %s6168
        // Predicated region
        $region93: #{tpu_custom_call.1} parent=67 // pred_check
          %p6170 = pneg %p320
        $region94: #{tpu_custom_call.1} parent=67 // pred_check_branch
          %6172 = sbr.rel (%p6170) target = $region96
        $region95: #{tpu_custom_call.1} parent=67 // pred_region
          %s6173 = smul.u32 8, %s34
          %s6175 = ssub.s32 1024, 1024
          %6176 = vsyncadd %s6166, %s6175
          %s6177 = sadd.s32 %s33, %s6173
          %s6178 = smul.addr %s6177, 128
          %s6179 = scalar_lea.hbm %s12, %s6178
          %s6180 = sshll.u32 %s6169, 4
          %s6181 = int_to_ptr.vmem [resolvable:$true] %s6180
          %6186 = dma.vmem_to_hbm [thread:$0]  %s6181, 1024, %s6179, %s6166, 128, 128, 8
        $region96: #{tpu_custom_call.1} parent=67 // pred_fallthru
          _
      $region68: #{tpu_custom_call.1} parent=5 // pred_fallthru
        _
      %p6187 = scmp.le.s32.totalorder 2, %s24
      // Predicated region
      $region97: #{tpu_custom_call.1} parent=5 // pred_check
        %p6188 = pneg %p6187
      $region98: #{tpu_custom_call.1} parent=5 // pred_check_branch
        %6190 = sbr.rel (%p6188) target = $region100
      $region99: #{tpu_custom_call.1} parent=5 // pred_region
        %s6191 = ssub.s32 %s24, 2
        // Predicated region
        $region101: #{tpu_custom_call.1} parent=99 // pred_check
          %p6192 = pneg %p326
        $region102: #{tpu_custom_call.1} parent=99 // pred_check_branch
          %6194 = sbr.rel (%p6192) target = $region104
        $region103: #{tpu_custom_call.1} parent=99 // pred_region
          %s6195 = sand.u32 %s311, 1
          %s6196 = scalar_lea.sflag [#allocation9], %s6195
          %s6197 = sand.u32 %s311, 1
          %s6198 = smul.addr %s6197, 64
          %s6199 = scalar_lea.vmem [#allocation16], %s6198
          %6200 = dma.done %s6196, 1024
        $region104: #{tpu_custom_call.1} parent=99 // pred_fallthru
          _
      $region100: #{tpu_custom_call.1} parent=5 // pred_fallthru
        _
    $region6: #{tpu_custom_call.1} parent=1 // loop_footer
      %s28 = sadd.s32 1, %s24
    $region7: #{tpu_custom_call.1} parent=1 // loop_footer_branch
      %23 = sbr.rel target = $region3
    $region8: #{tpu_custom_call.1} parent=1 // loop_exit
      _
    %6201 = vsyncpa [#allocation8], 1
    %s6202 = scalar_lea.sflag [#allocation8], 1
    %6203 = vsyncpa %s6202, 1
    %6204 = vsyncpa [#allocation11], 1
    %6205 = vsyncpa [#allocation14], 1
    %6206 = vsyncpa [#allocation9], 1
    %s6207 = scalar_lea.sflag [#allocation9], 1
    %6208 = vsyncpa %s6207, 1

</llo_original>
